<compile_context>
chip_gen: v7x
topology: tpu7x:2x2x1
jax: 0.10.0
libtpu: 0.0.40
codegen_flags: <defaults>
</compile_context>

<pallas_src>
import functools

import jax
import jax.numpy as jnp
from jax import lax
from jax.experimental import pallas as pl
from jax.experimental.pallas import tpu as pltpu


# --------------------------------------------------------------------------- #
# In-kernel helpers
# --------------------------------------------------------------------------- #
def _conv3x3_accum(get_tap, w_ref, h, w):
    """3x3 'same' conv as 9 accumulating per-tap MXU dots (no im2col patch).

    get_tap(dy, dx) -> (h, w, Cp) activation window for kernel tap (dy, dx),
                       already zero-padded at the image border.
    w_ref           -> (9, Cp, Cp) weights, tap-major, rows = cin, cols = cout.
    Returns the f32 conv output flattened to (h*w, Cp).
    """
    acc = None
    for t in range(9):
        dy, dx = divmod(t, 3)
        tap = get_tap(dy, dx).reshape(h * w, -1)
        part = jnp.dot(tap, w_ref[t], preferred_element_type=jnp.float32)
        acc = part if acc is None else acc + part
    return acc


def _write_channel_stats(stats_ref, acc):
    """Per-image BN partial sums: row 0 = sum over pixels, row 1 = sum(x^2)."""
    stats_ref[0, 0:1, :] = jnp.sum(acc, axis=0, keepdims=True)
    stats_ref[0, 1:2, :] = jnp.sum(acc * acc, axis=0, keepdims=True)


# --------------------------------------------------------------------------- #
# Pass 1: conv1 (+ BN1 partial sums).  Output is flat & lane-dense (H*W, Cp).
# --------------------------------------------------------------------------- #
def _conv1_kernel(xpad_ref, w_ref, y_ref, stats_ref, *, h, w):
    acc = _conv3x3_accum(
        lambda dy, dx: xpad_ref[0, dy:dy + h, dx:dx + w, :], w_ref, h, w)
    y_ref[0] = acc.astype(y_ref.dtype)          # flat, unmasked lane-dense store
    _write_channel_stats(stats_ref, acc)


# --------------------------------------------------------------------------- #
# Pass 2: bn1 (fused scale/bias) + relu + conv2 (+ BN2 partial sums)
# --------------------------------------------------------------------------- #
def _bn_relu_conv2_kernel(y1_ref, w_ref, scale_ref, bias_ref, y2_ref, stats_ref,
                          *, h, w):
    cp = y1_ref.shape[-1]
    cdt = y1_ref.dtype
    # bn1 folded into one per-channel FMA, then ReLU (f32), back to MXU dtype.
    z = jnp.maximum(y1_ref[0].astype(jnp.float32) * scale_ref[...]
                    + bias_ref[...], 0.0)
    zi = z.reshape(h, w, cp).astype(cdt)
    # Rebuild conv2's exact 1-pixel zero halo in-kernel (no uninitialized
    # memory, no cross-step scratch state, no full-lane iota masks).
    zrow = jnp.zeros((1, w, cp), cdt)
    zp = jnp.concatenate([zrow, zi, zrow], axis=0)          # (h+2, w,   cp)
    zcol = jnp.zeros((h + 2, 1, cp), cdt)
    zp = jnp.concatenate([zcol, zp, zcol], axis=1)          # (h+2, w+2, cp)
    acc = _conv3x3_accum(lambda dy, dx: zp[dy:dy + h, dx:dx + w, :], w_ref, h, w)
    y2_ref[0] = acc.astype(y2_ref.dtype)
    _write_channel_stats(stats_ref, acc)


# --------------------------------------------------------------------------- #
# Pass 3: bn2 (fused scale/bias) + residual add + relu
# --------------------------------------------------------------------------- #
def _bn_add_relu_kernel(y2_ref, xres_ref, scale_ref, bias_ref, out_ref):
    out_ref[0] = jnp.maximum(
        y2_ref[0].astype(jnp.float32) * scale_ref[...] + bias_ref[...]
        + xres_ref[0], 0.0)


# --------------------------------------------------------------------------- #
# Host-side helpers
# --------------------------------------------------------------------------- #
def _prep_conv_weight(w_oihw, cp, compute_dtype):
    """PyTorch OIHW 3x3 weight -> channel-padded, tap-major (9, Cp, Cp)."""
    cout, cin = int(w_oihw.shape[0]), int(w_oihw.shape[1])
    wgt = jnp.transpose(w_oihw, (2, 3, 1, 0)).astype(jnp.float32)   # (3,3,Ci,Co)
    wgt = jnp.pad(wgt, ((0, 0), (0, 0), (0, cp - cin), (0, cp - cout)))
    return wgt.reshape(9, cp, cp).astype(compute_dtype)


def _bn_scale_bias(stats, gamma, beta, count, eps):
    """Finalize training-mode BN (biased variance) from per-image partial sums;
    fold gamma/beta into one per-channel scale & bias (a single in-kernel FMA).
    NOTE: one-pass E[x^2]-mean^2 in f32 -- fine at these sizes; switch to
    centered partial sums if N*H*W grows to where cancellation matters."""
    s = jnp.sum(stats[:, 0, :], axis=0)
    ss = jnp.sum(stats[:, 1, :], axis=0)
    mean = s / count
    var = jnp.maximum(ss / count - mean * mean, 0.0)
    scale = gamma * lax.rsqrt(var + eps)
    bias = beta - mean * scale
    return scale.reshape(1, -1), bias.reshape(1, -1)


def _vmem_limit_bytes():
    """~3/4 of physical VMEM, capped: ~48 MiB on v7x, ~96 MiB on v5e/v6e."""
    try:
        cap = int(pltpu.get_tpu_info().vmem_capacity_bytes)
    except Exception:
        cap = 64 * 1024 * 1024          # conservative fallback (v7x-sized)
    return int(min(cap * 3 // 4, 100 * 1024 * 1024))


def basic_block_forward(x_nchw, w1_oihw, w2_oihw, g1, b1, g2, b2,
                        *, compute_dtype=jnp.bfloat16, eps=1e-5):
    """BasicBlock forward. x_nchw: (N, C, H, W) f32; conv weights OIHW, no bias."""
    n, c, h, w = x_nchw.shape
    hp = h + 2
    wp = ((w + 2 + 7) // 8) * 8            # sublane-aligned padded width
    cp = ((c + 127) // 128) * 128          # lane-dense channel padding
    m = n * h * w                          # BN reduction count
    f32 = jnp.float32

    x_nhwc = jnp.transpose(x_nchw, (0, 2, 3, 1)).astype(f32)
    x_c = jnp.pad(x_nhwc, ((0, 0), (0, 0), (0, 0), (0, cp - c)))
    x_res = x_c.reshape(n, h * w, cp)                                 # residual f32
    x_pad = jnp.pad(x_c, ((0, 0), (1, 1), (1, wp - w - 1), (0, 0))
                    ).astype(compute_dtype)                           # conv1 zero pad

    w1m = _prep_conv_weight(w1_oihw, cp, compute_dtype)
    w2m = _prep_conv_weight(w2_oihw, cp, compute_dtype)
    g1p, b1p, g2p, b2p = (
        jnp.pad(v.astype(f32).reshape(-1), (0, cp - c)) for v in (g1, b1, g2, b2))

    cparams = pltpu.CompilerParams(
        dimension_semantics=("parallel",),      # images across TCs (v7x megacore)
        vmem_limit_bytes=_vmem_limit_bytes())

    xpad_spec = pl.BlockSpec((1, hp, wp, cp), lambda i: (i, 0, 0, 0))
    flat_spec = pl.BlockSpec((1, h * w, cp), lambda i: (i, 0, 0))
    stats_spec = pl.BlockSpec((1, 2, cp), lambda i: (i, 0, 0))
    w_spec = pl.BlockSpec((9, cp, cp), lambda i: (0, 0, 0))
    vec_spec = pl.BlockSpec((1, cp), lambda i: (0, 0))

    # ---- Pass 1: conv1 (+ per-image BN1 partial sums) ------------------------
    y1, stats1 = pl.pallas_call(
        functools.partial(_conv1_kernel, h=h, w=w),
        grid=(n,),
        in_specs=[xpad_spec, w_spec],
        out_specs=(flat_spec, stats_spec),
        out_shape=(jax.ShapeDtypeStruct((n, h * w, cp), compute_dtype),
                   jax.ShapeDtypeStruct((n, 2, cp), f32)),
        compiler_params=cparams,
    )(x_pad, w1m)

    scale1, bias1 = _bn_scale_bias(stats1, g1p, b1p, m, eps)

    # ---- Pass 2: bn1 + relu + conv2 (+ per-image BN2 partial sums) -----------
    y2, stats2 = pl.pallas_call(
        functools.partial(_bn_relu_conv2_kernel, h=h, w=w),
        grid=(n,),
        in_specs=[flat_spec, w_spec, vec_spec, vec_spec],
        out_specs=(flat_spec, stats_spec),
        out_shape=(jax.ShapeDtypeStruct((n, h * w, cp), compute_dtype),
                   jax.ShapeDtypeStruct((n, 2, cp), f32)),
        compiler_params=cparams,
    )(y1, w2m, scale1, bias1)

    scale2, bias2 = _bn_scale_bias(stats2, g2p, b2p, m, eps)

    # ---- Pass 3: bn2 + residual add + relu ------------------------------------
    out_flat = pl.pallas_call(
        _bn_add_relu_kernel,
        grid=(n,),
        in_specs=[flat_spec, flat_spec, vec_spec, vec_spec],
        out_specs=flat_spec,
        out_shape=jax.ShapeDtypeStruct((n, h * w, cp), f32),
        compiler_params=cparams,
    )(y2, x_res, scale2, bias2)

    out = out_flat.reshape(n, h, w, cp)[..., :c]
    return jnp.transpose(out, (0, 3, 1, 2))                           # back to NCHW


# --------------------------------------------------------------------------- #
# Pure-JAX reference of the PyTorch forward (training-mode BN)
# --------------------------------------------------------------------------- #
def _reference(x, w1, w2, g1, b1, g2, b2):
    def conv(a, wgt):
        return lax.conv_general_dilated(
            a, wgt, window_strides=(1, 1), padding=((1, 1), (1, 1)),
            dimension_numbers=('NCHW', 'OIHW', 'NCHW'),
            precision=lax.Precision.HIGHEST)

    def bn(a, g, b):
        mean = jnp.mean(a, axis=(0, 2, 3), keepdims=True)
        var = jnp.mean((a - mean) ** 2, axis=(0, 2, 3), keepdims=True)
        return ((a - mean) * lax.rsqrt(var + 1e-5) * g.reshape(1, -1, 1, 1)
                + b.reshape(1, -1, 1, 1))

    out = jnp.maximum(bn(conv(x, w1), g1, b1), 0.0)
    out = bn(conv(out, w2), g2, b2)
    return jnp.maximum(out + x, 0.0)


if __name__ == "__main__":
    # Small shapes consistent with BasicBlock(inplanes=4, planes=4, stride=1).
    N, C, H, W = 2, 4, 16, 16
    key = jax.random.PRNGKey(0)
    kx, k1, k2, kg1, kb1, kg2, kb2 = jax.random.split(key, 7)

    x = jax.random.normal(kx, (N, C, H, W), jnp.float32)
    w1 = jax.random.normal(k1, (C, C, 3, 3), jnp.float32) * 0.1     # conv1 OIHW
    w2 = jax.random.normal(k2, (C, C, 3, 3), jnp.float32) * 0.1     # conv2 OIHW
    g1 = 1.0 + 0.1 * jax.random.normal(kg1, (C,), jnp.float32)      # bn1 gamma
    b1 = 0.1 * jax.random.normal(kb1, (C,), jnp.float32)            # bn1 beta
    g2 = 1.0 + 0.1 * jax.random.normal(kg2, (C,), jnp.float32)      # bn2 gamma
    b2 = 0.1 * jax.random.normal(kb2, (C,), jnp.float32)            # bn2 beta

    fwd = jax.jit(basic_block_forward, static_argnames=("compute_dtype",))
    ref = jax.block_until_ready(_reference(x, w1, w2, g1, b1, g2, b2))

    # Default perf path: bf16 MXU operands + bf16 intermediates, f32 accumulation.
    out = jax.block_until_ready(fwd(x, w1, w2, g1, b1, g2, b2))
    assert out.shape == (N, C, H, W)
    assert bool(jnp.allclose(out, ref, rtol=5e-2, atol=5e-2)), "bf16 kernel mismatch"

    # Strict structural check: identical kernels with f32 operands/intermediates.
    out32 = jax.block_until_ready(
        fwd(x, w1, w2, g1, b1, g2, b2, compute_dtype=jnp.float32))
    assert bool(jnp.allclose(out32, ref, rtol=1e-3, atol=1e-3)), "f32 kernel mismatch"

    print("KERNEL_OK")
</pallas_src>

<mosaic_0001>
module attributes {stable_mosaic.version = 11 : i64} {
  func.func @_conv1_kernel(%arg0: i32, %arg1: memref<1x18x24x128xbf16, #tpu.memory_space<vmem>>, %arg2: memref<9x128x128xbf16, #tpu.memory_space<vmem>>, %arg3: memref<1x256x128xbf16, #tpu.memory_space<vmem>>, %arg4: memref<1x2x128xf32, #tpu.memory_space<vmem>>) attributes {dimension_semantics = [#tpu.dimension_semantics<parallel>], iteration_bounds = array<i64: 2>, scalar_prefetch = 0 : i64, scratch_operands = 0 : i64, tpu.core_type = #tpu.core_type<tc>, window_params = [{transform_indices = @transform_0, window_bounds = array<i64: 1, 18, 24, 128>}, {pipeline_mode = #tpu.pipeline_mode<synchronous>, transform_indices = @transform_1, window_bounds = array<i64: 9, 128, 128>}, {transform_indices = @transform_2, window_bounds = array<i64: 1, 256, 128>}, {transform_indices = @transform_3, window_bounds = array<i64: 1, 2, 128>}]} {
    %c0 = arith.constant 0 : index
    %c0_0 = arith.constant 0 : index
    %c0_1 = arith.constant 0 : index
    %c0_2 = arith.constant 0 : index
    %0 = vector.load %arg1[%c0, %c0_0, %c0_1, %c0_2] : memref<1x18x24x128xbf16, #tpu.memory_space<vmem>>, vector<1x16x16x128xbf16>
    %1 = vector.shape_cast %0 : vector<1x16x16x128xbf16> to vector<16x16x128xbf16>
    %2 = vector.shape_cast %1 : vector<16x16x128xbf16> to vector<256x128xbf16>
    %c0_3 = arith.constant 0 : index
    %c0_4 = arith.constant 0 : index
    %c0_5 = arith.constant 0 : index
    %3 = vector.load %arg2[%c0_3, %c0_4, %c0_5] : memref<9x128x128xbf16, #tpu.memory_space<vmem>>, vector<1x128x128xbf16>
    %4 = vector.shape_cast %3 : vector<1x128x128xbf16> to vector<128x128xbf16>
    %cst = arith.constant dense<0.000000e+00> : vector<256x128xf32>
    %5 = tpu.matmul %2, %4, %cst {dimension_numbers = #tpu.dot_dimension_numbers<[1], [0], [0], [1], [0, 0, 1, 1], [], []>} : vector<256x128xbf16>, vector<128x128xbf16>, vector<256x128xf32> -> vector<256x128xf32>
    %c0_6 = arith.constant 0 : index
    %c0_7 = arith.constant 0 : index
    %c1 = arith.constant 1 : index
    %c0_8 = arith.constant 0 : index
    %6 = vector.load %arg1[%c0_6, %c0_7, %c1, %c0_8] : memref<1x18x24x128xbf16, #tpu.memory_space<vmem>>, vector<1x16x16x128xbf16>
    %7 = vector.shape_cast %6 : vector<1x16x16x128xbf16> to vector<16x16x128xbf16>
    %8 = vector.shape_cast %7 : vector<16x16x128xbf16> to vector<256x128xbf16>
    %c1_9 = arith.constant 1 : index
    %c0_10 = arith.constant 0 : index
    %c0_11 = arith.constant 0 : index
    %9 = vector.load %arg2[%c1_9, %c0_10, %c0_11] : memref<9x128x128xbf16, #tpu.memory_space<vmem>>, vector<1x128x128xbf16>
    %10 = vector.shape_cast %9 : vector<1x128x128xbf16> to vector<128x128xbf16>
    %cst_12 = arith.constant dense<0.000000e+00> : vector<256x128xf32>
    %11 = tpu.matmul %8, %10, %cst_12 {dimension_numbers = #tpu.dot_dimension_numbers<[1], [0], [0], [1], [0, 0, 1, 1], [], []>} : vector<256x128xbf16>, vector<128x128xbf16>, vector<256x128xf32> -> vector<256x128xf32>
    %12 = arith.addf %5, %11 : vector<256x128xf32>
    %c0_13 = arith.constant 0 : index
    %c0_14 = arith.constant 0 : index
    %c2 = arith.constant 2 : index
    %c0_15 = arith.constant 0 : index
    %13 = vector.load %arg1[%c0_13, %c0_14, %c2, %c0_15] : memref<1x18x24x128xbf16, #tpu.memory_space<vmem>>, vector<1x16x16x128xbf16>
    %14 = vector.shape_cast %13 : vector<1x16x16x128xbf16> to vector<16x16x128xbf16>
    %15 = vector.shape_cast %14 : vector<16x16x128xbf16> to vector<256x128xbf16>
    %c2_16 = arith.constant 2 : index
    %c0_17 = arith.constant 0 : index
    %c0_18 = arith.constant 0 : index
    %16 = vector.load %arg2[%c2_16, %c0_17, %c0_18] : memref<9x128x128xbf16, #tpu.memory_space<vmem>>, vector<1x128x128xbf16>
    %17 = vector.shape_cast %16 : vector<1x128x128xbf16> to vector<128x128xbf16>
    %cst_19 = arith.constant dense<0.000000e+00> : vector<256x128xf32>
    %18 = tpu.matmul %15, %17, %cst_19 {dimension_numbers = #tpu.dot_dimension_numbers<[1], [0], [0], [1], [0, 0, 1, 1], [], []>} : vector<256x128xbf16>, vector<128x128xbf16>, vector<256x128xf32> -> vector<256x128xf32>
    %19 = arith.addf %12, %18 : vector<256x128xf32>
    %c0_20 = arith.constant 0 : index
    %c1_21 = arith.constant 1 : index
    %c0_22 = arith.constant 0 : index
    %c0_23 = arith.constant 0 : index
    %20 = vector.load %arg1[%c0_20, %c1_21, %c0_22, %c0_23] : memref<1x18x24x128xbf16, #tpu.memory_space<vmem>>, vector<1x16x16x128xbf16>
    %21 = vector.shape_cast %20 : vector<1x16x16x128xbf16> to vector<16x16x128xbf16>
    %22 = vector.shape_cast %21 : vector<16x16x128xbf16> to vector<256x128xbf16>
    %c3 = arith.constant 3 : index
    %c0_24 = arith.constant 0 : index
    %c0_25 = arith.constant 0 : index
    %23 = vector.load %arg2[%c3, %c0_24, %c0_25] : memref<9x128x128xbf16, #tpu.memory_space<vmem>>, vector<1x128x128xbf16>
    %24 = vector.shape_cast %23 : vector<1x128x128xbf16> to vector<128x128xbf16>
    %cst_26 = arith.constant dense<0.000000e+00> : vector<256x128xf32>
    %25 = tpu.matmul %22, %24, %cst_26 {dimension_numbers = #tpu.dot_dimension_numbers<[1], [0], [0], [1], [0, 0, 1, 1], [], []>} : vector<256x128xbf16>, vector<128x128xbf16>, vector<256x128xf32> -> vector<256x128xf32>
    %26 = arith.addf %19, %25 : vector<256x128xf32>
    %c0_27 = arith.constant 0 : index
    %c1_28 = arith.constant 1 : index
    %c1_29 = arith.constant 1 : index
    %c0_30 = arith.constant 0 : index
    %27 = vector.load %arg1[%c0_27, %c1_28, %c1_29, %c0_30] : memref<1x18x24x128xbf16, #tpu.memory_space<vmem>>, vector<1x16x16x128xbf16>
    %28 = vector.shape_cast %27 : vector<1x16x16x128xbf16> to vector<16x16x128xbf16>
    %29 = vector.shape_cast %28 : vector<16x16x128xbf16> to vector<256x128xbf16>
    %c4 = arith.constant 4 : index
    %c0_31 = arith.constant 0 : index
    %c0_32 = arith.constant 0 : index
    %30 = vector.load %arg2[%c4, %c0_31, %c0_32] : memref<9x128x128xbf16, #tpu.memory_space<vmem>>, vector<1x128x128xbf16>
    %31 = vector.shape_cast %30 : vector<1x128x128xbf16> to vector<128x128xbf16>
    %cst_33 = arith.constant dense<0.000000e+00> : vector<256x128xf32>
    %32 = tpu.matmul %29, %31, %cst_33 {dimension_numbers = #tpu.dot_dimension_numbers<[1], [0], [0], [1], [0, 0, 1, 1], [], []>} : vector<256x128xbf16>, vector<128x128xbf16>, vector<256x128xf32> -> vector<256x128xf32>
    %33 = arith.addf %26, %32 : vector<256x128xf32>
    %c0_34 = arith.constant 0 : index
    %c1_35 = arith.constant 1 : index
    %c2_36 = arith.constant 2 : index
    %c0_37 = arith.constant 0 : index
    %34 = vector.load %arg1[%c0_34, %c1_35, %c2_36, %c0_37] : memref<1x18x24x128xbf16, #tpu.memory_space<vmem>>, vector<1x16x16x128xbf16>
    %35 = vector.shape_cast %34 : vector<1x16x16x128xbf16> to vector<16x16x128xbf16>
    %36 = vector.shape_cast %35 : vector<16x16x128xbf16> to vector<256x128xbf16>
    %c5 = arith.constant 5 : index
    %c0_38 = arith.constant 0 : index
    %c0_39 = arith.constant 0 : index
    %37 = vector.load %arg2[%c5, %c0_38, %c0_39] : memref<9x128x128xbf16, #tpu.memory_space<vmem>>, vector<1x128x128xbf16>
    %38 = vector.shape_cast %37 : vector<1x128x128xbf16> to vector<128x128xbf16>
    %cst_40 = arith.constant dense<0.000000e+00> : vector<256x128xf32>
    %39 = tpu.matmul %36, %38, %cst_40 {dimension_numbers = #tpu.dot_dimension_numbers<[1], [0], [0], [1], [0, 0, 1, 1], [], []>} : vector<256x128xbf16>, vector<128x128xbf16>, vector<256x128xf32> -> vector<256x128xf32>
    %40 = arith.addf %33, %39 : vector<256x128xf32>
    %c0_41 = arith.constant 0 : index
    %c2_42 = arith.constant 2 : index
    %c0_43 = arith.constant 0 : index
    %c0_44 = arith.constant 0 : index
    %41 = vector.load %arg1[%c0_41, %c2_42, %c0_43, %c0_44] : memref<1x18x24x128xbf16, #tpu.memory_space<vmem>>, vector<1x16x16x128xbf16>
    %42 = vector.shape_cast %41 : vector<1x16x16x128xbf16> to vector<16x16x128xbf16>
    %43 = vector.shape_cast %42 : vector<16x16x128xbf16> to vector<256x128xbf16>
    %c6 = arith.constant 6 : index
    %c0_45 = arith.constant 0 : index
    %c0_46 = arith.constant 0 : index
    %44 = vector.load %arg2[%c6, %c0_45, %c0_46] : memref<9x128x128xbf16, #tpu.memory_space<vmem>>, vector<1x128x128xbf16>
    %45 = vector.shape_cast %44 : vector<1x128x128xbf16> to vector<128x128xbf16>
    %cst_47 = arith.constant dense<0.000000e+00> : vector<256x128xf32>
    %46 = tpu.matmul %43, %45, %cst_47 {dimension_numbers = #tpu.dot_dimension_numbers<[1], [0], [0], [1], [0, 0, 1, 1], [], []>} : vector<256x128xbf16>, vector<128x128xbf16>, vector<256x128xf32> -> vector<256x128xf32>
    %47 = arith.addf %40, %46 : vector<256x128xf32>
    %c0_48 = arith.constant 0 : index
    %c2_49 = arith.constant 2 : index
    %c1_50 = arith.constant 1 : index
    %c0_51 = arith.constant 0 : index
    %48 = vector.load %arg1[%c0_48, %c2_49, %c1_50, %c0_51] : memref<1x18x24x128xbf16, #tpu.memory_space<vmem>>, vector<1x16x16x128xbf16>
    %49 = vector.shape_cast %48 : vector<1x16x16x128xbf16> to vector<16x16x128xbf16>
    %50 = vector.shape_cast %49 : vector<16x16x128xbf16> to vector<256x128xbf16>
    %c7 = arith.constant 7 : index
    %c0_52 = arith.constant 0 : index
    %c0_53 = arith.constant 0 : index
    %51 = vector.load %arg2[%c7, %c0_52, %c0_53] : memref<9x128x128xbf16, #tpu.memory_space<vmem>>, vector<1x128x128xbf16>
    %52 = vector.shape_cast %51 : vector<1x128x128xbf16> to vector<128x128xbf16>
    %cst_54 = arith.constant dense<0.000000e+00> : vector<256x128xf32>
    %53 = tpu.matmul %50, %52, %cst_54 {dimension_numbers = #tpu.dot_dimension_numbers<[1], [0], [0], [1], [0, 0, 1, 1], [], []>} : vector<256x128xbf16>, vector<128x128xbf16>, vector<256x128xf32> -> vector<256x128xf32>
    %54 = arith.addf %47, %53 : vector<256x128xf32>
    %c0_55 = arith.constant 0 : index
    %c2_56 = arith.constant 2 : index
    %c2_57 = arith.constant 2 : index
    %c0_58 = arith.constant 0 : index
    %55 = vector.load %arg1[%c0_55, %c2_56, %c2_57, %c0_58] : memref<1x18x24x128xbf16, #tpu.memory_space<vmem>>, vector<1x16x16x128xbf16>
    %56 = vector.shape_cast %55 : vector<1x16x16x128xbf16> to vector<16x16x128xbf16>
    %57 = vector.shape_cast %56 : vector<16x16x128xbf16> to vector<256x128xbf16>
    %c8 = arith.constant 8 : index
    %c0_59 = arith.constant 0 : index
    %c0_60 = arith.constant 0 : index
    %58 = vector.load %arg2[%c8, %c0_59, %c0_60] : memref<9x128x128xbf16, #tpu.memory_space<vmem>>, vector<1x128x128xbf16>
    %59 = vector.shape_cast %58 : vector<1x128x128xbf16> to vector<128x128xbf16>
    %cst_61 = arith.constant dense<0.000000e+00> : vector<256x128xf32>
    %60 = tpu.matmul %57, %59, %cst_61 {dimension_numbers = #tpu.dot_dimension_numbers<[1], [0], [0], [1], [0, 0, 1, 1], [], []>} : vector<256x128xbf16>, vector<128x128xbf16>, vector<256x128xf32> -> vector<256x128xf32>
    %61 = arith.addf %54, %60 : vector<256x128xf32>
    %62 = arith.truncf %61 : vector<256x128xf32> to vector<256x128xbf16>
    %c0_62 = arith.constant 0 : index
    %c0_63 = arith.constant 0 : index
    %c0_64 = arith.constant 0 : index
    %63 = vector.load %arg3[%c0_62, %c0_63, %c0_64] : memref<1x256x128xbf16, #tpu.memory_space<vmem>>, vector<1x256x128xbf16>
    %64 = vector.shape_cast %63 : vector<1x256x128xbf16> to vector<256x128xbf16>
    %65 = vector.shape_cast %62 : vector<256x128xbf16> to vector<1x256x128xbf16>
    tpu.vector_store %arg3[%c0_62, %c0_63, %c0_64], %65 {strides = array<i32>} : memref<1x256x128xbf16, #tpu.memory_space<vmem>>, vector<1x256x128xbf16>,
    %cst_65 = arith.constant dense<0.000000e+00> : vector<128xf32>
    %66 = vector.multi_reduction <add>, %61, %cst_65 [0] : vector<256x128xf32> to vector<128xf32>
    %67 = vector.shape_cast %66 : vector<128xf32> to vector<1x128xf32>
    %c0_66 = arith.constant 0 : index
    %c0_67 = arith.constant 0 : index
    %c0_68 = arith.constant 0 : index
    %68 = vector.load %arg4[%c0_66, %c0_67, %c0_68] : memref<1x2x128xf32, #tpu.memory_space<vmem>>, vector<1x1x128xf32>
    %69 = vector.shape_cast %68 : vector<1x1x128xf32> to vector<1x128xf32>
    %70 = vector.shape_cast %67 : vector<1x128xf32> to vector<1x1x128xf32>
    tpu.vector_store %arg4[%c0_66, %c0_67, %c0_68], %70 {strides = array<i32>} : memref<1x2x128xf32, #tpu.memory_space<vmem>>, vector<1x1x128xf32>,
    %71 = arith.mulf %61, %61 : vector<256x128xf32>
    %cst_69 = arith.constant dense<0.000000e+00> : vector<128xf32>
    %72 = vector.multi_reduction <add>, %71, %cst_69 [0] : vector<256x128xf32> to vector<128xf32>
    %73 = vector.shape_cast %72 : vector<128xf32> to vector<1x128xf32>
    %c0_70 = arith.constant 0 : index
    %c1_71 = arith.constant 1 : index
    %c0_72 = arith.constant 0 : index
    %74 = vector.load %arg4[%c0_70, %c1_71, %c0_72] : memref<1x2x128xf32, #tpu.memory_space<vmem>>, vector<1x1x128xf32>
    %75 = vector.shape_cast %74 : vector<1x1x128xf32> to vector<1x128xf32>
    %76 = vector.shape_cast %73 : vector<1x128xf32> to vector<1x1x128xf32>
    tpu.vector_store %arg4[%c0_70, %c1_71, %c0_72], %76 {strides = array<i32>} : memref<1x2x128xf32, #tpu.memory_space<vmem>>, vector<1x1x128xf32>,
    return
  }
  func.func @transform_0(%arg0: i32) -> (i32, i32, i32, i32) {
    %c0_i32 = arith.constant 0 : i32
    %c0_i32_0 = arith.constant 0 : i32
    %c0_i32_1 = arith.constant 0 : i32
    %c0_i32_2 = arith.constant 0 : i32
    return %arg0, %c0_i32, %c0_i32_0, %c0_i32_1 : i32, i32, i32, i32
  }
  func.func @transform_1(%arg0: i32) -> (i32, i32, i32) {
    %c0_i32 = arith.constant 0 : i32
    %c0_i32_0 = arith.constant 0 : i32
    %c0_i32_1 = arith.constant 0 : i32
    %c0_i32_2 = arith.constant 0 : i32
    return %c0_i32, %c0_i32_0, %c0_i32_1 : i32, i32, i32
  }
  func.func @transform_2(%arg0: i32) -> (i32, i32, i32) {
    %c0_i32 = arith.constant 0 : i32
    %c0_i32_0 = arith.constant 0 : i32
    %c0_i32_1 = arith.constant 0 : i32
    return %arg0, %c0_i32, %c0_i32_0 : i32, i32, i32
  }
  func.func @transform_3(%arg0: i32) -> (i32, i32, i32) {
    %c0_i32 = arith.constant 0 : i32
    %c0_i32_0 = arith.constant 0 : i32
    %c0_i32_1 = arith.constant 0 : i32
    return %arg0, %c0_i32, %c0_i32_0 : i32, i32, i32
  }
}

module attributes {stable_mosaic.version = 11 : i64} {
  func.func @_bn_add_relu_kernel(%arg0: i32, %arg1: memref<1x256x128xbf16, #tpu.memory_space<vmem>>, %arg2: memref<1x256x128xf32, #tpu.memory_space<vmem>>, %arg3: memref<1x128xf32, #tpu.memory_space<vmem>>, %arg4: memref<1x128xf32, #tpu.memory_space<vmem>>, %arg5: memref<1x256x128xf32, #tpu.memory_space<vmem>>) attributes {dimension_semantics = [#tpu.dimension_semantics<parallel>], iteration_bounds = array<i64: 2>, scalar_prefetch = 0 : i64, scratch_operands = 0 : i64, tpu.core_type = #tpu.core_type<tc>, window_params = [{transform_indices = @transform_0, window_bounds = array<i64: 1, 256, 128>}, {transform_indices = @transform_1, window_bounds = array<i64: 1, 256, 128>}, {pipeline_mode = #tpu.pipeline_mode<synchronous>, transform_indices = @transform_2, window_bounds = array<i64: 1, 128>}, {pipeline_mode = #tpu.pipeline_mode<synchronous>, transform_indices = @transform_3, window_bounds = array<i64: 1, 128>}, {transform_indices = @transform_4, window_bounds = array<i64: 1, 256, 128>}]} {
    %c0 = arith.constant 0 : index
    %c0_0 = arith.constant 0 : index
    %c0_1 = arith.constant 0 : index
    %0 = vector.load %arg1[%c0, %c0_0, %c0_1] : memref<1x256x128xbf16, #tpu.memory_space<vmem>>, vector<1x256x128xbf16>
    %1 = vector.shape_cast %0 : vector<1x256x128xbf16> to vector<256x128xbf16>
    %2 = arith.extf %1 : vector<256x128xbf16> to vector<256x128xf32>
    %c0_2 = arith.constant 0 : index
    %c0_3 = arith.constant 0 : index
    %3 = vector.load %arg3[%c0_2, %c0_3] : memref<1x128xf32, #tpu.memory_space<vmem>>, vector<1x128xf32>
    %4 = vector.broadcast %3 : vector<1x128xf32> to vector<256x128xf32>
    %5 = arith.mulf %2, %4 : vector<256x128xf32>
    %c0_4 = arith.constant 0 : index
    %c0_5 = arith.constant 0 : index
    %6 = vector.load %arg4[%c0_4, %c0_5] : memref<1x128xf32, #tpu.memory_space<vmem>>, vector<1x128xf32>
    %7 = vector.broadcast %6 : vector<1x128xf32> to vector<256x128xf32>
    %8 = arith.addf %5, %7 : vector<256x128xf32>
    %c0_6 = arith.constant 0 : index
    %c0_7 = arith.constant 0 : index
    %c0_8 = arith.constant 0 : index
    %9 = vector.load %arg2[%c0_6, %c0_7, %c0_8] : memref<1x256x128xf32, #tpu.memory_space<vmem>>, vector<1x256x128xf32>
    %10 = vector.shape_cast %9 : vector<1x256x128xf32> to vector<256x128xf32>
    %11 = arith.addf %8, %10 : vector<256x128xf32>
    %cst = arith.constant 0.000000e+00 : f32
    %12 = vector.broadcast %cst : f32 to vector<256x128xf32>
    %13 = arith.maximumf %11, %12 : vector<256x128xf32>
    %c0_9 = arith.constant 0 : index
    %c0_10 = arith.constant 0 : index
    %c0_11 = arith.constant 0 : index
    %14 = vector.load %arg5[%c0_9, %c0_10, %c0_11] : memref<1x256x128xf32, #tpu.memory_space<vmem>>, vector<1x256x128xf32>
    %15 = vector.shape_cast %14 : vector<1x256x128xf32> to vector<256x128xf32>
    %16 = vector.shape_cast %13 : vector<256x128xf32> to vector<1x256x128xf32>
    tpu.vector_store %arg5[%c0_9, %c0_10, %c0_11], %16 {strides = array<i32>} : memref<1x256x128xf32, #tpu.memory_space<vmem>>, vector<1x256x128xf32>,
    return
  }
  func.func @transform_0(%arg0: i32) -> (i32, i32, i32) {
    %c0_i32 = arith.constant 0 : i32
    %c0_i32_0 = arith.constant 0 : i32
    %c0_i32_1 = arith.constant 0 : i32
    return %arg0, %c0_i32, %c0_i32_0 : i32, i32, i32
  }
  func.func @transform_1(%arg0: i32) -> (i32, i32, i32) {
    %c0_i32 = arith.constant 0 : i32
    %c0_i32_0 = arith.constant 0 : i32
    %c0_i32_1 = arith.constant 0 : i32
    return %arg0, %c0_i32, %c0_i32_0 : i32, i32, i32
  }
  func.func @transform_2(%arg0: i32) -> (i32, i32) {
    %c0_i32 = arith.constant 0 : i32
    %c0_i32_0 = arith.constant 0 : i32
    %c0_i32_1 = arith.constant 0 : i32
    return %c0_i32, %c0_i32_0 : i32, i32
  }
  func.func @transform_3(%arg0: i32) -> (i32, i32) {
    %c0_i32 = arith.constant 0 : i32
    %c0_i32_0 = arith.constant 0 : i32
    %c0_i32_1 = arith.constant 0 : i32
    return %c0_i32, %c0_i32_0 : i32, i32
  }
  func.func @transform_4(%arg0: i32) -> (i32, i32, i32) {
    %c0_i32 = arith.constant 0 : i32
    %c0_i32_0 = arith.constant 0 : i32
    %c0_i32_1 = arith.constant 0 : i32
    return %arg0, %c0_i32, %c0_i32_0 : i32, i32, i32
  }
}

module attributes {stable_mosaic.version = 11 : i64} {
  func.func @_bn_relu_conv2_kernel(%arg0: i32, %arg1: memref<1x256x128xbf16, #tpu.memory_space<vmem>>, %arg2: memref<9x128x128xbf16, #tpu.memory_space<vmem>>, %arg3: memref<1x128xf32, #tpu.memory_space<vmem>>, %arg4: memref<1x128xf32, #tpu.memory_space<vmem>>, %arg5: memref<1x256x128xbf16, #tpu.memory_space<vmem>>, %arg6: memref<1x2x128xf32, #tpu.memory_space<vmem>>) attributes {dimension_semantics = [#tpu.dimension_semantics<parallel>], iteration_bounds = array<i64: 2>, scalar_prefetch = 0 : i64, scratch_operands = 0 : i64, tpu.core_type = #tpu.core_type<tc>, window_params = [{transform_indices = @transform_0, window_bounds = array<i64: 1, 256, 128>}, {pipeline_mode = #tpu.pipeline_mode<synchronous>, transform_indices = @transform_1, window_bounds = array<i64: 9, 128, 128>}, {pipeline_mode = #tpu.pipeline_mode<synchronous>, transform_indices = @transform_2, window_bounds = array<i64: 1, 128>}, {pipeline_mode = #tpu.pipeline_mode<synchronous>, transform_indices = @transform_3, window_bounds = array<i64: 1, 128>}, {transform_indices = @transform_4, window_bounds = array<i64: 1, 256, 128>}, {transform_indices = @transform_5, window_bounds = array<i64: 1, 2, 128>}]} {
    %c0 = arith.constant 0 : index
    %c0_0 = arith.constant 0 : index
    %c0_1 = arith.constant 0 : index
    %0 = vector.load %arg1[%c0, %c0_0, %c0_1] : memref<1x256x128xbf16, #tpu.memory_space<vmem>>, vector<1x256x128xbf16>
    %1 = vector.shape_cast %0 : vector<1x256x128xbf16> to vector<256x128xbf16>
    %2 = arith.extf %1 : vector<256x128xbf16> to vector<256x128xf32>
    %c0_2 = arith.constant 0 : index
    %c0_3 = arith.constant 0 : index
    %3 = vector.load %arg3[%c0_2, %c0_3] : memref<1x128xf32, #tpu.memory_space<vmem>>, vector<1x128xf32>
    %4 = vector.broadcast %3 : vector<1x128xf32> to vector<256x128xf32>
    %5 = arith.mulf %2, %4 : vector<256x128xf32>
    %c0_4 = arith.constant 0 : index
    %c0_5 = arith.constant 0 : index
    %6 = vector.load %arg4[%c0_4, %c0_5] : memref<1x128xf32, #tpu.memory_space<vmem>>, vector<1x128xf32>
    %7 = vector.broadcast %6 : vector<1x128xf32> to vector<256x128xf32>
    %8 = arith.addf %5, %7 : vector<256x128xf32>
    %cst = arith.constant 0.000000e+00 : f32
    %9 = vector.broadcast %cst : f32 to vector<256x128xf32>
    %10 = arith.maximumf %8, %9 : vector<256x128xf32>
    %11 = vector.shape_cast %10 : vector<256x128xf32> to vector<16x16x128xf32>
    %12 = arith.truncf %11 : vector<16x16x128xf32> to vector<16x16x128xbf16>
    %cst_6 = arith.constant 0.000000e+00 : bf16
    %13 = vector.broadcast %cst_6 : bf16 to vector<1x16x128xbf16>
    %14 = tpu.concatenate %13, %12, %13 in 0 : vector<1x16x128xbf16>, vector<16x16x128xbf16>, vector<1x16x128xbf16> -> vector<18x16x128xbf16>
    %cst_7 = arith.constant 0.000000e+00 : bf16
    %15 = vector.broadcast %cst_7 : bf16 to vector<18x1x128xbf16>
    %16 = tpu.concatenate %15, %14, %15 in 1 : vector<18x1x128xbf16>, vector<18x16x128xbf16>, vector<18x1x128xbf16> -> vector<18x18x128xbf16>
    %17 = vector.extract_strided_slice %16 {offsets = [0, 0, 0], sizes = [16, 16, 128], strides = [1, 1, 1]} : vector<18x18x128xbf16> to vector<16x16x128xbf16>
    %18 = vector.shape_cast %17 : vector<16x16x128xbf16> to vector<256x128xbf16>
    %c0_8 = arith.constant 0 : index
    %c0_9 = arith.constant 0 : index
    %c0_10 = arith.constant 0 : index
    %19 = vector.load %arg2[%c0_8, %c0_9, %c0_10] : memref<9x128x128xbf16, #tpu.memory_space<vmem>>, vector<1x128x128xbf16>
    %20 = vector.shape_cast %19 : vector<1x128x128xbf16> to vector<128x128xbf16>
    %cst_11 = arith.constant dense<0.000000e+00> : vector<256x128xf32>
    %21 = tpu.matmul %18, %20, %cst_11 {dimension_numbers = #tpu.dot_dimension_numbers<[1], [0], [0], [1], [0, 0, 1, 1], [], []>} : vector<256x128xbf16>, vector<128x128xbf16>, vector<256x128xf32> -> vector<256x128xf32>
    %22 = vector.extract_strided_slice %16 {offsets = [0, 1, 0], sizes = [16, 16, 128], strides = [1, 1, 1]} : vector<18x18x128xbf16> to vector<16x16x128xbf16>
    %23 = vector.shape_cast %22 : vector<16x16x128xbf16> to vector<256x128xbf16>
    %c1 = arith.constant 1 : index
    %c0_12 = arith.constant 0 : index
    %c0_13 = arith.constant 0 : index
    %24 = vector.load %arg2[%c1, %c0_12, %c0_13] : memref<9x128x128xbf16, #tpu.memory_space<vmem>>, vector<1x128x128xbf16>
    %25 = vector.shape_cast %24 : vector<1x128x128xbf16> to vector<128x128xbf16>
    %cst_14 = arith.constant dense<0.000000e+00> : vector<256x128xf32>
    %26 = tpu.matmul %23, %25, %cst_14 {dimension_numbers = #tpu.dot_dimension_numbers<[1], [0], [0], [1], [0, 0, 1, 1], [], []>} : vector<256x128xbf16>, vector<128x128xbf16>, vector<256x128xf32> -> vector<256x128xf32>
    %27 = arith.addf %21, %26 : vector<256x128xf32>
    %28 = vector.extract_strided_slice %16 {offsets = [0, 2, 0], sizes = [16, 16, 128], strides = [1, 1, 1]} : vector<18x18x128xbf16> to vector<16x16x128xbf16>
    %29 = vector.shape_cast %28 : vector<16x16x128xbf16> to vector<256x128xbf16>
    %c2 = arith.constant 2 : index
    %c0_15 = arith.constant 0 : index
    %c0_16 = arith.constant 0 : index
    %30 = vector.load %arg2[%c2, %c0_15, %c0_16] : memref<9x128x128xbf16, #tpu.memory_space<vmem>>, vector<1x128x128xbf16>
    %31 = vector.shape_cast %30 : vector<1x128x128xbf16> to vector<128x128xbf16>
    %cst_17 = arith.constant dense<0.000000e+00> : vector<256x128xf32>
    %32 = tpu.matmul %29, %31, %cst_17 {dimension_numbers = #tpu.dot_dimension_numbers<[1], [0], [0], [1], [0, 0, 1, 1], [], []>} : vector<256x128xbf16>, vector<128x128xbf16>, vector<256x128xf32> -> vector<256x128xf32>
    %33 = arith.addf %27, %32 : vector<256x128xf32>
    %34 = vector.extract_strided_slice %16 {offsets = [1, 0, 0], sizes = [16, 16, 128], strides = [1, 1, 1]} : vector<18x18x128xbf16> to vector<16x16x128xbf16>
    %35 = vector.shape_cast %34 : vector<16x16x128xbf16> to vector<256x128xbf16>
    %c3 = arith.constant 3 : index
    %c0_18 = arith.constant 0 : index
    %c0_19 = arith.constant 0 : index
    %36 = vector.load %arg2[%c3, %c0_18, %c0_19] : memref<9x128x128xbf16, #tpu.memory_space<vmem>>, vector<1x128x128xbf16>
    %37 = vector.shape_cast %36 : vector<1x128x128xbf16> to vector<128x128xbf16>
    %cst_20 = arith.constant dense<0.000000e+00> : vector<256x128xf32>
    %38 = tpu.matmul %35, %37, %cst_20 {dimension_numbers = #tpu.dot_dimension_numbers<[1], [0], [0], [1], [0, 0, 1, 1], [], []>} : vector<256x128xbf16>, vector<128x128xbf16>, vector<256x128xf32> -> vector<256x128xf32>
    %39 = arith.addf %33, %38 : vector<256x128xf32>
    %40 = vector.extract_strided_slice %16 {offsets = [1, 1, 0], sizes = [16, 16, 128], strides = [1, 1, 1]} : vector<18x18x128xbf16> to vector<16x16x128xbf16>
    %41 = vector.shape_cast %40 : vector<16x16x128xbf16> to vector<256x128xbf16>
    %c4 = arith.constant 4 : index
    %c0_21 = arith.constant 0 : index
    %c0_22 = arith.constant 0 : index
    %42 = vector.load %arg2[%c4, %c0_21, %c0_22] : memref<9x128x128xbf16, #tpu.memory_space<vmem>>, vector<1x128x128xbf16>
    %43 = vector.shape_cast %42 : vector<1x128x128xbf16> to vector<128x128xbf16>
    %cst_23 = arith.constant dense<0.000000e+00> : vector<256x128xf32>
    %44 = tpu.matmul %41, %43, %cst_23 {dimension_numbers = #tpu.dot_dimension_numbers<[1], [0], [0], [1], [0, 0, 1, 1], [], []>} : vector<256x128xbf16>, vector<128x128xbf16>, vector<256x128xf32> -> vector<256x128xf32>
    %45 = arith.addf %39, %44 : vector<256x128xf32>
    %46 = vector.extract_strided_slice %16 {offsets = [1, 2, 0], sizes = [16, 16, 128], strides = [1, 1, 1]} : vector<18x18x128xbf16> to vector<16x16x128xbf16>
    %47 = vector.shape_cast %46 : vector<16x16x128xbf16> to vector<256x128xbf16>
    %c5 = arith.constant 5 : index
    %c0_24 = arith.constant 0 : index
    %c0_25 = arith.constant 0 : index
    %48 = vector.load %arg2[%c5, %c0_24, %c0_25] : memref<9x128x128xbf16, #tpu.memory_space<vmem>>, vector<1x128x128xbf16>
    %49 = vector.shape_cast %48 : vector<1x128x128xbf16> to vector<128x128xbf16>
    %cst_26 = arith.constant dense<0.000000e+00> : vector<256x128xf32>
    %50 = tpu.matmul %47, %49, %cst_26 {dimension_numbers = #tpu.dot_dimension_numbers<[1], [0], [0], [1], [0, 0, 1, 1], [], []>} : vector<256x128xbf16>, vector<128x128xbf16>, vector<256x128xf32> -> vector<256x128xf32>
    %51 = arith.addf %45, %50 : vector<256x128xf32>
    %52 = vector.extract_strided_slice %16 {offsets = [2, 0, 0], sizes = [16, 16, 128], strides = [1, 1, 1]} : vector<18x18x128xbf16> to vector<16x16x128xbf16>
    %53 = vector.shape_cast %52 : vector<16x16x128xbf16> to vector<256x128xbf16>
    %c6 = arith.constant 6 : index
    %c0_27 = arith.constant 0 : index
    %c0_28 = arith.constant 0 : index
    %54 = vector.load %arg2[%c6, %c0_27, %c0_28] : memref<9x128x128xbf16, #tpu.memory_space<vmem>>, vector<1x128x128xbf16>
    %55 = vector.shape_cast %54 : vector<1x128x128xbf16> to vector<128x128xbf16>
    %cst_29 = arith.constant dense<0.000000e+00> : vector<256x128xf32>
    %56 = tpu.matmul %53, %55, %cst_29 {dimension_numbers = #tpu.dot_dimension_numbers<[1], [0], [0], [1], [0, 0, 1, 1], [], []>} : vector<256x128xbf16>, vector<128x128xbf16>, vector<256x128xf32> -> vector<256x128xf32>
    %57 = arith.addf %51, %56 : vector<256x128xf32>
    %58 = vector.extract_strided_slice %16 {offsets = [2, 1, 0], sizes = [16, 16, 128], strides = [1, 1, 1]} : vector<18x18x128xbf16> to vector<16x16x128xbf16>
    %59 = vector.shape_cast %58 : vector<16x16x128xbf16> to vector<256x128xbf16>
    %c7 = arith.constant 7 : index
    %c0_30 = arith.constant 0 : index
    %c0_31 = arith.constant 0 : index
    %60 = vector.load %arg2[%c7, %c0_30, %c0_31] : memref<9x128x128xbf16, #tpu.memory_space<vmem>>, vector<1x128x128xbf16>
    %61 = vector.shape_cast %60 : vector<1x128x128xbf16> to vector<128x128xbf16>
    %cst_32 = arith.constant dense<0.000000e+00> : vector<256x128xf32>
    %62 = tpu.matmul %59, %61, %cst_32 {dimension_numbers = #tpu.dot_dimension_numbers<[1], [0], [0], [1], [0, 0, 1, 1], [], []>} : vector<256x128xbf16>, vector<128x128xbf16>, vector<256x128xf32> -> vector<256x128xf32>
    %63 = arith.addf %57, %62 : vector<256x128xf32>
    %64 = vector.extract_strided_slice %16 {offsets = [2, 2, 0], sizes = [16, 16, 128], strides = [1, 1, 1]} : vector<18x18x128xbf16> to vector<16x16x128xbf16>
    %65 = vector.shape_cast %64 : vector<16x16x128xbf16> to vector<256x128xbf16>
    %c8 = arith.constant 8 : index
    %c0_33 = arith.constant 0 : index
    %c0_34 = arith.constant 0 : index
    %66 = vector.load %arg2[%c8, %c0_33, %c0_34] : memref<9x128x128xbf16, #tpu.memory_space<vmem>>, vector<1x128x128xbf16>
    %67 = vector.shape_cast %66 : vector<1x128x128xbf16> to vector<128x128xbf16>
    %cst_35 = arith.constant dense<0.000000e+00> : vector<256x128xf32>
    %68 = tpu.matmul %65, %67, %cst_35 {dimension_numbers = #tpu.dot_dimension_numbers<[1], [0], [0], [1], [0, 0, 1, 1], [], []>} : vector<256x128xbf16>, vector<128x128xbf16>, vector<256x128xf32> -> vector<256x128xf32>
    %69 = arith.addf %63, %68 : vector<256x128xf32>
    %70 = arith.truncf %69 : vector<256x128xf32> to vector<256x128xbf16>
    %c0_36 = arith.constant 0 : index
    %c0_37 = arith.constant 0 : index
    %c0_38 = arith.constant 0 : index
    %71 = vector.load %arg5[%c0_36, %c0_37, %c0_38] : memref<1x256x128xbf16, #tpu.memory_space<vmem>>, vector<1x256x128xbf16>
    %72 = vector.shape_cast %71 : vector<1x256x128xbf16> to vector<256x128xbf16>
    %73 = vector.shape_cast %70 : vector<256x128xbf16> to vector<1x256x128xbf16>
    tpu.vector_store %arg5[%c0_36, %c0_37, %c0_38], %73 {strides = array<i32>} : memref<1x256x128xbf16, #tpu.memory_space<vmem>>, vector<1x256x128xbf16>,
    %cst_39 = arith.constant dense<0.000000e+00> : vector<128xf32>
    %74 = vector.multi_reduction <add>, %69, %cst_39 [0] : vector<256x128xf32> to vector<128xf32>
    %75 = vector.shape_cast %74 : vector<128xf32> to vector<1x128xf32>
    %c0_40 = arith.constant 0 : index
    %c0_41 = arith.constant 0 : index
    %c0_42 = arith.constant 0 : index
    %76 = vector.load %arg6[%c0_40, %c0_41, %c0_42] : memref<1x2x128xf32, #tpu.memory_space<vmem>>, vector<1x1x128xf32>
    %77 = vector.shape_cast %76 : vector<1x1x128xf32> to vector<1x128xf32>
    %78 = vector.shape_cast %75 : vector<1x128xf32> to vector<1x1x128xf32>
    tpu.vector_store %arg6[%c0_40, %c0_41, %c0_42], %78 {strides = array<i32>} : memref<1x2x128xf32, #tpu.memory_space<vmem>>, vector<1x1x128xf32>,
    %79 = arith.mulf %69, %69 : vector<256x128xf32>
    %cst_43 = arith.constant dense<0.000000e+00> : vector<128xf32>
    %80 = vector.multi_reduction <add>, %79, %cst_43 [0] : vector<256x128xf32> to vector<128xf32>
    %81 = vector.shape_cast %80 : vector<128xf32> to vector<1x128xf32>
    %c0_44 = arith.constant 0 : index
    %c1_45 = arith.constant 1 : index
    %c0_46 = arith.constant 0 : index
    %82 = vector.load %arg6[%c0_44, %c1_45, %c0_46] : memref<1x2x128xf32, #tpu.memory_space<vmem>>, vector<1x1x128xf32>
    %83 = vector.shape_cast %82 : vector<1x1x128xf32> to vector<1x128xf32>
    %84 = vector.shape_cast %81 : vector<1x128xf32> to vector<1x1x128xf32>
    tpu.vector_store %arg6[%c0_44, %c1_45, %c0_46], %84 {strides = array<i32>} : memref<1x2x128xf32, #tpu.memory_space<vmem>>, vector<1x1x128xf32>,
    return
  }
  func.func @transform_0(%arg0: i32) -> (i32, i32, i32) {
    %c0_i32 = arith.constant 0 : i32
    %c0_i32_0 = arith.constant 0 : i32
    %c0_i32_1 = arith.constant 0 : i32
    return %arg0, %c0_i32, %c0_i32_0 : i32, i32, i32
  }
  func.func @transform_1(%arg0: i32) -> (i32, i32, i32) {
    %c0_i32 = arith.constant 0 : i32
    %c0_i32_0 = arith.constant 0 : i32
    %c0_i32_1 = arith.constant 0 : i32
    %c0_i32_2 = arith.constant 0 : i32
    return %c0_i32, %c0_i32_0, %c0_i32_1 : i32, i32, i32
  }
  func.func @transform_2(%arg0: i32) -> (i32, i32) {
    %c0_i32 = arith.constant 0 : i32
    %c0_i32_0 = arith.constant 0 : i32
    %c0_i32_1 = arith.constant 0 : i32
    return %c0_i32, %c0_i32_0 : i32, i32
  }
  func.func @transform_3(%arg0: i32) -> (i32, i32) {
    %c0_i32 = arith.constant 0 : i32
    %c0_i32_0 = arith.constant 0 : i32
    %c0_i32_1 = arith.constant 0 : i32
    return %c0_i32, %c0_i32_0 : i32, i32
  }
  func.func @transform_4(%arg0: i32) -> (i32, i32, i32) {
    %c0_i32 = arith.constant 0 : i32
    %c0_i32_0 = arith.constant 0 : i32
    %c0_i32_1 = arith.constant 0 : i32
    return %arg0, %c0_i32, %c0_i32_0 : i32, i32, i32
  }
  func.func @transform_5(%arg0: i32) -> (i32, i32, i32) {
    %c0_i32 = arith.constant 0 : i32
    %c0_i32_0 = arith.constant 0 : i32
    %c0_i32_1 = arith.constant 0 : i32
    return %arg0, %c0_i32, %c0_i32_0 : i32, i32, i32
  }
}

</mosaic_0001>

<llo_original>
// kernel: basic_block_forward.5
$region0: #{basic_block_forward.5}
  #allocation0 [shape = 'u32[]', space=smem, size = 0x4, offset = 0x4, fixed_abs, tag = 'smem constant byte address 0x4 - core index']
  #allocation1 [shape = 'u32[144,128]{1,0:T(1,128)}', space=vmem, size = 0x12000, scoped, tag = 'internal scratch']
  %s0 = inlined_call_operand.vmem [shape: bf16[2,256,128], index: 0, kind: input, shape index: {}]
  %s1 = inlined_call_operand.vmem [shape: f32[2,256,128], index: 1, kind: input, shape index: {}]
  %s2 = inlined_call_operand.vmem [shape: f32[1,128], index: 2, kind: input, shape index: {}]
  %s3 = inlined_call_operand.vmem [shape: f32[1,128], index: 3, kind: input, shape index: {}]
  %s4 = inlined_call_operand.vmem [shape: f32[2,256,128], index: 4, kind: output, shape index: {}]
  %s5 = sld [smem:[#allocation0]]
  $region49: #{basic_block_forward.5} parent=0
    _
  %s7 = ssub.s32 1, %s5
  %s8 = scalar_select 0, %s7, %s5
  loop: start=0, step=1, limit=4
  $region2: #{basic_block_forward.5} parent=0 // loop_pre_header
    _
  $region3: #{basic_block_forward.5} parent=0 // loop_header
    %s10 = sphi 0, %s14
    %p11 = scmp.ge.s32.totalorder %s10, 4
    %s20 = sphi 0, %s22
    %s23 = sphi 0, %s20
    %s24 = sphi 0, %s23
    %s40 = sphi 0, %s24
    %s46 = sphi 0, %s48
    %s49 = sphi 0, %s46
    %s50 = sphi 0, %s49
    %s66 = sphi 0, %s50
    %s70 = sphi 0, %s70
    %s72 = sphi 0, %s70
    %s73 = sphi 0, %s72
    %s87 = sphi 0, %s73
    %s91 = sphi 0, %s91
    %s93 = sphi 0, %s91
    %s94 = sphi 0, %s93
    %s108 = sphi 0, %s94
    %s114 = sphi 0, %s116
    %s117 = sphi 0, %s114
    %s118 = sphi 0, %s117
    %s134 = sphi 0, %s118
  $region4: #{basic_block_forward.5} parent=0 // loop_header_branch
    %13 = sbr.rel (%p11) target = $region8
  $region5: #{basic_block_forward.5} parent=0 // loop_body
    %s15 = ssub.s32 %s10, 1
    %s16 = ssub.s32 %s10, 2
    %s17 = sadd.s32 %s10, 1
    %s18 = ssub.s32 %s10, %s17
    %p19 = scmp.eq.s32.totalorder %s18, 0
    %s21 = sadd.s32 %s20, 1
    %s22 = scalar_select %p19, %s20, %s21
    %p25 = pneg %p19
    %p26 = scmp.eq.s32.totalorder %s10, 1
    %p27 = por %p25, %p26
    %p28 = scmp.ne.s32.totalorder %s20, %s23
    %p29 = scmp.eq.s32.totalorder %s10, 0
    %p30 = por %p28, %p29
    %p31 = scmp.ne.s32.totalorder %s20, %s23
    %p32 = scmp.eq.s32.totalorder %s15, 1
    %p33 = por %p31, %p32
    %p34 = scmp.ne.s32.totalorder %s23, %s24
    %p35 = scmp.eq.s32.totalorder %s15, 0
    %p36 = por %p34, %p35
    %p37 = scmp.ne.s32.totalorder %s23, %s24
    %p38 = scmp.eq.s32.totalorder %s16, 1
    %p39 = por %p37, %p38
    %p41 = scmp.ne.s32.totalorder %s24, %s40
    %p42 = scmp.eq.s32.totalorder %s16, 0
    %p43 = por %p41, %p42
    %s44 = ssub.s32 %s10, %s17
    %p45 = scmp.eq.s32.totalorder %s44, 0
    %s47 = sadd.s32 %s46, 1
    %s48 = scalar_select %p45, %s46, %s47
    %p51 = pneg %p45
    %p52 = scmp.eq.s32.totalorder %s10, 1
    %p53 = por %p51, %p52
    %p54 = scmp.ne.s32.totalorder %s46, %s49
    %p55 = scmp.eq.s32.totalorder %s10, 0
    %p56 = por %p54, %p55
    %p57 = scmp.ne.s32.totalorder %s46, %s49
    %p58 = scmp.eq.s32.totalorder %s15, 1
    %p59 = por %p57, %p58
    %p60 = scmp.ne.s32.totalorder %s49, %s50
    %p61 = scmp.eq.s32.totalorder %s15, 0
    %p62 = por %p60, %p61
    %p63 = scmp.ne.s32.totalorder %s49, %s50
    %p64 = scmp.eq.s32.totalorder %s16, 1
    %p65 = por %p63, %p64
    %p67 = scmp.ne.s32.totalorder %s50, %s66
    %p68 = scmp.eq.s32.totalorder %s16, 0
    %p69 = por %p67, %p68
    %s71 = sadd.s32 %s70, 1
    %p74 = scmp.eq.s32.totalorder %s10, 1
    %p75 = scmp.ne.s32.totalorder %s70, %s72
    %p76 = scmp.eq.s32.totalorder %s10, 0
    %p77 = por %p75, %p76
    %p78 = scmp.ne.s32.totalorder %s70, %s72
    %p79 = scmp.eq.s32.totalorder %s15, 1
    %p80 = por %p78, %p79
    %p81 = scmp.ne.s32.totalorder %s72, %s73
    %p82 = scmp.eq.s32.totalorder %s15, 0
    %p83 = por %p81, %p82
    %p84 = scmp.ne.s32.totalorder %s72, %s73
    %p85 = scmp.eq.s32.totalorder %s16, 1
    %p86 = por %p84, %p85
    %p88 = scmp.ne.s32.totalorder %s73, %s87
    %p89 = scmp.eq.s32.totalorder %s16, 0
    %p90 = por %p88, %p89
    %s92 = sadd.s32 %s91, 1
    %p95 = scmp.eq.s32.totalorder %s10, 1
    %p96 = scmp.ne.s32.totalorder %s91, %s93
    %p97 = scmp.eq.s32.totalorder %s10, 0
    %p98 = por %p96, %p97
    %p99 = scmp.ne.s32.totalorder %s91, %s93
    %p100 = scmp.eq.s32.totalorder %s15, 1
    %p101 = por %p99, %p100
    %p102 = scmp.ne.s32.totalorder %s93, %s94
    %p103 = scmp.eq.s32.totalorder %s15, 0
    %p104 = por %p102, %p103
    %p105 = scmp.ne.s32.totalorder %s93, %s94
    %p106 = scmp.eq.s32.totalorder %s16, 1
    %p107 = por %p105, %p106
    %p109 = scmp.ne.s32.totalorder %s94, %s108
    %p110 = scmp.eq.s32.totalorder %s16, 0
    %p111 = por %p109, %p110
    %s112 = ssub.s32 %s10, %s17
    %p113 = scmp.eq.s32.totalorder %s112, 0
    %s115 = sadd.s32 %s114, 1
    %s116 = scalar_select %p113, %s114, %s115
    %p119 = pneg %p113
    %p120 = scmp.eq.s32.totalorder %s10, 1
    %p121 = por %p119, %p120
    %p122 = scmp.ne.s32.totalorder %s114, %s117
    %p123 = scmp.eq.s32.totalorder %s10, 0
    %p124 = por %p122, %p123
    %p125 = scmp.ne.s32.totalorder %s114, %s117
    %p126 = scmp.eq.s32.totalorder %s15, 1
    %p127 = por %p125, %p126
    %p128 = scmp.ne.s32.totalorder %s117, %s118
    %p129 = scmp.eq.s32.totalorder %s15, 0
    %p130 = por %p128, %p129
    %p131 = scmp.ne.s32.totalorder %s117, %s118
    %p132 = scmp.eq.s32.totalorder %s16, 1
    %p133 = por %p131, %p132
    %p135 = scmp.ne.s32.totalorder %s118, %s134
    %p136 = scmp.eq.s32.totalorder %s16, 0
    %p137 = por %p135, %p136
    %p138 = scmp.le.s32.totalorder 1, %s10
    %p139 = scmp.lt.s32.totalorder %s10, 3
    %p140 = pnand %p138, %p139
    %p141 = pneg %p140
    // Predicated region
    $region9: #{basic_block_forward.5} parent=5 // pred_check
      _
    $region10: #{basic_block_forward.5} parent=5 // pred_check_branch
      %143 = sbr.rel (%p140) target = $region12
    $region11: #{basic_block_forward.5} parent=5 // pred_region
      %s144 = ssub.s32 %s10, 1
      // Predicated region
      $region13: #{basic_block_forward.5} parent=11 // pred_check
        %p145 = pneg %p83
      $region14: #{basic_block_forward.5} parent=11 // pred_check_branch
        %147 = sbr.rel (%p145) target = $region16
      $region15: #{basic_block_forward.5} parent=11 // pred_region
        _
      $region16: #{basic_block_forward.5} parent=11 // pred_fallthru
        _
      // Predicated region
      $region17: #{basic_block_forward.5} parent=11 // pred_check
        %p148 = pneg %p104
      $region18: #{basic_block_forward.5} parent=11 // pred_check_branch
        %150 = sbr.rel (%p148) target = $region20
      $region19: #{basic_block_forward.5} parent=11 // pred_region
        _
      $region20: #{basic_block_forward.5} parent=11 // pred_fallthru
        _
    $region12: #{basic_block_forward.5} parent=5 // pred_fallthru
      _
    %p151 = scmp.lt.s32.totalorder %s10, 2
    // Predicated region
    $region21: #{basic_block_forward.5} parent=5 // pred_check
      %p152 = pneg %p151
    $region22: #{basic_block_forward.5} parent=5 // pred_check_branch
      %154 = sbr.rel (%p152) target = $region24
    $region23: #{basic_block_forward.5} parent=5 // pred_region
      // Predicated region
      $region25: #{basic_block_forward.5} parent=23 // pred_check
        %p155 = pneg %p30
      $region26: #{basic_block_forward.5} parent=23 // pred_check_branch
        %157 = sbr.rel (%p155) target = $region28
      $region27: #{basic_block_forward.5} parent=23 // pred_region
        %p158 = scmp.lt.s32.totalorder %s10, 1
        %s159 = scalar_select %p158, %s10, 1
        %s160 = smul.addr %s159, 32
        %s161 = smul.addr %s160, 4
        %s162 = scalar_lea.vmem %s0, %s161
      $region28: #{basic_block_forward.5} parent=23 // pred_fallthru
        _
      // Predicated region
      $region29: #{basic_block_forward.5} parent=23 // pred_check
        %p163 = pneg %p56
      $region30: #{basic_block_forward.5} parent=23 // pred_check_branch
        %165 = sbr.rel (%p163) target = $region32
      $region31: #{basic_block_forward.5} parent=23 // pred_region
        %p166 = scmp.lt.s32.totalorder %s10, 1
        %s167 = scalar_select %p166, %s10, 1
        %s168 = smul.addr %s167, 32
        %s169 = smul.addr %s168, 8
        %s170 = scalar_lea.vmem %s1, %s169
      $region32: #{basic_block_forward.5} parent=23 // pred_fallthru
        _
    $region24: #{basic_block_forward.5} parent=5 // pred_fallthru
      _
    %p171 = scmp.le.s32.totalorder 1, %s10
    %p172 = scmp.lt.s32.totalorder %s10, 3
    %p173 = pnand %p171, %p172
    %p174 = pneg %p173
    // Predicated region
    $region33: #{basic_block_forward.5} parent=5 // pred_check
      _
    $region34: #{basic_block_forward.5} parent=5 // pred_check_branch
      %176 = sbr.rel (%p173) target = $region36
    $region35: #{basic_block_forward.5} parent=5 // pred_region
      %s177 = ssub.s32 %s10, 1
      %p178 = scmp.lt.s32.totalorder %s15, 1
      %s179 = scalar_select %p178, %s15, 1
      %s180 = smul.addr %s179, 32
      %s181 = smul.addr %s180, 4
      %s182 = scalar_lea.vmem %s0, %s181
      %p183 = pneg %p36
      %p184 = pneg %p33
      %p185 = scmp.lt.s32.totalorder %s15, 1
      %s186 = scalar_select %p185, %s15, 1
      %s187 = smul.addr %s186, 32
      %s188 = smul.addr %s187, 8
      %s189 = scalar_lea.vmem %s1, %s188
      %p190 = pneg %p62
      %p191 = pneg %p59
      %p192 = pneg %p83
      %p193 = pneg %p80
      %p194 = pneg %p104
      %p195 = pneg %p101
      %p196 = pneg %p130
      %p197 = pneg %p127
      %p198 = scmp.lt.s32.totalorder %s15, 1
      %s199 = scalar_select %p198, %s15, 1
      %s200 = smul.addr %s199, 32
      %s201 = smul.addr %s200, 8
      %s202 = scalar_lea.vmem %s4, %s201
      %p203 = scmp.lt.s32.totalorder %s15, 1
      %s204 = scalar_select %p203, %s15, 1
      %s205 = smul.addr %s204, 32
      %s206 = smul.addr %s205, 4
      %s207 = scalar_lea.vmem %s0, %s206
      %p208 = scmp.lt.s32.totalorder %s15, 1
      %s209 = scalar_select %p208, %s15, 1
      %s210 = smul.addr %s209, 32
      %s211 = smul.addr %s210, 8
      %s212 = scalar_lea.vmem %s1, %s211
      %p213 = scmp.lt.s32.totalorder %s15, 1
      %s214 = scalar_select %p213, %s15, 1
      %s215 = smul.addr %s214, 32
      %s216 = smul.addr %s215, 8
      %s217 = scalar_lea.vmem %s4, %s216
      %v218 = vld [vmem:[%s207] sm:$0xf]
      %v219 = vld [vmem:[%s207 + $0x4] sm:$0xf]
      %v220 = vld [vmem:[%s207 + $0x8] sm:$0xf]
      %v221 = vld [vmem:[%s207 + $0xc] sm:$0xf]
      %v222 = vld [vmem:[%s207 + $0x10] sm:$0xf]
      %v223 = vld [vmem:[%s207 + $0x14] sm:$0xf]
      %v224 = vld [vmem:[%s207 + $0x18] sm:$0xf]
      %v225 = vld [vmem:[%s207 + $0x1c] sm:$0xf]
      %v226 = vld [vmem:[%s207 + $0x20] sm:$0xf]
      %v227 = vld [vmem:[%s207 + $0x24] sm:$0xf]
      %v228 = vld [vmem:[%s207 + $0x28] sm:$0xf]
      %v229 = vld [vmem:[%s207 + $0x2c] sm:$0xf]
      %v230 = vld [vmem:[%s207 + $0x30] sm:$0xf]
      %v231 = vld [vmem:[%s207 + $0x34] sm:$0xf]
      %v232 = vld [vmem:[%s207 + $0x38] sm:$0xf]
      %v233 = vld [vmem:[%s207 + $0x3c] sm:$0xf]
      %v234 = vld [vmem:[%s207 + $0x40] sm:$0xf]
      %v235 = vld [vmem:[%s207 + $0x44] sm:$0xf]
      %v236 = vld [vmem:[%s207 + $0x48] sm:$0xf]
      %v237 = vld [vmem:[%s207 + $0x4c] sm:$0xf]
      %v238 = vld [vmem:[%s207 + $0x50] sm:$0xf]
      %v239 = vld [vmem:[%s207 + $0x54] sm:$0xf]
      %v240 = vld [vmem:[%s207 + $0x58] sm:$0xf]
      %v241 = vld [vmem:[%s207 + $0x5c] sm:$0xf]
      %v242 = vld [vmem:[%s207 + $0x60] sm:$0xf]
      %v243 = vld [vmem:[%s207 + $0x64] sm:$0xf]
      %v244 = vld [vmem:[%s207 + $0x68] sm:$0xf]
      %v245 = vld [vmem:[%s207 + $0x6c] sm:$0xf]
      %v246 = vld [vmem:[%s207 + $0x70] sm:$0xf]
      %v247 = vld [vmem:[%s207 + $0x74] sm:$0xf]
      %v248 = vld [vmem:[%s207 + $0x78] sm:$0xf]
      %v249 = vld [vmem:[%s207 + $0x7c] sm:$0xf]
      %v250 = vunpack.c.l.bf16 %v218
      %v251 = vunpack.c.l.bf16 %v219
      %v252 = vunpack.c.l.bf16 %v220
      %v253 = vunpack.c.l.bf16 %v221
      %v254 = vunpack.c.l.bf16 %v222
      %v255 = vunpack.c.l.bf16 %v223
      %v256 = vunpack.c.l.bf16 %v224
      %v257 = vunpack.c.l.bf16 %v225
      %v258 = vunpack.c.l.bf16 %v226
      %v259 = vunpack.c.l.bf16 %v227
      %v260 = vunpack.c.l.bf16 %v228
      %v261 = vunpack.c.l.bf16 %v229
      %v262 = vunpack.c.l.bf16 %v230
      %v263 = vunpack.c.l.bf16 %v231
      %v264 = vunpack.c.l.bf16 %v232
      %v265 = vunpack.c.l.bf16 %v233
      %v266 = vunpack.c.l.bf16 %v234
      %v267 = vunpack.c.l.bf16 %v235
      %v268 = vunpack.c.l.bf16 %v236
      %v269 = vunpack.c.l.bf16 %v237
      %v270 = vunpack.c.l.bf16 %v238
      %v271 = vunpack.c.l.bf16 %v239
      %v272 = vunpack.c.l.bf16 %v240
      %v273 = vunpack.c.l.bf16 %v241
      %v274 = vunpack.c.l.bf16 %v242
      %v275 = vunpack.c.l.bf16 %v243
      %v276 = vunpack.c.l.bf16 %v244
      %v277 = vunpack.c.l.bf16 %v245
      %v278 = vunpack.c.l.bf16 %v246
      %v279 = vunpack.c.l.bf16 %v247
      %v280 = vunpack.c.l.bf16 %v248
      %v281 = vunpack.c.l.bf16 %v249
      %v282 = vld [vmem:[%s2] sm:$0x1]
      %v284 = vlaneseq
      %v285 = vshrl.u32 %v284, 7
      %v286 = vsub.s32 0, %v285
      %v287 = vrot.slane %v282, %v286
      %v289 = vmul.f32 %v250, %v287
      %v290 = vmul.f32 %v251, %v287
      %v291 = vmul.f32 %v252, %v287
      %v292 = vmul.f32 %v253, %v287
      %v293 = vmul.f32 %v254, %v287
      %v294 = vmul.f32 %v255, %v287
      %v295 = vmul.f32 %v256, %v287
      %v296 = vmul.f32 %v257, %v287
      %v297 = vmul.f32 %v258, %v287
      %v298 = vmul.f32 %v259, %v287
      %v299 = vmul.f32 %v260, %v287
      %v300 = vmul.f32 %v261, %v287
      %v301 = vmul.f32 %v262, %v287
      %v302 = vmul.f32 %v263, %v287
      %v303 = vmul.f32 %v264, %v287
      %v304 = vmul.f32 %v265, %v287
      %v305 = vmul.f32 %v266, %v287
      %v306 = vmul.f32 %v267, %v287
      %v307 = vmul.f32 %v268, %v287
      %v308 = vmul.f32 %v269, %v287
      %v309 = vmul.f32 %v270, %v287
      %v310 = vmul.f32 %v271, %v287
      %v311 = vmul.f32 %v272, %v287
      %v312 = vmul.f32 %v273, %v287
      %v313 = vmul.f32 %v274, %v287
      %v314 = vmul.f32 %v275, %v287
      %v315 = vmul.f32 %v276, %v287
      %v316 = vmul.f32 %v277, %v287
      %v317 = vmul.f32 %v278, %v287
      %v318 = vmul.f32 %v279, %v287
      %v319 = vmul.f32 %v280, %v287
      %v320 = vmul.f32 %v281, %v287
      %v321 = vld [vmem:[%s3] sm:$0x1]
      %v323 = vlaneseq
      %v324 = vshrl.u32 %v323, 7
      %v325 = vsub.s32 0, %v324
      %v326 = vrot.slane %v321, %v325
      %v328 = vadd.f32 %v289, %v326
      %v329 = vadd.f32 %v290, %v326
      %v330 = vadd.f32 %v291, %v326
      %v331 = vadd.f32 %v292, %v326
      %v332 = vadd.f32 %v293, %v326
      %v333 = vadd.f32 %v294, %v326
      %v334 = vadd.f32 %v295, %v326
      %v335 = vadd.f32 %v296, %v326
      %v336 = vadd.f32 %v297, %v326
      %v337 = vadd.f32 %v298, %v326
      %v338 = vadd.f32 %v299, %v326
      %v339 = vadd.f32 %v300, %v326
      %v340 = vadd.f32 %v301, %v326
      %v341 = vadd.f32 %v302, %v326
      %v342 = vadd.f32 %v303, %v326
      %v343 = vadd.f32 %v304, %v326
      %v344 = vadd.f32 %v305, %v326
      %v345 = vadd.f32 %v306, %v326
      %v346 = vadd.f32 %v307, %v326
      %v347 = vadd.f32 %v308, %v326
      %v348 = vadd.f32 %v309, %v326
      %v349 = vadd.f32 %v310, %v326
      %v350 = vadd.f32 %v311, %v326
      %v351 = vadd.f32 %v312, %v326
      %v352 = vadd.f32 %v313, %v326
      %v353 = vadd.f32 %v314, %v326
      %v354 = vadd.f32 %v315, %v326
      %v355 = vadd.f32 %v316, %v326
      %v356 = vadd.f32 %v317, %v326
      %v357 = vadd.f32 %v318, %v326
      %v358 = vadd.f32 %v319, %v326
      %v359 = vadd.f32 %v320, %v326
      %v360 = vld [vmem:[%s212] sm:$0xff]
      %v361 = vld [vmem:[%s212 + $0x8] sm:$0xff]
      %v362 = vld [vmem:[%s212 + $0x10] sm:$0xff]
      %v363 = vld [vmem:[%s212 + $0x18] sm:$0xff]
      %v364 = vld [vmem:[%s212 + $0x20] sm:$0xff]
      %v365 = vld [vmem:[%s212 + $0x28] sm:$0xff]
      %v366 = vld [vmem:[%s212 + $0x30] sm:$0xff]
      %v367 = vld [vmem:[%s212 + $0x38] sm:$0xff]
      %v368 = vld [vmem:[%s212 + $0x40] sm:$0xff]
      %v369 = vld [vmem:[%s212 + $0x48] sm:$0xff]
      %v370 = vld [vmem:[%s212 + $0x50] sm:$0xff]
      %v371 = vld [vmem:[%s212 + $0x58] sm:$0xff]
      %v372 = vld [vmem:[%s212 + $0x60] sm:$0xff]
      %v373 = vld [vmem:[%s212 + $0x68] sm:$0xff]
      %v374 = vld [vmem:[%s212 + $0x70] sm:$0xff]
      %v375 = vld [vmem:[%s212 + $0x78] sm:$0xff]
      %v376 = vld [vmem:[%s212 + $0x80] sm:$0xff]
      %v377 = vld [vmem:[%s212 + $0x88] sm:$0xff]
      %v378 = vld [vmem:[%s212 + $0x90] sm:$0xff]
      %v379 = vld [vmem:[%s212 + $0x98] sm:$0xff]
      %v380 = vld [vmem:[%s212 + $0xa0] sm:$0xff]
      %v381 = vld [vmem:[%s212 + $0xa8] sm:$0xff]
      %v382 = vld [vmem:[%s212 + $0xb0] sm:$0xff]
      %v383 = vld [vmem:[%s212 + $0xb8] sm:$0xff]
      %v384 = vld [vmem:[%s212 + $0xc0] sm:$0xff]
      %v385 = vld [vmem:[%s212 + $0xc8] sm:$0xff]
      %v386 = vld [vmem:[%s212 + $0xd0] sm:$0xff]
      %v387 = vld [vmem:[%s212 + $0xd8] sm:$0xff]
      %v388 = vld [vmem:[%s212 + $0xe0] sm:$0xff]
      %v389 = vld [vmem:[%s212 + $0xe8] sm:$0xff]
      %v390 = vld [vmem:[%s212 + $0xf0] sm:$0xff]
      %v391 = vld [vmem:[%s212 + $0xf8] sm:$0xff]
      %v392 = vadd.f32 %v328, %v360
      %v393 = vadd.f32 %v329, %v361
      %v394 = vadd.f32 %v330, %v362
      %v395 = vadd.f32 %v331, %v363
      %v396 = vadd.f32 %v332, %v364
      %v397 = vadd.f32 %v333, %v365
      %v398 = vadd.f32 %v334, %v366
      %v399 = vadd.f32 %v335, %v367
      %v400 = vadd.f32 %v336, %v368
      %v401 = vadd.f32 %v337, %v369
      %v402 = vadd.f32 %v338, %v370
      %v403 = vadd.f32 %v339, %v371
      %v404 = vadd.f32 %v340, %v372
      %v405 = vadd.f32 %v341, %v373
      %v406 = vadd.f32 %v342, %v374
      %v407 = vadd.f32 %v343, %v375
      %v408 = vadd.f32 %v344, %v376
      %v409 = vadd.f32 %v345, %v377
      %v410 = vadd.f32 %v346, %v378
      %v411 = vadd.f32 %v347, %v379
      %v412 = vadd.f32 %v348, %v380
      %v413 = vadd.f32 %v349, %v381
      %v414 = vadd.f32 %v350, %v382
      %v415 = vadd.f32 %v351, %v383
      %v416 = vadd.f32 %v352, %v384
      %v417 = vadd.f32 %v353, %v385
      %v418 = vadd.f32 %v354, %v386
      %v419 = vadd.f32 %v355, %v387
      %v420 = vadd.f32 %v356, %v388
      %v421 = vadd.f32 %v357, %v389
      %v422 = vadd.f32 %v358, %v390
      %v423 = vadd.f32 %v359, %v391
      %v424 = vmax.f32 %v392, 0.0
      %v425 = vmax.f32 %v393, 0.0
      %v426 = vmax.f32 %v394, 0.0
      %v427 = vmax.f32 %v395, 0.0
      %v428 = vmax.f32 %v396, 0.0
      %v429 = vmax.f32 %v397, 0.0
      %v430 = vmax.f32 %v398, 0.0
      %v431 = vmax.f32 %v399, 0.0
      %v432 = vmax.f32 %v400, 0.0
      %v433 = vmax.f32 %v401, 0.0
      %v434 = vmax.f32 %v402, 0.0
      %v435 = vmax.f32 %v403, 0.0
      %v436 = vmax.f32 %v404, 0.0
      %v437 = vmax.f32 %v405, 0.0
      %v438 = vmax.f32 %v406, 0.0
      %v439 = vmax.f32 %v407, 0.0
      %v440 = vmax.f32 %v408, 0.0
      %v441 = vmax.f32 %v409, 0.0
      %v442 = vmax.f32 %v410, 0.0
      %v443 = vmax.f32 %v411, 0.0
      %v444 = vmax.f32 %v412, 0.0
      %v445 = vmax.f32 %v413, 0.0
      %v446 = vmax.f32 %v414, 0.0
      %v447 = vmax.f32 %v415, 0.0
      %v448 = vmax.f32 %v416, 0.0
      %v449 = vmax.f32 %v417, 0.0
      %v450 = vmax.f32 %v418, 0.0
      %v451 = vmax.f32 %v419, 0.0
      %v452 = vmax.f32 %v420, 0.0
      %v453 = vmax.f32 %v421, 0.0
      %v454 = vmax.f32 %v422, 0.0
      %v455 = vmax.f32 %v423, 0.0
      %456 = vst [vmem:[%s217] sm:$0xff] %v424
      %457 = vst [vmem:[%s217 + $0x8] sm:$0xff] %v425
      %458 = vst [vmem:[%s217 + $0x10] sm:$0xff] %v426
      %459 = vst [vmem:[%s217 + $0x18] sm:$0xff] %v427
      %460 = vst [vmem:[%s217 + $0x20] sm:$0xff] %v428
      %461 = vst [vmem:[%s217 + $0x28] sm:$0xff] %v429
      %462 = vst [vmem:[%s217 + $0x30] sm:$0xff] %v430
      %463 = vst [vmem:[%s217 + $0x38] sm:$0xff] %v431
      %464 = vst [vmem:[%s217 + $0x40] sm:$0xff] %v432
      %465 = vst [vmem:[%s217 + $0x48] sm:$0xff] %v433
      %466 = vst [vmem:[%s217 + $0x50] sm:$0xff] %v434
      %467 = vst [vmem:[%s217 + $0x58] sm:$0xff] %v435
      %468 = vst [vmem:[%s217 + $0x60] sm:$0xff] %v436
      %469 = vst [vmem:[%s217 + $0x68] sm:$0xff] %v437
      %470 = vst [vmem:[%s217 + $0x70] sm:$0xff] %v438
      %471 = vst [vmem:[%s217 + $0x78] sm:$0xff] %v439
      %472 = vst [vmem:[%s217 + $0x80] sm:$0xff] %v440
      %473 = vst [vmem:[%s217 + $0x88] sm:$0xff] %v441
      %474 = vst [vmem:[%s217 + $0x90] sm:$0xff] %v442
      %475 = vst [vmem:[%s217 + $0x98] sm:$0xff] %v443
      %476 = vst [vmem:[%s217 + $0xa0] sm:$0xff] %v444
      %477 = vst [vmem:[%s217 + $0xa8] sm:$0xff] %v445
      %478 = vst [vmem:[%s217 + $0xb0] sm:$0xff] %v446
      %479 = vst [vmem:[%s217 + $0xb8] sm:$0xff] %v447
      %480 = vst [vmem:[%s217 + $0xc0] sm:$0xff] %v448
      %481 = vst [vmem:[%s217 + $0xc8] sm:$0xff] %v449
      %482 = vst [vmem:[%s217 + $0xd0] sm:$0xff] %v450
      %483 = vst [vmem:[%s217 + $0xd8] sm:$0xff] %v451
      %484 = vst [vmem:[%s217 + $0xe0] sm:$0xff] %v452
      %485 = vst [vmem:[%s217 + $0xe8] sm:$0xff] %v453
      %486 = vst [vmem:[%s217 + $0xf0] sm:$0xff] %v454
      %487 = vst [vmem:[%s217 + $0xf8] sm:$0xff] %v455
      %p488 = scmp.lt.s32.totalorder %s15, 1
      %s489 = scalar_select %p488, %s15, 1
      %s490 = smul.addr %s489, 32
      %s491 = smul.addr %s490, 8
      %s492 = scalar_lea.vmem %s4, %s491
      // Predicated region
      $region37: #{basic_block_forward.5} parent=35 // pred_check
        %p493 = pneg %p127
      $region38: #{basic_block_forward.5} parent=35 // pred_check_branch
        %495 = sbr.rel (%p493) target = $region40
      $region39: #{basic_block_forward.5} parent=35 // pred_region
        _
      $region40: #{basic_block_forward.5} parent=35 // pred_fallthru
        _
    $region36: #{basic_block_forward.5} parent=5 // pred_fallthru
      _
    %p496 = scmp.le.s32.totalorder 2, %s10
    // Predicated region
    $region41: #{basic_block_forward.5} parent=5 // pred_check
      %p497 = pneg %p496
    $region42: #{basic_block_forward.5} parent=5 // pred_check_branch
      %499 = sbr.rel (%p497) target = $region44
    $region43: #{basic_block_forward.5} parent=5 // pred_region
      %s500 = ssub.s32 %s10, 2
      // Predicated region
      $region45: #{basic_block_forward.5} parent=43 // pred_check
        %p501 = pneg %p133
      $region46: #{basic_block_forward.5} parent=43 // pred_check_branch
        %503 = sbr.rel (%p501) target = $region48
      $region47: #{basic_block_forward.5} parent=43 // pred_region
        %p504 = scmp.lt.s32.totalorder %s16, 1
        %s505 = scalar_select %p504, %s16, 1
        %s506 = smul.addr %s505, 32
        %s507 = smul.addr %s506, 8
        %s508 = scalar_lea.vmem %s4, %s507
      $region48: #{basic_block_forward.5} parent=43 // pred_fallthru
        _
    $region44: #{basic_block_forward.5} parent=5 // pred_fallthru
      _
  $region6: #{basic_block_forward.5} parent=0 // loop_footer
    %s14 = sadd.s32 1, %s10
  $region7: #{basic_block_forward.5} parent=0 // loop_footer_branch
    %9 = sbr.rel target = $region3
  $region8: #{basic_block_forward.5} parent=0 // loop_exit
    _

// kernel: basic_block_forward.4
$region0: #{basic_block_forward.4}
  #allocation0 [shape = 'u32[]', space=smem, size = 0x4, offset = 0x4, fixed_abs, tag = 'smem constant byte address 0x4 - core index']
  #allocation1 [shape = 'u32[144,128]{1,0:T(1,128)}', space=vmem, size = 0x12000, scoped, tag = 'internal scratch']
  %s0 = inlined_call_operand.vmem [shape: bf16[2,256,128], index: 0, kind: input, shape index: {}]
  %s1 = inlined_call_operand.vmem [shape: bf16[9,128,128], index: 1, kind: input, shape index: {}]
  %s2 = inlined_call_operand.vmem [shape: f32[1,128], index: 2, kind: input, shape index: {}]
  %s3 = inlined_call_operand.vmem [shape: f32[1,128], index: 3, kind: input, shape index: {}]
  %s4 = inlined_call_operand.vmem [shape: bf16[2,256,128], index: 4, kind: output, shape index: {0}]
  %s5 = inlined_call_operand.vmem [shape: f32[2,2,128], index: 5, kind: output, shape index: {1}]
  %6 = xla_tuple %s4, %s5
  %s7 = sld [smem:[#allocation0]]
  $region57: #{basic_block_forward.4} parent=0
    _
  %s9 = ssub.s32 1, %s7
  %s10 = scalar_select 0, %s9, %s7
  loop: start=0, step=1, limit=4
  $region2: #{basic_block_forward.4} parent=0 // loop_pre_header
    _
  $region3: #{basic_block_forward.4} parent=0 // loop_header
    %s12 = sphi 0, %s16
    %p13 = scmp.ge.s32.totalorder %s12, 4
    %s22 = sphi 0, %s24
    %s25 = sphi 0, %s22
    %s26 = sphi 0, %s25
    %s42 = sphi 0, %s26
    %s46 = sphi 0, %s46
    %s48 = sphi 0, %s46
    %s49 = sphi 0, %s48
    %s63 = sphi 0, %s49
    %s67 = sphi 0, %s67
    %s69 = sphi 0, %s67
    %s70 = sphi 0, %s69
    %s84 = sphi 0, %s70
    %s88 = sphi 0, %s88
    %s90 = sphi 0, %s88
    %s91 = sphi 0, %s90
    %s105 = sphi 0, %s91
    %s111 = sphi 0, %s113
    %s114 = sphi 0, %s111
    %s115 = sphi 0, %s114
    %s131 = sphi 0, %s115
    %s137 = sphi 0, %s139
    %s140 = sphi 0, %s137
    %s141 = sphi 0, %s140
    %s157 = sphi 0, %s141
  $region4: #{basic_block_forward.4} parent=0 // loop_header_branch
    %15 = sbr.rel (%p13) target = $region8
  $region5: #{basic_block_forward.4} parent=0 // loop_body
    %s17 = ssub.s32 %s12, 1
    %s18 = ssub.s32 %s12, 2
    %s19 = sadd.s32 %s12, 1
    %s20 = ssub.s32 %s12, %s19
    %p21 = scmp.eq.s32.totalorder %s20, 0
    %s23 = sadd.s32 %s22, 1
    %s24 = scalar_select %p21, %s22, %s23
    %p27 = pneg %p21
    %p28 = scmp.eq.s32.totalorder %s12, 1
    %p29 = por %p27, %p28
    %p30 = scmp.ne.s32.totalorder %s22, %s25
    %p31 = scmp.eq.s32.totalorder %s12, 0
    %p32 = por %p30, %p31
    %p33 = scmp.ne.s32.totalorder %s22, %s25
    %p34 = scmp.eq.s32.totalorder %s17, 1
    %p35 = por %p33, %p34
    %p36 = scmp.ne.s32.totalorder %s25, %s26
    %p37 = scmp.eq.s32.totalorder %s17, 0
    %p38 = por %p36, %p37
    %p39 = scmp.ne.s32.totalorder %s25, %s26
    %p40 = scmp.eq.s32.totalorder %s18, 1
    %p41 = por %p39, %p40
    %p43 = scmp.ne.s32.totalorder %s26, %s42
    %p44 = scmp.eq.s32.totalorder %s18, 0
    %p45 = por %p43, %p44
    %s47 = sadd.s32 %s46, 1
    %p50 = scmp.eq.s32.totalorder %s12, 1
    %p51 = scmp.ne.s32.totalorder %s46, %s48
    %p52 = scmp.eq.s32.totalorder %s12, 0
    %p53 = por %p51, %p52
    %p54 = scmp.ne.s32.totalorder %s46, %s48
    %p55 = scmp.eq.s32.totalorder %s17, 1
    %p56 = por %p54, %p55
    %p57 = scmp.ne.s32.totalorder %s48, %s49
    %p58 = scmp.eq.s32.totalorder %s17, 0
    %p59 = por %p57, %p58
    %p60 = scmp.ne.s32.totalorder %s48, %s49
    %p61 = scmp.eq.s32.totalorder %s18, 1
    %p62 = por %p60, %p61
    %p64 = scmp.ne.s32.totalorder %s49, %s63
    %p65 = scmp.eq.s32.totalorder %s18, 0
    %p66 = por %p64, %p65
    %s68 = sadd.s32 %s67, 1
    %p71 = scmp.eq.s32.totalorder %s12, 1
    %p72 = scmp.ne.s32.totalorder %s67, %s69
    %p73 = scmp.eq.s32.totalorder %s12, 0
    %p74 = por %p72, %p73
    %p75 = scmp.ne.s32.totalorder %s67, %s69
    %p76 = scmp.eq.s32.totalorder %s17, 1
    %p77 = por %p75, %p76
    %p78 = scmp.ne.s32.totalorder %s69, %s70
    %p79 = scmp.eq.s32.totalorder %s17, 0
    %p80 = por %p78, %p79
    %p81 = scmp.ne.s32.totalorder %s69, %s70
    %p82 = scmp.eq.s32.totalorder %s18, 1
    %p83 = por %p81, %p82
    %p85 = scmp.ne.s32.totalorder %s70, %s84
    %p86 = scmp.eq.s32.totalorder %s18, 0
    %p87 = por %p85, %p86
    %s89 = sadd.s32 %s88, 1
    %p92 = scmp.eq.s32.totalorder %s12, 1
    %p93 = scmp.ne.s32.totalorder %s88, %s90
    %p94 = scmp.eq.s32.totalorder %s12, 0
    %p95 = por %p93, %p94
    %p96 = scmp.ne.s32.totalorder %s88, %s90
    %p97 = scmp.eq.s32.totalorder %s17, 1
    %p98 = por %p96, %p97
    %p99 = scmp.ne.s32.totalorder %s90, %s91
    %p100 = scmp.eq.s32.totalorder %s17, 0
    %p101 = por %p99, %p100
    %p102 = scmp.ne.s32.totalorder %s90, %s91
    %p103 = scmp.eq.s32.totalorder %s18, 1
    %p104 = por %p102, %p103
    %p106 = scmp.ne.s32.totalorder %s91, %s105
    %p107 = scmp.eq.s32.totalorder %s18, 0
    %p108 = por %p106, %p107
    %s109 = ssub.s32 %s12, %s19
    %p110 = scmp.eq.s32.totalorder %s109, 0
    %s112 = sadd.s32 %s111, 1
    %s113 = scalar_select %p110, %s111, %s112
    %p116 = pneg %p110
    %p117 = scmp.eq.s32.totalorder %s12, 1
    %p118 = por %p116, %p117
    %p119 = scmp.ne.s32.totalorder %s111, %s114
    %p120 = scmp.eq.s32.totalorder %s12, 0
    %p121 = por %p119, %p120
    %p122 = scmp.ne.s32.totalorder %s111, %s114
    %p123 = scmp.eq.s32.totalorder %s17, 1
    %p124 = por %p122, %p123
    %p125 = scmp.ne.s32.totalorder %s114, %s115
    %p126 = scmp.eq.s32.totalorder %s17, 0
    %p127 = por %p125, %p126
    %p128 = scmp.ne.s32.totalorder %s114, %s115
    %p129 = scmp.eq.s32.totalorder %s18, 1
    %p130 = por %p128, %p129
    %p132 = scmp.ne.s32.totalorder %s115, %s131
    %p133 = scmp.eq.s32.totalorder %s18, 0
    %p134 = por %p132, %p133
    %s135 = ssub.s32 %s12, %s19
    %p136 = scmp.eq.s32.totalorder %s135, 0
    %s138 = sadd.s32 %s137, 1
    %s139 = scalar_select %p136, %s137, %s138
    %p142 = pneg %p136
    %p143 = scmp.eq.s32.totalorder %s12, 1
    %p144 = por %p142, %p143
    %p145 = scmp.ne.s32.totalorder %s137, %s140
    %p146 = scmp.eq.s32.totalorder %s12, 0
    %p147 = por %p145, %p146
    %p148 = scmp.ne.s32.totalorder %s137, %s140
    %p149 = scmp.eq.s32.totalorder %s17, 1
    %p150 = por %p148, %p149
    %p151 = scmp.ne.s32.totalorder %s140, %s141
    %p152 = scmp.eq.s32.totalorder %s17, 0
    %p153 = por %p151, %p152
    %p154 = scmp.ne.s32.totalorder %s140, %s141
    %p155 = scmp.eq.s32.totalorder %s18, 1
    %p156 = por %p154, %p155
    %p158 = scmp.ne.s32.totalorder %s141, %s157
    %p159 = scmp.eq.s32.totalorder %s18, 0
    %p160 = por %p158, %p159
    %p161 = scmp.le.s32.totalorder 1, %s12
    %p162 = scmp.lt.s32.totalorder %s12, 3
    %p163 = pnand %p161, %p162
    %p164 = pneg %p163
    // Predicated region
    $region9: #{basic_block_forward.4} parent=5 // pred_check
      _
    $region10: #{basic_block_forward.4} parent=5 // pred_check_branch
      %166 = sbr.rel (%p163) target = $region12
    $region11: #{basic_block_forward.4} parent=5 // pred_region
      %s167 = ssub.s32 %s12, 1
      // Predicated region
      $region13: #{basic_block_forward.4} parent=11 // pred_check
        %p168 = pneg %p59
      $region14: #{basic_block_forward.4} parent=11 // pred_check_branch
        %170 = sbr.rel (%p168) target = $region16
      $region15: #{basic_block_forward.4} parent=11 // pred_region
        _
      $region16: #{basic_block_forward.4} parent=11 // pred_fallthru
        _
      // Predicated region
      $region17: #{basic_block_forward.4} parent=11 // pred_check
        %p171 = pneg %p80
      $region18: #{basic_block_forward.4} parent=11 // pred_check_branch
        %173 = sbr.rel (%p171) target = $region20
      $region19: #{basic_block_forward.4} parent=11 // pred_region
        _
      $region20: #{basic_block_forward.4} parent=11 // pred_fallthru
        _
      // Predicated region
      $region21: #{basic_block_forward.4} parent=11 // pred_check
        %p174 = pneg %p101
      $region22: #{basic_block_forward.4} parent=11 // pred_check_branch
        %176 = sbr.rel (%p174) target = $region24
      $region23: #{basic_block_forward.4} parent=11 // pred_region
        _
      $region24: #{basic_block_forward.4} parent=11 // pred_fallthru
        _
    $region12: #{basic_block_forward.4} parent=5 // pred_fallthru
      _
    %p177 = scmp.lt.s32.totalorder %s12, 2
    // Predicated region
    $region25: #{basic_block_forward.4} parent=5 // pred_check
      %p178 = pneg %p177
    $region26: #{basic_block_forward.4} parent=5 // pred_check_branch
      %180 = sbr.rel (%p178) target = $region28
    $region27: #{basic_block_forward.4} parent=5 // pred_region
      // Predicated region
      $region29: #{basic_block_forward.4} parent=27 // pred_check
        %p181 = pneg %p32
      $region30: #{basic_block_forward.4} parent=27 // pred_check_branch
        %183 = sbr.rel (%p181) target = $region32
      $region31: #{basic_block_forward.4} parent=27 // pred_region
        %p184 = scmp.lt.s32.totalorder %s12, 1
        %s185 = scalar_select %p184, %s12, 1
        %s186 = smul.addr %s185, 32
        %s187 = smul.addr %s186, 4
        %s188 = scalar_lea.vmem %s0, %s187
      $region32: #{basic_block_forward.4} parent=27 // pred_fallthru
        _
    $region28: #{basic_block_forward.4} parent=5 // pred_fallthru
      _
    %p189 = scmp.le.s32.totalorder 1, %s12
    %p190 = scmp.lt.s32.totalorder %s12, 3
    %p191 = pnand %p189, %p190
    %p192 = pneg %p191
    // Predicated region
    $region33: #{basic_block_forward.4} parent=5 // pred_check
      _
    $region34: #{basic_block_forward.4} parent=5 // pred_check_branch
      %194 = sbr.rel (%p191) target = $region36
    $region35: #{basic_block_forward.4} parent=5 // pred_region
      %s195 = ssub.s32 %s12, 1
      %p196 = scmp.lt.s32.totalorder %s17, 1
      %s197 = scalar_select %p196, %s17, 1
      %s198 = smul.addr %s197, 32
      %s199 = smul.addr %s198, 4
      %s200 = scalar_lea.vmem %s0, %s199
      %p201 = pneg %p38
      %p202 = pneg %p35
      %p203 = pneg %p59
      %p204 = pneg %p56
      %p205 = pneg %p80
      %p206 = pneg %p77
      %p207 = pneg %p101
      %p208 = pneg %p98
      %p209 = pneg %p127
      %p210 = pneg %p124
      %p211 = scmp.lt.s32.totalorder %s17, 1
      %s212 = scalar_select %p211, %s17, 1
      %s213 = smul.addr %s212, 32
      %s214 = smul.addr %s213, 4
      %s215 = scalar_lea.vmem %s4, %s214
      %p216 = pneg %p153
      %p217 = pneg %p150
      %p218 = scmp.lt.s32.totalorder %s17, 1
      %s219 = scalar_select %p218, %s17, 1
      %s220 = smul.addr %s219, 2
      %s221 = scalar_lea.vmem %s5, %s220
      %p222 = scmp.lt.s32.totalorder %s17, 1
      %s223 = scalar_select %p222, %s17, 1
      %s224 = smul.addr %s223, 32
      %s225 = smul.addr %s224, 4
      %s226 = scalar_lea.vmem %s0, %s225
      %p227 = scmp.lt.s32.totalorder %s17, 1
      %s228 = scalar_select %p227, %s17, 1
      %s229 = smul.addr %s228, 32
      %s230 = smul.addr %s229, 4
      %s231 = scalar_lea.vmem %s4, %s230
      %p232 = scmp.lt.s32.totalorder %s17, 1
      %s233 = scalar_select %p232, %s17, 1
      %s234 = smul.addr %s233, 2
      %s235 = scalar_lea.vmem %s5, %s234
      %v237 = vld [vmem:[%s226] sm:$0xf]
      %v238 = vld [vmem:[%s226 + $0x4] sm:$0xf]
      %v239 = vld [vmem:[%s226 + $0x8] sm:$0xf]
      %v240 = vld [vmem:[%s226 + $0xc] sm:$0xf]
      %v241 = vld [vmem:[%s226 + $0x10] sm:$0xf]
      %v242 = vld [vmem:[%s226 + $0x14] sm:$0xf]
      %v243 = vld [vmem:[%s226 + $0x18] sm:$0xf]
      %v244 = vld [vmem:[%s226 + $0x1c] sm:$0xf]
      %v245 = vld [vmem:[%s226 + $0x20] sm:$0xf]
      %v246 = vld [vmem:[%s226 + $0x24] sm:$0xf]
      %v247 = vld [vmem:[%s226 + $0x28] sm:$0xf]
      %v248 = vld [vmem:[%s226 + $0x2c] sm:$0xf]
      %v249 = vld [vmem:[%s226 + $0x30] sm:$0xf]
      %v250 = vld [vmem:[%s226 + $0x34] sm:$0xf]
      %v251 = vld [vmem:[%s226 + $0x38] sm:$0xf]
      %v252 = vld [vmem:[%s226 + $0x3c] sm:$0xf]
      %v253 = vld [vmem:[%s226 + $0x40] sm:$0xf]
      %v254 = vld [vmem:[%s226 + $0x44] sm:$0xf]
      %v255 = vld [vmem:[%s226 + $0x48] sm:$0xf]
      %v256 = vld [vmem:[%s226 + $0x4c] sm:$0xf]
      %v257 = vld [vmem:[%s226 + $0x50] sm:$0xf]
      %v258 = vld [vmem:[%s226 + $0x54] sm:$0xf]
      %v259 = vld [vmem:[%s226 + $0x58] sm:$0xf]
      %v260 = vld [vmem:[%s226 + $0x5c] sm:$0xf]
      %v261 = vld [vmem:[%s226 + $0x60] sm:$0xf]
      %v262 = vld [vmem:[%s226 + $0x64] sm:$0xf]
      %v263 = vld [vmem:[%s226 + $0x68] sm:$0xf]
      %v264 = vld [vmem:[%s226 + $0x6c] sm:$0xf]
      %v265 = vld [vmem:[%s226 + $0x70] sm:$0xf]
      %v266 = vld [vmem:[%s226 + $0x74] sm:$0xf]
      %v267 = vld [vmem:[%s226 + $0x78] sm:$0xf]
      %v268 = vld [vmem:[%s226 + $0x7c] sm:$0xf]
      %v269 = vunpack.c.l.bf16 %v237
      %v270 = vunpack.c.l.bf16 %v238
      %v271 = vunpack.c.l.bf16 %v239
      %v272 = vunpack.c.l.bf16 %v240
      %v273 = vunpack.c.l.bf16 %v241
      %v274 = vunpack.c.l.bf16 %v242
      %v275 = vunpack.c.l.bf16 %v243
      %v276 = vunpack.c.l.bf16 %v244
      %v277 = vunpack.c.l.bf16 %v245
      %v278 = vunpack.c.l.bf16 %v246
      %v279 = vunpack.c.l.bf16 %v247
      %v280 = vunpack.c.l.bf16 %v248
      %v281 = vunpack.c.l.bf16 %v249
      %v282 = vunpack.c.l.bf16 %v250
      %v283 = vunpack.c.l.bf16 %v251
      %v284 = vunpack.c.l.bf16 %v252
      %v285 = vunpack.c.l.bf16 %v253
      %v286 = vunpack.c.l.bf16 %v254
      %v287 = vunpack.c.l.bf16 %v255
      %v288 = vunpack.c.l.bf16 %v256
      %v289 = vunpack.c.l.bf16 %v257
      %v290 = vunpack.c.l.bf16 %v258
      %v291 = vunpack.c.l.bf16 %v259
      %v292 = vunpack.c.l.bf16 %v260
      %v293 = vunpack.c.l.bf16 %v261
      %v294 = vunpack.c.l.bf16 %v262
      %v295 = vunpack.c.l.bf16 %v263
      %v296 = vunpack.c.l.bf16 %v264
      %v297 = vunpack.c.l.bf16 %v265
      %v298 = vunpack.c.l.bf16 %v266
      %v299 = vunpack.c.l.bf16 %v267
      %v300 = vunpack.c.l.bf16 %v268
      %v301 = vld [vmem:[%s2] sm:$0x1]
      %v303 = vlaneseq
      %v304 = vshrl.u32 %v303, 7
      %v305 = vsub.s32 0, %v304
      %v306 = vrot.slane %v301, %v305
      %v308 = vmul.f32 %v269, %v306
      %v309 = vmul.f32 %v270, %v306
      %v310 = vmul.f32 %v271, %v306
      %v311 = vmul.f32 %v272, %v306
      %v312 = vmul.f32 %v273, %v306
      %v313 = vmul.f32 %v274, %v306
      %v314 = vmul.f32 %v275, %v306
      %v315 = vmul.f32 %v276, %v306
      %v316 = vmul.f32 %v277, %v306
      %v317 = vmul.f32 %v278, %v306
      %v318 = vmul.f32 %v279, %v306
      %v319 = vmul.f32 %v280, %v306
      %v320 = vmul.f32 %v281, %v306
      %v321 = vmul.f32 %v282, %v306
      %v322 = vmul.f32 %v283, %v306
      %v323 = vmul.f32 %v284, %v306
      %v324 = vmul.f32 %v285, %v306
      %v325 = vmul.f32 %v286, %v306
      %v326 = vmul.f32 %v287, %v306
      %v327 = vmul.f32 %v288, %v306
      %v328 = vmul.f32 %v289, %v306
      %v329 = vmul.f32 %v290, %v306
      %v330 = vmul.f32 %v291, %v306
      %v331 = vmul.f32 %v292, %v306
      %v332 = vmul.f32 %v293, %v306
      %v333 = vmul.f32 %v294, %v306
      %v334 = vmul.f32 %v295, %v306
      %v335 = vmul.f32 %v296, %v306
      %v336 = vmul.f32 %v297, %v306
      %v337 = vmul.f32 %v298, %v306
      %v338 = vmul.f32 %v299, %v306
      %v339 = vmul.f32 %v300, %v306
      %v340 = vld [vmem:[%s3] sm:$0x1]
      %v342 = vlaneseq
      %v343 = vshrl.u32 %v342, 7
      %v344 = vsub.s32 0, %v343
      %v345 = vrot.slane %v340, %v344
      %v347 = vadd.f32 %v308, %v345
      %v348 = vadd.f32 %v309, %v345
      %v349 = vadd.f32 %v310, %v345
      %v350 = vadd.f32 %v311, %v345
      %v351 = vadd.f32 %v312, %v345
      %v352 = vadd.f32 %v313, %v345
      %v353 = vadd.f32 %v314, %v345
      %v354 = vadd.f32 %v315, %v345
      %v355 = vadd.f32 %v316, %v345
      %v356 = vadd.f32 %v317, %v345
      %v357 = vadd.f32 %v318, %v345
      %v358 = vadd.f32 %v319, %v345
      %v359 = vadd.f32 %v320, %v345
      %v360 = vadd.f32 %v321, %v345
      %v361 = vadd.f32 %v322, %v345
      %v362 = vadd.f32 %v323, %v345
      %v363 = vadd.f32 %v324, %v345
      %v364 = vadd.f32 %v325, %v345
      %v365 = vadd.f32 %v326, %v345
      %v366 = vadd.f32 %v327, %v345
      %v367 = vadd.f32 %v328, %v345
      %v368 = vadd.f32 %v329, %v345
      %v369 = vadd.f32 %v330, %v345
      %v370 = vadd.f32 %v331, %v345
      %v371 = vadd.f32 %v332, %v345
      %v372 = vadd.f32 %v333, %v345
      %v373 = vadd.f32 %v334, %v345
      %v374 = vadd.f32 %v335, %v345
      %v375 = vadd.f32 %v336, %v345
      %v376 = vadd.f32 %v337, %v345
      %v377 = vadd.f32 %v338, %v345
      %v378 = vadd.f32 %v339, %v345
      %v379 = vmax.f32 %v347, 0.0
      %v380 = vmax.f32 %v348, 0.0
      %v381 = vmax.f32 %v349, 0.0
      %v382 = vmax.f32 %v350, 0.0
      %v383 = vmax.f32 %v351, 0.0
      %v384 = vmax.f32 %v352, 0.0
      %v385 = vmax.f32 %v353, 0.0
      %v386 = vmax.f32 %v354, 0.0
      %v387 = vmax.f32 %v355, 0.0
      %v388 = vmax.f32 %v356, 0.0
      %v389 = vmax.f32 %v357, 0.0
      %v390 = vmax.f32 %v358, 0.0
      %v391 = vmax.f32 %v359, 0.0
      %v392 = vmax.f32 %v360, 0.0
      %v393 = vmax.f32 %v361, 0.0
      %v394 = vmax.f32 %v362, 0.0
      %v395 = vmax.f32 %v363, 0.0
      %v396 = vmax.f32 %v364, 0.0
      %v397 = vmax.f32 %v365, 0.0
      %v398 = vmax.f32 %v366, 0.0
      %v399 = vmax.f32 %v367, 0.0
      %v400 = vmax.f32 %v368, 0.0
      %v401 = vmax.f32 %v369, 0.0
      %v402 = vmax.f32 %v370, 0.0
      %v403 = vmax.f32 %v371, 0.0
      %v404 = vmax.f32 %v372, 0.0
      %v405 = vmax.f32 %v373, 0.0
      %v406 = vmax.f32 %v374, 0.0
      %v407 = vmax.f32 %v375, 0.0
      %v408 = vmax.f32 %v376, 0.0
      %v409 = vmax.f32 %v377, 0.0
      %v410 = vmax.f32 %v378, 0.0
      %v411 = vpack.c.bf16 %v380, %v379
      %v412 = vpack.c.bf16 %v382, %v381
      %v413 = vpack.c.bf16 %v384, %v383
      %v414 = vpack.c.bf16 %v386, %v385
      %v415 = vpack.c.bf16 %v388, %v387
      %v416 = vpack.c.bf16 %v390, %v389
      %v417 = vpack.c.bf16 %v392, %v391
      %v418 = vpack.c.bf16 %v394, %v393
      %v419 = vpack.c.bf16 %v396, %v395
      %v420 = vpack.c.bf16 %v398, %v397
      %v421 = vpack.c.bf16 %v400, %v399
      %v422 = vpack.c.bf16 %v402, %v401
      %v423 = vpack.c.bf16 %v404, %v403
      %v424 = vpack.c.bf16 %v406, %v405
      %v425 = vpack.c.bf16 %v408, %v407
      %v426 = vpack.c.bf16 %v410, %v409
      %v428 = vshrl.u32 0, 16
      %v430 = vrot.slane %v428, 7
      %v431 = vshll.u32 0, 16
      %v433 = vor.u32 %v430, %v431
      %v435 = vshrl.u32 %v411, 16
      %v437 = vrot.slane %v435, 7
      %v438 = vshll.u32 %v411, 16
      %v440 = vor.u32 %v437, %v438
      %v442 = vshrl.u32 %v412, 16
      %v444 = vrot.slane %v442, 7
      %v445 = vshll.u32 %v412, 16
      %v447 = vor.u32 %v444, %v445
      %v449 = vshrl.u32 %v413, 16
      %v451 = vrot.slane %v449, 7
      %v452 = vshll.u32 %v413, 16
      %v454 = vor.u32 %v451, %v452
      %v456 = vshrl.u32 %v414, 16
      %v458 = vrot.slane %v456, 7
      %v459 = vshll.u32 %v414, 16
      %v461 = vor.u32 %v458, %v459
      %v463 = vshrl.u32 %v415, 16
      %v465 = vrot.slane %v463, 7
      %v466 = vshll.u32 %v415, 16
      %v468 = vor.u32 %v465, %v466
      %v470 = vshrl.u32 %v416, 16
      %v472 = vrot.slane %v470, 7
      %v473 = vshll.u32 %v416, 16
      %v475 = vor.u32 %v472, %v473
      %v477 = vshrl.u32 %v417, 16
      %v479 = vrot.slane %v477, 7
      %v480 = vshll.u32 %v417, 16
      %v482 = vor.u32 %v479, %v480
      %v484 = vshrl.u32 %v418, 16
      %v486 = vrot.slane %v484, 7
      %v487 = vshll.u32 %v418, 16
      %v489 = vor.u32 %v486, %v487
      %v491 = vshrl.u32 %v419, 16
      %v493 = vrot.slane %v491, 7
      %v494 = vshll.u32 %v419, 16
      %v496 = vor.u32 %v493, %v494
      %v498 = vshrl.u32 %v420, 16
      %v500 = vrot.slane %v498, 7
      %v501 = vshll.u32 %v420, 16
      %v503 = vor.u32 %v500, %v501
      %v505 = vshrl.u32 %v421, 16
      %v507 = vrot.slane %v505, 7
      %v508 = vshll.u32 %v421, 16
      %v510 = vor.u32 %v507, %v508
      %v512 = vshrl.u32 %v422, 16
      %v514 = vrot.slane %v512, 7
      %v515 = vshll.u32 %v422, 16
      %v517 = vor.u32 %v514, %v515
      %v519 = vshrl.u32 %v423, 16
      %v521 = vrot.slane %v519, 7
      %v522 = vshll.u32 %v423, 16
      %v524 = vor.u32 %v521, %v522
      %v526 = vshrl.u32 %v424, 16
      %v528 = vrot.slane %v526, 7
      %v529 = vshll.u32 %v424, 16
      %v531 = vor.u32 %v528, %v529
      %v533 = vshrl.u32 %v425, 16
      %v535 = vrot.slane %v533, 7
      %v536 = vshll.u32 %v425, 16
      %v538 = vor.u32 %v535, %v536
      %v540 = vshrl.u32 %v426, 16
      %v542 = vrot.slane %v540, 7
      %v543 = vshll.u32 %v426, 16
      %v545 = vor.u32 %v542, %v543
      %vm580 = vcmask 1040384
      %vm581 = vsmask.f32 256
      %vm582 = vmand %vm580, %vm581
      %v583 = vsel %vm582, 0, %v433
      %v584 = vsel %vm582, 0, %v440
      %v585 = vsel %vm582, 0, %v447
      %v586 = vsel %vm582, 0, %v454
      %v587 = vsel %vm582, 0, %v461
      %v588 = vsel %vm582, 0, %v468
      %v589 = vsel %vm582, 0, %v475
      %v590 = vsel %vm582, 0, %v482
      %v591 = vsel %vm582, 0, %v489
      %v592 = vsel %vm582, 0, %v496
      %v593 = vsel %vm582, 0, %v503
      %v594 = vsel %vm582, 0, %v510
      %v595 = vsel %vm582, 0, %v517
      %v596 = vsel %vm582, 0, %v524
      %v597 = vsel %vm582, 0, %v531
      %v598 = vsel %vm582, 0, %v538
      %v599 = vsel %vm582, 0, %v545
      %v600 = vsel %vm582, %v430, 0
      %v601 = vsel %vm582, %v437, 0
      %v602 = vsel %vm582, %v444, 0
      %v603 = vsel %vm582, %v451, 0
      %v604 = vsel %vm582, %v458, 0
      %v605 = vsel %vm582, %v465, 0
      %v606 = vsel %vm582, %v472, 0
      %v607 = vsel %vm582, %v479, 0
      %v608 = vsel %vm582, %v486, 0
      %v609 = vsel %vm582, %v493, 0
      %v610 = vsel %vm582, %v500, 0
      %v611 = vsel %vm582, %v507, 0
      %v612 = vsel %vm582, %v514, 0
      %v613 = vsel %vm582, %v521, 0
      %v614 = vsel %vm582, %v528, 0
      %v615 = vsel %vm582, %v535, 0
      %v616 = vsel %vm582, %v542, 0
      %v617 = vld [vmem:[%s1] sm:$0xf]
      %v618 = vld [vmem:[%s1 + $0x4] sm:$0xf]
      %v619 = vld [vmem:[%s1 + $0x8] sm:$0xf]
      %v620 = vld [vmem:[%s1 + $0xc] sm:$0xf]
      %v621 = vld [vmem:[%s1 + $0x10] sm:$0xf]
      %v622 = vld [vmem:[%s1 + $0x14] sm:$0xf]
      %v623 = vld [vmem:[%s1 + $0x18] sm:$0xf]
      %v624 = vld [vmem:[%s1 + $0x1c] sm:$0xf]
      %v625 = vld [vmem:[%s1 + $0x20] sm:$0xf]
      %v626 = vld [vmem:[%s1 + $0x24] sm:$0xf]
      %v627 = vld [vmem:[%s1 + $0x28] sm:$0xf]
      %v628 = vld [vmem:[%s1 + $0x2c] sm:$0xf]
      %v629 = vld [vmem:[%s1 + $0x30] sm:$0xf]
      %v630 = vld [vmem:[%s1 + $0x34] sm:$0xf]
      %v631 = vld [vmem:[%s1 + $0x38] sm:$0xf]
      %v632 = vld [vmem:[%s1 + $0x3c] sm:$0xf]
      %vm633 = vsmask.f32 7424
      %v635 = vshrl.u32 %v583, 16
      %v637 = vshll.u32 %v583, 16
      %v639 = vrot.slane %v637, 1
      %v640 = vor.u32 %v635, %v639
      %v642 = vshll.u32 %v600, 16
      %v644 = vrot.slane %v642, 1
      %v645 = vsel %vm633, %v640, %v644
      %v647 = vshrl.u32 %v584, 16
      %v649 = vshll.u32 %v584, 16
      %v651 = vrot.slane %v649, 1
      %v652 = vor.u32 %v647, %v651
      %v654 = vshll.u32 %v601, 16
      %v656 = vrot.slane %v654, 1
      %v657 = vsel %vm633, %v652, %v656
      %v659 = vshrl.u32 %v585, 16
      %v661 = vshll.u32 %v585, 16
      %v663 = vrot.slane %v661, 1
      %v664 = vor.u32 %v659, %v663
      %v666 = vshll.u32 %v602, 16
      %v668 = vrot.slane %v666, 1
      %v669 = vsel %vm633, %v664, %v668
      %v671 = vshrl.u32 %v586, 16
      %v673 = vshll.u32 %v586, 16
      %v675 = vrot.slane %v673, 1
      %v676 = vor.u32 %v671, %v675
      %v678 = vshll.u32 %v603, 16
      %v680 = vrot.slane %v678, 1
      %v681 = vsel %vm633, %v676, %v680
      %v683 = vshrl.u32 %v587, 16
      %v685 = vshll.u32 %v587, 16
      %v687 = vrot.slane %v685, 1
      %v688 = vor.u32 %v683, %v687
      %v690 = vshll.u32 %v604, 16
      %v692 = vrot.slane %v690, 1
      %v693 = vsel %vm633, %v688, %v692
      %v695 = vshrl.u32 %v588, 16
      %v697 = vshll.u32 %v588, 16
      %v699 = vrot.slane %v697, 1
      %v700 = vor.u32 %v695, %v699
      %v702 = vshll.u32 %v605, 16
      %v704 = vrot.slane %v702, 1
      %v705 = vsel %vm633, %v700, %v704
      %v707 = vshrl.u32 %v589, 16
      %v709 = vshll.u32 %v589, 16
      %v711 = vrot.slane %v709, 1
      %v712 = vor.u32 %v707, %v711
      %v714 = vshll.u32 %v606, 16
      %v716 = vrot.slane %v714, 1
      %v717 = vsel %vm633, %v712, %v716
      %v719 = vshrl.u32 %v590, 16
      %v721 = vshll.u32 %v590, 16
      %v723 = vrot.slane %v721, 1
      %v724 = vor.u32 %v719, %v723
      %v726 = vshll.u32 %v607, 16
      %v728 = vrot.slane %v726, 1
      %v729 = vsel %vm633, %v724, %v728
      %v731 = vshrl.u32 %v591, 16
      %v733 = vshll.u32 %v591, 16
      %v735 = vrot.slane %v733, 1
      %v736 = vor.u32 %v731, %v735
      %v738 = vshll.u32 %v608, 16
      %v740 = vrot.slane %v738, 1
      %v741 = vsel %vm633, %v736, %v740
      %v743 = vshrl.u32 %v592, 16
      %v745 = vshll.u32 %v592, 16
      %v747 = vrot.slane %v745, 1
      %v748 = vor.u32 %v743, %v747
      %v750 = vshll.u32 %v609, 16
      %v752 = vrot.slane %v750, 1
      %v753 = vsel %vm633, %v748, %v752
      %v755 = vshrl.u32 %v593, 16
      %v757 = vshll.u32 %v593, 16
      %v759 = vrot.slane %v757, 1
      %v760 = vor.u32 %v755, %v759
      %v762 = vshll.u32 %v610, 16
      %v764 = vrot.slane %v762, 1
      %v765 = vsel %vm633, %v760, %v764
      %v767 = vshrl.u32 %v594, 16
      %v769 = vshll.u32 %v594, 16
      %v771 = vrot.slane %v769, 1
      %v772 = vor.u32 %v767, %v771
      %v774 = vshll.u32 %v611, 16
      %v776 = vrot.slane %v774, 1
      %v777 = vsel %vm633, %v772, %v776
      %v779 = vshrl.u32 %v595, 16
      %v781 = vshll.u32 %v595, 16
      %v783 = vrot.slane %v781, 1
      %v784 = vor.u32 %v779, %v783
      %v786 = vshll.u32 %v612, 16
      %v788 = vrot.slane %v786, 1
      %v789 = vsel %vm633, %v784, %v788
      %v791 = vshrl.u32 %v596, 16
      %v793 = vshll.u32 %v596, 16
      %v795 = vrot.slane %v793, 1
      %v796 = vor.u32 %v791, %v795
      %v798 = vshll.u32 %v613, 16
      %v800 = vrot.slane %v798, 1
      %v801 = vsel %vm633, %v796, %v800
      %v803 = vshrl.u32 %v597, 16
      %v805 = vshll.u32 %v597, 16
      %v807 = vrot.slane %v805, 1
      %v808 = vor.u32 %v803, %v807
      %v810 = vshll.u32 %v614, 16
      %v812 = vrot.slane %v810, 1
      %v813 = vsel %vm633, %v808, %v812
      %v815 = vshrl.u32 %v598, 16
      %v817 = vshll.u32 %v598, 16
      %v819 = vrot.slane %v817, 1
      %v820 = vor.u32 %v815, %v819
      %v822 = vshll.u32 %v615, 16
      %v824 = vrot.slane %v822, 1
      %v825 = vsel %vm633, %v820, %v824
      %s842 = scalar_lea.vmem %s1, 64
      %v843 = vld [vmem:[%s842] sm:$0xf]
      %v844 = vld [vmem:[%s842 + $0x4] sm:$0xf]
      %v845 = vld [vmem:[%s842 + $0x8] sm:$0xf]
      %v846 = vld [vmem:[%s842 + $0xc] sm:$0xf]
      %v847 = vld [vmem:[%s842 + $0x10] sm:$0xf]
      %v848 = vld [vmem:[%s842 + $0x14] sm:$0xf]
      %v849 = vld [vmem:[%s842 + $0x18] sm:$0xf]
      %v850 = vld [vmem:[%s842 + $0x1c] sm:$0xf]
      %v851 = vld [vmem:[%s842 + $0x20] sm:$0xf]
      %v852 = vld [vmem:[%s842 + $0x24] sm:$0xf]
      %v853 = vld [vmem:[%s842 + $0x28] sm:$0xf]
      %v854 = vld [vmem:[%s842 + $0x2c] sm:$0xf]
      %v855 = vld [vmem:[%s842 + $0x30] sm:$0xf]
      %v856 = vld [vmem:[%s842 + $0x34] sm:$0xf]
      %v857 = vld [vmem:[%s842 + $0x38] sm:$0xf]
      %v858 = vld [vmem:[%s842 + $0x3c] sm:$0xf]
      %v875 = vunpack.c.l.b16 %v843
      %v876 = vunpack.c.l.b16 %v844
      %v877 = vunpack.c.l.b16 %v845
      %v878 = vunpack.c.l.b16 %v846
      %v879 = vunpack.c.l.b16 %v847
      %v880 = vunpack.c.l.b16 %v848
      %v881 = vunpack.c.l.b16 %v849
      %v882 = vunpack.c.l.b16 %v850
      %v883 = vunpack.c.l.b16 %v851
      %v884 = vunpack.c.l.b16 %v852
      %v885 = vunpack.c.l.b16 %v853
      %v886 = vunpack.c.l.b16 %v854
      %v887 = vunpack.c.l.b16 %v855
      %v888 = vunpack.c.l.b16 %v856
      %v889 = vunpack.c.l.b16 %v857
      %v890 = vunpack.c.l.b16 %v858
      %v891 = vpack.c.b16 %v876, %v875
      %v892 = vpack.c.b16 %v878, %v877
      %v893 = vpack.c.b16 %v880, %v879
      %v894 = vpack.c.b16 %v882, %v881
      %v895 = vpack.c.b16 %v884, %v883
      %v896 = vpack.c.b16 %v886, %v885
      %v897 = vpack.c.b16 %v888, %v887
      %v898 = vpack.c.b16 %v890, %v889
      %907 = vmatprep.subr.bf16.mxu0 0
      %908 = vmatpush1.bf16.msra.mxu0 %v891
      %909 = vmatprep.subr.bf16.mxu0 0
      %910 = vmatpush1.bf16.msra.mxu0 %v892
      %911 = vmatprep.subr.bf16.mxu0 0
      %912 = vmatpush1.bf16.msra.mxu0 %v893
      %913 = vmatprep.subr.bf16.mxu0 0
      %914 = vmatpush1.bf16.msra.mxu0 %v894
      %915 = vmatprep.subr.bf16.mxu0 0
      %916 = vmatpush1.bf16.msra.mxu0 %v895
      %917 = vmatprep.subr.bf16.mxu0 0
      %918 = vmatpush1.bf16.msra.mxu0 %v896
      %919 = vmatprep.subr.bf16.mxu0 0
      %920 = vmatpush1.bf16.msra.mxu0 %v897
      %921 = vmatprep.subr.bf16.mxu0 0
      %922 = vmatpush1.bf16.msra.mxu0 %v898
      %923 = vmatprep.subr.bf16.mxu0 0
      %924 = vmatpush1.bf16.msra.mxu0 0
      %925 = vmatprep.subr.bf16.mxu0 0
      %926 = vmatpush1.bf16.msra.mxu0 0
      %927 = vmatprep.subr.bf16.mxu0 0
      %928 = vmatpush1.bf16.msra.mxu0 0
      %929 = vmatprep.subr.bf16.mxu0 0
      %930 = vmatpush1.bf16.msra.mxu0 0
      %931 = vmatprep.subr.bf16.mxu0 0
      %932 = vmatpush1.bf16.msra.mxu0 0
      %933 = vmatprep.subr.bf16.mxu0 0
      %934 = vmatpush1.bf16.msra.mxu0 0
      %935 = vmatprep.subr.bf16.mxu0 0
      %936 = vmatpush1.bf16.msra.mxu0 0
      %937 = vmatprep.subr.bf16.mxu0 0
      %938 = vmatpush1.bf16.msra.mxu0 0
      %939 = vmatprep.mubr.bf16.mxu0 0
      %940 = vmatmul.mubr.bf16.gmra.mrb[0].mxu0 %v645
      %v941 = vpop.f32.mrb[0].mxu0
      %v942 = vadd.f32 0.0, %v941
      %v943 = vpop.f32.mrb[0].mxu0
      %v944 = vpop.f32.mrb[0].mxu0
      %v945 = vadd.f32 0.0, %v944
      %v946 = vpop.f32.mrb[0].mxu0
      %947 = vmatprep.mubr.bf16.mxu0 0
      %948 = vmatmul.mubr.bf16.gmra.mrb[0].mxu0 %v657
      %v949 = vpop.f32.mrb[0].mxu0
      %v950 = vadd.f32 0.0, %v949
      %v951 = vpop.f32.mrb[0].mxu0
      %v952 = vpop.f32.mrb[0].mxu0
      %v953 = vadd.f32 0.0, %v952
      %v954 = vpop.f32.mrb[0].mxu0
      %955 = vmatprep.mubr.bf16.mxu0 0
      %956 = vmatmul.mubr.bf16.gmra.mrb[0].mxu0 %v669
      %v957 = vpop.f32.mrb[0].mxu0
      %v958 = vadd.f32 0.0, %v957
      %v959 = vpop.f32.mrb[0].mxu0
      %v960 = vpop.f32.mrb[0].mxu0
      %v961 = vadd.f32 0.0, %v960
      %v962 = vpop.f32.mrb[0].mxu0
      %963 = vmatprep.mubr.bf16.mxu0 0
      %964 = vmatmul.mubr.bf16.gmra.mrb[0].mxu0 %v681
      %v965 = vpop.f32.mrb[0].mxu0
      %v966 = vadd.f32 0.0, %v965
      %v967 = vpop.f32.mrb[0].mxu0
      %v968 = vpop.f32.mrb[0].mxu0
      %v969 = vadd.f32 0.0, %v968
      %v970 = vpop.f32.mrb[0].mxu0
      %971 = vmatprep.mubr.bf16.mxu0 0
      %972 = vmatmul.mubr.bf16.gmra.mrb[0].mxu0 %v693
      %v973 = vpop.f32.mrb[0].mxu0
      %v974 = vadd.f32 0.0, %v973
      %v975 = vpop.f32.mrb[0].mxu0
      %v976 = vpop.f32.mrb[0].mxu0
      %v977 = vadd.f32 0.0, %v976
      %v978 = vpop.f32.mrb[0].mxu0
      %979 = vmatprep.mubr.bf16.mxu0 0
      %980 = vmatmul.mubr.bf16.gmra.mrb[0].mxu0 %v705
      %v981 = vpop.f32.mrb[0].mxu0
      %v982 = vadd.f32 0.0, %v981
      %v983 = vpop.f32.mrb[0].mxu0
      %v984 = vpop.f32.mrb[0].mxu0
      %v985 = vadd.f32 0.0, %v984
      %v986 = vpop.f32.mrb[0].mxu0
      %987 = vmatprep.mubr.bf16.mxu0 0
      %988 = vmatmul.mubr.bf16.gmra.mrb[0].mxu0 %v717
      %v989 = vpop.f32.mrb[0].mxu0
      %v990 = vadd.f32 0.0, %v989
      %v991 = vpop.f32.mrb[0].mxu0
      %v992 = vpop.f32.mrb[0].mxu0
      %v993 = vadd.f32 0.0, %v992
      %v994 = vpop.f32.mrb[0].mxu0
      %995 = vmatprep.mubr.bf16.mxu0 0
      %996 = vmatmul.mubr.bf16.gmra.mrb[0].mxu0 %v729
      %v997 = vpop.f32.mrb[0].mxu0
      %v998 = vadd.f32 0.0, %v997
      %v999 = vpop.f32.mrb[0].mxu0
      %v1000 = vpop.f32.mrb[0].mxu0
      %v1001 = vadd.f32 0.0, %v1000
      %v1002 = vpop.f32.mrb[0].mxu0
      %1003 = vmatprep.mubr.bf16.mxu0 0
      %1004 = vmatmul.mubr.bf16.gmra.mrb[0].mxu0 %v741
      %v1005 = vpop.f32.mrb[0].mxu0
      %v1006 = vadd.f32 0.0, %v1005
      %v1007 = vpop.f32.mrb[0].mxu0
      %v1008 = vpop.f32.mrb[0].mxu0
      %v1009 = vadd.f32 0.0, %v1008
      %v1010 = vpop.f32.mrb[0].mxu0
      %1011 = vmatprep.mubr.bf16.mxu0 0
      %1012 = vmatmul.mubr.bf16.gmra.mrb[0].mxu0 %v753
      %v1013 = vpop.f32.mrb[0].mxu0
      %v1014 = vadd.f32 0.0, %v1013
      %v1015 = vpop.f32.mrb[0].mxu0
      %v1016 = vpop.f32.mrb[0].mxu0
      %v1017 = vadd.f32 0.0, %v1016
      %v1018 = vpop.f32.mrb[0].mxu0
      %1019 = vmatprep.mubr.bf16.mxu0 0
      %1020 = vmatmul.mubr.bf16.gmra.mrb[0].mxu0 %v765
      %v1021 = vpop.f32.mrb[0].mxu0
      %v1022 = vadd.f32 0.0, %v1021
      %v1023 = vpop.f32.mrb[0].mxu0
      %v1024 = vpop.f32.mrb[0].mxu0
      %v1025 = vadd.f32 0.0, %v1024
      %v1026 = vpop.f32.mrb[0].mxu0
      %1027 = vmatprep.mubr.bf16.mxu0 0
      %1028 = vmatmul.mubr.bf16.gmra.mrb[0].mxu0 %v777
      %v1029 = vpop.f32.mrb[0].mxu0
      %v1030 = vadd.f32 0.0, %v1029
      %v1031 = vpop.f32.mrb[0].mxu0
      %v1032 = vpop.f32.mrb[0].mxu0
      %v1033 = vadd.f32 0.0, %v1032
      %v1034 = vpop.f32.mrb[0].mxu0
      %1035 = vmatprep.mubr.bf16.mxu0 0
      %1036 = vmatmul.mubr.bf16.gmra.mrb[0].mxu0 %v789
      %v1037 = vpop.f32.mrb[0].mxu0
      %v1038 = vadd.f32 0.0, %v1037
      %v1039 = vpop.f32.mrb[0].mxu0
      %v1040 = vpop.f32.mrb[0].mxu0
      %v1041 = vadd.f32 0.0, %v1040
      %v1042 = vpop.f32.mrb[0].mxu0
      %1043 = vmatprep.mubr.bf16.mxu0 0
      %1044 = vmatmul.mubr.bf16.gmra.mrb[0].mxu0 %v801
      %v1045 = vpop.f32.mrb[0].mxu0
      %v1046 = vadd.f32 0.0, %v1045
      %v1047 = vpop.f32.mrb[0].mxu0
      %v1048 = vpop.f32.mrb[0].mxu0
      %v1049 = vadd.f32 0.0, %v1048
      %v1050 = vpop.f32.mrb[0].mxu0
      %1051 = vmatprep.mubr.bf16.mxu0 0
      %1052 = vmatmul.mubr.bf16.gmra.mrb[0].mxu0 %v813
      %v1053 = vpop.f32.mrb[0].mxu0
      %v1054 = vadd.f32 0.0, %v1053
      %v1055 = vpop.f32.mrb[0].mxu0
      %v1056 = vpop.f32.mrb[0].mxu0
      %v1057 = vadd.f32 0.0, %v1056
      %v1058 = vpop.f32.mrb[0].mxu0
      %1059 = vmatprep.mubr.bf16.mxu0 0
      %1060 = vmatmul.mubr.bf16.gmra.mrb[0].mxu0 %v825
      %v1061 = vpop.f32.mrb[0].mxu0
      %v1062 = vadd.f32 0.0, %v1061
      %v1063 = vpop.f32.mrb[0].mxu0
      %v1064 = vpop.f32.mrb[0].mxu0
      %v1065 = vadd.f32 0.0, %v1064
      %v1066 = vpop.f32.mrb[0].mxu0
      %1067 = vdwg.mxu0
      %v1084 = vunpack.c.l.b16 %v617
      %v1085 = vunpack.c.l.b16 %v618
      %v1086 = vunpack.c.l.b16 %v619
      %v1087 = vunpack.c.l.b16 %v620
      %v1088 = vunpack.c.l.b16 %v621
      %v1089 = vunpack.c.l.b16 %v622
      %v1090 = vunpack.c.l.b16 %v623
      %v1091 = vunpack.c.l.b16 %v624
      %v1092 = vunpack.c.l.b16 %v625
      %v1093 = vunpack.c.l.b16 %v626
      %v1094 = vunpack.c.l.b16 %v627
      %v1095 = vunpack.c.l.b16 %v628
      %v1096 = vunpack.c.l.b16 %v629
      %v1097 = vunpack.c.l.b16 %v630
      %v1098 = vunpack.c.l.b16 %v631
      %v1099 = vunpack.c.l.b16 %v632
      %v1100 = vpack.c.b16 %v1085, %v1084
      %v1101 = vpack.c.b16 %v1087, %v1086
      %v1102 = vpack.c.b16 %v1089, %v1088
      %v1103 = vpack.c.b16 %v1091, %v1090
      %v1104 = vpack.c.b16 %v1093, %v1092
      %v1105 = vpack.c.b16 %v1095, %v1094
      %v1106 = vpack.c.b16 %v1097, %v1096
      %v1107 = vpack.c.b16 %v1099, %v1098
      %1116 = vmatprep.subr.bf16.mxu0 0
      %1117 = vmatpush1.bf16.msra.mxu0 %v1100
      %1118 = vmatprep.subr.bf16.mxu0 0
      %1119 = vmatpush1.bf16.msra.mxu0 %v1101
      %1120 = vmatprep.subr.bf16.mxu0 0
      %1121 = vmatpush1.bf16.msra.mxu0 %v1102
      %1122 = vmatprep.subr.bf16.mxu0 0
      %1123 = vmatpush1.bf16.msra.mxu0 %v1103
      %1124 = vmatprep.subr.bf16.mxu0 0
      %1125 = vmatpush1.bf16.msra.mxu0 %v1104
      %1126 = vmatprep.subr.bf16.mxu0 0
      %1127 = vmatpush1.bf16.msra.mxu0 %v1105
      %1128 = vmatprep.subr.bf16.mxu0 0
      %1129 = vmatpush1.bf16.msra.mxu0 %v1106
      %1130 = vmatprep.subr.bf16.mxu0 0
      %1131 = vmatpush1.bf16.msra.mxu0 %v1107
      %1132 = vmatprep.subr.bf16.mxu0 0
      %1133 = vmatpush1.bf16.msra.mxu0 0
      %1134 = vmatprep.subr.bf16.mxu0 0
      %1135 = vmatpush1.bf16.msra.mxu0 0
      %1136 = vmatprep.subr.bf16.mxu0 0
      %1137 = vmatpush1.bf16.msra.mxu0 0
      %1138 = vmatprep.subr.bf16.mxu0 0
      %1139 = vmatpush1.bf16.msra.mxu0 0
      %1140 = vmatprep.subr.bf16.mxu0 0
      %1141 = vmatpush1.bf16.msra.mxu0 0
      %1142 = vmatprep.subr.bf16.mxu0 0
      %1143 = vmatpush1.bf16.msra.mxu0 0
      %1144 = vmatprep.subr.bf16.mxu0 0
      %1145 = vmatpush1.bf16.msra.mxu0 0
      %1146 = vmatprep.subr.bf16.mxu0 0
      %1147 = vmatpush1.bf16.msra.mxu0 0
      %1148 = vmatprep.mubr.bf16.mxu0 0
      %1149 = vmatmul.mubr.bf16.gmra.mrb[0].mxu0 %v583
      %v1150 = vpop.f32.mrb[0].mxu0
      %v1151 = vadd.f32 %v942, %v1150
      %v1152 = vpop.f32.mrb[0].mxu0
      %v1153 = vpop.f32.mrb[0].mxu0
      %v1154 = vadd.f32 %v945, %v1153
      %v1155 = vpop.f32.mrb[0].mxu0
      %1156 = vmatprep.mubr.bf16.mxu0 0
      %1157 = vmatmul.mubr.bf16.gmra.mrb[0].mxu0 %v584
      %v1158 = vpop.f32.mrb[0].mxu0
      %v1159 = vadd.f32 %v950, %v1158
      %v1160 = vpop.f32.mrb[0].mxu0
      %v1161 = vpop.f32.mrb[0].mxu0
      %v1162 = vadd.f32 %v953, %v1161
      %v1163 = vpop.f32.mrb[0].mxu0
      %1164 = vmatprep.mubr.bf16.mxu0 0
      %1165 = vmatmul.mubr.bf16.gmra.mrb[0].mxu0 %v585
      %v1166 = vpop.f32.mrb[0].mxu0
      %v1167 = vadd.f32 %v958, %v1166
      %v1168 = vpop.f32.mrb[0].mxu0
      %v1169 = vpop.f32.mrb[0].mxu0
      %v1170 = vadd.f32 %v961, %v1169
      %v1171 = vpop.f32.mrb[0].mxu0
      %1172 = vmatprep.mubr.bf16.mxu0 0
      %1173 = vmatmul.mubr.bf16.gmra.mrb[0].mxu0 %v586
      %v1174 = vpop.f32.mrb[0].mxu0
      %v1175 = vadd.f32 %v966, %v1174
      %v1176 = vpop.f32.mrb[0].mxu0
      %v1177 = vpop.f32.mrb[0].mxu0
      %v1178 = vadd.f32 %v969, %v1177
      %v1179 = vpop.f32.mrb[0].mxu0
      %1180 = vmatprep.mubr.bf16.mxu0 0
      %1181 = vmatmul.mubr.bf16.gmra.mrb[0].mxu0 %v587
      %v1182 = vpop.f32.mrb[0].mxu0
      %v1183 = vadd.f32 %v974, %v1182
      %v1184 = vpop.f32.mrb[0].mxu0
      %v1185 = vpop.f32.mrb[0].mxu0
      %v1186 = vadd.f32 %v977, %v1185
      %v1187 = vpop.f32.mrb[0].mxu0
      %1188 = vmatprep.mubr.bf16.mxu0 0
      %1189 = vmatmul.mubr.bf16.gmra.mrb[0].mxu0 %v588
      %v1190 = vpop.f32.mrb[0].mxu0
      %v1191 = vadd.f32 %v982, %v1190
      %v1192 = vpop.f32.mrb[0].mxu0
      %v1193 = vpop.f32.mrb[0].mxu0
      %v1194 = vadd.f32 %v985, %v1193
      %v1195 = vpop.f32.mrb[0].mxu0
      %1196 = vmatprep.mubr.bf16.mxu0 0
      %1197 = vmatmul.mubr.bf16.gmra.mrb[0].mxu0 %v589
      %v1198 = vpop.f32.mrb[0].mxu0
      %v1199 = vadd.f32 %v990, %v1198
      %v1200 = vpop.f32.mrb[0].mxu0
      %v1201 = vpop.f32.mrb[0].mxu0
      %v1202 = vadd.f32 %v993, %v1201
      %v1203 = vpop.f32.mrb[0].mxu0
      %1204 = vmatprep.mubr.bf16.mxu0 0
      %1205 = vmatmul.mubr.bf16.gmra.mrb[0].mxu0 %v590
      %v1206 = vpop.f32.mrb[0].mxu0
      %v1207 = vadd.f32 %v998, %v1206
      %v1208 = vpop.f32.mrb[0].mxu0
      %v1209 = vpop.f32.mrb[0].mxu0
      %v1210 = vadd.f32 %v1001, %v1209
      %v1211 = vpop.f32.mrb[0].mxu0
      %1212 = vmatprep.mubr.bf16.mxu0 0
      %1213 = vmatmul.mubr.bf16.gmra.mrb[0].mxu0 %v591
      %v1214 = vpop.f32.mrb[0].mxu0
      %v1215 = vadd.f32 %v1006, %v1214
      %v1216 = vpop.f32.mrb[0].mxu0
      %v1217 = vpop.f32.mrb[0].mxu0
      %v1218 = vadd.f32 %v1009, %v1217
      %v1219 = vpop.f32.mrb[0].mxu0
      %1220 = vmatprep.mubr.bf16.mxu0 0
      %1221 = vmatmul.mubr.bf16.gmra.mrb[0].mxu0 %v592
      %v1222 = vpop.f32.mrb[0].mxu0
      %v1223 = vadd.f32 %v1014, %v1222
      %v1224 = vpop.f32.mrb[0].mxu0
      %v1225 = vpop.f32.mrb[0].mxu0
      %v1226 = vadd.f32 %v1017, %v1225
      %v1227 = vpop.f32.mrb[0].mxu0
      %1228 = vmatprep.mubr.bf16.mxu0 0
      %1229 = vmatmul.mubr.bf16.gmra.mrb[0].mxu0 %v593
      %v1230 = vpop.f32.mrb[0].mxu0
      %v1231 = vadd.f32 %v1022, %v1230
      %v1232 = vpop.f32.mrb[0].mxu0
      %v1233 = vpop.f32.mrb[0].mxu0
      %v1234 = vadd.f32 %v1025, %v1233
      %v1235 = vpop.f32.mrb[0].mxu0
      %1236 = vmatprep.mubr.bf16.mxu0 0
      %1237 = vmatmul.mubr.bf16.gmra.mrb[0].mxu0 %v594
      %v1238 = vpop.f32.mrb[0].mxu0
      %v1239 = vadd.f32 %v1030, %v1238
      %v1240 = vpop.f32.mrb[0].mxu0
      %v1241 = vpop.f32.mrb[0].mxu0
      %v1242 = vadd.f32 %v1033, %v1241
      %v1243 = vpop.f32.mrb[0].mxu0
      %1244 = vmatprep.mubr.bf16.mxu0 0
      %1245 = vmatmul.mubr.bf16.gmra.mrb[0].mxu0 %v595
      %v1246 = vpop.f32.mrb[0].mxu0
      %v1247 = vadd.f32 %v1038, %v1246
      %v1248 = vpop.f32.mrb[0].mxu0
      %v1249 = vpop.f32.mrb[0].mxu0
      %v1250 = vadd.f32 %v1041, %v1249
      %v1251 = vpop.f32.mrb[0].mxu0
      %1252 = vmatprep.mubr.bf16.mxu0 0
      %1253 = vmatmul.mubr.bf16.gmra.mrb[0].mxu0 %v596
      %v1254 = vpop.f32.mrb[0].mxu0
      %v1255 = vadd.f32 %v1046, %v1254
      %v1256 = vpop.f32.mrb[0].mxu0
      %v1257 = vpop.f32.mrb[0].mxu0
      %v1258 = vadd.f32 %v1049, %v1257
      %v1259 = vpop.f32.mrb[0].mxu0
      %1260 = vmatprep.mubr.bf16.mxu0 0
      %1261 = vmatmul.mubr.bf16.gmra.mrb[0].mxu0 %v597
      %v1262 = vpop.f32.mrb[0].mxu0
      %v1263 = vadd.f32 %v1054, %v1262
      %v1264 = vpop.f32.mrb[0].mxu0
      %v1265 = vpop.f32.mrb[0].mxu0
      %v1266 = vadd.f32 %v1057, %v1265
      %v1267 = vpop.f32.mrb[0].mxu0
      %1268 = vmatprep.mubr.bf16.mxu0 0
      %1269 = vmatmul.mubr.bf16.gmra.mrb[0].mxu0 %v598
      %v1270 = vpop.f32.mrb[0].mxu0
      %v1271 = vadd.f32 %v1062, %v1270
      %v1272 = vpop.f32.mrb[0].mxu0
      %v1273 = vpop.f32.mrb[0].mxu0
      %v1274 = vadd.f32 %v1065, %v1273
      %v1275 = vpop.f32.mrb[0].mxu0
      %1276 = vdwg.mxu0
      %vm1309 = vcmask 1046528
      %v1310 = vrot.slane %v583, 1
      %v1311 = vrot.slane %v600, 1
      %v1312 = vsel %vm1309, %v1310, %v1311
      %v1313 = vrot.slane %v584, 1
      %v1314 = vrot.slane %v601, 1
      %v1315 = vsel %vm1309, %v1313, %v1314
      %v1316 = vrot.slane %v585, 1
      %v1317 = vrot.slane %v602, 1
      %v1318 = vsel %vm1309, %v1316, %v1317
      %v1319 = vrot.slane %v586, 1
      %v1320 = vrot.slane %v603, 1
      %v1321 = vsel %vm1309, %v1319, %v1320
      %v1322 = vrot.slane %v587, 1
      %v1323 = vrot.slane %v604, 1
      %v1324 = vsel %vm1309, %v1322, %v1323
      %v1325 = vrot.slane %v588, 1
      %v1326 = vrot.slane %v605, 1
      %v1327 = vsel %vm1309, %v1325, %v1326
      %v1328 = vrot.slane %v589, 1
      %v1329 = vrot.slane %v606, 1
      %v1330 = vsel %vm1309, %v1328, %v1329
      %v1331 = vrot.slane %v590, 1
      %v1332 = vrot.slane %v607, 1
      %v1333 = vsel %vm1309, %v1331, %v1332
      %v1334 = vrot.slane %v591, 1
      %v1335 = vrot.slane %v608, 1
      %v1336 = vsel %vm1309, %v1334, %v1335
      %v1337 = vrot.slane %v592, 1
      %v1338 = vrot.slane %v609, 1
      %v1339 = vsel %vm1309, %v1337, %v1338
      %v1340 = vrot.slane %v593, 1
      %v1341 = vrot.slane %v610, 1
      %v1342 = vsel %vm1309, %v1340, %v1341
      %v1343 = vrot.slane %v594, 1
      %v1344 = vrot.slane %v611, 1
      %v1345 = vsel %vm1309, %v1343, %v1344
      %v1346 = vrot.slane %v595, 1
      %v1347 = vrot.slane %v612, 1
      %v1348 = vsel %vm1309, %v1346, %v1347
      %v1349 = vrot.slane %v596, 1
      %v1350 = vrot.slane %v613, 1
      %v1351 = vsel %vm1309, %v1349, %v1350
      %v1352 = vrot.slane %v597, 1
      %v1353 = vrot.slane %v614, 1
      %v1354 = vsel %vm1309, %v1352, %v1353
      %v1355 = vrot.slane %v598, 1
      %v1356 = vrot.slane %v615, 1
      %v1357 = vsel %vm1309, %v1355, %v1356
      %s1374 = scalar_lea.vmem %s1, 128
      %v1375 = vld [vmem:[%s1374] sm:$0xf]
      %v1376 = vld [vmem:[%s1374 + $0x4] sm:$0xf]
      %v1377 = vld [vmem:[%s1374 + $0x8] sm:$0xf]
      %v1378 = vld [vmem:[%s1374 + $0xc] sm:$0xf]
      %v1379 = vld [vmem:[%s1374 + $0x10] sm:$0xf]
      %v1380 = vld [vmem:[%s1374 + $0x14] sm:$0xf]
      %v1381 = vld [vmem:[%s1374 + $0x18] sm:$0xf]
      %v1382 = vld [vmem:[%s1374 + $0x1c] sm:$0xf]
      %v1383 = vld [vmem:[%s1374 + $0x20] sm:$0xf]
      %v1384 = vld [vmem:[%s1374 + $0x24] sm:$0xf]
      %v1385 = vld [vmem:[%s1374 + $0x28] sm:$0xf]
      %v1386 = vld [vmem:[%s1374 + $0x2c] sm:$0xf]
      %v1387 = vld [vmem:[%s1374 + $0x30] sm:$0xf]
      %v1388 = vld [vmem:[%s1374 + $0x34] sm:$0xf]
      %v1389 = vld [vmem:[%s1374 + $0x38] sm:$0xf]
      %v1390 = vld [vmem:[%s1374 + $0x3c] sm:$0xf]
      %v1407 = vunpack.c.l.b16 %v1375
      %v1408 = vunpack.c.l.b16 %v1376
      %v1409 = vunpack.c.l.b16 %v1377
      %v1410 = vunpack.c.l.b16 %v1378
      %v1411 = vunpack.c.l.b16 %v1379
      %v1412 = vunpack.c.l.b16 %v1380
      %v1413 = vunpack.c.l.b16 %v1381
      %v1414 = vunpack.c.l.b16 %v1382
      %v1415 = vunpack.c.l.b16 %v1383
      %v1416 = vunpack.c.l.b16 %v1384
      %v1417 = vunpack.c.l.b16 %v1385
      %v1418 = vunpack.c.l.b16 %v1386
      %v1419 = vunpack.c.l.b16 %v1387
      %v1420 = vunpack.c.l.b16 %v1388
      %v1421 = vunpack.c.l.b16 %v1389
      %v1422 = vunpack.c.l.b16 %v1390
      %v1423 = vpack.c.b16 %v1408, %v1407
      %v1424 = vpack.c.b16 %v1410, %v1409
      %v1425 = vpack.c.b16 %v1412, %v1411
      %v1426 = vpack.c.b16 %v1414, %v1413
      %v1427 = vpack.c.b16 %v1416, %v1415
      %v1428 = vpack.c.b16 %v1418, %v1417
      %v1429 = vpack.c.b16 %v1420, %v1419
      %v1430 = vpack.c.b16 %v1422, %v1421
      %1439 = vmatprep.subr.bf16.mxu0 0
      %1440 = vmatpush1.bf16.msra.mxu0 %v1423
      %1441 = vmatprep.subr.bf16.mxu0 0
      %1442 = vmatpush1.bf16.msra.mxu0 %v1424
      %1443 = vmatprep.subr.bf16.mxu0 0
      %1444 = vmatpush1.bf16.msra.mxu0 %v1425
      %1445 = vmatprep.subr.bf16.mxu0 0
      %1446 = vmatpush1.bf16.msra.mxu0 %v1426
      %1447 = vmatprep.subr.bf16.mxu0 0
      %1448 = vmatpush1.bf16.msra.mxu0 %v1427
      %1449 = vmatprep.subr.bf16.mxu0 0
      %1450 = vmatpush1.bf16.msra.mxu0 %v1428
      %1451 = vmatprep.subr.bf16.mxu0 0
      %1452 = vmatpush1.bf16.msra.mxu0 %v1429
      %1453 = vmatprep.subr.bf16.mxu0 0
      %1454 = vmatpush1.bf16.msra.mxu0 %v1430
      %1455 = vmatprep.subr.bf16.mxu0 0
      %1456 = vmatpush1.bf16.msra.mxu0 0
      %1457 = vmatprep.subr.bf16.mxu0 0
      %1458 = vmatpush1.bf16.msra.mxu0 0
      %1459 = vmatprep.subr.bf16.mxu0 0
      %1460 = vmatpush1.bf16.msra.mxu0 0
      %1461 = vmatprep.subr.bf16.mxu0 0
      %1462 = vmatpush1.bf16.msra.mxu0 0
      %1463 = vmatprep.subr.bf16.mxu0 0
      %1464 = vmatpush1.bf16.msra.mxu0 0
      %1465 = vmatprep.subr.bf16.mxu0 0
      %1466 = vmatpush1.bf16.msra.mxu0 0
      %1467 = vmatprep.subr.bf16.mxu0 0
      %1468 = vmatpush1.bf16.msra.mxu0 0
      %1469 = vmatprep.subr.bf16.mxu0 0
      %1470 = vmatpush1.bf16.msra.mxu0 0
      %1471 = vmatprep.mubr.bf16.mxu0 0
      %1472 = vmatmul.mubr.bf16.gmra.mrb[0].mxu0 %v1312
      %v1473 = vpop.f32.mrb[0].mxu0
      %v1474 = vadd.f32 0.0, %v1473
      %v1475 = vpop.f32.mrb[0].mxu0
      %v1476 = vpop.f32.mrb[0].mxu0
      %v1477 = vadd.f32 0.0, %v1476
      %v1478 = vpop.f32.mrb[0].mxu0
      %1479 = vmatprep.mubr.bf16.mxu0 0
      %1480 = vmatmul.mubr.bf16.gmra.mrb[0].mxu0 %v1315
      %v1481 = vpop.f32.mrb[0].mxu0
      %v1482 = vadd.f32 0.0, %v1481
      %v1483 = vpop.f32.mrb[0].mxu0
      %v1484 = vpop.f32.mrb[0].mxu0
      %v1485 = vadd.f32 0.0, %v1484
      %v1486 = vpop.f32.mrb[0].mxu0
      %1487 = vmatprep.mubr.bf16.mxu0 0
      %1488 = vmatmul.mubr.bf16.gmra.mrb[0].mxu0 %v1318
      %v1489 = vpop.f32.mrb[0].mxu0
      %v1490 = vadd.f32 0.0, %v1489
      %v1491 = vpop.f32.mrb[0].mxu0
      %v1492 = vpop.f32.mrb[0].mxu0
      %v1493 = vadd.f32 0.0, %v1492
      %v1494 = vpop.f32.mrb[0].mxu0
      %1495 = vmatprep.mubr.bf16.mxu0 0
      %1496 = vmatmul.mubr.bf16.gmra.mrb[0].mxu0 %v1321
      %v1497 = vpop.f32.mrb[0].mxu0
      %v1498 = vadd.f32 0.0, %v1497
      %v1499 = vpop.f32.mrb[0].mxu0
      %v1500 = vpop.f32.mrb[0].mxu0
      %v1501 = vadd.f32 0.0, %v1500
      %v1502 = vpop.f32.mrb[0].mxu0
      %1503 = vmatprep.mubr.bf16.mxu0 0
      %1504 = vmatmul.mubr.bf16.gmra.mrb[0].mxu0 %v1324
      %v1505 = vpop.f32.mrb[0].mxu0
      %v1506 = vadd.f32 0.0, %v1505
      %v1507 = vpop.f32.mrb[0].mxu0
      %v1508 = vpop.f32.mrb[0].mxu0
      %v1509 = vadd.f32 0.0, %v1508
      %v1510 = vpop.f32.mrb[0].mxu0
      %1511 = vmatprep.mubr.bf16.mxu0 0
      %1512 = vmatmul.mubr.bf16.gmra.mrb[0].mxu0 %v1327
      %v1513 = vpop.f32.mrb[0].mxu0
      %v1514 = vadd.f32 0.0, %v1513
      %v1515 = vpop.f32.mrb[0].mxu0
      %v1516 = vpop.f32.mrb[0].mxu0
      %v1517 = vadd.f32 0.0, %v1516
      %v1518 = vpop.f32.mrb[0].mxu0
      %1519 = vmatprep.mubr.bf16.mxu0 0
      %1520 = vmatmul.mubr.bf16.gmra.mrb[0].mxu0 %v1330
      %v1521 = vpop.f32.mrb[0].mxu0
      %v1522 = vadd.f32 0.0, %v1521
      %v1523 = vpop.f32.mrb[0].mxu0
      %v1524 = vpop.f32.mrb[0].mxu0
      %v1525 = vadd.f32 0.0, %v1524
      %v1526 = vpop.f32.mrb[0].mxu0
      %1527 = vmatprep.mubr.bf16.mxu0 0
      %1528 = vmatmul.mubr.bf16.gmra.mrb[0].mxu0 %v1333
      %v1529 = vpop.f32.mrb[0].mxu0
      %v1530 = vadd.f32 0.0, %v1529
      %v1531 = vpop.f32.mrb[0].mxu0
      %v1532 = vpop.f32.mrb[0].mxu0
      %v1533 = vadd.f32 0.0, %v1532
      %v1534 = vpop.f32.mrb[0].mxu0
      %1535 = vmatprep.mubr.bf16.mxu0 0
      %1536 = vmatmul.mubr.bf16.gmra.mrb[0].mxu0 %v1336
      %v1537 = vpop.f32.mrb[0].mxu0
      %v1538 = vadd.f32 0.0, %v1537
      %v1539 = vpop.f32.mrb[0].mxu0
      %v1540 = vpop.f32.mrb[0].mxu0
      %v1541 = vadd.f32 0.0, %v1540
      %v1542 = vpop.f32.mrb[0].mxu0
      %1543 = vmatprep.mubr.bf16.mxu0 0
      %1544 = vmatmul.mubr.bf16.gmra.mrb[0].mxu0 %v1339
      %v1545 = vpop.f32.mrb[0].mxu0
      %v1546 = vadd.f32 0.0, %v1545
      %v1547 = vpop.f32.mrb[0].mxu0
      %v1548 = vpop.f32.mrb[0].mxu0
      %v1549 = vadd.f32 0.0, %v1548
      %v1550 = vpop.f32.mrb[0].mxu0
      %1551 = vmatprep.mubr.bf16.mxu0 0
      %1552 = vmatmul.mubr.bf16.gmra.mrb[0].mxu0 %v1342
      %v1553 = vpop.f32.mrb[0].mxu0
      %v1554 = vadd.f32 0.0, %v1553
      %v1555 = vpop.f32.mrb[0].mxu0
      %v1556 = vpop.f32.mrb[0].mxu0
      %v1557 = vadd.f32 0.0, %v1556
      %v1558 = vpop.f32.mrb[0].mxu0
      %1559 = vmatprep.mubr.bf16.mxu0 0
      %1560 = vmatmul.mubr.bf16.gmra.mrb[0].mxu0 %v1345
      %v1561 = vpop.f32.mrb[0].mxu0
      %v1562 = vadd.f32 0.0, %v1561
      %v1563 = vpop.f32.mrb[0].mxu0
      %v1564 = vpop.f32.mrb[0].mxu0
      %v1565 = vadd.f32 0.0, %v1564
      %v1566 = vpop.f32.mrb[0].mxu0
      %1567 = vmatprep.mubr.bf16.mxu0 0
      %1568 = vmatmul.mubr.bf16.gmra.mrb[0].mxu0 %v1348
      %v1569 = vpop.f32.mrb[0].mxu0
      %v1570 = vadd.f32 0.0, %v1569
      %v1571 = vpop.f32.mrb[0].mxu0
      %v1572 = vpop.f32.mrb[0].mxu0
      %v1573 = vadd.f32 0.0, %v1572
      %v1574 = vpop.f32.mrb[0].mxu0
      %1575 = vmatprep.mubr.bf16.mxu0 0
      %1576 = vmatmul.mubr.bf16.gmra.mrb[0].mxu0 %v1351
      %v1577 = vpop.f32.mrb[0].mxu0
      %v1578 = vadd.f32 0.0, %v1577
      %v1579 = vpop.f32.mrb[0].mxu0
      %v1580 = vpop.f32.mrb[0].mxu0
      %v1581 = vadd.f32 0.0, %v1580
      %v1582 = vpop.f32.mrb[0].mxu0
      %1583 = vmatprep.mubr.bf16.mxu0 0
      %1584 = vmatmul.mubr.bf16.gmra.mrb[0].mxu0 %v1354
      %v1585 = vpop.f32.mrb[0].mxu0
      %v1586 = vadd.f32 0.0, %v1585
      %v1587 = vpop.f32.mrb[0].mxu0
      %v1588 = vpop.f32.mrb[0].mxu0
      %v1589 = vadd.f32 0.0, %v1588
      %v1590 = vpop.f32.mrb[0].mxu0
      %1591 = vmatprep.mubr.bf16.mxu0 0
      %1592 = vmatmul.mubr.bf16.gmra.mrb[0].mxu0 %v1357
      %v1593 = vpop.f32.mrb[0].mxu0
      %v1594 = vadd.f32 0.0, %v1593
      %v1595 = vpop.f32.mrb[0].mxu0
      %v1596 = vpop.f32.mrb[0].mxu0
      %v1597 = vadd.f32 0.0, %v1596
      %v1598 = vpop.f32.mrb[0].mxu0
      %1599 = vdwg.mxu0
      %v1600 = vadd.f32 %v1151, %v1474
      %v1601 = vadd.f32 %v1154, %v1477
      %v1602 = vadd.f32 %v1159, %v1482
      %v1603 = vadd.f32 %v1162, %v1485
      %v1604 = vadd.f32 %v1167, %v1490
      %v1605 = vadd.f32 %v1170, %v1493
      %v1606 = vadd.f32 %v1175, %v1498
      %v1607 = vadd.f32 %v1178, %v1501
      %v1608 = vadd.f32 %v1183, %v1506
      %v1609 = vadd.f32 %v1186, %v1509
      %v1610 = vadd.f32 %v1191, %v1514
      %v1611 = vadd.f32 %v1194, %v1517
      %v1612 = vadd.f32 %v1199, %v1522
      %v1613 = vadd.f32 %v1202, %v1525
      %v1614 = vadd.f32 %v1207, %v1530
      %v1615 = vadd.f32 %v1210, %v1533
      %v1616 = vadd.f32 %v1215, %v1538
      %v1617 = vadd.f32 %v1218, %v1541
      %v1618 = vadd.f32 %v1223, %v1546
      %v1619 = vadd.f32 %v1226, %v1549
      %v1620 = vadd.f32 %v1231, %v1554
      %v1621 = vadd.f32 %v1234, %v1557
      %v1622 = vadd.f32 %v1239, %v1562
      %v1623 = vadd.f32 %v1242, %v1565
      %v1624 = vadd.f32 %v1247, %v1570
      %v1625 = vadd.f32 %v1250, %v1573
      %v1626 = vadd.f32 %v1255, %v1578
      %v1627 = vadd.f32 %v1258, %v1581
      %v1628 = vadd.f32 %v1263, %v1586
      %v1629 = vadd.f32 %v1266, %v1589
      %v1630 = vadd.f32 %v1271, %v1594
      %v1631 = vadd.f32 %v1274, %v1597
      %s1632 = scalar_lea.vmem %s1, 192
      %v1633 = vld [vmem:[%s1632] sm:$0xf]
      %v1634 = vld [vmem:[%s1632 + $0x4] sm:$0xf]
      %v1635 = vld [vmem:[%s1632 + $0x8] sm:$0xf]
      %v1636 = vld [vmem:[%s1632 + $0xc] sm:$0xf]
      %v1637 = vld [vmem:[%s1632 + $0x10] sm:$0xf]
      %v1638 = vld [vmem:[%s1632 + $0x14] sm:$0xf]
      %v1639 = vld [vmem:[%s1632 + $0x18] sm:$0xf]
      %v1640 = vld [vmem:[%s1632 + $0x1c] sm:$0xf]
      %v1641 = vld [vmem:[%s1632 + $0x20] sm:$0xf]
      %v1642 = vld [vmem:[%s1632 + $0x24] sm:$0xf]
      %v1643 = vld [vmem:[%s1632 + $0x28] sm:$0xf]
      %v1644 = vld [vmem:[%s1632 + $0x2c] sm:$0xf]
      %v1645 = vld [vmem:[%s1632 + $0x30] sm:$0xf]
      %v1646 = vld [vmem:[%s1632 + $0x34] sm:$0xf]
      %v1647 = vld [vmem:[%s1632 + $0x38] sm:$0xf]
      %v1648 = vld [vmem:[%s1632 + $0x3c] sm:$0xf]
      %v1665 = vunpack.c.l.b16 %v1633
      %v1666 = vunpack.c.l.b16 %v1634
      %v1667 = vunpack.c.l.b16 %v1635
      %v1668 = vunpack.c.l.b16 %v1636
      %v1669 = vunpack.c.l.b16 %v1637
      %v1670 = vunpack.c.l.b16 %v1638
      %v1671 = vunpack.c.l.b16 %v1639
      %v1672 = vunpack.c.l.b16 %v1640
      %v1673 = vunpack.c.l.b16 %v1641
      %v1674 = vunpack.c.l.b16 %v1642
      %v1675 = vunpack.c.l.b16 %v1643
      %v1676 = vunpack.c.l.b16 %v1644
      %v1677 = vunpack.c.l.b16 %v1645
      %v1678 = vunpack.c.l.b16 %v1646
      %v1679 = vunpack.c.l.b16 %v1647
      %v1680 = vunpack.c.l.b16 %v1648
      %v1681 = vpack.c.b16 %v1666, %v1665
      %v1682 = vpack.c.b16 %v1668, %v1667
      %v1683 = vpack.c.b16 %v1670, %v1669
      %v1684 = vpack.c.b16 %v1672, %v1671
      %v1685 = vpack.c.b16 %v1674, %v1673
      %v1686 = vpack.c.b16 %v1676, %v1675
      %v1687 = vpack.c.b16 %v1678, %v1677
      %v1688 = vpack.c.b16 %v1680, %v1679
      %1697 = vmatprep.subr.bf16.mxu0 0
      %1698 = vmatpush1.bf16.msra.mxu0 %v1681
      %1699 = vmatprep.subr.bf16.mxu0 0
      %1700 = vmatpush1.bf16.msra.mxu0 %v1682
      %1701 = vmatprep.subr.bf16.mxu0 0
      %1702 = vmatpush1.bf16.msra.mxu0 %v1683
      %1703 = vmatprep.subr.bf16.mxu0 0
      %1704 = vmatpush1.bf16.msra.mxu0 %v1684
      %1705 = vmatprep.subr.bf16.mxu0 0
      %1706 = vmatpush1.bf16.msra.mxu0 %v1685
      %1707 = vmatprep.subr.bf16.mxu0 0
      %1708 = vmatpush1.bf16.msra.mxu0 %v1686
      %1709 = vmatprep.subr.bf16.mxu0 0
      %1710 = vmatpush1.bf16.msra.mxu0 %v1687
      %1711 = vmatprep.subr.bf16.mxu0 0
      %1712 = vmatpush1.bf16.msra.mxu0 %v1688
      %1713 = vmatprep.subr.bf16.mxu0 0
      %1714 = vmatpush1.bf16.msra.mxu0 0
      %1715 = vmatprep.subr.bf16.mxu0 0
      %1716 = vmatpush1.bf16.msra.mxu0 0
      %1717 = vmatprep.subr.bf16.mxu0 0
      %1718 = vmatpush1.bf16.msra.mxu0 0
      %1719 = vmatprep.subr.bf16.mxu0 0
      %1720 = vmatpush1.bf16.msra.mxu0 0
      %1721 = vmatprep.subr.bf16.mxu0 0
      %1722 = vmatpush1.bf16.msra.mxu0 0
      %1723 = vmatprep.subr.bf16.mxu0 0
      %1724 = vmatpush1.bf16.msra.mxu0 0
      %1725 = vmatprep.subr.bf16.mxu0 0
      %1726 = vmatpush1.bf16.msra.mxu0 0
      %1727 = vmatprep.subr.bf16.mxu0 0
      %1728 = vmatpush1.bf16.msra.mxu0 0
      %1729 = vmatprep.mubr.bf16.mxu0 0
      %1730 = vmatmul.mubr.bf16.gmra.mrb[0].mxu0 %v584
      %v1731 = vpop.f32.mrb[0].mxu0
      %v1732 = vadd.f32 0.0, %v1731
      %v1733 = vpop.f32.mrb[0].mxu0
      %v1734 = vpop.f32.mrb[0].mxu0
      %v1735 = vadd.f32 0.0, %v1734
      %v1736 = vpop.f32.mrb[0].mxu0
      %1737 = vmatprep.mubr.bf16.mxu0 0
      %1738 = vmatmul.mubr.bf16.gmra.mrb[0].mxu0 %v585
      %v1739 = vpop.f32.mrb[0].mxu0
      %v1740 = vadd.f32 0.0, %v1739
      %v1741 = vpop.f32.mrb[0].mxu0
      %v1742 = vpop.f32.mrb[0].mxu0
      %v1743 = vadd.f32 0.0, %v1742
      %v1744 = vpop.f32.mrb[0].mxu0
      %1745 = vmatprep.mubr.bf16.mxu0 0
      %1746 = vmatmul.mubr.bf16.gmra.mrb[0].mxu0 %v586
      %v1747 = vpop.f32.mrb[0].mxu0
      %v1748 = vadd.f32 0.0, %v1747
      %v1749 = vpop.f32.mrb[0].mxu0
      %v1750 = vpop.f32.mrb[0].mxu0
      %v1751 = vadd.f32 0.0, %v1750
      %v1752 = vpop.f32.mrb[0].mxu0
      %1753 = vmatprep.mubr.bf16.mxu0 0
      %1754 = vmatmul.mubr.bf16.gmra.mrb[0].mxu0 %v587
      %v1755 = vpop.f32.mrb[0].mxu0
      %v1756 = vadd.f32 0.0, %v1755
      %v1757 = vpop.f32.mrb[0].mxu0
      %v1758 = vpop.f32.mrb[0].mxu0
      %v1759 = vadd.f32 0.0, %v1758
      %v1760 = vpop.f32.mrb[0].mxu0
      %1761 = vmatprep.mubr.bf16.mxu0 0
      %1762 = vmatmul.mubr.bf16.gmra.mrb[0].mxu0 %v588
      %v1763 = vpop.f32.mrb[0].mxu0
      %v1764 = vadd.f32 0.0, %v1763
      %v1765 = vpop.f32.mrb[0].mxu0
      %v1766 = vpop.f32.mrb[0].mxu0
      %v1767 = vadd.f32 0.0, %v1766
      %v1768 = vpop.f32.mrb[0].mxu0
      %1769 = vmatprep.mubr.bf16.mxu0 0
      %1770 = vmatmul.mubr.bf16.gmra.mrb[0].mxu0 %v589
      %v1771 = vpop.f32.mrb[0].mxu0
      %v1772 = vadd.f32 0.0, %v1771
      %v1773 = vpop.f32.mrb[0].mxu0
      %v1774 = vpop.f32.mrb[0].mxu0
      %v1775 = vadd.f32 0.0, %v1774
      %v1776 = vpop.f32.mrb[0].mxu0
      %1777 = vmatprep.mubr.bf16.mxu0 0
      %1778 = vmatmul.mubr.bf16.gmra.mrb[0].mxu0 %v590
      %v1779 = vpop.f32.mrb[0].mxu0
      %v1780 = vadd.f32 0.0, %v1779
      %v1781 = vpop.f32.mrb[0].mxu0
      %v1782 = vpop.f32.mrb[0].mxu0
      %v1783 = vadd.f32 0.0, %v1782
      %v1784 = vpop.f32.mrb[0].mxu0
      %1785 = vmatprep.mubr.bf16.mxu0 0
      %1786 = vmatmul.mubr.bf16.gmra.mrb[0].mxu0 %v591
      %v1787 = vpop.f32.mrb[0].mxu0
      %v1788 = vadd.f32 0.0, %v1787
      %v1789 = vpop.f32.mrb[0].mxu0
      %v1790 = vpop.f32.mrb[0].mxu0
      %v1791 = vadd.f32 0.0, %v1790
      %v1792 = vpop.f32.mrb[0].mxu0
      %1793 = vmatprep.mubr.bf16.mxu0 0
      %1794 = vmatmul.mubr.bf16.gmra.mrb[0].mxu0 %v592
      %v1795 = vpop.f32.mrb[0].mxu0
      %v1796 = vadd.f32 0.0, %v1795
      %v1797 = vpop.f32.mrb[0].mxu0
      %v1798 = vpop.f32.mrb[0].mxu0
      %v1799 = vadd.f32 0.0, %v1798
      %v1800 = vpop.f32.mrb[0].mxu0
      %1801 = vmatprep.mubr.bf16.mxu0 0
      %1802 = vmatmul.mubr.bf16.gmra.mrb[0].mxu0 %v593
      %v1803 = vpop.f32.mrb[0].mxu0
      %v1804 = vadd.f32 0.0, %v1803
      %v1805 = vpop.f32.mrb[0].mxu0
      %v1806 = vpop.f32.mrb[0].mxu0
      %v1807 = vadd.f32 0.0, %v1806
      %v1808 = vpop.f32.mrb[0].mxu0
      %1809 = vmatprep.mubr.bf16.mxu0 0
      %1810 = vmatmul.mubr.bf16.gmra.mrb[0].mxu0 %v594
      %v1811 = vpop.f32.mrb[0].mxu0
      %v1812 = vadd.f32 0.0, %v1811
      %v1813 = vpop.f32.mrb[0].mxu0
      %v1814 = vpop.f32.mrb[0].mxu0
      %v1815 = vadd.f32 0.0, %v1814
      %v1816 = vpop.f32.mrb[0].mxu0
      %1817 = vmatprep.mubr.bf16.mxu0 0
      %1818 = vmatmul.mubr.bf16.gmra.mrb[0].mxu0 %v595
      %v1819 = vpop.f32.mrb[0].mxu0
      %v1820 = vadd.f32 0.0, %v1819
      %v1821 = vpop.f32.mrb[0].mxu0
      %v1822 = vpop.f32.mrb[0].mxu0
      %v1823 = vadd.f32 0.0, %v1822
      %v1824 = vpop.f32.mrb[0].mxu0
      %1825 = vmatprep.mubr.bf16.mxu0 0
      %1826 = vmatmul.mubr.bf16.gmra.mrb[0].mxu0 %v596
      %v1827 = vpop.f32.mrb[0].mxu0
      %v1828 = vadd.f32 0.0, %v1827
      %v1829 = vpop.f32.mrb[0].mxu0
      %v1830 = vpop.f32.mrb[0].mxu0
      %v1831 = vadd.f32 0.0, %v1830
      %v1832 = vpop.f32.mrb[0].mxu0
      %1833 = vmatprep.mubr.bf16.mxu0 0
      %1834 = vmatmul.mubr.bf16.gmra.mrb[0].mxu0 %v597
      %v1835 = vpop.f32.mrb[0].mxu0
      %v1836 = vadd.f32 0.0, %v1835
      %v1837 = vpop.f32.mrb[0].mxu0
      %v1838 = vpop.f32.mrb[0].mxu0
      %v1839 = vadd.f32 0.0, %v1838
      %v1840 = vpop.f32.mrb[0].mxu0
      %1841 = vmatprep.mubr.bf16.mxu0 0
      %1842 = vmatmul.mubr.bf16.gmra.mrb[0].mxu0 %v598
      %v1843 = vpop.f32.mrb[0].mxu0
      %v1844 = vadd.f32 0.0, %v1843
      %v1845 = vpop.f32.mrb[0].mxu0
      %v1846 = vpop.f32.mrb[0].mxu0
      %v1847 = vadd.f32 0.0, %v1846
      %v1848 = vpop.f32.mrb[0].mxu0
      %1849 = vmatprep.mubr.bf16.mxu0 0
      %1850 = vmatmul.mubr.bf16.gmra.mrb[0].mxu0 %v599
      %v1851 = vpop.f32.mrb[0].mxu0
      %v1852 = vadd.f32 0.0, %v1851
      %v1853 = vpop.f32.mrb[0].mxu0
      %v1854 = vpop.f32.mrb[0].mxu0
      %v1855 = vadd.f32 0.0, %v1854
      %v1856 = vpop.f32.mrb[0].mxu0
      %1857 = vdwg.mxu0
      %v1858 = vadd.f32 %v1600, %v1732
      %v1859 = vadd.f32 %v1601, %v1735
      %v1860 = vadd.f32 %v1602, %v1740
      %v1861 = vadd.f32 %v1603, %v1743
      %v1862 = vadd.f32 %v1604, %v1748
      %v1863 = vadd.f32 %v1605, %v1751
      %v1864 = vadd.f32 %v1606, %v1756
      %v1865 = vadd.f32 %v1607, %v1759
      %v1866 = vadd.f32 %v1608, %v1764
      %v1867 = vadd.f32 %v1609, %v1767
      %v1868 = vadd.f32 %v1610, %v1772
      %v1869 = vadd.f32 %v1611, %v1775
      %v1870 = vadd.f32 %v1612, %v1780
      %v1871 = vadd.f32 %v1613, %v1783
      %v1872 = vadd.f32 %v1614, %v1788
      %v1873 = vadd.f32 %v1615, %v1791
      %v1874 = vadd.f32 %v1616, %v1796
      %v1875 = vadd.f32 %v1617, %v1799
      %v1876 = vadd.f32 %v1618, %v1804
      %v1877 = vadd.f32 %v1619, %v1807
      %v1878 = vadd.f32 %v1620, %v1812
      %v1879 = vadd.f32 %v1621, %v1815
      %v1880 = vadd.f32 %v1622, %v1820
      %v1881 = vadd.f32 %v1623, %v1823
      %v1882 = vadd.f32 %v1624, %v1828
      %v1883 = vadd.f32 %v1625, %v1831
      %v1884 = vadd.f32 %v1626, %v1836
      %v1885 = vadd.f32 %v1627, %v1839
      %v1886 = vadd.f32 %v1628, %v1844
      %v1887 = vadd.f32 %v1629, %v1847
      %v1888 = vadd.f32 %v1630, %v1852
      %v1889 = vadd.f32 %v1631, %v1855
      %v1891 = vshrl.u32 %v599, 16
      %v1893 = vshll.u32 %v599, 16
      %v1895 = vrot.slane %v1893, 1
      %v1896 = vor.u32 %v1891, %v1895
      %v1898 = vshll.u32 %v616, 16
      %v1900 = vrot.slane %v1898, 1
      %v1901 = vsel %vm633, %v1896, %v1900
      %s1903 = scalar_lea.vmem %s1, 256
      %v1904 = vld [vmem:[%s1903] sm:$0xf]
      %v1905 = vld [vmem:[%s1903 + $0x4] sm:$0xf]
      %v1906 = vld [vmem:[%s1903 + $0x8] sm:$0xf]
      %v1907 = vld [vmem:[%s1903 + $0xc] sm:$0xf]
      %v1908 = vld [vmem:[%s1903 + $0x10] sm:$0xf]
      %v1909 = vld [vmem:[%s1903 + $0x14] sm:$0xf]
      %v1910 = vld [vmem:[%s1903 + $0x18] sm:$0xf]
      %v1911 = vld [vmem:[%s1903 + $0x1c] sm:$0xf]
      %v1912 = vld [vmem:[%s1903 + $0x20] sm:$0xf]
      %v1913 = vld [vmem:[%s1903 + $0x24] sm:$0xf]
      %v1914 = vld [vmem:[%s1903 + $0x28] sm:$0xf]
      %v1915 = vld [vmem:[%s1903 + $0x2c] sm:$0xf]
      %v1916 = vld [vmem:[%s1903 + $0x30] sm:$0xf]
      %v1917 = vld [vmem:[%s1903 + $0x34] sm:$0xf]
      %v1918 = vld [vmem:[%s1903 + $0x38] sm:$0xf]
      %v1919 = vld [vmem:[%s1903 + $0x3c] sm:$0xf]
      %v1936 = vunpack.c.l.b16 %v1904
      %v1937 = vunpack.c.l.b16 %v1905
      %v1938 = vunpack.c.l.b16 %v1906
      %v1939 = vunpack.c.l.b16 %v1907
      %v1940 = vunpack.c.l.b16 %v1908
      %v1941 = vunpack.c.l.b16 %v1909
      %v1942 = vunpack.c.l.b16 %v1910
      %v1943 = vunpack.c.l.b16 %v1911
      %v1944 = vunpack.c.l.b16 %v1912
      %v1945 = vunpack.c.l.b16 %v1913
      %v1946 = vunpack.c.l.b16 %v1914
      %v1947 = vunpack.c.l.b16 %v1915
      %v1948 = vunpack.c.l.b16 %v1916
      %v1949 = vunpack.c.l.b16 %v1917
      %v1950 = vunpack.c.l.b16 %v1918
      %v1951 = vunpack.c.l.b16 %v1919
      %v1952 = vpack.c.b16 %v1937, %v1936
      %v1953 = vpack.c.b16 %v1939, %v1938
      %v1954 = vpack.c.b16 %v1941, %v1940
      %v1955 = vpack.c.b16 %v1943, %v1942
      %v1956 = vpack.c.b16 %v1945, %v1944
      %v1957 = vpack.c.b16 %v1947, %v1946
      %v1958 = vpack.c.b16 %v1949, %v1948
      %v1959 = vpack.c.b16 %v1951, %v1950
      %1968 = vmatprep.subr.bf16.mxu0 0
      %1969 = vmatpush1.bf16.msra.mxu0 %v1952
      %1970 = vmatprep.subr.bf16.mxu0 0
      %1971 = vmatpush1.bf16.msra.mxu0 %v1953
      %1972 = vmatprep.subr.bf16.mxu0 0
      %1973 = vmatpush1.bf16.msra.mxu0 %v1954
      %1974 = vmatprep.subr.bf16.mxu0 0
      %1975 = vmatpush1.bf16.msra.mxu0 %v1955
      %1976 = vmatprep.subr.bf16.mxu0 0
      %1977 = vmatpush1.bf16.msra.mxu0 %v1956
      %1978 = vmatprep.subr.bf16.mxu0 0
      %1979 = vmatpush1.bf16.msra.mxu0 %v1957
      %1980 = vmatprep.subr.bf16.mxu0 0
      %1981 = vmatpush1.bf16.msra.mxu0 %v1958
      %1982 = vmatprep.subr.bf16.mxu0 0
      %1983 = vmatpush1.bf16.msra.mxu0 %v1959
      %1984 = vmatprep.subr.bf16.mxu0 0
      %1985 = vmatpush1.bf16.msra.mxu0 0
      %1986 = vmatprep.subr.bf16.mxu0 0
      %1987 = vmatpush1.bf16.msra.mxu0 0
      %1988 = vmatprep.subr.bf16.mxu0 0
      %1989 = vmatpush1.bf16.msra.mxu0 0
      %1990 = vmatprep.subr.bf16.mxu0 0
      %1991 = vmatpush1.bf16.msra.mxu0 0
      %1992 = vmatprep.subr.bf16.mxu0 0
      %1993 = vmatpush1.bf16.msra.mxu0 0
      %1994 = vmatprep.subr.bf16.mxu0 0
      %1995 = vmatpush1.bf16.msra.mxu0 0
      %1996 = vmatprep.subr.bf16.mxu0 0
      %1997 = vmatpush1.bf16.msra.mxu0 0
      %1998 = vmatprep.subr.bf16.mxu0 0
      %1999 = vmatpush1.bf16.msra.mxu0 0
      %2000 = vmatprep.mubr.bf16.mxu0 0
      %2001 = vmatmul.mubr.bf16.gmra.mrb[0].mxu0 %v657
      %v2002 = vpop.f32.mrb[0].mxu0
      %v2003 = vadd.f32 0.0, %v2002
      %v2004 = vpop.f32.mrb[0].mxu0
      %v2005 = vpop.f32.mrb[0].mxu0
      %v2006 = vadd.f32 0.0, %v2005
      %v2007 = vpop.f32.mrb[0].mxu0
      %2008 = vmatprep.mubr.bf16.mxu0 0
      %2009 = vmatmul.mubr.bf16.gmra.mrb[0].mxu0 %v669
      %v2010 = vpop.f32.mrb[0].mxu0
      %v2011 = vadd.f32 0.0, %v2010
      %v2012 = vpop.f32.mrb[0].mxu0
      %v2013 = vpop.f32.mrb[0].mxu0
      %v2014 = vadd.f32 0.0, %v2013
      %v2015 = vpop.f32.mrb[0].mxu0
      %2016 = vmatprep.mubr.bf16.mxu0 0
      %2017 = vmatmul.mubr.bf16.gmra.mrb[0].mxu0 %v681
      %v2018 = vpop.f32.mrb[0].mxu0
      %v2019 = vadd.f32 0.0, %v2018
      %v2020 = vpop.f32.mrb[0].mxu0
      %v2021 = vpop.f32.mrb[0].mxu0
      %v2022 = vadd.f32 0.0, %v2021
      %v2023 = vpop.f32.mrb[0].mxu0
      %2024 = vmatprep.mubr.bf16.mxu0 0
      %2025 = vmatmul.mubr.bf16.gmra.mrb[0].mxu0 %v693
      %v2026 = vpop.f32.mrb[0].mxu0
      %v2027 = vadd.f32 0.0, %v2026
      %v2028 = vpop.f32.mrb[0].mxu0
      %v2029 = vpop.f32.mrb[0].mxu0
      %v2030 = vadd.f32 0.0, %v2029
      %v2031 = vpop.f32.mrb[0].mxu0
      %2032 = vmatprep.mubr.bf16.mxu0 0
      %2033 = vmatmul.mubr.bf16.gmra.mrb[0].mxu0 %v705
      %v2034 = vpop.f32.mrb[0].mxu0
      %v2035 = vadd.f32 0.0, %v2034
      %v2036 = vpop.f32.mrb[0].mxu0
      %v2037 = vpop.f32.mrb[0].mxu0
      %v2038 = vadd.f32 0.0, %v2037
      %v2039 = vpop.f32.mrb[0].mxu0
      %2040 = vmatprep.mubr.bf16.mxu0 0
      %2041 = vmatmul.mubr.bf16.gmra.mrb[0].mxu0 %v717
      %v2042 = vpop.f32.mrb[0].mxu0
      %v2043 = vadd.f32 0.0, %v2042
      %v2044 = vpop.f32.mrb[0].mxu0
      %v2045 = vpop.f32.mrb[0].mxu0
      %v2046 = vadd.f32 0.0, %v2045
      %v2047 = vpop.f32.mrb[0].mxu0
      %2048 = vmatprep.mubr.bf16.mxu0 0
      %2049 = vmatmul.mubr.bf16.gmra.mrb[0].mxu0 %v729
      %v2050 = vpop.f32.mrb[0].mxu0
      %v2051 = vadd.f32 0.0, %v2050
      %v2052 = vpop.f32.mrb[0].mxu0
      %v2053 = vpop.f32.mrb[0].mxu0
      %v2054 = vadd.f32 0.0, %v2053
      %v2055 = vpop.f32.mrb[0].mxu0
      %2056 = vmatprep.mubr.bf16.mxu0 0
      %2057 = vmatmul.mubr.bf16.gmra.mrb[0].mxu0 %v741
      %v2058 = vpop.f32.mrb[0].mxu0
      %v2059 = vadd.f32 0.0, %v2058
      %v2060 = vpop.f32.mrb[0].mxu0
      %v2061 = vpop.f32.mrb[0].mxu0
      %v2062 = vadd.f32 0.0, %v2061
      %v2063 = vpop.f32.mrb[0].mxu0
      %2064 = vmatprep.mubr.bf16.mxu0 0
      %2065 = vmatmul.mubr.bf16.gmra.mrb[0].mxu0 %v753
      %v2066 = vpop.f32.mrb[0].mxu0
      %v2067 = vadd.f32 0.0, %v2066
      %v2068 = vpop.f32.mrb[0].mxu0
      %v2069 = vpop.f32.mrb[0].mxu0
      %v2070 = vadd.f32 0.0, %v2069
      %v2071 = vpop.f32.mrb[0].mxu0
      %2072 = vmatprep.mubr.bf16.mxu0 0
      %2073 = vmatmul.mubr.bf16.gmra.mrb[0].mxu0 %v765
      %v2074 = vpop.f32.mrb[0].mxu0
      %v2075 = vadd.f32 0.0, %v2074
      %v2076 = vpop.f32.mrb[0].mxu0
      %v2077 = vpop.f32.mrb[0].mxu0
      %v2078 = vadd.f32 0.0, %v2077
      %v2079 = vpop.f32.mrb[0].mxu0
      %2080 = vmatprep.mubr.bf16.mxu0 0
      %2081 = vmatmul.mubr.bf16.gmra.mrb[0].mxu0 %v777
      %v2082 = vpop.f32.mrb[0].mxu0
      %v2083 = vadd.f32 0.0, %v2082
      %v2084 = vpop.f32.mrb[0].mxu0
      %v2085 = vpop.f32.mrb[0].mxu0
      %v2086 = vadd.f32 0.0, %v2085
      %v2087 = vpop.f32.mrb[0].mxu0
      %2088 = vmatprep.mubr.bf16.mxu0 0
      %2089 = vmatmul.mubr.bf16.gmra.mrb[0].mxu0 %v789
      %v2090 = vpop.f32.mrb[0].mxu0
      %v2091 = vadd.f32 0.0, %v2090
      %v2092 = vpop.f32.mrb[0].mxu0
      %v2093 = vpop.f32.mrb[0].mxu0
      %v2094 = vadd.f32 0.0, %v2093
      %v2095 = vpop.f32.mrb[0].mxu0
      %2096 = vmatprep.mubr.bf16.mxu0 0
      %2097 = vmatmul.mubr.bf16.gmra.mrb[0].mxu0 %v801
      %v2098 = vpop.f32.mrb[0].mxu0
      %v2099 = vadd.f32 0.0, %v2098
      %v2100 = vpop.f32.mrb[0].mxu0
      %v2101 = vpop.f32.mrb[0].mxu0
      %v2102 = vadd.f32 0.0, %v2101
      %v2103 = vpop.f32.mrb[0].mxu0
      %2104 = vmatprep.mubr.bf16.mxu0 0
      %2105 = vmatmul.mubr.bf16.gmra.mrb[0].mxu0 %v813
      %v2106 = vpop.f32.mrb[0].mxu0
      %v2107 = vadd.f32 0.0, %v2106
      %v2108 = vpop.f32.mrb[0].mxu0
      %v2109 = vpop.f32.mrb[0].mxu0
      %v2110 = vadd.f32 0.0, %v2109
      %v2111 = vpop.f32.mrb[0].mxu0
      %2112 = vmatprep.mubr.bf16.mxu0 0
      %2113 = vmatmul.mubr.bf16.gmra.mrb[0].mxu0 %v825
      %v2114 = vpop.f32.mrb[0].mxu0
      %v2115 = vadd.f32 0.0, %v2114
      %v2116 = vpop.f32.mrb[0].mxu0
      %v2117 = vpop.f32.mrb[0].mxu0
      %v2118 = vadd.f32 0.0, %v2117
      %v2119 = vpop.f32.mrb[0].mxu0
      %2120 = vmatprep.mubr.bf16.mxu0 0
      %2121 = vmatmul.mubr.bf16.gmra.mrb[0].mxu0 %v1901
      %v2122 = vpop.f32.mrb[0].mxu0
      %v2123 = vadd.f32 0.0, %v2122
      %v2124 = vpop.f32.mrb[0].mxu0
      %v2125 = vpop.f32.mrb[0].mxu0
      %v2126 = vadd.f32 0.0, %v2125
      %v2127 = vpop.f32.mrb[0].mxu0
      %2128 = vdwg.mxu0
      %v2129 = vadd.f32 %v1858, %v2003
      %v2130 = vadd.f32 %v1859, %v2006
      %v2131 = vadd.f32 %v1860, %v2011
      %v2132 = vadd.f32 %v1861, %v2014
      %v2133 = vadd.f32 %v1862, %v2019
      %v2134 = vadd.f32 %v1863, %v2022
      %v2135 = vadd.f32 %v1864, %v2027
      %v2136 = vadd.f32 %v1865, %v2030
      %v2137 = vadd.f32 %v1866, %v2035
      %v2138 = vadd.f32 %v1867, %v2038
      %v2139 = vadd.f32 %v1868, %v2043
      %v2140 = vadd.f32 %v1869, %v2046
      %v2141 = vadd.f32 %v1870, %v2051
      %v2142 = vadd.f32 %v1871, %v2054
      %v2143 = vadd.f32 %v1872, %v2059
      %v2144 = vadd.f32 %v1873, %v2062
      %v2145 = vadd.f32 %v1874, %v2067
      %v2146 = vadd.f32 %v1875, %v2070
      %v2147 = vadd.f32 %v1876, %v2075
      %v2148 = vadd.f32 %v1877, %v2078
      %v2149 = vadd.f32 %v1878, %v2083
      %v2150 = vadd.f32 %v1879, %v2086
      %v2151 = vadd.f32 %v1880, %v2091
      %v2152 = vadd.f32 %v1881, %v2094
      %v2153 = vadd.f32 %v1882, %v2099
      %v2154 = vadd.f32 %v1883, %v2102
      %v2155 = vadd.f32 %v1884, %v2107
      %v2156 = vadd.f32 %v1885, %v2110
      %v2157 = vadd.f32 %v1886, %v2115
      %v2158 = vadd.f32 %v1887, %v2118
      %v2159 = vadd.f32 %v1888, %v2123
      %v2160 = vadd.f32 %v1889, %v2126
      %v2163 = vrot.slane %v599, 1
      %v2164 = vrot.slane %v616, 1
      %v2165 = vsel %vm1309, %v2163, %v2164
      %s2167 = scalar_lea.vmem %s1, 320
      %v2168 = vld [vmem:[%s2167] sm:$0xf]
      %v2169 = vld [vmem:[%s2167 + $0x4] sm:$0xf]
      %v2170 = vld [vmem:[%s2167 + $0x8] sm:$0xf]
      %v2171 = vld [vmem:[%s2167 + $0xc] sm:$0xf]
      %v2172 = vld [vmem:[%s2167 + $0x10] sm:$0xf]
      %v2173 = vld [vmem:[%s2167 + $0x14] sm:$0xf]
      %v2174 = vld [vmem:[%s2167 + $0x18] sm:$0xf]
      %v2175 = vld [vmem:[%s2167 + $0x1c] sm:$0xf]
      %v2176 = vld [vmem:[%s2167 + $0x20] sm:$0xf]
      %v2177 = vld [vmem:[%s2167 + $0x24] sm:$0xf]
      %v2178 = vld [vmem:[%s2167 + $0x28] sm:$0xf]
      %v2179 = vld [vmem:[%s2167 + $0x2c] sm:$0xf]
      %v2180 = vld [vmem:[%s2167 + $0x30] sm:$0xf]
      %v2181 = vld [vmem:[%s2167 + $0x34] sm:$0xf]
      %v2182 = vld [vmem:[%s2167 + $0x38] sm:$0xf]
      %v2183 = vld [vmem:[%s2167 + $0x3c] sm:$0xf]
      %v2200 = vunpack.c.l.b16 %v2168
      %v2201 = vunpack.c.l.b16 %v2169
      %v2202 = vunpack.c.l.b16 %v2170
      %v2203 = vunpack.c.l.b16 %v2171
      %v2204 = vunpack.c.l.b16 %v2172
      %v2205 = vunpack.c.l.b16 %v2173
      %v2206 = vunpack.c.l.b16 %v2174
      %v2207 = vunpack.c.l.b16 %v2175
      %v2208 = vunpack.c.l.b16 %v2176
      %v2209 = vunpack.c.l.b16 %v2177
      %v2210 = vunpack.c.l.b16 %v2178
      %v2211 = vunpack.c.l.b16 %v2179
      %v2212 = vunpack.c.l.b16 %v2180
      %v2213 = vunpack.c.l.b16 %v2181
      %v2214 = vunpack.c.l.b16 %v2182
      %v2215 = vunpack.c.l.b16 %v2183
      %v2216 = vpack.c.b16 %v2201, %v2200
      %v2217 = vpack.c.b16 %v2203, %v2202
      %v2218 = vpack.c.b16 %v2205, %v2204
      %v2219 = vpack.c.b16 %v2207, %v2206
      %v2220 = vpack.c.b16 %v2209, %v2208
      %v2221 = vpack.c.b16 %v2211, %v2210
      %v2222 = vpack.c.b16 %v2213, %v2212
      %v2223 = vpack.c.b16 %v2215, %v2214
      %2232 = vmatprep.subr.bf16.mxu0 0
      %2233 = vmatpush1.bf16.msra.mxu0 %v2216
      %2234 = vmatprep.subr.bf16.mxu0 0
      %2235 = vmatpush1.bf16.msra.mxu0 %v2217
      %2236 = vmatprep.subr.bf16.mxu0 0
      %2237 = vmatpush1.bf16.msra.mxu0 %v2218
      %2238 = vmatprep.subr.bf16.mxu0 0
      %2239 = vmatpush1.bf16.msra.mxu0 %v2219
      %2240 = vmatprep.subr.bf16.mxu0 0
      %2241 = vmatpush1.bf16.msra.mxu0 %v2220
      %2242 = vmatprep.subr.bf16.mxu0 0
      %2243 = vmatpush1.bf16.msra.mxu0 %v2221
      %2244 = vmatprep.subr.bf16.mxu0 0
      %2245 = vmatpush1.bf16.msra.mxu0 %v2222
      %2246 = vmatprep.subr.bf16.mxu0 0
      %2247 = vmatpush1.bf16.msra.mxu0 %v2223
      %2248 = vmatprep.subr.bf16.mxu0 0
      %2249 = vmatpush1.bf16.msra.mxu0 0
      %2250 = vmatprep.subr.bf16.mxu0 0
      %2251 = vmatpush1.bf16.msra.mxu0 0
      %2252 = vmatprep.subr.bf16.mxu0 0
      %2253 = vmatpush1.bf16.msra.mxu0 0
      %2254 = vmatprep.subr.bf16.mxu0 0
      %2255 = vmatpush1.bf16.msra.mxu0 0
      %2256 = vmatprep.subr.bf16.mxu0 0
      %2257 = vmatpush1.bf16.msra.mxu0 0
      %2258 = vmatprep.subr.bf16.mxu0 0
      %2259 = vmatpush1.bf16.msra.mxu0 0
      %2260 = vmatprep.subr.bf16.mxu0 0
      %2261 = vmatpush1.bf16.msra.mxu0 0
      %2262 = vmatprep.subr.bf16.mxu0 0
      %2263 = vmatpush1.bf16.msra.mxu0 0
      %2264 = vmatprep.mubr.bf16.mxu0 0
      %2265 = vmatmul.mubr.bf16.gmra.mrb[0].mxu0 %v1315
      %v2266 = vpop.f32.mrb[0].mxu0
      %v2267 = vadd.f32 0.0, %v2266
      %v2268 = vpop.f32.mrb[0].mxu0
      %v2269 = vpop.f32.mrb[0].mxu0
      %v2270 = vadd.f32 0.0, %v2269
      %v2271 = vpop.f32.mrb[0].mxu0
      %2272 = vmatprep.mubr.bf16.mxu0 0
      %2273 = vmatmul.mubr.bf16.gmra.mrb[0].mxu0 %v1318
      %v2274 = vpop.f32.mrb[0].mxu0
      %v2275 = vadd.f32 0.0, %v2274
      %v2276 = vpop.f32.mrb[0].mxu0
      %v2277 = vpop.f32.mrb[0].mxu0
      %v2278 = vadd.f32 0.0, %v2277
      %v2279 = vpop.f32.mrb[0].mxu0
      %2280 = vmatprep.mubr.bf16.mxu0 0
      %2281 = vmatmul.mubr.bf16.gmra.mrb[0].mxu0 %v1321
      %v2282 = vpop.f32.mrb[0].mxu0
      %v2283 = vadd.f32 0.0, %v2282
      %v2284 = vpop.f32.mrb[0].mxu0
      %v2285 = vpop.f32.mrb[0].mxu0
      %v2286 = vadd.f32 0.0, %v2285
      %v2287 = vpop.f32.mrb[0].mxu0
      %2288 = vmatprep.mubr.bf16.mxu0 0
      %2289 = vmatmul.mubr.bf16.gmra.mrb[0].mxu0 %v1324
      %v2290 = vpop.f32.mrb[0].mxu0
      %v2291 = vadd.f32 0.0, %v2290
      %v2292 = vpop.f32.mrb[0].mxu0
      %v2293 = vpop.f32.mrb[0].mxu0
      %v2294 = vadd.f32 0.0, %v2293
      %v2295 = vpop.f32.mrb[0].mxu0
      %2296 = vmatprep.mubr.bf16.mxu0 0
      %2297 = vmatmul.mubr.bf16.gmra.mrb[0].mxu0 %v1327
      %v2298 = vpop.f32.mrb[0].mxu0
      %v2299 = vadd.f32 0.0, %v2298
      %v2300 = vpop.f32.mrb[0].mxu0
      %v2301 = vpop.f32.mrb[0].mxu0
      %v2302 = vadd.f32 0.0, %v2301
      %v2303 = vpop.f32.mrb[0].mxu0
      %2304 = vmatprep.mubr.bf16.mxu0 0
      %2305 = vmatmul.mubr.bf16.gmra.mrb[0].mxu0 %v1330
      %v2306 = vpop.f32.mrb[0].mxu0
      %v2307 = vadd.f32 0.0, %v2306
      %v2308 = vpop.f32.mrb[0].mxu0
      %v2309 = vpop.f32.mrb[0].mxu0
      %v2310 = vadd.f32 0.0, %v2309
      %v2311 = vpop.f32.mrb[0].mxu0
      %2312 = vmatprep.mubr.bf16.mxu0 0
      %2313 = vmatmul.mubr.bf16.gmra.mrb[0].mxu0 %v1333
      %v2314 = vpop.f32.mrb[0].mxu0
      %v2315 = vadd.f32 0.0, %v2314
      %v2316 = vpop.f32.mrb[0].mxu0
      %v2317 = vpop.f32.mrb[0].mxu0
      %v2318 = vadd.f32 0.0, %v2317
      %v2319 = vpop.f32.mrb[0].mxu0
      %2320 = vmatprep.mubr.bf16.mxu0 0
      %2321 = vmatmul.mubr.bf16.gmra.mrb[0].mxu0 %v1336
      %v2322 = vpop.f32.mrb[0].mxu0
      %v2323 = vadd.f32 0.0, %v2322
      %v2324 = vpop.f32.mrb[0].mxu0
      %v2325 = vpop.f32.mrb[0].mxu0
      %v2326 = vadd.f32 0.0, %v2325
      %v2327 = vpop.f32.mrb[0].mxu0
      %2328 = vmatprep.mubr.bf16.mxu0 0
      %2329 = vmatmul.mubr.bf16.gmra.mrb[0].mxu0 %v1339
      %v2330 = vpop.f32.mrb[0].mxu0
      %v2331 = vadd.f32 0.0, %v2330
      %v2332 = vpop.f32.mrb[0].mxu0
      %v2333 = vpop.f32.mrb[0].mxu0
      %v2334 = vadd.f32 0.0, %v2333
      %v2335 = vpop.f32.mrb[0].mxu0
      %2336 = vmatprep.mubr.bf16.mxu0 0
      %2337 = vmatmul.mubr.bf16.gmra.mrb[0].mxu0 %v1342
      %v2338 = vpop.f32.mrb[0].mxu0
      %v2339 = vadd.f32 0.0, %v2338
      %v2340 = vpop.f32.mrb[0].mxu0
      %v2341 = vpop.f32.mrb[0].mxu0
      %v2342 = vadd.f32 0.0, %v2341
      %v2343 = vpop.f32.mrb[0].mxu0
      %2344 = vmatprep.mubr.bf16.mxu0 0
      %2345 = vmatmul.mubr.bf16.gmra.mrb[0].mxu0 %v1345
      %v2346 = vpop.f32.mrb[0].mxu0
      %v2347 = vadd.f32 0.0, %v2346
      %v2348 = vpop.f32.mrb[0].mxu0
      %v2349 = vpop.f32.mrb[0].mxu0
      %v2350 = vadd.f32 0.0, %v2349
      %v2351 = vpop.f32.mrb[0].mxu0
      %2352 = vmatprep.mubr.bf16.mxu0 0
      %2353 = vmatmul.mubr.bf16.gmra.mrb[0].mxu0 %v1348
      %v2354 = vpop.f32.mrb[0].mxu0
      %v2355 = vadd.f32 0.0, %v2354
      %v2356 = vpop.f32.mrb[0].mxu0
      %v2357 = vpop.f32.mrb[0].mxu0
      %v2358 = vadd.f32 0.0, %v2357
      %v2359 = vpop.f32.mrb[0].mxu0
      %2360 = vmatprep.mubr.bf16.mxu0 0
      %2361 = vmatmul.mubr.bf16.gmra.mrb[0].mxu0 %v1351
      %v2362 = vpop.f32.mrb[0].mxu0
      %v2363 = vadd.f32 0.0, %v2362
      %v2364 = vpop.f32.mrb[0].mxu0
      %v2365 = vpop.f32.mrb[0].mxu0
      %v2366 = vadd.f32 0.0, %v2365
      %v2367 = vpop.f32.mrb[0].mxu0
      %2368 = vmatprep.mubr.bf16.mxu0 0
      %2369 = vmatmul.mubr.bf16.gmra.mrb[0].mxu0 %v1354
      %v2370 = vpop.f32.mrb[0].mxu0
      %v2371 = vadd.f32 0.0, %v2370
      %v2372 = vpop.f32.mrb[0].mxu0
      %v2373 = vpop.f32.mrb[0].mxu0
      %v2374 = vadd.f32 0.0, %v2373
      %v2375 = vpop.f32.mrb[0].mxu0
      %2376 = vmatprep.mubr.bf16.mxu0 0
      %2377 = vmatmul.mubr.bf16.gmra.mrb[0].mxu0 %v1357
      %v2378 = vpop.f32.mrb[0].mxu0
      %v2379 = vadd.f32 0.0, %v2378
      %v2380 = vpop.f32.mrb[0].mxu0
      %v2381 = vpop.f32.mrb[0].mxu0
      %v2382 = vadd.f32 0.0, %v2381
      %v2383 = vpop.f32.mrb[0].mxu0
      %2384 = vmatprep.mubr.bf16.mxu0 0
      %2385 = vmatmul.mubr.bf16.gmra.mrb[0].mxu0 %v2165
      %v2386 = vpop.f32.mrb[0].mxu0
      %v2387 = vadd.f32 0.0, %v2386
      %v2388 = vpop.f32.mrb[0].mxu0
      %v2389 = vpop.f32.mrb[0].mxu0
      %v2390 = vadd.f32 0.0, %v2389
      %v2391 = vpop.f32.mrb[0].mxu0
      %2392 = vdwg.mxu0
      %v2393 = vadd.f32 %v2129, %v2267
      %v2394 = vadd.f32 %v2130, %v2270
      %v2395 = vadd.f32 %v2131, %v2275
      %v2396 = vadd.f32 %v2132, %v2278
      %v2397 = vadd.f32 %v2133, %v2283
      %v2398 = vadd.f32 %v2134, %v2286
      %v2399 = vadd.f32 %v2135, %v2291
      %v2400 = vadd.f32 %v2136, %v2294
      %v2401 = vadd.f32 %v2137, %v2299
      %v2402 = vadd.f32 %v2138, %v2302
      %v2403 = vadd.f32 %v2139, %v2307
      %v2404 = vadd.f32 %v2140, %v2310
      %v2405 = vadd.f32 %v2141, %v2315
      %v2406 = vadd.f32 %v2142, %v2318
      %v2407 = vadd.f32 %v2143, %v2323
      %v2408 = vadd.f32 %v2144, %v2326
      %v2409 = vadd.f32 %v2145, %v2331
      %v2410 = vadd.f32 %v2146, %v2334
      %v2411 = vadd.f32 %v2147, %v2339
      %v2412 = vadd.f32 %v2148, %v2342
      %v2413 = vadd.f32 %v2149, %v2347
      %v2414 = vadd.f32 %v2150, %v2350
      %v2415 = vadd.f32 %v2151, %v2355
      %v2416 = vadd.f32 %v2152, %v2358
      %v2417 = vadd.f32 %v2153, %v2363
      %v2418 = vadd.f32 %v2154, %v2366
      %v2419 = vadd.f32 %v2155, %v2371
      %v2420 = vadd.f32 %v2156, %v2374
      %v2421 = vadd.f32 %v2157, %v2379
      %v2422 = vadd.f32 %v2158, %v2382
      %v2423 = vadd.f32 %v2159, %v2387
      %v2424 = vadd.f32 %v2160, %v2390
      %s2425 = scalar_lea.vmem %s1, 384
      %v2426 = vld [vmem:[%s2425] sm:$0xf]
      %v2427 = vld [vmem:[%s2425 + $0x4] sm:$0xf]
      %v2428 = vld [vmem:[%s2425 + $0x8] sm:$0xf]
      %v2429 = vld [vmem:[%s2425 + $0xc] sm:$0xf]
      %v2430 = vld [vmem:[%s2425 + $0x10] sm:$0xf]
      %v2431 = vld [vmem:[%s2425 + $0x14] sm:$0xf]
      %v2432 = vld [vmem:[%s2425 + $0x18] sm:$0xf]
      %v2433 = vld [vmem:[%s2425 + $0x1c] sm:$0xf]
      %v2434 = vld [vmem:[%s2425 + $0x20] sm:$0xf]
      %v2435 = vld [vmem:[%s2425 + $0x24] sm:$0xf]
      %v2436 = vld [vmem:[%s2425 + $0x28] sm:$0xf]
      %v2437 = vld [vmem:[%s2425 + $0x2c] sm:$0xf]
      %v2438 = vld [vmem:[%s2425 + $0x30] sm:$0xf]
      %v2439 = vld [vmem:[%s2425 + $0x34] sm:$0xf]
      %v2440 = vld [vmem:[%s2425 + $0x38] sm:$0xf]
      %v2441 = vld [vmem:[%s2425 + $0x3c] sm:$0xf]
      %v2458 = vunpack.c.l.b16 %v2426
      %v2459 = vunpack.c.l.b16 %v2427
      %v2460 = vunpack.c.l.b16 %v2428
      %v2461 = vunpack.c.l.b16 %v2429
      %v2462 = vunpack.c.l.b16 %v2430
      %v2463 = vunpack.c.l.b16 %v2431
      %v2464 = vunpack.c.l.b16 %v2432
      %v2465 = vunpack.c.l.b16 %v2433
      %v2466 = vunpack.c.l.b16 %v2434
      %v2467 = vunpack.c.l.b16 %v2435
      %v2468 = vunpack.c.l.b16 %v2436
      %v2469 = vunpack.c.l.b16 %v2437
      %v2470 = vunpack.c.l.b16 %v2438
      %v2471 = vunpack.c.l.b16 %v2439
      %v2472 = vunpack.c.l.b16 %v2440
      %v2473 = vunpack.c.l.b16 %v2441
      %v2474 = vpack.c.b16 %v2459, %v2458
      %v2475 = vpack.c.b16 %v2461, %v2460
      %v2476 = vpack.c.b16 %v2463, %v2462
      %v2477 = vpack.c.b16 %v2465, %v2464
      %v2478 = vpack.c.b16 %v2467, %v2466
      %v2479 = vpack.c.b16 %v2469, %v2468
      %v2480 = vpack.c.b16 %v2471, %v2470
      %v2481 = vpack.c.b16 %v2473, %v2472
      %2490 = vmatprep.subr.bf16.mxu0 0
      %2491 = vmatpush1.bf16.msra.mxu0 %v2474
      %2492 = vmatprep.subr.bf16.mxu0 0
      %2493 = vmatpush1.bf16.msra.mxu0 %v2475
      %2494 = vmatprep.subr.bf16.mxu0 0
      %2495 = vmatpush1.bf16.msra.mxu0 %v2476
      %2496 = vmatprep.subr.bf16.mxu0 0
      %2497 = vmatpush1.bf16.msra.mxu0 %v2477
      %2498 = vmatprep.subr.bf16.mxu0 0
      %2499 = vmatpush1.bf16.msra.mxu0 %v2478
      %2500 = vmatprep.subr.bf16.mxu0 0
      %2501 = vmatpush1.bf16.msra.mxu0 %v2479
      %2502 = vmatprep.subr.bf16.mxu0 0
      %2503 = vmatpush1.bf16.msra.mxu0 %v2480
      %2504 = vmatprep.subr.bf16.mxu0 0
      %2505 = vmatpush1.bf16.msra.mxu0 %v2481
      %2506 = vmatprep.subr.bf16.mxu0 0
      %2507 = vmatpush1.bf16.msra.mxu0 0
      %2508 = vmatprep.subr.bf16.mxu0 0
      %2509 = vmatpush1.bf16.msra.mxu0 0
      %2510 = vmatprep.subr.bf16.mxu0 0
      %2511 = vmatpush1.bf16.msra.mxu0 0
      %2512 = vmatprep.subr.bf16.mxu0 0
      %2513 = vmatpush1.bf16.msra.mxu0 0
      %2514 = vmatprep.subr.bf16.mxu0 0
      %2515 = vmatpush1.bf16.msra.mxu0 0
      %2516 = vmatprep.subr.bf16.mxu0 0
      %2517 = vmatpush1.bf16.msra.mxu0 0
      %2518 = vmatprep.subr.bf16.mxu0 0
      %2519 = vmatpush1.bf16.msra.mxu0 0
      %2520 = vmatprep.subr.bf16.mxu0 0
      %2521 = vmatpush1.bf16.msra.mxu0 0
      %2522 = vmatprep.mubr.bf16.mxu0 0
      %2523 = vmatmul.mubr.bf16.gmra.mrb[0].mxu0 %v585
      %v2524 = vpop.f32.mrb[0].mxu0
      %v2525 = vadd.f32 0.0, %v2524
      %v2526 = vpop.f32.mrb[0].mxu0
      %v2527 = vpop.f32.mrb[0].mxu0
      %v2528 = vadd.f32 0.0, %v2527
      %v2529 = vpop.f32.mrb[0].mxu0
      %2530 = vmatprep.mubr.bf16.mxu0 0
      %2531 = vmatmul.mubr.bf16.gmra.mrb[0].mxu0 %v586
      %v2532 = vpop.f32.mrb[0].mxu0
      %v2533 = vadd.f32 0.0, %v2532
      %v2534 = vpop.f32.mrb[0].mxu0
      %v2535 = vpop.f32.mrb[0].mxu0
      %v2536 = vadd.f32 0.0, %v2535
      %v2537 = vpop.f32.mrb[0].mxu0
      %2538 = vmatprep.mubr.bf16.mxu0 0
      %2539 = vmatmul.mubr.bf16.gmra.mrb[0].mxu0 %v587
      %v2540 = vpop.f32.mrb[0].mxu0
      %v2541 = vadd.f32 0.0, %v2540
      %v2542 = vpop.f32.mrb[0].mxu0
      %v2543 = vpop.f32.mrb[0].mxu0
      %v2544 = vadd.f32 0.0, %v2543
      %v2545 = vpop.f32.mrb[0].mxu0
      %2546 = vmatprep.mubr.bf16.mxu0 0
      %2547 = vmatmul.mubr.bf16.gmra.mrb[0].mxu0 %v588
      %v2548 = vpop.f32.mrb[0].mxu0
      %v2549 = vadd.f32 0.0, %v2548
      %v2550 = vpop.f32.mrb[0].mxu0
      %v2551 = vpop.f32.mrb[0].mxu0
      %v2552 = vadd.f32 0.0, %v2551
      %v2553 = vpop.f32.mrb[0].mxu0
      %2554 = vmatprep.mubr.bf16.mxu0 0
      %2555 = vmatmul.mubr.bf16.gmra.mrb[0].mxu0 %v589
      %v2556 = vpop.f32.mrb[0].mxu0
      %v2557 = vadd.f32 0.0, %v2556
      %v2558 = vpop.f32.mrb[0].mxu0
      %v2559 = vpop.f32.mrb[0].mxu0
      %v2560 = vadd.f32 0.0, %v2559
      %v2561 = vpop.f32.mrb[0].mxu0
      %2562 = vmatprep.mubr.bf16.mxu0 0
      %2563 = vmatmul.mubr.bf16.gmra.mrb[0].mxu0 %v590
      %v2564 = vpop.f32.mrb[0].mxu0
      %v2565 = vadd.f32 0.0, %v2564
      %v2566 = vpop.f32.mrb[0].mxu0
      %v2567 = vpop.f32.mrb[0].mxu0
      %v2568 = vadd.f32 0.0, %v2567
      %v2569 = vpop.f32.mrb[0].mxu0
      %2570 = vmatprep.mubr.bf16.mxu0 0
      %2571 = vmatmul.mubr.bf16.gmra.mrb[0].mxu0 %v591
      %v2572 = vpop.f32.mrb[0].mxu0
      %v2573 = vadd.f32 0.0, %v2572
      %v2574 = vpop.f32.mrb[0].mxu0
      %v2575 = vpop.f32.mrb[0].mxu0
      %v2576 = vadd.f32 0.0, %v2575
      %v2577 = vpop.f32.mrb[0].mxu0
      %2578 = vmatprep.mubr.bf16.mxu0 0
      %2579 = vmatmul.mubr.bf16.gmra.mrb[0].mxu0 %v592
      %v2580 = vpop.f32.mrb[0].mxu0
      %v2581 = vadd.f32 0.0, %v2580
      %v2582 = vpop.f32.mrb[0].mxu0
      %v2583 = vpop.f32.mrb[0].mxu0
      %v2584 = vadd.f32 0.0, %v2583
      %v2585 = vpop.f32.mrb[0].mxu0
      %2586 = vmatprep.mubr.bf16.mxu0 0
      %2587 = vmatmul.mubr.bf16.gmra.mrb[0].mxu0 %v593
      %v2588 = vpop.f32.mrb[0].mxu0
      %v2589 = vadd.f32 0.0, %v2588
      %v2590 = vpop.f32.mrb[0].mxu0
      %v2591 = vpop.f32.mrb[0].mxu0
      %v2592 = vadd.f32 0.0, %v2591
      %v2593 = vpop.f32.mrb[0].mxu0
      %2594 = vmatprep.mubr.bf16.mxu0 0
      %2595 = vmatmul.mubr.bf16.gmra.mrb[0].mxu0 %v594
      %v2596 = vpop.f32.mrb[0].mxu0
      %v2597 = vadd.f32 0.0, %v2596
      %v2598 = vpop.f32.mrb[0].mxu0
      %v2599 = vpop.f32.mrb[0].mxu0
      %v2600 = vadd.f32 0.0, %v2599
      %v2601 = vpop.f32.mrb[0].mxu0
      %2602 = vmatprep.mubr.bf16.mxu0 0
      %2603 = vmatmul.mubr.bf16.gmra.mrb[0].mxu0 %v595
      %v2604 = vpop.f32.mrb[0].mxu0
      %v2605 = vadd.f32 0.0, %v2604
      %v2606 = vpop.f32.mrb[0].mxu0
      %v2607 = vpop.f32.mrb[0].mxu0
      %v2608 = vadd.f32 0.0, %v2607
      %v2609 = vpop.f32.mrb[0].mxu0
      %2610 = vmatprep.mubr.bf16.mxu0 0
      %2611 = vmatmul.mubr.bf16.gmra.mrb[0].mxu0 %v596
      %v2612 = vpop.f32.mrb[0].mxu0
      %v2613 = vadd.f32 0.0, %v2612
      %v2614 = vpop.f32.mrb[0].mxu0
      %v2615 = vpop.f32.mrb[0].mxu0
      %v2616 = vadd.f32 0.0, %v2615
      %v2617 = vpop.f32.mrb[0].mxu0
      %2618 = vmatprep.mubr.bf16.mxu0 0
      %2619 = vmatmul.mubr.bf16.gmra.mrb[0].mxu0 %v597
      %v2620 = vpop.f32.mrb[0].mxu0
      %v2621 = vadd.f32 0.0, %v2620
      %v2622 = vpop.f32.mrb[0].mxu0
      %v2623 = vpop.f32.mrb[0].mxu0
      %v2624 = vadd.f32 0.0, %v2623
      %v2625 = vpop.f32.mrb[0].mxu0
      %2626 = vmatprep.mubr.bf16.mxu0 0
      %2627 = vmatmul.mubr.bf16.gmra.mrb[0].mxu0 %v598
      %v2628 = vpop.f32.mrb[0].mxu0
      %v2629 = vadd.f32 0.0, %v2628
      %v2630 = vpop.f32.mrb[0].mxu0
      %v2631 = vpop.f32.mrb[0].mxu0
      %v2632 = vadd.f32 0.0, %v2631
      %v2633 = vpop.f32.mrb[0].mxu0
      %2634 = vmatprep.mubr.bf16.mxu0 0
      %2635 = vmatmul.mubr.bf16.gmra.mrb[0].mxu0 %v599
      %v2636 = vpop.f32.mrb[0].mxu0
      %v2637 = vadd.f32 0.0, %v2636
      %v2638 = vpop.f32.mrb[0].mxu0
      %v2639 = vpop.f32.mrb[0].mxu0
      %v2640 = vadd.f32 0.0, %v2639
      %v2641 = vpop.f32.mrb[0].mxu0
      %2642 = vmatprep.mubr.bf16.mxu0 0
      %2643 = vmatmul.mubr.bf16.gmra.mrb[0].mxu0 %v583
      %v2644 = vpop.f32.mrb[0].mxu0
      %v2645 = vadd.f32 0.0, %v2644
      %v2646 = vpop.f32.mrb[0].mxu0
      %v2647 = vpop.f32.mrb[0].mxu0
      %v2648 = vadd.f32 0.0, %v2647
      %v2649 = vpop.f32.mrb[0].mxu0
      %2650 = vdwg.mxu0
      %v2651 = vadd.f32 %v2393, %v2525
      %v2652 = vadd.f32 %v2394, %v2528
      %v2653 = vadd.f32 %v2395, %v2533
      %v2654 = vadd.f32 %v2396, %v2536
      %v2655 = vadd.f32 %v2397, %v2541
      %v2656 = vadd.f32 %v2398, %v2544
      %v2657 = vadd.f32 %v2399, %v2549
      %v2658 = vadd.f32 %v2400, %v2552
      %v2659 = vadd.f32 %v2401, %v2557
      %v2660 = vadd.f32 %v2402, %v2560
      %v2661 = vadd.f32 %v2403, %v2565
      %v2662 = vadd.f32 %v2404, %v2568
      %v2663 = vadd.f32 %v2405, %v2573
      %v2664 = vadd.f32 %v2406, %v2576
      %v2665 = vadd.f32 %v2407, %v2581
      %v2666 = vadd.f32 %v2408, %v2584
      %v2667 = vadd.f32 %v2409, %v2589
      %v2668 = vadd.f32 %v2410, %v2592
      %v2669 = vadd.f32 %v2411, %v2597
      %v2670 = vadd.f32 %v2412, %v2600
      %v2671 = vadd.f32 %v2413, %v2605
      %v2672 = vadd.f32 %v2414, %v2608
      %v2673 = vadd.f32 %v2415, %v2613
      %v2674 = vadd.f32 %v2416, %v2616
      %v2675 = vadd.f32 %v2417, %v2621
      %v2676 = vadd.f32 %v2418, %v2624
      %v2677 = vadd.f32 %v2419, %v2629
      %v2678 = vadd.f32 %v2420, %v2632
      %v2679 = vadd.f32 %v2421, %v2637
      %v2680 = vadd.f32 %v2422, %v2640
      %v2681 = vadd.f32 %v2423, %v2645
      %v2682 = vadd.f32 %v2424, %v2648
      %s2683 = scalar_lea.vmem %s1, 448
      %v2684 = vld [vmem:[%s2683] sm:$0xf]
      %v2685 = vld [vmem:[%s2683 + $0x4] sm:$0xf]
      %v2686 = vld [vmem:[%s2683 + $0x8] sm:$0xf]
      %v2687 = vld [vmem:[%s2683 + $0xc] sm:$0xf]
      %v2688 = vld [vmem:[%s2683 + $0x10] sm:$0xf]
      %v2689 = vld [vmem:[%s2683 + $0x14] sm:$0xf]
      %v2690 = vld [vmem:[%s2683 + $0x18] sm:$0xf]
      %v2691 = vld [vmem:[%s2683 + $0x1c] sm:$0xf]
      %v2692 = vld [vmem:[%s2683 + $0x20] sm:$0xf]
      %v2693 = vld [vmem:[%s2683 + $0x24] sm:$0xf]
      %v2694 = vld [vmem:[%s2683 + $0x28] sm:$0xf]
      %v2695 = vld [vmem:[%s2683 + $0x2c] sm:$0xf]
      %v2696 = vld [vmem:[%s2683 + $0x30] sm:$0xf]
      %v2697 = vld [vmem:[%s2683 + $0x34] sm:$0xf]
      %v2698 = vld [vmem:[%s2683 + $0x38] sm:$0xf]
      %v2699 = vld [vmem:[%s2683 + $0x3c] sm:$0xf]
      %v2716 = vunpack.c.l.b16 %v2684
      %v2717 = vunpack.c.l.b16 %v2685
      %v2718 = vunpack.c.l.b16 %v2686
      %v2719 = vunpack.c.l.b16 %v2687
      %v2720 = vunpack.c.l.b16 %v2688
      %v2721 = vunpack.c.l.b16 %v2689
      %v2722 = vunpack.c.l.b16 %v2690
      %v2723 = vunpack.c.l.b16 %v2691
      %v2724 = vunpack.c.l.b16 %v2692
      %v2725 = vunpack.c.l.b16 %v2693
      %v2726 = vunpack.c.l.b16 %v2694
      %v2727 = vunpack.c.l.b16 %v2695
      %v2728 = vunpack.c.l.b16 %v2696
      %v2729 = vunpack.c.l.b16 %v2697
      %v2730 = vunpack.c.l.b16 %v2698
      %v2731 = vunpack.c.l.b16 %v2699
      %v2732 = vpack.c.b16 %v2717, %v2716
      %v2733 = vpack.c.b16 %v2719, %v2718
      %v2734 = vpack.c.b16 %v2721, %v2720
      %v2735 = vpack.c.b16 %v2723, %v2722
      %v2736 = vpack.c.b16 %v2725, %v2724
      %v2737 = vpack.c.b16 %v2727, %v2726
      %v2738 = vpack.c.b16 %v2729, %v2728
      %v2739 = vpack.c.b16 %v2731, %v2730
      %2748 = vmatprep.subr.bf16.mxu0 0
      %2749 = vmatpush1.bf16.msra.mxu0 %v2732
      %2750 = vmatprep.subr.bf16.mxu0 0
      %2751 = vmatpush1.bf16.msra.mxu0 %v2733
      %2752 = vmatprep.subr.bf16.mxu0 0
      %2753 = vmatpush1.bf16.msra.mxu0 %v2734
      %2754 = vmatprep.subr.bf16.mxu0 0
      %2755 = vmatpush1.bf16.msra.mxu0 %v2735
      %2756 = vmatprep.subr.bf16.mxu0 0
      %2757 = vmatpush1.bf16.msra.mxu0 %v2736
      %2758 = vmatprep.subr.bf16.mxu0 0
      %2759 = vmatpush1.bf16.msra.mxu0 %v2737
      %2760 = vmatprep.subr.bf16.mxu0 0
      %2761 = vmatpush1.bf16.msra.mxu0 %v2738
      %2762 = vmatprep.subr.bf16.mxu0 0
      %2763 = vmatpush1.bf16.msra.mxu0 %v2739
      %2764 = vmatprep.subr.bf16.mxu0 0
      %2765 = vmatpush1.bf16.msra.mxu0 0
      %2766 = vmatprep.subr.bf16.mxu0 0
      %2767 = vmatpush1.bf16.msra.mxu0 0
      %2768 = vmatprep.subr.bf16.mxu0 0
      %2769 = vmatpush1.bf16.msra.mxu0 0
      %2770 = vmatprep.subr.bf16.mxu0 0
      %2771 = vmatpush1.bf16.msra.mxu0 0
      %2772 = vmatprep.subr.bf16.mxu0 0
      %2773 = vmatpush1.bf16.msra.mxu0 0
      %2774 = vmatprep.subr.bf16.mxu0 0
      %2775 = vmatpush1.bf16.msra.mxu0 0
      %2776 = vmatprep.subr.bf16.mxu0 0
      %2777 = vmatpush1.bf16.msra.mxu0 0
      %2778 = vmatprep.subr.bf16.mxu0 0
      %2779 = vmatpush1.bf16.msra.mxu0 0
      %2780 = vmatprep.mubr.bf16.mxu0 0
      %2781 = vmatmul.mubr.bf16.gmra.mrb[0].mxu0 %v669
      %v2782 = vpop.f32.mrb[0].mxu0
      %v2783 = vadd.f32 0.0, %v2782
      %v2784 = vpop.f32.mrb[0].mxu0
      %v2785 = vpop.f32.mrb[0].mxu0
      %v2786 = vadd.f32 0.0, %v2785
      %v2787 = vpop.f32.mrb[0].mxu0
      %2788 = vmatprep.mubr.bf16.mxu0 0
      %2789 = vmatmul.mubr.bf16.gmra.mrb[0].mxu0 %v681
      %v2790 = vpop.f32.mrb[0].mxu0
      %v2791 = vadd.f32 0.0, %v2790
      %v2792 = vpop.f32.mrb[0].mxu0
      %v2793 = vpop.f32.mrb[0].mxu0
      %v2794 = vadd.f32 0.0, %v2793
      %v2795 = vpop.f32.mrb[0].mxu0
      %2796 = vmatprep.mubr.bf16.mxu0 0
      %2797 = vmatmul.mubr.bf16.gmra.mrb[0].mxu0 %v693
      %v2798 = vpop.f32.mrb[0].mxu0
      %v2799 = vadd.f32 0.0, %v2798
      %v2800 = vpop.f32.mrb[0].mxu0
      %v2801 = vpop.f32.mrb[0].mxu0
      %v2802 = vadd.f32 0.0, %v2801
      %v2803 = vpop.f32.mrb[0].mxu0
      %2804 = vmatprep.mubr.bf16.mxu0 0
      %2805 = vmatmul.mubr.bf16.gmra.mrb[0].mxu0 %v705
      %v2806 = vpop.f32.mrb[0].mxu0
      %v2807 = vadd.f32 0.0, %v2806
      %v2808 = vpop.f32.mrb[0].mxu0
      %v2809 = vpop.f32.mrb[0].mxu0
      %v2810 = vadd.f32 0.0, %v2809
      %v2811 = vpop.f32.mrb[0].mxu0
      %2812 = vmatprep.mubr.bf16.mxu0 0
      %2813 = vmatmul.mubr.bf16.gmra.mrb[0].mxu0 %v717
      %v2814 = vpop.f32.mrb[0].mxu0
      %v2815 = vadd.f32 0.0, %v2814
      %v2816 = vpop.f32.mrb[0].mxu0
      %v2817 = vpop.f32.mrb[0].mxu0
      %v2818 = vadd.f32 0.0, %v2817
      %v2819 = vpop.f32.mrb[0].mxu0
      %2820 = vmatprep.mubr.bf16.mxu0 0
      %2821 = vmatmul.mubr.bf16.gmra.mrb[0].mxu0 %v729
      %v2822 = vpop.f32.mrb[0].mxu0
      %v2823 = vadd.f32 0.0, %v2822
      %v2824 = vpop.f32.mrb[0].mxu0
      %v2825 = vpop.f32.mrb[0].mxu0
      %v2826 = vadd.f32 0.0, %v2825
      %v2827 = vpop.f32.mrb[0].mxu0
      %2828 = vmatprep.mubr.bf16.mxu0 0
      %2829 = vmatmul.mubr.bf16.gmra.mrb[0].mxu0 %v741
      %v2830 = vpop.f32.mrb[0].mxu0
      %v2831 = vadd.f32 0.0, %v2830
      %v2832 = vpop.f32.mrb[0].mxu0
      %v2833 = vpop.f32.mrb[0].mxu0
      %v2834 = vadd.f32 0.0, %v2833
      %v2835 = vpop.f32.mrb[0].mxu0
      %2836 = vmatprep.mubr.bf16.mxu0 0
      %2837 = vmatmul.mubr.bf16.gmra.mrb[0].mxu0 %v753
      %v2838 = vpop.f32.mrb[0].mxu0
      %v2839 = vadd.f32 0.0, %v2838
      %v2840 = vpop.f32.mrb[0].mxu0
      %v2841 = vpop.f32.mrb[0].mxu0
      %v2842 = vadd.f32 0.0, %v2841
      %v2843 = vpop.f32.mrb[0].mxu0
      %2844 = vmatprep.mubr.bf16.mxu0 0
      %2845 = vmatmul.mubr.bf16.gmra.mrb[0].mxu0 %v765
      %v2846 = vpop.f32.mrb[0].mxu0
      %v2847 = vadd.f32 0.0, %v2846
      %v2848 = vpop.f32.mrb[0].mxu0
      %v2849 = vpop.f32.mrb[0].mxu0
      %v2850 = vadd.f32 0.0, %v2849
      %v2851 = vpop.f32.mrb[0].mxu0
      %2852 = vmatprep.mubr.bf16.mxu0 0
      %2853 = vmatmul.mubr.bf16.gmra.mrb[0].mxu0 %v777
      %v2854 = vpop.f32.mrb[0].mxu0
      %v2855 = vadd.f32 0.0, %v2854
      %v2856 = vpop.f32.mrb[0].mxu0
      %v2857 = vpop.f32.mrb[0].mxu0
      %v2858 = vadd.f32 0.0, %v2857
      %v2859 = vpop.f32.mrb[0].mxu0
      %2860 = vmatprep.mubr.bf16.mxu0 0
      %2861 = vmatmul.mubr.bf16.gmra.mrb[0].mxu0 %v789
      %v2862 = vpop.f32.mrb[0].mxu0
      %v2863 = vadd.f32 0.0, %v2862
      %v2864 = vpop.f32.mrb[0].mxu0
      %v2865 = vpop.f32.mrb[0].mxu0
      %v2866 = vadd.f32 0.0, %v2865
      %v2867 = vpop.f32.mrb[0].mxu0
      %2868 = vmatprep.mubr.bf16.mxu0 0
      %2869 = vmatmul.mubr.bf16.gmra.mrb[0].mxu0 %v801
      %v2870 = vpop.f32.mrb[0].mxu0
      %v2871 = vadd.f32 0.0, %v2870
      %v2872 = vpop.f32.mrb[0].mxu0
      %v2873 = vpop.f32.mrb[0].mxu0
      %v2874 = vadd.f32 0.0, %v2873
      %v2875 = vpop.f32.mrb[0].mxu0
      %2876 = vmatprep.mubr.bf16.mxu0 0
      %2877 = vmatmul.mubr.bf16.gmra.mrb[0].mxu0 %v813
      %v2878 = vpop.f32.mrb[0].mxu0
      %v2879 = vadd.f32 0.0, %v2878
      %v2880 = vpop.f32.mrb[0].mxu0
      %v2881 = vpop.f32.mrb[0].mxu0
      %v2882 = vadd.f32 0.0, %v2881
      %v2883 = vpop.f32.mrb[0].mxu0
      %2884 = vmatprep.mubr.bf16.mxu0 0
      %2885 = vmatmul.mubr.bf16.gmra.mrb[0].mxu0 %v825
      %v2886 = vpop.f32.mrb[0].mxu0
      %v2887 = vadd.f32 0.0, %v2886
      %v2888 = vpop.f32.mrb[0].mxu0
      %v2889 = vpop.f32.mrb[0].mxu0
      %v2890 = vadd.f32 0.0, %v2889
      %v2891 = vpop.f32.mrb[0].mxu0
      %2892 = vmatprep.mubr.bf16.mxu0 0
      %2893 = vmatmul.mubr.bf16.gmra.mrb[0].mxu0 %v1901
      %v2894 = vpop.f32.mrb[0].mxu0
      %v2895 = vadd.f32 0.0, %v2894
      %v2896 = vpop.f32.mrb[0].mxu0
      %v2897 = vpop.f32.mrb[0].mxu0
      %v2898 = vadd.f32 0.0, %v2897
      %v2899 = vpop.f32.mrb[0].mxu0
      %2900 = vmatprep.mubr.bf16.mxu0 0
      %2901 = vmatmul.mubr.bf16.gmra.mrb[0].mxu0 %v645
      %v2902 = vpop.f32.mrb[0].mxu0
      %v2903 = vadd.f32 0.0, %v2902
      %v2904 = vpop.f32.mrb[0].mxu0
      %v2905 = vpop.f32.mrb[0].mxu0
      %v2906 = vadd.f32 0.0, %v2905
      %v2907 = vpop.f32.mrb[0].mxu0
      %2908 = vdwg.mxu0
      %v2909 = vadd.f32 %v2651, %v2783
      %v2910 = vadd.f32 %v2652, %v2786
      %v2911 = vadd.f32 %v2653, %v2791
      %v2912 = vadd.f32 %v2654, %v2794
      %v2913 = vadd.f32 %v2655, %v2799
      %v2914 = vadd.f32 %v2656, %v2802
      %v2915 = vadd.f32 %v2657, %v2807
      %v2916 = vadd.f32 %v2658, %v2810
      %v2917 = vadd.f32 %v2659, %v2815
      %v2918 = vadd.f32 %v2660, %v2818
      %v2919 = vadd.f32 %v2661, %v2823
      %v2920 = vadd.f32 %v2662, %v2826
      %v2921 = vadd.f32 %v2663, %v2831
      %v2922 = vadd.f32 %v2664, %v2834
      %v2923 = vadd.f32 %v2665, %v2839
      %v2924 = vadd.f32 %v2666, %v2842
      %v2925 = vadd.f32 %v2667, %v2847
      %v2926 = vadd.f32 %v2668, %v2850
      %v2927 = vadd.f32 %v2669, %v2855
      %v2928 = vadd.f32 %v2670, %v2858
      %v2929 = vadd.f32 %v2671, %v2863
      %v2930 = vadd.f32 %v2672, %v2866
      %v2931 = vadd.f32 %v2673, %v2871
      %v2932 = vadd.f32 %v2674, %v2874
      %v2933 = vadd.f32 %v2675, %v2879
      %v2934 = vadd.f32 %v2676, %v2882
      %v2935 = vadd.f32 %v2677, %v2887
      %v2936 = vadd.f32 %v2678, %v2890
      %v2937 = vadd.f32 %v2679, %v2895
      %v2938 = vadd.f32 %v2680, %v2898
      %v2939 = vadd.f32 %v2681, %v2903
      %v2940 = vadd.f32 %v2682, %v2906
      %s2941 = scalar_lea.vmem %s1, 512
      %v2942 = vld [vmem:[%s2941] sm:$0xf]
      %v2943 = vld [vmem:[%s2941 + $0x4] sm:$0xf]
      %v2944 = vld [vmem:[%s2941 + $0x8] sm:$0xf]
      %v2945 = vld [vmem:[%s2941 + $0xc] sm:$0xf]
      %v2946 = vld [vmem:[%s2941 + $0x10] sm:$0xf]
      %v2947 = vld [vmem:[%s2941 + $0x14] sm:$0xf]
      %v2948 = vld [vmem:[%s2941 + $0x18] sm:$0xf]
      %v2949 = vld [vmem:[%s2941 + $0x1c] sm:$0xf]
      %v2950 = vld [vmem:[%s2941 + $0x20] sm:$0xf]
      %v2951 = vld [vmem:[%s2941 + $0x24] sm:$0xf]
      %v2952 = vld [vmem:[%s2941 + $0x28] sm:$0xf]
      %v2953 = vld [vmem:[%s2941 + $0x2c] sm:$0xf]
      %v2954 = vld [vmem:[%s2941 + $0x30] sm:$0xf]
      %v2955 = vld [vmem:[%s2941 + $0x34] sm:$0xf]
      %v2956 = vld [vmem:[%s2941 + $0x38] sm:$0xf]
      %v2957 = vld [vmem:[%s2941 + $0x3c] sm:$0xf]
      %v2974 = vunpack.c.l.b16 %v2942
      %v2975 = vunpack.c.l.b16 %v2943
      %v2976 = vunpack.c.l.b16 %v2944
      %v2977 = vunpack.c.l.b16 %v2945
      %v2978 = vunpack.c.l.b16 %v2946
      %v2979 = vunpack.c.l.b16 %v2947
      %v2980 = vunpack.c.l.b16 %v2948
      %v2981 = vunpack.c.l.b16 %v2949
      %v2982 = vunpack.c.l.b16 %v2950
      %v2983 = vunpack.c.l.b16 %v2951
      %v2984 = vunpack.c.l.b16 %v2952
      %v2985 = vunpack.c.l.b16 %v2953
      %v2986 = vunpack.c.l.b16 %v2954
      %v2987 = vunpack.c.l.b16 %v2955
      %v2988 = vunpack.c.l.b16 %v2956
      %v2989 = vunpack.c.l.b16 %v2957
      %v2990 = vpack.c.b16 %v2975, %v2974
      %v2991 = vpack.c.b16 %v2977, %v2976
      %v2992 = vpack.c.b16 %v2979, %v2978
      %v2993 = vpack.c.b16 %v2981, %v2980
      %v2994 = vpack.c.b16 %v2983, %v2982
      %v2995 = vpack.c.b16 %v2985, %v2984
      %v2996 = vpack.c.b16 %v2987, %v2986
      %v2997 = vpack.c.b16 %v2989, %v2988
      %3006 = vmatprep.subr.bf16.mxu0 0
      %3007 = vmatpush1.bf16.msra.mxu0 %v2990
      %3008 = vmatprep.subr.bf16.mxu0 0
      %3009 = vmatpush1.bf16.msra.mxu0 %v2991
      %3010 = vmatprep.subr.bf16.mxu0 0
      %3011 = vmatpush1.bf16.msra.mxu0 %v2992
      %3012 = vmatprep.subr.bf16.mxu0 0
      %3013 = vmatpush1.bf16.msra.mxu0 %v2993
      %3014 = vmatprep.subr.bf16.mxu0 0
      %3015 = vmatpush1.bf16.msra.mxu0 %v2994
      %3016 = vmatprep.subr.bf16.mxu0 0
      %3017 = vmatpush1.bf16.msra.mxu0 %v2995
      %3018 = vmatprep.subr.bf16.mxu0 0
      %3019 = vmatpush1.bf16.msra.mxu0 %v2996
      %3020 = vmatprep.subr.bf16.mxu0 0
      %3021 = vmatpush1.bf16.msra.mxu0 %v2997
      %3022 = vmatprep.subr.bf16.mxu0 0
      %3023 = vmatpush1.bf16.msra.mxu0 0
      %3024 = vmatprep.subr.bf16.mxu0 0
      %3025 = vmatpush1.bf16.msra.mxu0 0
      %3026 = vmatprep.subr.bf16.mxu0 0
      %3027 = vmatpush1.bf16.msra.mxu0 0
      %3028 = vmatprep.subr.bf16.mxu0 0
      %3029 = vmatpush1.bf16.msra.mxu0 0
      %3030 = vmatprep.subr.bf16.mxu0 0
      %3031 = vmatpush1.bf16.msra.mxu0 0
      %3032 = vmatprep.subr.bf16.mxu0 0
      %3033 = vmatpush1.bf16.msra.mxu0 0
      %3034 = vmatprep.subr.bf16.mxu0 0
      %3035 = vmatpush1.bf16.msra.mxu0 0
      %3036 = vmatprep.subr.bf16.mxu0 0
      %3037 = vmatpush1.bf16.msra.mxu0 0
      %3038 = vmatprep.mubr.bf16.mxu0 0
      %3039 = vmatmul.mubr.bf16.gmra.mrb[0].mxu0 %v1318
      %v3040 = vpop.f32.mrb[0].mxu0
      %v3041 = vadd.f32 0.0, %v3040
      %v3042 = vpop.f32.mrb[0].mxu0
      %v3043 = vpop.f32.mrb[0].mxu0
      %v3044 = vadd.f32 0.0, %v3043
      %v3045 = vpop.f32.mrb[0].mxu0
      %3046 = vmatprep.mubr.bf16.mxu0 0
      %3047 = vmatmul.mubr.bf16.gmra.mrb[0].mxu0 %v1321
      %v3048 = vpop.f32.mrb[0].mxu0
      %v3049 = vadd.f32 0.0, %v3048
      %v3050 = vpop.f32.mrb[0].mxu0
      %v3051 = vpop.f32.mrb[0].mxu0
      %v3052 = vadd.f32 0.0, %v3051
      %v3053 = vpop.f32.mrb[0].mxu0
      %3054 = vmatprep.mubr.bf16.mxu0 0
      %3055 = vmatmul.mubr.bf16.gmra.mrb[0].mxu0 %v1324
      %v3056 = vpop.f32.mrb[0].mxu0
      %v3057 = vadd.f32 0.0, %v3056
      %v3058 = vpop.f32.mrb[0].mxu0
      %v3059 = vpop.f32.mrb[0].mxu0
      %v3060 = vadd.f32 0.0, %v3059
      %v3061 = vpop.f32.mrb[0].mxu0
      %3062 = vmatprep.mubr.bf16.mxu0 0
      %3063 = vmatmul.mubr.bf16.gmra.mrb[0].mxu0 %v1327
      %v3064 = vpop.f32.mrb[0].mxu0
      %v3065 = vadd.f32 0.0, %v3064
      %v3066 = vpop.f32.mrb[0].mxu0
      %v3067 = vpop.f32.mrb[0].mxu0
      %v3068 = vadd.f32 0.0, %v3067
      %v3069 = vpop.f32.mrb[0].mxu0
      %3070 = vmatprep.mubr.bf16.mxu0 0
      %3071 = vmatmul.mubr.bf16.gmra.mrb[0].mxu0 %v1330
      %v3072 = vpop.f32.mrb[0].mxu0
      %v3073 = vadd.f32 0.0, %v3072
      %v3074 = vpop.f32.mrb[0].mxu0
      %v3075 = vpop.f32.mrb[0].mxu0
      %v3076 = vadd.f32 0.0, %v3075
      %v3077 = vpop.f32.mrb[0].mxu0
      %3078 = vmatprep.mubr.bf16.mxu0 0
      %3079 = vmatmul.mubr.bf16.gmra.mrb[0].mxu0 %v1333
      %v3080 = vpop.f32.mrb[0].mxu0
      %v3081 = vadd.f32 0.0, %v3080
      %v3082 = vpop.f32.mrb[0].mxu0
      %v3083 = vpop.f32.mrb[0].mxu0
      %v3084 = vadd.f32 0.0, %v3083
      %v3085 = vpop.f32.mrb[0].mxu0
      %3086 = vmatprep.mubr.bf16.mxu0 0
      %3087 = vmatmul.mubr.bf16.gmra.mrb[0].mxu0 %v1336
      %v3088 = vpop.f32.mrb[0].mxu0
      %v3089 = vadd.f32 0.0, %v3088
      %v3090 = vpop.f32.mrb[0].mxu0
      %v3091 = vpop.f32.mrb[0].mxu0
      %v3092 = vadd.f32 0.0, %v3091
      %v3093 = vpop.f32.mrb[0].mxu0
      %3094 = vmatprep.mubr.bf16.mxu0 0
      %3095 = vmatmul.mubr.bf16.gmra.mrb[0].mxu0 %v1339
      %v3096 = vpop.f32.mrb[0].mxu0
      %v3097 = vadd.f32 0.0, %v3096
      %v3098 = vpop.f32.mrb[0].mxu0
      %v3099 = vpop.f32.mrb[0].mxu0
      %v3100 = vadd.f32 0.0, %v3099
      %v3101 = vpop.f32.mrb[0].mxu0
      %3102 = vmatprep.mubr.bf16.mxu0 0
      %3103 = vmatmul.mubr.bf16.gmra.mrb[0].mxu0 %v1342
      %v3104 = vpop.f32.mrb[0].mxu0
      %v3105 = vadd.f32 0.0, %v3104
      %v3106 = vpop.f32.mrb[0].mxu0
      %v3107 = vpop.f32.mrb[0].mxu0
      %v3108 = vadd.f32 0.0, %v3107
      %v3109 = vpop.f32.mrb[0].mxu0
      %3110 = vmatprep.mubr.bf16.mxu0 0
      %3111 = vmatmul.mubr.bf16.gmra.mrb[0].mxu0 %v1345
      %v3112 = vpop.f32.mrb[0].mxu0
      %v3113 = vadd.f32 0.0, %v3112
      %v3114 = vpop.f32.mrb[0].mxu0
      %v3115 = vpop.f32.mrb[0].mxu0
      %v3116 = vadd.f32 0.0, %v3115
      %v3117 = vpop.f32.mrb[0].mxu0
      %3118 = vmatprep.mubr.bf16.mxu0 0
      %3119 = vmatmul.mubr.bf16.gmra.mrb[0].mxu0 %v1348
      %v3120 = vpop.f32.mrb[0].mxu0
      %v3121 = vadd.f32 0.0, %v3120
      %v3122 = vpop.f32.mrb[0].mxu0
      %v3123 = vpop.f32.mrb[0].mxu0
      %v3124 = vadd.f32 0.0, %v3123
      %v3125 = vpop.f32.mrb[0].mxu0
      %3126 = vmatprep.mubr.bf16.mxu0 0
      %3127 = vmatmul.mubr.bf16.gmra.mrb[0].mxu0 %v1351
      %v3128 = vpop.f32.mrb[0].mxu0
      %v3129 = vadd.f32 0.0, %v3128
      %v3130 = vpop.f32.mrb[0].mxu0
      %v3131 = vpop.f32.mrb[0].mxu0
      %v3132 = vadd.f32 0.0, %v3131
      %v3133 = vpop.f32.mrb[0].mxu0
      %3134 = vmatprep.mubr.bf16.mxu0 0
      %3135 = vmatmul.mubr.bf16.gmra.mrb[0].mxu0 %v1354
      %v3136 = vpop.f32.mrb[0].mxu0
      %v3137 = vadd.f32 0.0, %v3136
      %v3138 = vpop.f32.mrb[0].mxu0
      %v3139 = vpop.f32.mrb[0].mxu0
      %v3140 = vadd.f32 0.0, %v3139
      %v3141 = vpop.f32.mrb[0].mxu0
      %3142 = vmatprep.mubr.bf16.mxu0 0
      %3143 = vmatmul.mubr.bf16.gmra.mrb[0].mxu0 %v1357
      %v3144 = vpop.f32.mrb[0].mxu0
      %v3145 = vadd.f32 0.0, %v3144
      %v3146 = vpop.f32.mrb[0].mxu0
      %v3147 = vpop.f32.mrb[0].mxu0
      %v3148 = vadd.f32 0.0, %v3147
      %v3149 = vpop.f32.mrb[0].mxu0
      %3150 = vmatprep.mubr.bf16.mxu0 0
      %3151 = vmatmul.mubr.bf16.gmra.mrb[0].mxu0 %v2165
      %v3152 = vpop.f32.mrb[0].mxu0
      %v3153 = vadd.f32 0.0, %v3152
      %v3154 = vpop.f32.mrb[0].mxu0
      %v3155 = vpop.f32.mrb[0].mxu0
      %v3156 = vadd.f32 0.0, %v3155
      %v3157 = vpop.f32.mrb[0].mxu0
      %3158 = vmatprep.mubr.bf16.mxu0 0
      %3159 = vmatmul.mubr.bf16.gmra.mrb[0].mxu0 %v1312
      %v3160 = vpop.f32.mrb[0].mxu0
      %v3161 = vadd.f32 0.0, %v3160
      %v3162 = vpop.f32.mrb[0].mxu0
      %v3163 = vpop.f32.mrb[0].mxu0
      %v3164 = vadd.f32 0.0, %v3163
      %v3165 = vpop.f32.mrb[0].mxu0
      %3166 = vdwg.mxu0
      %v3167 = vadd.f32 %v2909, %v3041
      %v3168 = vadd.f32 %v2910, %v3044
      %v3169 = vadd.f32 %v2911, %v3049
      %v3170 = vadd.f32 %v2912, %v3052
      %v3171 = vadd.f32 %v2913, %v3057
      %v3172 = vadd.f32 %v2914, %v3060
      %v3173 = vadd.f32 %v2915, %v3065
      %v3174 = vadd.f32 %v2916, %v3068
      %v3175 = vadd.f32 %v2917, %v3073
      %v3176 = vadd.f32 %v2918, %v3076
      %v3177 = vadd.f32 %v2919, %v3081
      %v3178 = vadd.f32 %v2920, %v3084
      %v3179 = vadd.f32 %v2921, %v3089
      %v3180 = vadd.f32 %v2922, %v3092
      %v3181 = vadd.f32 %v2923, %v3097
      %v3182 = vadd.f32 %v2924, %v3100
      %v3183 = vadd.f32 %v2925, %v3105
      %v3184 = vadd.f32 %v2926, %v3108
      %v3185 = vadd.f32 %v2927, %v3113
      %v3186 = vadd.f32 %v2928, %v3116
      %v3187 = vadd.f32 %v2929, %v3121
      %v3188 = vadd.f32 %v2930, %v3124
      %v3189 = vadd.f32 %v2931, %v3129
      %v3190 = vadd.f32 %v2932, %v3132
      %v3191 = vadd.f32 %v2933, %v3137
      %v3192 = vadd.f32 %v2934, %v3140
      %v3193 = vadd.f32 %v2935, %v3145
      %v3194 = vadd.f32 %v2936, %v3148
      %v3195 = vadd.f32 %v2937, %v3153
      %v3196 = vadd.f32 %v2938, %v3156
      %v3197 = vadd.f32 %v2939, %v3161
      %v3198 = vadd.f32 %v2940, %v3164
      %v3199 = vpack.c.bf16 %v3168, %v3167
      %v3200 = vpack.c.bf16 %v3170, %v3169
      %v3201 = vpack.c.bf16 %v3172, %v3171
      %v3202 = vpack.c.bf16 %v3174, %v3173
      %v3203 = vpack.c.bf16 %v3176, %v3175
      %v3204 = vpack.c.bf16 %v3178, %v3177
      %v3205 = vpack.c.bf16 %v3180, %v3179
      %v3206 = vpack.c.bf16 %v3182, %v3181
      %v3207 = vpack.c.bf16 %v3184, %v3183
      %v3208 = vpack.c.bf16 %v3186, %v3185
      %v3209 = vpack.c.bf16 %v3188, %v3187
      %v3210 = vpack.c.bf16 %v3190, %v3189
      %v3211 = vpack.c.bf16 %v3192, %v3191
      %v3212 = vpack.c.bf16 %v3194, %v3193
      %v3213 = vpack.c.bf16 %v3196, %v3195
      %v3214 = vpack.c.bf16 %v3198, %v3197
      %v3231 = vunpack.c.l.b16 %v3199
      %v3232 = vunpack.c.h.b16 %v3199
      %v3233 = vunpack.c.l.b16 %v3200
      %v3234 = vunpack.c.h.b16 %v3200
      %v3235 = vunpack.c.l.b16 %v3201
      %v3236 = vunpack.c.h.b16 %v3201
      %v3237 = vunpack.c.l.b16 %v3202
      %v3238 = vunpack.c.h.b16 %v3202
      %v3239 = vunpack.c.l.b16 %v3203
      %v3240 = vunpack.c.h.b16 %v3203
      %v3241 = vunpack.c.l.b16 %v3204
      %v3242 = vunpack.c.h.b16 %v3204
      %v3243 = vunpack.c.l.b16 %v3205
      %v3244 = vunpack.c.h.b16 %v3205
      %v3245 = vunpack.c.l.b16 %v3206
      %v3246 = vunpack.c.h.b16 %v3206
      %v3247 = vunpack.c.l.b16 %v3207
      %v3248 = vunpack.c.h.b16 %v3207
      %v3249 = vunpack.c.l.b16 %v3208
      %v3250 = vunpack.c.h.b16 %v3208
      %v3251 = vunpack.c.l.b16 %v3209
      %v3252 = vunpack.c.h.b16 %v3209
      %v3253 = vunpack.c.l.b16 %v3210
      %v3254 = vunpack.c.h.b16 %v3210
      %v3255 = vunpack.c.l.b16 %v3211
      %v3256 = vunpack.c.h.b16 %v3211
      %v3257 = vunpack.c.l.b16 %v3212
      %v3258 = vunpack.c.h.b16 %v3212
      %v3259 = vunpack.c.l.b16 %v3213
      %v3260 = vunpack.c.h.b16 %v3213
      %v3261 = vunpack.c.l.b16 %v3214
      %v3262 = vunpack.c.h.b16 %v3214
      %v3263 = vpack.c.b16 %v3231, %v3231
      %v3264 = vpack.c.b16 %v3232, %v3232
      %v3265 = vpack.c.b16 %v3233, %v3233
      %v3266 = vpack.c.b16 %v3234, %v3234
      %v3267 = vpack.c.b16 %v3235, %v3235
      %v3268 = vpack.c.b16 %v3236, %v3236
      %v3269 = vpack.c.b16 %v3237, %v3237
      %v3270 = vpack.c.b16 %v3238, %v3238
      %v3271 = vpack.c.b16 %v3239, %v3239
      %v3272 = vpack.c.b16 %v3240, %v3240
      %v3273 = vpack.c.b16 %v3241, %v3241
      %v3274 = vpack.c.b16 %v3242, %v3242
      %v3275 = vpack.c.b16 %v3243, %v3243
      %v3276 = vpack.c.b16 %v3244, %v3244
      %v3277 = vpack.c.b16 %v3245, %v3245
      %v3278 = vpack.c.b16 %v3246, %v3246
      %v3279 = vpack.c.b16 %v3247, %v3247
      %v3280 = vpack.c.b16 %v3248, %v3248
      %v3281 = vpack.c.b16 %v3249, %v3249
      %v3282 = vpack.c.b16 %v3250, %v3250
      %v3283 = vpack.c.b16 %v3251, %v3251
      %v3284 = vpack.c.b16 %v3252, %v3252
      %v3285 = vpack.c.b16 %v3253, %v3253
      %v3286 = vpack.c.b16 %v3254, %v3254
      %v3287 = vpack.c.b16 %v3255, %v3255
      %v3288 = vpack.c.b16 %v3256, %v3256
      %v3289 = vpack.c.b16 %v3257, %v3257
      %v3290 = vpack.c.b16 %v3258, %v3258
      %v3291 = vpack.c.b16 %v3259, %v3259
      %v3292 = vpack.c.b16 %v3260, %v3260
      %v3293 = vpack.c.b16 %v3261, %v3261
      %v3294 = vpack.c.b16 %v3262, %v3262
      %3327 = vst [vmem:[%s231] sm:$0xf] %v3263
      %3328 = vst [vmem:[%s231 + $0x4] sm:$0xf] %v3264
      %3329 = vst [vmem:[%s231 + $0x8] sm:$0xf] %v3265
      %3330 = vst [vmem:[%s231 + $0xc] sm:$0xf] %v3266
      %3331 = vst [vmem:[%s231 + $0x10] sm:$0xf] %v3267
      %3332 = vst [vmem:[%s231 + $0x14] sm:$0xf] %v3268
      %3333 = vst [vmem:[%s231 + $0x18] sm:$0xf] %v3269
      %3334 = vst [vmem:[%s231 + $0x1c] sm:$0xf] %v3270
      %3335 = vst [vmem:[%s231 + $0x20] sm:$0xf] %v3271
      %3336 = vst [vmem:[%s231 + $0x24] sm:$0xf] %v3272
      %3337 = vst [vmem:[%s231 + $0x28] sm:$0xf] %v3273
      %3338 = vst [vmem:[%s231 + $0x2c] sm:$0xf] %v3274
      %3339 = vst [vmem:[%s231 + $0x30] sm:$0xf] %v3275
      %3340 = vst [vmem:[%s231 + $0x34] sm:$0xf] %v3276
      %3341 = vst [vmem:[%s231 + $0x38] sm:$0xf] %v3277
      %3342 = vst [vmem:[%s231 + $0x3c] sm:$0xf] %v3278
      %3343 = vst [vmem:[%s231 + $0x40] sm:$0xf] %v3279
      %3344 = vst [vmem:[%s231 + $0x44] sm:$0xf] %v3280
      %3345 = vst [vmem:[%s231 + $0x48] sm:$0xf] %v3281
      %3346 = vst [vmem:[%s231 + $0x4c] sm:$0xf] %v3282
      %3347 = vst [vmem:[%s231 + $0x50] sm:$0xf] %v3283
      %3348 = vst [vmem:[%s231 + $0x54] sm:$0xf] %v3284
      %3349 = vst [vmem:[%s231 + $0x58] sm:$0xf] %v3285
      %3350 = vst [vmem:[%s231 + $0x5c] sm:$0xf] %v3286
      %3351 = vst [vmem:[%s231 + $0x60] sm:$0xf] %v3287
      %3352 = vst [vmem:[%s231 + $0x64] sm:$0xf] %v3288
      %3353 = vst [vmem:[%s231 + $0x68] sm:$0xf] %v3289
      %3354 = vst [vmem:[%s231 + $0x6c] sm:$0xf] %v3290
      %3355 = vst [vmem:[%s231 + $0x70] sm:$0xf] %v3291
      %3356 = vst [vmem:[%s231 + $0x74] sm:$0xf] %v3292
      %3357 = vst [vmem:[%s231 + $0x78] sm:$0xf] %v3293
      %3358 = vst [vmem:[%s231 + $0x7c] sm:$0xf] %v3294
      %v3359 = vadd.f32 %v3167, %v3168
      %v3360 = vadd.f32 %v3359, %v3169
      %v3361 = vadd.f32 %v3360, %v3170
      %v3362 = vadd.f32 %v3361, %v3171
      %v3363 = vadd.f32 %v3362, %v3172
      %v3364 = vadd.f32 %v3363, %v3173
      %v3365 = vadd.f32 %v3364, %v3174
      %v3366 = vadd.f32 %v3365, %v3175
      %v3367 = vadd.f32 %v3366, %v3176
      %v3368 = vadd.f32 %v3367, %v3177
      %v3369 = vadd.f32 %v3368, %v3178
      %v3370 = vadd.f32 %v3369, %v3179
      %v3371 = vadd.f32 %v3370, %v3180
      %v3372 = vadd.f32 %v3371, %v3181
      %v3373 = vadd.f32 %v3372, %v3182
      %v3374 = vadd.f32 %v3373, %v3183
      %v3375 = vadd.f32 %v3374, %v3184
      %v3376 = vadd.f32 %v3375, %v3185
      %v3377 = vadd.f32 %v3376, %v3186
      %v3378 = vadd.f32 %v3377, %v3187
      %v3379 = vadd.f32 %v3378, %v3188
      %v3380 = vadd.f32 %v3379, %v3189
      %v3381 = vadd.f32 %v3380, %v3190
      %v3382 = vadd.f32 %v3381, %v3191
      %v3383 = vadd.f32 %v3382, %v3192
      %v3384 = vadd.f32 %v3383, %v3193
      %v3385 = vadd.f32 %v3384, %v3194
      %v3386 = vadd.f32 %v3385, %v3195
      %v3387 = vadd.f32 %v3386, %v3196
      %v3388 = vadd.f32 %v3387, %v3197
      %v3389 = vadd.f32 %v3388, %v3198
      %v3390 = vrot.slane %v3389, 4
      %v3391 = vadd.f32 %v3389, %v3390
      %v3392 = vrot.slane %v3391, 2
      %v3393 = vadd.f32 %v3391, %v3392
      %v3394 = vrot.slane %v3393, 1
      %v3395 = vadd.f32 %v3393, %v3394
      %3396 = vst [vmem:[%s235] sm:$0x1] %v3395
      %v3397 = vmul.f32 %v3167, %v3167
      %v3398 = vmul.f32 %v3168, %v3168
      %v3399 = vmul.f32 %v3169, %v3169
      %v3400 = vmul.f32 %v3170, %v3170
      %v3401 = vmul.f32 %v3171, %v3171
      %v3402 = vmul.f32 %v3172, %v3172
      %v3403 = vmul.f32 %v3173, %v3173
      %v3404 = vmul.f32 %v3174, %v3174
      %v3405 = vmul.f32 %v3175, %v3175
      %v3406 = vmul.f32 %v3176, %v3176
      %v3407 = vmul.f32 %v3177, %v3177
      %v3408 = vmul.f32 %v3178, %v3178
      %v3409 = vmul.f32 %v3179, %v3179
      %v3410 = vmul.f32 %v3180, %v3180
      %v3411 = vmul.f32 %v3181, %v3181
      %v3412 = vmul.f32 %v3182, %v3182
      %v3413 = vmul.f32 %v3183, %v3183
      %v3414 = vmul.f32 %v3184, %v3184
      %v3415 = vmul.f32 %v3185, %v3185
      %v3416 = vmul.f32 %v3186, %v3186
      %v3417 = vmul.f32 %v3187, %v3187
      %v3418 = vmul.f32 %v3188, %v3188
      %v3419 = vmul.f32 %v3189, %v3189
      %v3420 = vmul.f32 %v3190, %v3190
      %v3421 = vmul.f32 %v3191, %v3191
      %v3422 = vmul.f32 %v3192, %v3192
      %v3423 = vmul.f32 %v3193, %v3193
      %v3424 = vmul.f32 %v3194, %v3194
      %v3425 = vmul.f32 %v3195, %v3195
      %v3426 = vmul.f32 %v3196, %v3196
      %v3427 = vmul.f32 %v3197, %v3197
      %v3428 = vmul.f32 %v3198, %v3198
      %v3429 = vadd.f32 %v3397, %v3398
      %v3430 = vadd.f32 %v3429, %v3399
      %v3431 = vadd.f32 %v3430, %v3400
      %v3432 = vadd.f32 %v3431, %v3401
      %v3433 = vadd.f32 %v3432, %v3402
      %v3434 = vadd.f32 %v3433, %v3403
      %v3435 = vadd.f32 %v3434, %v3404
      %v3436 = vadd.f32 %v3435, %v3405
      %v3437 = vadd.f32 %v3436, %v3406
      %v3438 = vadd.f32 %v3437, %v3407
      %v3439 = vadd.f32 %v3438, %v3408
      %v3440 = vadd.f32 %v3439, %v3409
      %v3441 = vadd.f32 %v3440, %v3410
      %v3442 = vadd.f32 %v3441, %v3411
      %v3443 = vadd.f32 %v3442, %v3412
      %v3444 = vadd.f32 %v3443, %v3413
      %v3445 = vadd.f32 %v3444, %v3414
      %v3446 = vadd.f32 %v3445, %v3415
      %v3447 = vadd.f32 %v3446, %v3416
      %v3448 = vadd.f32 %v3447, %v3417
      %v3449 = vadd.f32 %v3448, %v3418
      %v3450 = vadd.f32 %v3449, %v3419
      %v3451 = vadd.f32 %v3450, %v3420
      %v3452 = vadd.f32 %v3451, %v3421
      %v3453 = vadd.f32 %v3452, %v3422
      %v3454 = vadd.f32 %v3453, %v3423
      %v3455 = vadd.f32 %v3454, %v3424
      %v3456 = vadd.f32 %v3455, %v3425
      %v3457 = vadd.f32 %v3456, %v3426
      %v3458 = vadd.f32 %v3457, %v3427
      %v3459 = vadd.f32 %v3458, %v3428
      %v3460 = vrot.slane %v3459, 4
      %v3461 = vadd.f32 %v3459, %v3460
      %v3462 = vrot.slane %v3461, 2
      %v3463 = vadd.f32 %v3461, %v3462
      %v3464 = vrot.slane %v3463, 1
      %v3465 = vadd.f32 %v3463, %v3464
      %3466 = vst [vmem:[%s235 + $0x1] sm:$0x1] %v3465
      %p3467 = scmp.lt.s32.totalorder %s17, 1
      %s3468 = scalar_select %p3467, %s17, 1
      %s3469 = smul.addr %s3468, 32
      %s3470 = smul.addr %s3469, 4
      %s3471 = scalar_lea.vmem %s4, %s3470
      %p3472 = scmp.lt.s32.totalorder %s17, 1
      %s3473 = scalar_select %p3472, %s17, 1
      %s3474 = smul.addr %s3473, 2
      %s3475 = scalar_lea.vmem %s5, %s3474
      // Predicated region
      $region37: #{basic_block_forward.4} parent=35 // pred_check
        %p3476 = pneg %p124
      $region38: #{basic_block_forward.4} parent=35 // pred_check_branch
        %3478 = sbr.rel (%p3476) target = $region40
      $region39: #{basic_block_forward.4} parent=35 // pred_region
        _
      $region40: #{basic_block_forward.4} parent=35 // pred_fallthru
        _
      // Predicated region
      $region41: #{basic_block_forward.4} parent=35 // pred_check
        %p3479 = pneg %p150
      $region42: #{basic_block_forward.4} parent=35 // pred_check_branch
        %3481 = sbr.rel (%p3479) target = $region44
      $region43: #{basic_block_forward.4} parent=35 // pred_region
        _
      $region44: #{basic_block_forward.4} parent=35 // pred_fallthru
        _
    $region36: #{basic_block_forward.4} parent=5 // pred_fallthru
      _
    %p3482 = scmp.le.s32.totalorder 2, %s12
    // Predicated region
    $region45: #{basic_block_forward.4} parent=5 // pred_check
      %p3483 = pneg %p3482
    $region46: #{basic_block_forward.4} parent=5 // pred_check_branch
      %3485 = sbr.rel (%p3483) target = $region48
    $region47: #{basic_block_forward.4} parent=5 // pred_region
      %s3486 = ssub.s32 %s12, 2
      // Predicated region
      $region49: #{basic_block_forward.4} parent=47 // pred_check
        %p3487 = pneg %p130
      $region50: #{basic_block_forward.4} parent=47 // pred_check_branch
        %3489 = sbr.rel (%p3487) target = $region52
      $region51: #{basic_block_forward.4} parent=47 // pred_region
        %p3490 = scmp.lt.s32.totalorder %s18, 1
        %s3491 = scalar_select %p3490, %s18, 1
        %s3492 = smul.addr %s3491, 32
        %s3493 = smul.addr %s3492, 4
        %s3494 = scalar_lea.vmem %s4, %s3493
      $region52: #{basic_block_forward.4} parent=47 // pred_fallthru
        _
      // Predicated region
      $region53: #{basic_block_forward.4} parent=47 // pred_check
        %p3495 = pneg %p156
      $region54: #{basic_block_forward.4} parent=47 // pred_check_branch
        %3497 = sbr.rel (%p3495) target = $region56
      $region55: #{basic_block_forward.4} parent=47 // pred_region
        %p3498 = scmp.lt.s32.totalorder %s18, 1
        %s3499 = scalar_select %p3498, %s18, 1
        %s3500 = smul.addr %s3499, 2
        %s3501 = scalar_lea.vmem %s5, %s3500
      $region56: #{basic_block_forward.4} parent=47 // pred_fallthru
        _
    $region48: #{basic_block_forward.4} parent=5 // pred_fallthru
      _
  $region6: #{basic_block_forward.4} parent=0 // loop_footer
    %s16 = sadd.s32 1, %s12
  $region7: #{basic_block_forward.4} parent=0 // loop_footer_branch
    %11 = sbr.rel target = $region3
  $region8: #{basic_block_forward.4} parent=0 // loop_exit
    _

// kernel: basic_block_forward.3
$region0: #{basic_block_forward.3}
  #allocation0 [shape = 'u32[]', space=smem, size = 0x4, offset = 0x4, fixed_abs, tag = 'smem constant byte address 0x4 - core index']
  #allocation1 [shape = 'u32[144,128]{1,0:T(1,128)}', space=vmem, size = 0x12000, scoped, tag = 'internal scratch']
  %s0 = inlined_call_operand.vmem [shape: bf16[2,18,24,128], index: 0, kind: input, shape index: {}]
  %s1 = inlined_call_operand.vmem [shape: bf16[9,128,128], index: 1, kind: input, shape index: {}]
  %s2 = inlined_call_operand.vmem [shape: bf16[2,256,128], index: 2, kind: output, shape index: {0}]
  %s3 = inlined_call_operand.vmem [shape: f32[2,2,128], index: 3, kind: output, shape index: {1}]
  %4 = xla_tuple %s2, %s3
  %s5 = sld [smem:[#allocation0]]
  $region49: #{basic_block_forward.3} parent=0
    _
  %s7 = ssub.s32 1, %s5
  %s8 = scalar_select 0, %s7, %s5
  loop: start=0, step=1, limit=4
  $region2: #{basic_block_forward.3} parent=0 // loop_pre_header
    _
  $region3: #{basic_block_forward.3} parent=0 // loop_header
    %s10 = sphi 0, %s14
    %p11 = scmp.ge.s32.totalorder %s10, 4
    %s20 = sphi 0, %s22
    %s23 = sphi 0, %s20
    %s24 = sphi 0, %s23
    %s40 = sphi 0, %s24
    %s44 = sphi 0, %s44
    %s46 = sphi 0, %s44
    %s47 = sphi 0, %s46
    %s61 = sphi 0, %s47
    %s67 = sphi 0, %s69
    %s70 = sphi 0, %s67
    %s71 = sphi 0, %s70
    %s87 = sphi 0, %s71
    %s93 = sphi 0, %s95
    %s96 = sphi 0, %s93
    %s97 = sphi 0, %s96
    %s113 = sphi 0, %s97
  $region4: #{basic_block_forward.3} parent=0 // loop_header_branch
    %13 = sbr.rel (%p11) target = $region8
  $region5: #{basic_block_forward.3} parent=0 // loop_body
    %s15 = ssub.s32 %s10, 1
    %s16 = ssub.s32 %s10, 2
    %s17 = sadd.s32 %s10, 1
    %s18 = ssub.s32 %s10, %s17
    %p19 = scmp.eq.s32.totalorder %s18, 0
    %s21 = sadd.s32 %s20, 1
    %s22 = scalar_select %p19, %s20, %s21
    %p25 = pneg %p19
    %p26 = scmp.eq.s32.totalorder %s10, 1
    %p27 = por %p25, %p26
    %p28 = scmp.ne.s32.totalorder %s20, %s23
    %p29 = scmp.eq.s32.totalorder %s10, 0
    %p30 = por %p28, %p29
    %p31 = scmp.ne.s32.totalorder %s20, %s23
    %p32 = scmp.eq.s32.totalorder %s15, 1
    %p33 = por %p31, %p32
    %p34 = scmp.ne.s32.totalorder %s23, %s24
    %p35 = scmp.eq.s32.totalorder %s15, 0
    %p36 = por %p34, %p35
    %p37 = scmp.ne.s32.totalorder %s23, %s24
    %p38 = scmp.eq.s32.totalorder %s16, 1
    %p39 = por %p37, %p38
    %p41 = scmp.ne.s32.totalorder %s24, %s40
    %p42 = scmp.eq.s32.totalorder %s16, 0
    %p43 = por %p41, %p42
    %s45 = sadd.s32 %s44, 1
    %p48 = scmp.eq.s32.totalorder %s10, 1
    %p49 = scmp.ne.s32.totalorder %s44, %s46
    %p50 = scmp.eq.s32.totalorder %s10, 0
    %p51 = por %p49, %p50
    %p52 = scmp.ne.s32.totalorder %s44, %s46
    %p53 = scmp.eq.s32.totalorder %s15, 1
    %p54 = por %p52, %p53
    %p55 = scmp.ne.s32.totalorder %s46, %s47
    %p56 = scmp.eq.s32.totalorder %s15, 0
    %p57 = por %p55, %p56
    %p58 = scmp.ne.s32.totalorder %s46, %s47
    %p59 = scmp.eq.s32.totalorder %s16, 1
    %p60 = por %p58, %p59
    %p62 = scmp.ne.s32.totalorder %s47, %s61
    %p63 = scmp.eq.s32.totalorder %s16, 0
    %p64 = por %p62, %p63
    %s65 = ssub.s32 %s10, %s17
    %p66 = scmp.eq.s32.totalorder %s65, 0
    %s68 = sadd.s32 %s67, 1
    %s69 = scalar_select %p66, %s67, %s68
    %p72 = pneg %p66
    %p73 = scmp.eq.s32.totalorder %s10, 1
    %p74 = por %p72, %p73
    %p75 = scmp.ne.s32.totalorder %s67, %s70
    %p76 = scmp.eq.s32.totalorder %s10, 0
    %p77 = por %p75, %p76
    %p78 = scmp.ne.s32.totalorder %s67, %s70
    %p79 = scmp.eq.s32.totalorder %s15, 1
    %p80 = por %p78, %p79
    %p81 = scmp.ne.s32.totalorder %s70, %s71
    %p82 = scmp.eq.s32.totalorder %s15, 0
    %p83 = por %p81, %p82
    %p84 = scmp.ne.s32.totalorder %s70, %s71
    %p85 = scmp.eq.s32.totalorder %s16, 1
    %p86 = por %p84, %p85
    %p88 = scmp.ne.s32.totalorder %s71, %s87
    %p89 = scmp.eq.s32.totalorder %s16, 0
    %p90 = por %p88, %p89
    %s91 = ssub.s32 %s10, %s17
    %p92 = scmp.eq.s32.totalorder %s91, 0
    %s94 = sadd.s32 %s93, 1
    %s95 = scalar_select %p92, %s93, %s94
    %p98 = pneg %p92
    %p99 = scmp.eq.s32.totalorder %s10, 1
    %p100 = por %p98, %p99
    %p101 = scmp.ne.s32.totalorder %s93, %s96
    %p102 = scmp.eq.s32.totalorder %s10, 0
    %p103 = por %p101, %p102
    %p104 = scmp.ne.s32.totalorder %s93, %s96
    %p105 = scmp.eq.s32.totalorder %s15, 1
    %p106 = por %p104, %p105
    %p107 = scmp.ne.s32.totalorder %s96, %s97
    %p108 = scmp.eq.s32.totalorder %s15, 0
    %p109 = por %p107, %p108
    %p110 = scmp.ne.s32.totalorder %s96, %s97
    %p111 = scmp.eq.s32.totalorder %s16, 1
    %p112 = por %p110, %p111
    %p114 = scmp.ne.s32.totalorder %s97, %s113
    %p115 = scmp.eq.s32.totalorder %s16, 0
    %p116 = por %p114, %p115
    %p117 = scmp.le.s32.totalorder 1, %s10
    %p118 = scmp.lt.s32.totalorder %s10, 3
    %p119 = pnand %p117, %p118
    %p120 = pneg %p119
    // Predicated region
    $region9: #{basic_block_forward.3} parent=5 // pred_check
      _
    $region10: #{basic_block_forward.3} parent=5 // pred_check_branch
      %122 = sbr.rel (%p119) target = $region12
    $region11: #{basic_block_forward.3} parent=5 // pred_region
      %s123 = ssub.s32 %s10, 1
      // Predicated region
      $region13: #{basic_block_forward.3} parent=11 // pred_check
        %p124 = pneg %p57
      $region14: #{basic_block_forward.3} parent=11 // pred_check_branch
        %126 = sbr.rel (%p124) target = $region16
      $region15: #{basic_block_forward.3} parent=11 // pred_region
        _
      $region16: #{basic_block_forward.3} parent=11 // pred_fallthru
        _
    $region12: #{basic_block_forward.3} parent=5 // pred_fallthru
      _
    %p127 = scmp.lt.s32.totalorder %s10, 2
    // Predicated region
    $region17: #{basic_block_forward.3} parent=5 // pred_check
      %p128 = pneg %p127
    $region18: #{basic_block_forward.3} parent=5 // pred_check_branch
      %130 = sbr.rel (%p128) target = $region20
    $region19: #{basic_block_forward.3} parent=5 // pred_region
      // Predicated region
      $region21: #{basic_block_forward.3} parent=19 // pred_check
        %p131 = pneg %p30
      $region22: #{basic_block_forward.3} parent=19 // pred_check_branch
        %133 = sbr.rel (%p131) target = $region24
      $region23: #{basic_block_forward.3} parent=19 // pred_region
        %p134 = scmp.lt.s32.totalorder %s10, 1
        %s135 = scalar_select %p134, %s10, 1
        %s136 = smul.addr %s135, 54
        %s137 = smul.addr %s136, 4
        %s138 = scalar_lea.vmem %s0, %s137
      $region24: #{basic_block_forward.3} parent=19 // pred_fallthru
        _
    $region20: #{basic_block_forward.3} parent=5 // pred_fallthru
      _
    %p139 = scmp.le.s32.totalorder 1, %s10
    %p140 = scmp.lt.s32.totalorder %s10, 3
    %p141 = pnand %p139, %p140
    %p142 = pneg %p141
    // Predicated region
    $region25: #{basic_block_forward.3} parent=5 // pred_check
      _
    $region26: #{basic_block_forward.3} parent=5 // pred_check_branch
      %144 = sbr.rel (%p141) target = $region28
    $region27: #{basic_block_forward.3} parent=5 // pred_region
      %s145 = ssub.s32 %s10, 1
      %p146 = scmp.lt.s32.totalorder %s15, 1
      %s147 = scalar_select %p146, %s15, 1
      %s148 = smul.addr %s147, 54
      %s149 = smul.addr %s148, 4
      %s150 = scalar_lea.vmem %s0, %s149
      %p151 = pneg %p36
      %p152 = pneg %p33
      %p153 = pneg %p57
      %p154 = pneg %p54
      %p155 = pneg %p83
      %p156 = pneg %p80
      %p157 = scmp.lt.s32.totalorder %s15, 1
      %s158 = scalar_select %p157, %s15, 1
      %s159 = smul.addr %s158, 32
      %s160 = smul.addr %s159, 4
      %s161 = scalar_lea.vmem %s2, %s160
      %p162 = pneg %p109
      %p163 = pneg %p106
      %p164 = scmp.lt.s32.totalorder %s15, 1
      %s165 = scalar_select %p164, %s15, 1
      %s166 = smul.addr %s165, 2
      %s167 = scalar_lea.vmem %s3, %s166
      %p168 = scmp.lt.s32.totalorder %s15, 1
      %s169 = scalar_select %p168, %s15, 1
      %s170 = smul.addr %s169, 54
      %s171 = smul.addr %s170, 4
      %s172 = scalar_lea.vmem %s0, %s171
      %p173 = scmp.lt.s32.totalorder %s15, 1
      %s174 = scalar_select %p173, %s15, 1
      %s175 = smul.addr %s174, 32
      %s176 = smul.addr %s175, 4
      %s177 = scalar_lea.vmem %s2, %s176
      %p178 = scmp.lt.s32.totalorder %s15, 1
      %s179 = scalar_select %p178, %s15, 1
      %s180 = smul.addr %s179, 2
      %s181 = scalar_lea.vmem %s3, %s180
      %v183 = vld [vmem:[%s172] sm:$0xf]
      %v184 = vld [vmem:[%s172 + $0x4] sm:$0xf]
      %v185 = vld [vmem:[%s172 + $0xc] sm:$0xf]
      %v186 = vld [vmem:[%s172 + $0x10] sm:$0xf]
      %v187 = vld [vmem:[%s172 + $0x18] sm:$0xf]
      %v188 = vld [vmem:[%s172 + $0x1c] sm:$0xf]
      %v189 = vld [vmem:[%s172 + $0x24] sm:$0xf]
      %v190 = vld [vmem:[%s172 + $0x28] sm:$0xf]
      %v191 = vld [vmem:[%s172 + $0x30] sm:$0xf]
      %v192 = vld [vmem:[%s172 + $0x34] sm:$0xf]
      %v193 = vld [vmem:[%s172 + $0x3c] sm:$0xf]
      %v194 = vld [vmem:[%s172 + $0x40] sm:$0xf]
      %v195 = vld [vmem:[%s172 + $0x48] sm:$0xf]
      %v196 = vld [vmem:[%s172 + $0x4c] sm:$0xf]
      %v197 = vld [vmem:[%s172 + $0x54] sm:$0xf]
      %v198 = vld [vmem:[%s172 + $0x58] sm:$0xf]
      %v199 = vld [vmem:[%s172 + $0x60] sm:$0xf]
      %v200 = vld [vmem:[%s172 + $0x64] sm:$0xf]
      %v201 = vld [vmem:[%s172 + $0x6c] sm:$0xf]
      %v202 = vld [vmem:[%s172 + $0x70] sm:$0xf]
      %v203 = vld [vmem:[%s172 + $0x78] sm:$0xf]
      %v204 = vld [vmem:[%s172 + $0x7c] sm:$0xf]
      %v205 = vld [vmem:[%s172 + $0x84] sm:$0xf]
      %v206 = vld [vmem:[%s172 + $0x88] sm:$0xf]
      %v207 = vld [vmem:[%s172 + $0x90] sm:$0xf]
      %v208 = vld [vmem:[%s172 + $0x94] sm:$0xf]
      %v209 = vld [vmem:[%s172 + $0x9c] sm:$0xf]
      %v210 = vld [vmem:[%s172 + $0xa0] sm:$0xf]
      %v211 = vld [vmem:[%s172 + $0xa8] sm:$0xf]
      %v212 = vld [vmem:[%s172 + $0xac] sm:$0xf]
      %v213 = vld [vmem:[%s172 + $0xb4] sm:$0xf]
      %v214 = vld [vmem:[%s172 + $0xb8] sm:$0xf]
      %v215 = vld [vmem:[%s1] sm:$0xf]
      %v216 = vld [vmem:[%s1 + $0x4] sm:$0xf]
      %v217 = vld [vmem:[%s1 + $0x8] sm:$0xf]
      %v218 = vld [vmem:[%s1 + $0xc] sm:$0xf]
      %v219 = vld [vmem:[%s1 + $0x10] sm:$0xf]
      %v220 = vld [vmem:[%s1 + $0x14] sm:$0xf]
      %v221 = vld [vmem:[%s1 + $0x18] sm:$0xf]
      %v222 = vld [vmem:[%s1 + $0x1c] sm:$0xf]
      %v223 = vld [vmem:[%s1 + $0x20] sm:$0xf]
      %v224 = vld [vmem:[%s1 + $0x24] sm:$0xf]
      %v225 = vld [vmem:[%s1 + $0x28] sm:$0xf]
      %v226 = vld [vmem:[%s1 + $0x2c] sm:$0xf]
      %v227 = vld [vmem:[%s1 + $0x30] sm:$0xf]
      %v228 = vld [vmem:[%s1 + $0x34] sm:$0xf]
      %v229 = vld [vmem:[%s1 + $0x38] sm:$0xf]
      %v230 = vld [vmem:[%s1 + $0x3c] sm:$0xf]
      %v231 = vld [vmem:[%s172 + $0x8] sm:$0x1]
      %v232 = vld [vmem:[%s172 + $0x14] sm:$0x1]
      %v233 = vld [vmem:[%s172 + $0x20] sm:$0x1]
      %v234 = vld [vmem:[%s172 + $0x2c] sm:$0x1]
      %v235 = vld [vmem:[%s172 + $0x38] sm:$0x1]
      %v236 = vld [vmem:[%s172 + $0x44] sm:$0x1]
      %v237 = vld [vmem:[%s172 + $0x50] sm:$0x1]
      %v238 = vld [vmem:[%s172 + $0x5c] sm:$0x1]
      %v239 = vld [vmem:[%s172 + $0x68] sm:$0x1]
      %v240 = vld [vmem:[%s172 + $0x74] sm:$0x1]
      %v241 = vld [vmem:[%s172 + $0x80] sm:$0x1]
      %v242 = vld [vmem:[%s172 + $0x8c] sm:$0x1]
      %v243 = vld [vmem:[%s172 + $0x98] sm:$0x1]
      %v244 = vld [vmem:[%s172 + $0xa4] sm:$0x1]
      %v245 = vld [vmem:[%s172 + $0xb0] sm:$0x1]
      %v246 = vld [vmem:[%s172 + $0xbc] sm:$0x1]
      %vm247 = vsmask.f32 3328
      %vm248 = vsmask.f32 7440
      %vm249 = vmor %vm247, %vm248
      %v251 = vshrl.u32 %v183, 16
      %v253 = vrot.slane %v251, 4
      %v254 = vshll.u32 %v183, 16
      %v256 = vrot.slane %v254, 5
      %v257 = vor.u32 %v253, %v256
      %v258 = vrot.slane %v257, 4
      %v260 = vshll.u32 %v184, 16
      %v262 = vrot.slane %v260, 5
      %v263 = vsel %vm249, %v258, %v262
      %v264 = vshrl.u32 %v184, 16
      %v266 = vrot.slane %v264, 4
      %v267 = vor.u32 %v266, %v262
      %v268 = vrot.slane %v267, 4
      %v270 = vshll.u32 %v231, 16
      %v272 = vrot.slane %v270, 5
      %v273 = vsel %vm249, %v268, %v272
      %v275 = vshrl.u32 %v185, 16
      %v277 = vrot.slane %v275, 4
      %v278 = vshll.u32 %v185, 16
      %v280 = vrot.slane %v278, 5
      %v281 = vor.u32 %v277, %v280
      %v282 = vrot.slane %v281, 4
      %v284 = vshll.u32 %v186, 16
      %v286 = vrot.slane %v284, 5
      %v287 = vsel %vm249, %v282, %v286
      %v288 = vshrl.u32 %v186, 16
      %v290 = vrot.slane %v288, 4
      %v291 = vor.u32 %v290, %v286
      %v292 = vrot.slane %v291, 4
      %v294 = vshll.u32 %v232, 16
      %v296 = vrot.slane %v294, 5
      %v297 = vsel %vm249, %v292, %v296
      %v299 = vshrl.u32 %v187, 16
      %v301 = vrot.slane %v299, 4
      %v302 = vshll.u32 %v187, 16
      %v304 = vrot.slane %v302, 5
      %v305 = vor.u32 %v301, %v304
      %v306 = vrot.slane %v305, 4
      %v308 = vshll.u32 %v188, 16
      %v310 = vrot.slane %v308, 5
      %v311 = vsel %vm249, %v306, %v310
      %v312 = vshrl.u32 %v188, 16
      %v314 = vrot.slane %v312, 4
      %v315 = vor.u32 %v314, %v310
      %v316 = vrot.slane %v315, 4
      %v318 = vshll.u32 %v233, 16
      %v320 = vrot.slane %v318, 5
      %v321 = vsel %vm249, %v316, %v320
      %v323 = vshrl.u32 %v189, 16
      %v325 = vrot.slane %v323, 4
      %v326 = vshll.u32 %v189, 16
      %v328 = vrot.slane %v326, 5
      %v329 = vor.u32 %v325, %v328
      %v330 = vrot.slane %v329, 4
      %v332 = vshll.u32 %v190, 16
      %v334 = vrot.slane %v332, 5
      %v335 = vsel %vm249, %v330, %v334
      %v336 = vshrl.u32 %v190, 16
      %v338 = vrot.slane %v336, 4
      %v339 = vor.u32 %v338, %v334
      %v340 = vrot.slane %v339, 4
      %v342 = vshll.u32 %v234, 16
      %v344 = vrot.slane %v342, 5
      %v345 = vsel %vm249, %v340, %v344
      %v347 = vshrl.u32 %v191, 16
      %v349 = vrot.slane %v347, 4
      %v350 = vshll.u32 %v191, 16
      %v352 = vrot.slane %v350, 5
      %v353 = vor.u32 %v349, %v352
      %v354 = vrot.slane %v353, 4
      %v356 = vshll.u32 %v192, 16
      %v358 = vrot.slane %v356, 5
      %v359 = vsel %vm249, %v354, %v358
      %v360 = vshrl.u32 %v192, 16
      %v362 = vrot.slane %v360, 4
      %v363 = vor.u32 %v362, %v358
      %v364 = vrot.slane %v363, 4
      %v366 = vshll.u32 %v235, 16
      %v368 = vrot.slane %v366, 5
      %v369 = vsel %vm249, %v364, %v368
      %v371 = vshrl.u32 %v193, 16
      %v373 = vrot.slane %v371, 4
      %v374 = vshll.u32 %v193, 16
      %v376 = vrot.slane %v374, 5
      %v377 = vor.u32 %v373, %v376
      %v378 = vrot.slane %v377, 4
      %v380 = vshll.u32 %v194, 16
      %v382 = vrot.slane %v380, 5
      %v383 = vsel %vm249, %v378, %v382
      %v384 = vshrl.u32 %v194, 16
      %v386 = vrot.slane %v384, 4
      %v387 = vor.u32 %v386, %v382
      %v388 = vrot.slane %v387, 4
      %v390 = vshll.u32 %v236, 16
      %v392 = vrot.slane %v390, 5
      %v393 = vsel %vm249, %v388, %v392
      %v395 = vshrl.u32 %v195, 16
      %v397 = vrot.slane %v395, 4
      %v398 = vshll.u32 %v195, 16
      %v400 = vrot.slane %v398, 5
      %v401 = vor.u32 %v397, %v400
      %v402 = vrot.slane %v401, 4
      %v404 = vshll.u32 %v196, 16
      %v406 = vrot.slane %v404, 5
      %v407 = vsel %vm249, %v402, %v406
      %v408 = vshrl.u32 %v196, 16
      %v410 = vrot.slane %v408, 4
      %v411 = vor.u32 %v410, %v406
      %v412 = vrot.slane %v411, 4
      %v414 = vshll.u32 %v237, 16
      %v416 = vrot.slane %v414, 5
      %v417 = vsel %vm249, %v412, %v416
      %v419 = vshrl.u32 %v197, 16
      %v421 = vrot.slane %v419, 4
      %v422 = vshll.u32 %v197, 16
      %v424 = vrot.slane %v422, 5
      %v425 = vor.u32 %v421, %v424
      %v426 = vrot.slane %v425, 4
      %v428 = vshll.u32 %v198, 16
      %v430 = vrot.slane %v428, 5
      %v431 = vsel %vm249, %v426, %v430
      %v432 = vshrl.u32 %v198, 16
      %v434 = vrot.slane %v432, 4
      %v435 = vor.u32 %v434, %v430
      %v436 = vrot.slane %v435, 4
      %v438 = vshll.u32 %v238, 16
      %v440 = vrot.slane %v438, 5
      %v441 = vsel %vm249, %v436, %v440
      %v443 = vshrl.u32 %v199, 16
      %v445 = vrot.slane %v443, 4
      %v446 = vshll.u32 %v199, 16
      %v448 = vrot.slane %v446, 5
      %v449 = vor.u32 %v445, %v448
      %v450 = vrot.slane %v449, 4
      %v452 = vshll.u32 %v200, 16
      %v454 = vrot.slane %v452, 5
      %v455 = vsel %vm249, %v450, %v454
      %v456 = vshrl.u32 %v200, 16
      %v458 = vrot.slane %v456, 4
      %v459 = vor.u32 %v458, %v454
      %v460 = vrot.slane %v459, 4
      %v462 = vshll.u32 %v239, 16
      %v464 = vrot.slane %v462, 5
      %v465 = vsel %vm249, %v460, %v464
      %v467 = vshrl.u32 %v201, 16
      %v469 = vrot.slane %v467, 4
      %v470 = vshll.u32 %v201, 16
      %v472 = vrot.slane %v470, 5
      %v473 = vor.u32 %v469, %v472
      %v474 = vrot.slane %v473, 4
      %v476 = vshll.u32 %v202, 16
      %v478 = vrot.slane %v476, 5
      %v479 = vsel %vm249, %v474, %v478
      %v480 = vshrl.u32 %v202, 16
      %v482 = vrot.slane %v480, 4
      %v483 = vor.u32 %v482, %v478
      %v484 = vrot.slane %v483, 4
      %v486 = vshll.u32 %v240, 16
      %v488 = vrot.slane %v486, 5
      %v489 = vsel %vm249, %v484, %v488
      %v491 = vshrl.u32 %v203, 16
      %v493 = vrot.slane %v491, 4
      %v494 = vshll.u32 %v203, 16
      %v496 = vrot.slane %v494, 5
      %v497 = vor.u32 %v493, %v496
      %v498 = vrot.slane %v497, 4
      %v500 = vshll.u32 %v204, 16
      %v502 = vrot.slane %v500, 5
      %v503 = vsel %vm249, %v498, %v502
      %v504 = vshrl.u32 %v204, 16
      %v506 = vrot.slane %v504, 4
      %v507 = vor.u32 %v506, %v502
      %v508 = vrot.slane %v507, 4
      %v510 = vshll.u32 %v241, 16
      %v512 = vrot.slane %v510, 5
      %v513 = vsel %vm249, %v508, %v512
      %v515 = vshrl.u32 %v205, 16
      %v517 = vrot.slane %v515, 4
      %v518 = vshll.u32 %v205, 16
      %v520 = vrot.slane %v518, 5
      %v521 = vor.u32 %v517, %v520
      %v522 = vrot.slane %v521, 4
      %v524 = vshll.u32 %v206, 16
      %v526 = vrot.slane %v524, 5
      %v527 = vsel %vm249, %v522, %v526
      %v528 = vshrl.u32 %v206, 16
      %v530 = vrot.slane %v528, 4
      %v531 = vor.u32 %v530, %v526
      %v532 = vrot.slane %v531, 4
      %v534 = vshll.u32 %v242, 16
      %v536 = vrot.slane %v534, 5
      %v537 = vsel %vm249, %v532, %v536
      %v539 = vshrl.u32 %v207, 16
      %v541 = vrot.slane %v539, 4
      %v542 = vshll.u32 %v207, 16
      %v544 = vrot.slane %v542, 5
      %v545 = vor.u32 %v541, %v544
      %v546 = vrot.slane %v545, 4
      %v548 = vshll.u32 %v208, 16
      %v550 = vrot.slane %v548, 5
      %v551 = vsel %vm249, %v546, %v550
      %v552 = vshrl.u32 %v208, 16
      %v554 = vrot.slane %v552, 4
      %v555 = vor.u32 %v554, %v550
      %v556 = vrot.slane %v555, 4
      %v558 = vshll.u32 %v243, 16
      %v560 = vrot.slane %v558, 5
      %v561 = vsel %vm249, %v556, %v560
      %v563 = vshrl.u32 %v209, 16
      %v565 = vrot.slane %v563, 4
      %v566 = vshll.u32 %v209, 16
      %v568 = vrot.slane %v566, 5
      %v569 = vor.u32 %v565, %v568
      %v570 = vrot.slane %v569, 4
      %v572 = vshll.u32 %v210, 16
      %v574 = vrot.slane %v572, 5
      %v575 = vsel %vm249, %v570, %v574
      %v576 = vshrl.u32 %v210, 16
      %v578 = vrot.slane %v576, 4
      %v579 = vor.u32 %v578, %v574
      %v580 = vrot.slane %v579, 4
      %v582 = vshll.u32 %v244, 16
      %v584 = vrot.slane %v582, 5
      %v585 = vsel %vm249, %v580, %v584
      %v587 = vshrl.u32 %v211, 16
      %v589 = vrot.slane %v587, 4
      %v590 = vshll.u32 %v211, 16
      %v592 = vrot.slane %v590, 5
      %v593 = vor.u32 %v589, %v592
      %v594 = vrot.slane %v593, 4
      %v596 = vshll.u32 %v212, 16
      %v598 = vrot.slane %v596, 5
      %v599 = vsel %vm249, %v594, %v598
      %v600 = vshrl.u32 %v212, 16
      %v602 = vrot.slane %v600, 4
      %v603 = vor.u32 %v602, %v598
      %v604 = vrot.slane %v603, 4
      %v606 = vshll.u32 %v245, 16
      %v608 = vrot.slane %v606, 5
      %v609 = vsel %vm249, %v604, %v608
      %v611 = vshrl.u32 %v213, 16
      %v613 = vrot.slane %v611, 4
      %v614 = vshll.u32 %v213, 16
      %v616 = vrot.slane %v614, 5
      %v617 = vor.u32 %v613, %v616
      %v618 = vrot.slane %v617, 4
      %v620 = vshll.u32 %v214, 16
      %v622 = vrot.slane %v620, 5
      %v623 = vsel %vm249, %v618, %v622
      %v624 = vshrl.u32 %v214, 16
      %v626 = vrot.slane %v624, 4
      %v627 = vor.u32 %v626, %v622
      %v628 = vrot.slane %v627, 4
      %v630 = vshll.u32 %v246, 16
      %v632 = vrot.slane %v630, 5
      %v633 = vsel %vm249, %v628, %v632
      %s634 = scalar_lea.vmem %s1, 64
      %v635 = vld [vmem:[%s634] sm:$0xf]
      %v636 = vld [vmem:[%s634 + $0x4] sm:$0xf]
      %v637 = vld [vmem:[%s634 + $0x8] sm:$0xf]
      %v638 = vld [vmem:[%s634 + $0xc] sm:$0xf]
      %v639 = vld [vmem:[%s634 + $0x10] sm:$0xf]
      %v640 = vld [vmem:[%s634 + $0x14] sm:$0xf]
      %v641 = vld [vmem:[%s634 + $0x18] sm:$0xf]
      %v642 = vld [vmem:[%s634 + $0x1c] sm:$0xf]
      %v643 = vld [vmem:[%s634 + $0x20] sm:$0xf]
      %v644 = vld [vmem:[%s634 + $0x24] sm:$0xf]
      %v645 = vld [vmem:[%s634 + $0x28] sm:$0xf]
      %v646 = vld [vmem:[%s634 + $0x2c] sm:$0xf]
      %v647 = vld [vmem:[%s634 + $0x30] sm:$0xf]
      %v648 = vld [vmem:[%s634 + $0x34] sm:$0xf]
      %v649 = vld [vmem:[%s634 + $0x38] sm:$0xf]
      %v650 = vld [vmem:[%s634 + $0x3c] sm:$0xf]
      %v651 = vunpack.c.l.b16 %v263
      %v652 = vunpack.c.l.b16 %v273
      %v653 = vunpack.c.l.b16 %v287
      %v654 = vunpack.c.l.b16 %v297
      %v655 = vunpack.c.l.b16 %v311
      %v656 = vunpack.c.l.b16 %v321
      %v657 = vunpack.c.l.b16 %v335
      %v658 = vunpack.c.l.b16 %v345
      %v659 = vunpack.c.l.b16 %v359
      %v660 = vunpack.c.l.b16 %v369
      %v661 = vunpack.c.l.b16 %v383
      %v662 = vunpack.c.l.b16 %v393
      %v663 = vunpack.c.l.b16 %v407
      %v664 = vunpack.c.l.b16 %v417
      %v665 = vunpack.c.l.b16 %v431
      %v666 = vunpack.c.l.b16 %v441
      %v667 = vunpack.c.l.b16 %v455
      %v668 = vunpack.c.l.b16 %v465
      %v669 = vunpack.c.l.b16 %v479
      %v670 = vunpack.c.l.b16 %v489
      %v671 = vunpack.c.l.b16 %v503
      %v672 = vunpack.c.l.b16 %v513
      %v673 = vunpack.c.l.b16 %v527
      %v674 = vunpack.c.l.b16 %v537
      %v675 = vunpack.c.l.b16 %v551
      %v676 = vunpack.c.l.b16 %v561
      %v677 = vunpack.c.l.b16 %v575
      %v678 = vunpack.c.l.b16 %v585
      %v679 = vunpack.c.l.b16 %v599
      %v680 = vunpack.c.l.b16 %v609
      %v681 = vunpack.c.l.b16 %v623
      %v682 = vunpack.c.l.b16 %v633
      %v683 = vpack.c.b16 %v652, %v651
      %v684 = vpack.c.b16 %v654, %v653
      %v685 = vpack.c.b16 %v656, %v655
      %v686 = vpack.c.b16 %v658, %v657
      %v687 = vpack.c.b16 %v660, %v659
      %v688 = vpack.c.b16 %v662, %v661
      %v689 = vpack.c.b16 %v664, %v663
      %v690 = vpack.c.b16 %v666, %v665
      %v691 = vpack.c.b16 %v668, %v667
      %v692 = vpack.c.b16 %v670, %v669
      %v693 = vpack.c.b16 %v672, %v671
      %v694 = vpack.c.b16 %v674, %v673
      %v695 = vpack.c.b16 %v676, %v675
      %v696 = vpack.c.b16 %v678, %v677
      %v697 = vpack.c.b16 %v680, %v679
      %v698 = vpack.c.b16 %v682, %v681
      %v731 = vunpack.c.l.b16 %v635
      %v732 = vunpack.c.l.b16 %v636
      %v733 = vunpack.c.l.b16 %v637
      %v734 = vunpack.c.l.b16 %v638
      %v735 = vunpack.c.l.b16 %v639
      %v736 = vunpack.c.l.b16 %v640
      %v737 = vunpack.c.l.b16 %v641
      %v738 = vunpack.c.l.b16 %v642
      %v739 = vunpack.c.l.b16 %v643
      %v740 = vunpack.c.l.b16 %v644
      %v741 = vunpack.c.l.b16 %v645
      %v742 = vunpack.c.l.b16 %v646
      %v743 = vunpack.c.l.b16 %v647
      %v744 = vunpack.c.l.b16 %v648
      %v745 = vunpack.c.l.b16 %v649
      %v746 = vunpack.c.l.b16 %v650
      %v747 = vpack.c.b16 %v732, %v731
      %v748 = vpack.c.b16 %v734, %v733
      %v749 = vpack.c.b16 %v736, %v735
      %v750 = vpack.c.b16 %v738, %v737
      %v751 = vpack.c.b16 %v740, %v739
      %v752 = vpack.c.b16 %v742, %v741
      %v753 = vpack.c.b16 %v744, %v743
      %v754 = vpack.c.b16 %v746, %v745
      %763 = vmatprep.subr.bf16.mxu0 0
      %764 = vmatpush1.bf16.msra.mxu0 %v747
      %765 = vmatprep.subr.bf16.mxu0 0
      %766 = vmatpush1.bf16.msra.mxu0 %v748
      %767 = vmatprep.subr.bf16.mxu0 0
      %768 = vmatpush1.bf16.msra.mxu0 %v749
      %769 = vmatprep.subr.bf16.mxu0 0
      %770 = vmatpush1.bf16.msra.mxu0 %v750
      %771 = vmatprep.subr.bf16.mxu0 0
      %772 = vmatpush1.bf16.msra.mxu0 %v751
      %773 = vmatprep.subr.bf16.mxu0 0
      %774 = vmatpush1.bf16.msra.mxu0 %v752
      %775 = vmatprep.subr.bf16.mxu0 0
      %776 = vmatpush1.bf16.msra.mxu0 %v753
      %777 = vmatprep.subr.bf16.mxu0 0
      %778 = vmatpush1.bf16.msra.mxu0 %v754
      %779 = vmatprep.subr.bf16.mxu0 0
      %780 = vmatpush1.bf16.msra.mxu0 0
      %781 = vmatprep.subr.bf16.mxu0 0
      %782 = vmatpush1.bf16.msra.mxu0 0
      %783 = vmatprep.subr.bf16.mxu0 0
      %784 = vmatpush1.bf16.msra.mxu0 0
      %785 = vmatprep.subr.bf16.mxu0 0
      %786 = vmatpush1.bf16.msra.mxu0 0
      %787 = vmatprep.subr.bf16.mxu0 0
      %788 = vmatpush1.bf16.msra.mxu0 0
      %789 = vmatprep.subr.bf16.mxu0 0
      %790 = vmatpush1.bf16.msra.mxu0 0
      %791 = vmatprep.subr.bf16.mxu0 0
      %792 = vmatpush1.bf16.msra.mxu0 0
      %793 = vmatprep.subr.bf16.mxu0 0
      %794 = vmatpush1.bf16.msra.mxu0 0
      %795 = vmatprep.mubr.bf16.mxu0 0
      %796 = vmatmul.mubr.bf16.gmra.mrb[0].mxu0 %v683
      %v797 = vpop.f32.mrb[0].mxu0
      %v798 = vadd.f32 0.0, %v797
      %v799 = vpop.f32.mrb[0].mxu0
      %v800 = vpop.f32.mrb[0].mxu0
      %v801 = vadd.f32 0.0, %v800
      %v802 = vpop.f32.mrb[0].mxu0
      %803 = vmatprep.mubr.bf16.mxu0 0
      %804 = vmatmul.mubr.bf16.gmra.mrb[0].mxu0 %v684
      %v805 = vpop.f32.mrb[0].mxu0
      %v806 = vadd.f32 0.0, %v805
      %v807 = vpop.f32.mrb[0].mxu0
      %v808 = vpop.f32.mrb[0].mxu0
      %v809 = vadd.f32 0.0, %v808
      %v810 = vpop.f32.mrb[0].mxu0
      %811 = vmatprep.mubr.bf16.mxu0 0
      %812 = vmatmul.mubr.bf16.gmra.mrb[0].mxu0 %v685
      %v813 = vpop.f32.mrb[0].mxu0
      %v814 = vadd.f32 0.0, %v813
      %v815 = vpop.f32.mrb[0].mxu0
      %v816 = vpop.f32.mrb[0].mxu0
      %v817 = vadd.f32 0.0, %v816
      %v818 = vpop.f32.mrb[0].mxu0
      %819 = vmatprep.mubr.bf16.mxu0 0
      %820 = vmatmul.mubr.bf16.gmra.mrb[0].mxu0 %v686
      %v821 = vpop.f32.mrb[0].mxu0
      %v822 = vadd.f32 0.0, %v821
      %v823 = vpop.f32.mrb[0].mxu0
      %v824 = vpop.f32.mrb[0].mxu0
      %v825 = vadd.f32 0.0, %v824
      %v826 = vpop.f32.mrb[0].mxu0
      %827 = vmatprep.mubr.bf16.mxu0 0
      %828 = vmatmul.mubr.bf16.gmra.mrb[0].mxu0 %v687
      %v829 = vpop.f32.mrb[0].mxu0
      %v830 = vadd.f32 0.0, %v829
      %v831 = vpop.f32.mrb[0].mxu0
      %v832 = vpop.f32.mrb[0].mxu0
      %v833 = vadd.f32 0.0, %v832
      %v834 = vpop.f32.mrb[0].mxu0
      %835 = vmatprep.mubr.bf16.mxu0 0
      %836 = vmatmul.mubr.bf16.gmra.mrb[0].mxu0 %v688
      %v837 = vpop.f32.mrb[0].mxu0
      %v838 = vadd.f32 0.0, %v837
      %v839 = vpop.f32.mrb[0].mxu0
      %v840 = vpop.f32.mrb[0].mxu0
      %v841 = vadd.f32 0.0, %v840
      %v842 = vpop.f32.mrb[0].mxu0
      %843 = vmatprep.mubr.bf16.mxu0 0
      %844 = vmatmul.mubr.bf16.gmra.mrb[0].mxu0 %v689
      %v845 = vpop.f32.mrb[0].mxu0
      %v846 = vadd.f32 0.0, %v845
      %v847 = vpop.f32.mrb[0].mxu0
      %v848 = vpop.f32.mrb[0].mxu0
      %v849 = vadd.f32 0.0, %v848
      %v850 = vpop.f32.mrb[0].mxu0
      %851 = vmatprep.mubr.bf16.mxu0 0
      %852 = vmatmul.mubr.bf16.gmra.mrb[0].mxu0 %v690
      %v853 = vpop.f32.mrb[0].mxu0
      %v854 = vadd.f32 0.0, %v853
      %v855 = vpop.f32.mrb[0].mxu0
      %v856 = vpop.f32.mrb[0].mxu0
      %v857 = vadd.f32 0.0, %v856
      %v858 = vpop.f32.mrb[0].mxu0
      %859 = vmatprep.mubr.bf16.mxu0 0
      %860 = vmatmul.mubr.bf16.gmra.mrb[0].mxu0 %v691
      %v861 = vpop.f32.mrb[0].mxu0
      %v862 = vadd.f32 0.0, %v861
      %v863 = vpop.f32.mrb[0].mxu0
      %v864 = vpop.f32.mrb[0].mxu0
      %v865 = vadd.f32 0.0, %v864
      %v866 = vpop.f32.mrb[0].mxu0
      %867 = vmatprep.mubr.bf16.mxu0 0
      %868 = vmatmul.mubr.bf16.gmra.mrb[0].mxu0 %v692
      %v869 = vpop.f32.mrb[0].mxu0
      %v870 = vadd.f32 0.0, %v869
      %v871 = vpop.f32.mrb[0].mxu0
      %v872 = vpop.f32.mrb[0].mxu0
      %v873 = vadd.f32 0.0, %v872
      %v874 = vpop.f32.mrb[0].mxu0
      %875 = vmatprep.mubr.bf16.mxu0 0
      %876 = vmatmul.mubr.bf16.gmra.mrb[0].mxu0 %v693
      %v877 = vpop.f32.mrb[0].mxu0
      %v878 = vadd.f32 0.0, %v877
      %v879 = vpop.f32.mrb[0].mxu0
      %v880 = vpop.f32.mrb[0].mxu0
      %v881 = vadd.f32 0.0, %v880
      %v882 = vpop.f32.mrb[0].mxu0
      %883 = vmatprep.mubr.bf16.mxu0 0
      %884 = vmatmul.mubr.bf16.gmra.mrb[0].mxu0 %v694
      %v885 = vpop.f32.mrb[0].mxu0
      %v886 = vadd.f32 0.0, %v885
      %v887 = vpop.f32.mrb[0].mxu0
      %v888 = vpop.f32.mrb[0].mxu0
      %v889 = vadd.f32 0.0, %v888
      %v890 = vpop.f32.mrb[0].mxu0
      %891 = vmatprep.mubr.bf16.mxu0 0
      %892 = vmatmul.mubr.bf16.gmra.mrb[0].mxu0 %v695
      %v893 = vpop.f32.mrb[0].mxu0
      %v894 = vadd.f32 0.0, %v893
      %v895 = vpop.f32.mrb[0].mxu0
      %v896 = vpop.f32.mrb[0].mxu0
      %v897 = vadd.f32 0.0, %v896
      %v898 = vpop.f32.mrb[0].mxu0
      %899 = vmatprep.mubr.bf16.mxu0 0
      %900 = vmatmul.mubr.bf16.gmra.mrb[0].mxu0 %v696
      %v901 = vpop.f32.mrb[0].mxu0
      %v902 = vadd.f32 0.0, %v901
      %v903 = vpop.f32.mrb[0].mxu0
      %v904 = vpop.f32.mrb[0].mxu0
      %v905 = vadd.f32 0.0, %v904
      %v906 = vpop.f32.mrb[0].mxu0
      %907 = vmatprep.mubr.bf16.mxu0 0
      %908 = vmatmul.mubr.bf16.gmra.mrb[0].mxu0 %v697
      %v909 = vpop.f32.mrb[0].mxu0
      %v910 = vadd.f32 0.0, %v909
      %v911 = vpop.f32.mrb[0].mxu0
      %v912 = vpop.f32.mrb[0].mxu0
      %v913 = vadd.f32 0.0, %v912
      %v914 = vpop.f32.mrb[0].mxu0
      %915 = vmatprep.mubr.bf16.mxu0 0
      %916 = vmatmul.mubr.bf16.gmra.mrb[0].mxu0 %v698
      %v917 = vpop.f32.mrb[0].mxu0
      %v918 = vadd.f32 0.0, %v917
      %v919 = vpop.f32.mrb[0].mxu0
      %v920 = vpop.f32.mrb[0].mxu0
      %v921 = vadd.f32 0.0, %v920
      %v922 = vpop.f32.mrb[0].mxu0
      %923 = vdwg.mxu0
      %v956 = vunpack.c.l.b16 %v183
      %v957 = vunpack.c.l.b16 %v184
      %v958 = vunpack.c.l.b16 %v185
      %v959 = vunpack.c.l.b16 %v186
      %v960 = vunpack.c.l.b16 %v187
      %v961 = vunpack.c.l.b16 %v188
      %v962 = vunpack.c.l.b16 %v189
      %v963 = vunpack.c.l.b16 %v190
      %v964 = vunpack.c.l.b16 %v191
      %v965 = vunpack.c.l.b16 %v192
      %v966 = vunpack.c.l.b16 %v193
      %v967 = vunpack.c.l.b16 %v194
      %v968 = vunpack.c.l.b16 %v195
      %v969 = vunpack.c.l.b16 %v196
      %v970 = vunpack.c.l.b16 %v197
      %v971 = vunpack.c.l.b16 %v198
      %v972 = vunpack.c.l.b16 %v199
      %v973 = vunpack.c.l.b16 %v200
      %v974 = vunpack.c.l.b16 %v201
      %v975 = vunpack.c.l.b16 %v202
      %v976 = vunpack.c.l.b16 %v203
      %v977 = vunpack.c.l.b16 %v204
      %v978 = vunpack.c.l.b16 %v205
      %v979 = vunpack.c.l.b16 %v206
      %v980 = vunpack.c.l.b16 %v207
      %v981 = vunpack.c.l.b16 %v208
      %v982 = vunpack.c.l.b16 %v209
      %v983 = vunpack.c.l.b16 %v210
      %v984 = vunpack.c.l.b16 %v211
      %v985 = vunpack.c.l.b16 %v212
      %v986 = vunpack.c.l.b16 %v213
      %v987 = vunpack.c.l.b16 %v214
      %v988 = vpack.c.b16 %v957, %v956
      %v989 = vpack.c.b16 %v959, %v958
      %v990 = vpack.c.b16 %v961, %v960
      %v991 = vpack.c.b16 %v963, %v962
      %v992 = vpack.c.b16 %v965, %v964
      %v993 = vpack.c.b16 %v967, %v966
      %v994 = vpack.c.b16 %v969, %v968
      %v995 = vpack.c.b16 %v971, %v970
      %v996 = vpack.c.b16 %v973, %v972
      %v997 = vpack.c.b16 %v975, %v974
      %v998 = vpack.c.b16 %v977, %v976
      %v999 = vpack.c.b16 %v979, %v978
      %v1000 = vpack.c.b16 %v981, %v980
      %v1001 = vpack.c.b16 %v983, %v982
      %v1002 = vpack.c.b16 %v985, %v984
      %v1003 = vpack.c.b16 %v987, %v986
      %v1036 = vunpack.c.l.b16 %v215
      %v1037 = vunpack.c.l.b16 %v216
      %v1038 = vunpack.c.l.b16 %v217
      %v1039 = vunpack.c.l.b16 %v218
      %v1040 = vunpack.c.l.b16 %v219
      %v1041 = vunpack.c.l.b16 %v220
      %v1042 = vunpack.c.l.b16 %v221
      %v1043 = vunpack.c.l.b16 %v222
      %v1044 = vunpack.c.l.b16 %v223
      %v1045 = vunpack.c.l.b16 %v224
      %v1046 = vunpack.c.l.b16 %v225
      %v1047 = vunpack.c.l.b16 %v226
      %v1048 = vunpack.c.l.b16 %v227
      %v1049 = vunpack.c.l.b16 %v228
      %v1050 = vunpack.c.l.b16 %v229
      %v1051 = vunpack.c.l.b16 %v230
      %v1052 = vpack.c.b16 %v1037, %v1036
      %v1053 = vpack.c.b16 %v1039, %v1038
      %v1054 = vpack.c.b16 %v1041, %v1040
      %v1055 = vpack.c.b16 %v1043, %v1042
      %v1056 = vpack.c.b16 %v1045, %v1044
      %v1057 = vpack.c.b16 %v1047, %v1046
      %v1058 = vpack.c.b16 %v1049, %v1048
      %v1059 = vpack.c.b16 %v1051, %v1050
      %1068 = vmatprep.subr.bf16.mxu0 0
      %1069 = vmatpush1.bf16.msra.mxu0 %v1052
      %1070 = vmatprep.subr.bf16.mxu0 0
      %1071 = vmatpush1.bf16.msra.mxu0 %v1053
      %1072 = vmatprep.subr.bf16.mxu0 0
      %1073 = vmatpush1.bf16.msra.mxu0 %v1054
      %1074 = vmatprep.subr.bf16.mxu0 0
      %1075 = vmatpush1.bf16.msra.mxu0 %v1055
      %1076 = vmatprep.subr.bf16.mxu0 0
      %1077 = vmatpush1.bf16.msra.mxu0 %v1056
      %1078 = vmatprep.subr.bf16.mxu0 0
      %1079 = vmatpush1.bf16.msra.mxu0 %v1057
      %1080 = vmatprep.subr.bf16.mxu0 0
      %1081 = vmatpush1.bf16.msra.mxu0 %v1058
      %1082 = vmatprep.subr.bf16.mxu0 0
      %1083 = vmatpush1.bf16.msra.mxu0 %v1059
      %1084 = vmatprep.subr.bf16.mxu0 0
      %1085 = vmatpush1.bf16.msra.mxu0 0
      %1086 = vmatprep.subr.bf16.mxu0 0
      %1087 = vmatpush1.bf16.msra.mxu0 0
      %1088 = vmatprep.subr.bf16.mxu0 0
      %1089 = vmatpush1.bf16.msra.mxu0 0
      %1090 = vmatprep.subr.bf16.mxu0 0
      %1091 = vmatpush1.bf16.msra.mxu0 0
      %1092 = vmatprep.subr.bf16.mxu0 0
      %1093 = vmatpush1.bf16.msra.mxu0 0
      %1094 = vmatprep.subr.bf16.mxu0 0
      %1095 = vmatpush1.bf16.msra.mxu0 0
      %1096 = vmatprep.subr.bf16.mxu0 0
      %1097 = vmatpush1.bf16.msra.mxu0 0
      %1098 = vmatprep.subr.bf16.mxu0 0
      %1099 = vmatpush1.bf16.msra.mxu0 0
      %1100 = vmatprep.mubr.bf16.mxu0 0
      %1101 = vmatmul.mubr.bf16.gmra.mrb[0].mxu0 %v988
      %v1102 = vpop.f32.mrb[0].mxu0
      %v1103 = vadd.f32 %v798, %v1102
      %v1104 = vpop.f32.mrb[0].mxu0
      %v1105 = vpop.f32.mrb[0].mxu0
      %v1106 = vadd.f32 %v801, %v1105
      %v1107 = vpop.f32.mrb[0].mxu0
      %1108 = vmatprep.mubr.bf16.mxu0 0
      %1109 = vmatmul.mubr.bf16.gmra.mrb[0].mxu0 %v989
      %v1110 = vpop.f32.mrb[0].mxu0
      %v1111 = vadd.f32 %v806, %v1110
      %v1112 = vpop.f32.mrb[0].mxu0
      %v1113 = vpop.f32.mrb[0].mxu0
      %v1114 = vadd.f32 %v809, %v1113
      %v1115 = vpop.f32.mrb[0].mxu0
      %1116 = vmatprep.mubr.bf16.mxu0 0
      %1117 = vmatmul.mubr.bf16.gmra.mrb[0].mxu0 %v990
      %v1118 = vpop.f32.mrb[0].mxu0
      %v1119 = vadd.f32 %v814, %v1118
      %v1120 = vpop.f32.mrb[0].mxu0
      %v1121 = vpop.f32.mrb[0].mxu0
      %v1122 = vadd.f32 %v817, %v1121
      %v1123 = vpop.f32.mrb[0].mxu0
      %1124 = vmatprep.mubr.bf16.mxu0 0
      %1125 = vmatmul.mubr.bf16.gmra.mrb[0].mxu0 %v991
      %v1126 = vpop.f32.mrb[0].mxu0
      %v1127 = vadd.f32 %v822, %v1126
      %v1128 = vpop.f32.mrb[0].mxu0
      %v1129 = vpop.f32.mrb[0].mxu0
      %v1130 = vadd.f32 %v825, %v1129
      %v1131 = vpop.f32.mrb[0].mxu0
      %1132 = vmatprep.mubr.bf16.mxu0 0
      %1133 = vmatmul.mubr.bf16.gmra.mrb[0].mxu0 %v992
      %v1134 = vpop.f32.mrb[0].mxu0
      %v1135 = vadd.f32 %v830, %v1134
      %v1136 = vpop.f32.mrb[0].mxu0
      %v1137 = vpop.f32.mrb[0].mxu0
      %v1138 = vadd.f32 %v833, %v1137
      %v1139 = vpop.f32.mrb[0].mxu0
      %1140 = vmatprep.mubr.bf16.mxu0 0
      %1141 = vmatmul.mubr.bf16.gmra.mrb[0].mxu0 %v993
      %v1142 = vpop.f32.mrb[0].mxu0
      %v1143 = vadd.f32 %v838, %v1142
      %v1144 = vpop.f32.mrb[0].mxu0
      %v1145 = vpop.f32.mrb[0].mxu0
      %v1146 = vadd.f32 %v841, %v1145
      %v1147 = vpop.f32.mrb[0].mxu0
      %1148 = vmatprep.mubr.bf16.mxu0 0
      %1149 = vmatmul.mubr.bf16.gmra.mrb[0].mxu0 %v994
      %v1150 = vpop.f32.mrb[0].mxu0
      %v1151 = vadd.f32 %v846, %v1150
      %v1152 = vpop.f32.mrb[0].mxu0
      %v1153 = vpop.f32.mrb[0].mxu0
      %v1154 = vadd.f32 %v849, %v1153
      %v1155 = vpop.f32.mrb[0].mxu0
      %1156 = vmatprep.mubr.bf16.mxu0 0
      %1157 = vmatmul.mubr.bf16.gmra.mrb[0].mxu0 %v995
      %v1158 = vpop.f32.mrb[0].mxu0
      %v1159 = vadd.f32 %v854, %v1158
      %v1160 = vpop.f32.mrb[0].mxu0
      %v1161 = vpop.f32.mrb[0].mxu0
      %v1162 = vadd.f32 %v857, %v1161
      %v1163 = vpop.f32.mrb[0].mxu0
      %1164 = vmatprep.mubr.bf16.mxu0 0
      %1165 = vmatmul.mubr.bf16.gmra.mrb[0].mxu0 %v996
      %v1166 = vpop.f32.mrb[0].mxu0
      %v1167 = vadd.f32 %v862, %v1166
      %v1168 = vpop.f32.mrb[0].mxu0
      %v1169 = vpop.f32.mrb[0].mxu0
      %v1170 = vadd.f32 %v865, %v1169
      %v1171 = vpop.f32.mrb[0].mxu0
      %1172 = vmatprep.mubr.bf16.mxu0 0
      %1173 = vmatmul.mubr.bf16.gmra.mrb[0].mxu0 %v997
      %v1174 = vpop.f32.mrb[0].mxu0
      %v1175 = vadd.f32 %v870, %v1174
      %v1176 = vpop.f32.mrb[0].mxu0
      %v1177 = vpop.f32.mrb[0].mxu0
      %v1178 = vadd.f32 %v873, %v1177
      %v1179 = vpop.f32.mrb[0].mxu0
      %1180 = vmatprep.mubr.bf16.mxu0 0
      %1181 = vmatmul.mubr.bf16.gmra.mrb[0].mxu0 %v998
      %v1182 = vpop.f32.mrb[0].mxu0
      %v1183 = vadd.f32 %v878, %v1182
      %v1184 = vpop.f32.mrb[0].mxu0
      %v1185 = vpop.f32.mrb[0].mxu0
      %v1186 = vadd.f32 %v881, %v1185
      %v1187 = vpop.f32.mrb[0].mxu0
      %1188 = vmatprep.mubr.bf16.mxu0 0
      %1189 = vmatmul.mubr.bf16.gmra.mrb[0].mxu0 %v999
      %v1190 = vpop.f32.mrb[0].mxu0
      %v1191 = vadd.f32 %v886, %v1190
      %v1192 = vpop.f32.mrb[0].mxu0
      %v1193 = vpop.f32.mrb[0].mxu0
      %v1194 = vadd.f32 %v889, %v1193
      %v1195 = vpop.f32.mrb[0].mxu0
      %1196 = vmatprep.mubr.bf16.mxu0 0
      %1197 = vmatmul.mubr.bf16.gmra.mrb[0].mxu0 %v1000
      %v1198 = vpop.f32.mrb[0].mxu0
      %v1199 = vadd.f32 %v894, %v1198
      %v1200 = vpop.f32.mrb[0].mxu0
      %v1201 = vpop.f32.mrb[0].mxu0
      %v1202 = vadd.f32 %v897, %v1201
      %v1203 = vpop.f32.mrb[0].mxu0
      %1204 = vmatprep.mubr.bf16.mxu0 0
      %1205 = vmatmul.mubr.bf16.gmra.mrb[0].mxu0 %v1001
      %v1206 = vpop.f32.mrb[0].mxu0
      %v1207 = vadd.f32 %v902, %v1206
      %v1208 = vpop.f32.mrb[0].mxu0
      %v1209 = vpop.f32.mrb[0].mxu0
      %v1210 = vadd.f32 %v905, %v1209
      %v1211 = vpop.f32.mrb[0].mxu0
      %1212 = vmatprep.mubr.bf16.mxu0 0
      %1213 = vmatmul.mubr.bf16.gmra.mrb[0].mxu0 %v1002
      %v1214 = vpop.f32.mrb[0].mxu0
      %v1215 = vadd.f32 %v910, %v1214
      %v1216 = vpop.f32.mrb[0].mxu0
      %v1217 = vpop.f32.mrb[0].mxu0
      %v1218 = vadd.f32 %v913, %v1217
      %v1219 = vpop.f32.mrb[0].mxu0
      %1220 = vmatprep.mubr.bf16.mxu0 0
      %1221 = vmatmul.mubr.bf16.gmra.mrb[0].mxu0 %v1003
      %v1222 = vpop.f32.mrb[0].mxu0
      %v1223 = vadd.f32 %v918, %v1222
      %v1224 = vpop.f32.mrb[0].mxu0
      %v1225 = vpop.f32.mrb[0].mxu0
      %v1226 = vadd.f32 %v921, %v1225
      %v1227 = vpop.f32.mrb[0].mxu0
      %1228 = vdwg.mxu0
      %v1229 = vld [vmem:[%s172] sm:$0xe]
      %v1230 = vld [vmem:[%s172 + $0xc] sm:$0xe]
      %v1231 = vld [vmem:[%s172 + $0x18] sm:$0xe]
      %v1232 = vld [vmem:[%s172 + $0x24] sm:$0xe]
      %v1233 = vld [vmem:[%s172 + $0x30] sm:$0xe]
      %v1234 = vld [vmem:[%s172 + $0x3c] sm:$0xe]
      %v1235 = vld [vmem:[%s172 + $0x48] sm:$0xe]
      %v1236 = vld [vmem:[%s172 + $0x54] sm:$0xe]
      %v1237 = vld [vmem:[%s172 + $0x60] sm:$0xe]
      %v1238 = vld [vmem:[%s172 + $0x6c] sm:$0xe]
      %v1239 = vld [vmem:[%s172 + $0x78] sm:$0xe]
      %v1240 = vld [vmem:[%s172 + $0x84] sm:$0xe]
      %v1241 = vld [vmem:[%s172 + $0x90] sm:$0xe]
      %v1242 = vld [vmem:[%s172 + $0x9c] sm:$0xe]
      %v1243 = vld [vmem:[%s172 + $0xa8] sm:$0xe]
      %v1244 = vld [vmem:[%s172 + $0xb4] sm:$0xe]
      %vm1277 = vcmask 1042432
      %vm1278 = vcmask 1046532
      %vm1279 = vmor %vm1277, %vm1278
      %v1280 = vrot.slane %v1229, 5
      %v1281 = vrot.slane %v1280, 4
      %v1282 = vrot.slane %v184, 5
      %v1283 = vsel %vm1279, %v1281, %v1282
      %v1284 = vrot.slane %v1282, 4
      %v1285 = vrot.slane %v231, 5
      %v1286 = vsel %vm1279, %v1284, %v1285
      %v1287 = vrot.slane %v1230, 5
      %v1288 = vrot.slane %v1287, 4
      %v1289 = vrot.slane %v186, 5
      %v1290 = vsel %vm1279, %v1288, %v1289
      %v1291 = vrot.slane %v1289, 4
      %v1292 = vrot.slane %v232, 5
      %v1293 = vsel %vm1279, %v1291, %v1292
      %v1294 = vrot.slane %v1231, 5
      %v1295 = vrot.slane %v1294, 4
      %v1296 = vrot.slane %v188, 5
      %v1297 = vsel %vm1279, %v1295, %v1296
      %v1298 = vrot.slane %v1296, 4
      %v1299 = vrot.slane %v233, 5
      %v1300 = vsel %vm1279, %v1298, %v1299
      %v1301 = vrot.slane %v1232, 5
      %v1302 = vrot.slane %v1301, 4
      %v1303 = vrot.slane %v190, 5
      %v1304 = vsel %vm1279, %v1302, %v1303
      %v1305 = vrot.slane %v1303, 4
      %v1306 = vrot.slane %v234, 5
      %v1307 = vsel %vm1279, %v1305, %v1306
      %v1308 = vrot.slane %v1233, 5
      %v1309 = vrot.slane %v1308, 4
      %v1310 = vrot.slane %v192, 5
      %v1311 = vsel %vm1279, %v1309, %v1310
      %v1312 = vrot.slane %v1310, 4
      %v1313 = vrot.slane %v235, 5
      %v1314 = vsel %vm1279, %v1312, %v1313
      %v1315 = vrot.slane %v1234, 5
      %v1316 = vrot.slane %v1315, 4
      %v1317 = vrot.slane %v194, 5
      %v1318 = vsel %vm1279, %v1316, %v1317
      %v1319 = vrot.slane %v1317, 4
      %v1320 = vrot.slane %v236, 5
      %v1321 = vsel %vm1279, %v1319, %v1320
      %v1322 = vrot.slane %v1235, 5
      %v1323 = vrot.slane %v1322, 4
      %v1324 = vrot.slane %v196, 5
      %v1325 = vsel %vm1279, %v1323, %v1324
      %v1326 = vrot.slane %v1324, 4
      %v1327 = vrot.slane %v237, 5
      %v1328 = vsel %vm1279, %v1326, %v1327
      %v1329 = vrot.slane %v1236, 5
      %v1330 = vrot.slane %v1329, 4
      %v1331 = vrot.slane %v198, 5
      %v1332 = vsel %vm1279, %v1330, %v1331
      %v1333 = vrot.slane %v1331, 4
      %v1334 = vrot.slane %v238, 5
      %v1335 = vsel %vm1279, %v1333, %v1334
      %v1336 = vrot.slane %v1237, 5
      %v1337 = vrot.slane %v1336, 4
      %v1338 = vrot.slane %v200, 5
      %v1339 = vsel %vm1279, %v1337, %v1338
      %v1340 = vrot.slane %v1338, 4
      %v1341 = vrot.slane %v239, 5
      %v1342 = vsel %vm1279, %v1340, %v1341
      %v1343 = vrot.slane %v1238, 5
      %v1344 = vrot.slane %v1343, 4
      %v1345 = vrot.slane %v202, 5
      %v1346 = vsel %vm1279, %v1344, %v1345
      %v1347 = vrot.slane %v1345, 4
      %v1348 = vrot.slane %v240, 5
      %v1349 = vsel %vm1279, %v1347, %v1348
      %v1350 = vrot.slane %v1239, 5
      %v1351 = vrot.slane %v1350, 4
      %v1352 = vrot.slane %v204, 5
      %v1353 = vsel %vm1279, %v1351, %v1352
      %v1354 = vrot.slane %v1352, 4
      %v1355 = vrot.slane %v241, 5
      %v1356 = vsel %vm1279, %v1354, %v1355
      %v1357 = vrot.slane %v1240, 5
      %v1358 = vrot.slane %v1357, 4
      %v1359 = vrot.slane %v206, 5
      %v1360 = vsel %vm1279, %v1358, %v1359
      %v1361 = vrot.slane %v1359, 4
      %v1362 = vrot.slane %v242, 5
      %v1363 = vsel %vm1279, %v1361, %v1362
      %v1364 = vrot.slane %v1241, 5
      %v1365 = vrot.slane %v1364, 4
      %v1366 = vrot.slane %v208, 5
      %v1367 = vsel %vm1279, %v1365, %v1366
      %v1368 = vrot.slane %v1366, 4
      %v1369 = vrot.slane %v243, 5
      %v1370 = vsel %vm1279, %v1368, %v1369
      %v1371 = vrot.slane %v1242, 5
      %v1372 = vrot.slane %v1371, 4
      %v1373 = vrot.slane %v210, 5
      %v1374 = vsel %vm1279, %v1372, %v1373
      %v1375 = vrot.slane %v1373, 4
      %v1376 = vrot.slane %v244, 5
      %v1377 = vsel %vm1279, %v1375, %v1376
      %v1378 = vrot.slane %v1243, 5
      %v1379 = vrot.slane %v1378, 4
      %v1380 = vrot.slane %v212, 5
      %v1381 = vsel %vm1279, %v1379, %v1380
      %v1382 = vrot.slane %v1380, 4
      %v1383 = vrot.slane %v245, 5
      %v1384 = vsel %vm1279, %v1382, %v1383
      %v1385 = vrot.slane %v1244, 5
      %v1386 = vrot.slane %v1385, 4
      %v1387 = vrot.slane %v214, 5
      %v1388 = vsel %vm1279, %v1386, %v1387
      %v1389 = vrot.slane %v1387, 4
      %v1390 = vrot.slane %v246, 5
      %v1391 = vsel %vm1279, %v1389, %v1390
      %s1392 = scalar_lea.vmem %s1, 128
      %v1393 = vld [vmem:[%s1392] sm:$0xf]
      %v1394 = vld [vmem:[%s1392 + $0x4] sm:$0xf]
      %v1395 = vld [vmem:[%s1392 + $0x8] sm:$0xf]
      %v1396 = vld [vmem:[%s1392 + $0xc] sm:$0xf]
      %v1397 = vld [vmem:[%s1392 + $0x10] sm:$0xf]
      %v1398 = vld [vmem:[%s1392 + $0x14] sm:$0xf]
      %v1399 = vld [vmem:[%s1392 + $0x18] sm:$0xf]
      %v1400 = vld [vmem:[%s1392 + $0x1c] sm:$0xf]
      %v1401 = vld [vmem:[%s1392 + $0x20] sm:$0xf]
      %v1402 = vld [vmem:[%s1392 + $0x24] sm:$0xf]
      %v1403 = vld [vmem:[%s1392 + $0x28] sm:$0xf]
      %v1404 = vld [vmem:[%s1392 + $0x2c] sm:$0xf]
      %v1405 = vld [vmem:[%s1392 + $0x30] sm:$0xf]
      %v1406 = vld [vmem:[%s1392 + $0x34] sm:$0xf]
      %v1407 = vld [vmem:[%s1392 + $0x38] sm:$0xf]
      %v1408 = vld [vmem:[%s1392 + $0x3c] sm:$0xf]
      %v1409 = vunpack.c.l.b16 %v1283
      %v1410 = vunpack.c.l.b16 %v1286
      %v1411 = vunpack.c.l.b16 %v1290
      %v1412 = vunpack.c.l.b16 %v1293
      %v1413 = vunpack.c.l.b16 %v1297
      %v1414 = vunpack.c.l.b16 %v1300
      %v1415 = vunpack.c.l.b16 %v1304
      %v1416 = vunpack.c.l.b16 %v1307
      %v1417 = vunpack.c.l.b16 %v1311
      %v1418 = vunpack.c.l.b16 %v1314
      %v1419 = vunpack.c.l.b16 %v1318
      %v1420 = vunpack.c.l.b16 %v1321
      %v1421 = vunpack.c.l.b16 %v1325
      %v1422 = vunpack.c.l.b16 %v1328
      %v1423 = vunpack.c.l.b16 %v1332
      %v1424 = vunpack.c.l.b16 %v1335
      %v1425 = vunpack.c.l.b16 %v1339
      %v1426 = vunpack.c.l.b16 %v1342
      %v1427 = vunpack.c.l.b16 %v1346
      %v1428 = vunpack.c.l.b16 %v1349
      %v1429 = vunpack.c.l.b16 %v1353
      %v1430 = vunpack.c.l.b16 %v1356
      %v1431 = vunpack.c.l.b16 %v1360
      %v1432 = vunpack.c.l.b16 %v1363
      %v1433 = vunpack.c.l.b16 %v1367
      %v1434 = vunpack.c.l.b16 %v1370
      %v1435 = vunpack.c.l.b16 %v1374
      %v1436 = vunpack.c.l.b16 %v1377
      %v1437 = vunpack.c.l.b16 %v1381
      %v1438 = vunpack.c.l.b16 %v1384
      %v1439 = vunpack.c.l.b16 %v1388
      %v1440 = vunpack.c.l.b16 %v1391
      %v1441 = vpack.c.b16 %v1410, %v1409
      %v1442 = vpack.c.b16 %v1412, %v1411
      %v1443 = vpack.c.b16 %v1414, %v1413
      %v1444 = vpack.c.b16 %v1416, %v1415
      %v1445 = vpack.c.b16 %v1418, %v1417
      %v1446 = vpack.c.b16 %v1420, %v1419
      %v1447 = vpack.c.b16 %v1422, %v1421
      %v1448 = vpack.c.b16 %v1424, %v1423
      %v1449 = vpack.c.b16 %v1426, %v1425
      %v1450 = vpack.c.b16 %v1428, %v1427
      %v1451 = vpack.c.b16 %v1430, %v1429
      %v1452 = vpack.c.b16 %v1432, %v1431
      %v1453 = vpack.c.b16 %v1434, %v1433
      %v1454 = vpack.c.b16 %v1436, %v1435
      %v1455 = vpack.c.b16 %v1438, %v1437
      %v1456 = vpack.c.b16 %v1440, %v1439
      %v1489 = vunpack.c.l.b16 %v1393
      %v1490 = vunpack.c.l.b16 %v1394
      %v1491 = vunpack.c.l.b16 %v1395
      %v1492 = vunpack.c.l.b16 %v1396
      %v1493 = vunpack.c.l.b16 %v1397
      %v1494 = vunpack.c.l.b16 %v1398
      %v1495 = vunpack.c.l.b16 %v1399
      %v1496 = vunpack.c.l.b16 %v1400
      %v1497 = vunpack.c.l.b16 %v1401
      %v1498 = vunpack.c.l.b16 %v1402
      %v1499 = vunpack.c.l.b16 %v1403
      %v1500 = vunpack.c.l.b16 %v1404
      %v1501 = vunpack.c.l.b16 %v1405
      %v1502 = vunpack.c.l.b16 %v1406
      %v1503 = vunpack.c.l.b16 %v1407
      %v1504 = vunpack.c.l.b16 %v1408
      %v1505 = vpack.c.b16 %v1490, %v1489
      %v1506 = vpack.c.b16 %v1492, %v1491
      %v1507 = vpack.c.b16 %v1494, %v1493
      %v1508 = vpack.c.b16 %v1496, %v1495
      %v1509 = vpack.c.b16 %v1498, %v1497
      %v1510 = vpack.c.b16 %v1500, %v1499
      %v1511 = vpack.c.b16 %v1502, %v1501
      %v1512 = vpack.c.b16 %v1504, %v1503
      %1521 = vmatprep.subr.bf16.mxu0 0
      %1522 = vmatpush1.bf16.msra.mxu0 %v1505
      %1523 = vmatprep.subr.bf16.mxu0 0
      %1524 = vmatpush1.bf16.msra.mxu0 %v1506
      %1525 = vmatprep.subr.bf16.mxu0 0
      %1526 = vmatpush1.bf16.msra.mxu0 %v1507
      %1527 = vmatprep.subr.bf16.mxu0 0
      %1528 = vmatpush1.bf16.msra.mxu0 %v1508
      %1529 = vmatprep.subr.bf16.mxu0 0
      %1530 = vmatpush1.bf16.msra.mxu0 %v1509
      %1531 = vmatprep.subr.bf16.mxu0 0
      %1532 = vmatpush1.bf16.msra.mxu0 %v1510
      %1533 = vmatprep.subr.bf16.mxu0 0
      %1534 = vmatpush1.bf16.msra.mxu0 %v1511
      %1535 = vmatprep.subr.bf16.mxu0 0
      %1536 = vmatpush1.bf16.msra.mxu0 %v1512
      %1537 = vmatprep.subr.bf16.mxu0 0
      %1538 = vmatpush1.bf16.msra.mxu0 0
      %1539 = vmatprep.subr.bf16.mxu0 0
      %1540 = vmatpush1.bf16.msra.mxu0 0
      %1541 = vmatprep.subr.bf16.mxu0 0
      %1542 = vmatpush1.bf16.msra.mxu0 0
      %1543 = vmatprep.subr.bf16.mxu0 0
      %1544 = vmatpush1.bf16.msra.mxu0 0
      %1545 = vmatprep.subr.bf16.mxu0 0
      %1546 = vmatpush1.bf16.msra.mxu0 0
      %1547 = vmatprep.subr.bf16.mxu0 0
      %1548 = vmatpush1.bf16.msra.mxu0 0
      %1549 = vmatprep.subr.bf16.mxu0 0
      %1550 = vmatpush1.bf16.msra.mxu0 0
      %1551 = vmatprep.subr.bf16.mxu0 0
      %1552 = vmatpush1.bf16.msra.mxu0 0
      %1553 = vmatprep.mubr.bf16.mxu0 0
      %1554 = vmatmul.mubr.bf16.gmra.mrb[0].mxu0 %v1441
      %v1555 = vpop.f32.mrb[0].mxu0
      %v1556 = vadd.f32 0.0, %v1555
      %v1557 = vpop.f32.mrb[0].mxu0
      %v1558 = vpop.f32.mrb[0].mxu0
      %v1559 = vadd.f32 0.0, %v1558
      %v1560 = vpop.f32.mrb[0].mxu0
      %1561 = vmatprep.mubr.bf16.mxu0 0
      %1562 = vmatmul.mubr.bf16.gmra.mrb[0].mxu0 %v1442
      %v1563 = vpop.f32.mrb[0].mxu0
      %v1564 = vadd.f32 0.0, %v1563
      %v1565 = vpop.f32.mrb[0].mxu0
      %v1566 = vpop.f32.mrb[0].mxu0
      %v1567 = vadd.f32 0.0, %v1566
      %v1568 = vpop.f32.mrb[0].mxu0
      %1569 = vmatprep.mubr.bf16.mxu0 0
      %1570 = vmatmul.mubr.bf16.gmra.mrb[0].mxu0 %v1443
      %v1571 = vpop.f32.mrb[0].mxu0
      %v1572 = vadd.f32 0.0, %v1571
      %v1573 = vpop.f32.mrb[0].mxu0
      %v1574 = vpop.f32.mrb[0].mxu0
      %v1575 = vadd.f32 0.0, %v1574
      %v1576 = vpop.f32.mrb[0].mxu0
      %1577 = vmatprep.mubr.bf16.mxu0 0
      %1578 = vmatmul.mubr.bf16.gmra.mrb[0].mxu0 %v1444
      %v1579 = vpop.f32.mrb[0].mxu0
      %v1580 = vadd.f32 0.0, %v1579
      %v1581 = vpop.f32.mrb[0].mxu0
      %v1582 = vpop.f32.mrb[0].mxu0
      %v1583 = vadd.f32 0.0, %v1582
      %v1584 = vpop.f32.mrb[0].mxu0
      %1585 = vmatprep.mubr.bf16.mxu0 0
      %1586 = vmatmul.mubr.bf16.gmra.mrb[0].mxu0 %v1445
      %v1587 = vpop.f32.mrb[0].mxu0
      %v1588 = vadd.f32 0.0, %v1587
      %v1589 = vpop.f32.mrb[0].mxu0
      %v1590 = vpop.f32.mrb[0].mxu0
      %v1591 = vadd.f32 0.0, %v1590
      %v1592 = vpop.f32.mrb[0].mxu0
      %1593 = vmatprep.mubr.bf16.mxu0 0
      %1594 = vmatmul.mubr.bf16.gmra.mrb[0].mxu0 %v1446
      %v1595 = vpop.f32.mrb[0].mxu0
      %v1596 = vadd.f32 0.0, %v1595
      %v1597 = vpop.f32.mrb[0].mxu0
      %v1598 = vpop.f32.mrb[0].mxu0
      %v1599 = vadd.f32 0.0, %v1598
      %v1600 = vpop.f32.mrb[0].mxu0
      %1601 = vmatprep.mubr.bf16.mxu0 0
      %1602 = vmatmul.mubr.bf16.gmra.mrb[0].mxu0 %v1447
      %v1603 = vpop.f32.mrb[0].mxu0
      %v1604 = vadd.f32 0.0, %v1603
      %v1605 = vpop.f32.mrb[0].mxu0
      %v1606 = vpop.f32.mrb[0].mxu0
      %v1607 = vadd.f32 0.0, %v1606
      %v1608 = vpop.f32.mrb[0].mxu0
      %1609 = vmatprep.mubr.bf16.mxu0 0
      %1610 = vmatmul.mubr.bf16.gmra.mrb[0].mxu0 %v1448
      %v1611 = vpop.f32.mrb[0].mxu0
      %v1612 = vadd.f32 0.0, %v1611
      %v1613 = vpop.f32.mrb[0].mxu0
      %v1614 = vpop.f32.mrb[0].mxu0
      %v1615 = vadd.f32 0.0, %v1614
      %v1616 = vpop.f32.mrb[0].mxu0
      %1617 = vmatprep.mubr.bf16.mxu0 0
      %1618 = vmatmul.mubr.bf16.gmra.mrb[0].mxu0 %v1449
      %v1619 = vpop.f32.mrb[0].mxu0
      %v1620 = vadd.f32 0.0, %v1619
      %v1621 = vpop.f32.mrb[0].mxu0
      %v1622 = vpop.f32.mrb[0].mxu0
      %v1623 = vadd.f32 0.0, %v1622
      %v1624 = vpop.f32.mrb[0].mxu0
      %1625 = vmatprep.mubr.bf16.mxu0 0
      %1626 = vmatmul.mubr.bf16.gmra.mrb[0].mxu0 %v1450
      %v1627 = vpop.f32.mrb[0].mxu0
      %v1628 = vadd.f32 0.0, %v1627
      %v1629 = vpop.f32.mrb[0].mxu0
      %v1630 = vpop.f32.mrb[0].mxu0
      %v1631 = vadd.f32 0.0, %v1630
      %v1632 = vpop.f32.mrb[0].mxu0
      %1633 = vmatprep.mubr.bf16.mxu0 0
      %1634 = vmatmul.mubr.bf16.gmra.mrb[0].mxu0 %v1451
      %v1635 = vpop.f32.mrb[0].mxu0
      %v1636 = vadd.f32 0.0, %v1635
      %v1637 = vpop.f32.mrb[0].mxu0
      %v1638 = vpop.f32.mrb[0].mxu0
      %v1639 = vadd.f32 0.0, %v1638
      %v1640 = vpop.f32.mrb[0].mxu0
      %1641 = vmatprep.mubr.bf16.mxu0 0
      %1642 = vmatmul.mubr.bf16.gmra.mrb[0].mxu0 %v1452
      %v1643 = vpop.f32.mrb[0].mxu0
      %v1644 = vadd.f32 0.0, %v1643
      %v1645 = vpop.f32.mrb[0].mxu0
      %v1646 = vpop.f32.mrb[0].mxu0
      %v1647 = vadd.f32 0.0, %v1646
      %v1648 = vpop.f32.mrb[0].mxu0
      %1649 = vmatprep.mubr.bf16.mxu0 0
      %1650 = vmatmul.mubr.bf16.gmra.mrb[0].mxu0 %v1453
      %v1651 = vpop.f32.mrb[0].mxu0
      %v1652 = vadd.f32 0.0, %v1651
      %v1653 = vpop.f32.mrb[0].mxu0
      %v1654 = vpop.f32.mrb[0].mxu0
      %v1655 = vadd.f32 0.0, %v1654
      %v1656 = vpop.f32.mrb[0].mxu0
      %1657 = vmatprep.mubr.bf16.mxu0 0
      %1658 = vmatmul.mubr.bf16.gmra.mrb[0].mxu0 %v1454
      %v1659 = vpop.f32.mrb[0].mxu0
      %v1660 = vadd.f32 0.0, %v1659
      %v1661 = vpop.f32.mrb[0].mxu0
      %v1662 = vpop.f32.mrb[0].mxu0
      %v1663 = vadd.f32 0.0, %v1662
      %v1664 = vpop.f32.mrb[0].mxu0
      %1665 = vmatprep.mubr.bf16.mxu0 0
      %1666 = vmatmul.mubr.bf16.gmra.mrb[0].mxu0 %v1455
      %v1667 = vpop.f32.mrb[0].mxu0
      %v1668 = vadd.f32 0.0, %v1667
      %v1669 = vpop.f32.mrb[0].mxu0
      %v1670 = vpop.f32.mrb[0].mxu0
      %v1671 = vadd.f32 0.0, %v1670
      %v1672 = vpop.f32.mrb[0].mxu0
      %1673 = vmatprep.mubr.bf16.mxu0 0
      %1674 = vmatmul.mubr.bf16.gmra.mrb[0].mxu0 %v1456
      %v1675 = vpop.f32.mrb[0].mxu0
      %v1676 = vadd.f32 0.0, %v1675
      %v1677 = vpop.f32.mrb[0].mxu0
      %v1678 = vpop.f32.mrb[0].mxu0
      %v1679 = vadd.f32 0.0, %v1678
      %v1680 = vpop.f32.mrb[0].mxu0
      %1681 = vdwg.mxu0
      %v1682 = vadd.f32 %v1103, %v1556
      %v1683 = vadd.f32 %v1106, %v1559
      %v1684 = vadd.f32 %v1111, %v1564
      %v1685 = vadd.f32 %v1114, %v1567
      %v1686 = vadd.f32 %v1119, %v1572
      %v1687 = vadd.f32 %v1122, %v1575
      %v1688 = vadd.f32 %v1127, %v1580
      %v1689 = vadd.f32 %v1130, %v1583
      %v1690 = vadd.f32 %v1135, %v1588
      %v1691 = vadd.f32 %v1138, %v1591
      %v1692 = vadd.f32 %v1143, %v1596
      %v1693 = vadd.f32 %v1146, %v1599
      %v1694 = vadd.f32 %v1151, %v1604
      %v1695 = vadd.f32 %v1154, %v1607
      %v1696 = vadd.f32 %v1159, %v1612
      %v1697 = vadd.f32 %v1162, %v1615
      %v1698 = vadd.f32 %v1167, %v1620
      %v1699 = vadd.f32 %v1170, %v1623
      %v1700 = vadd.f32 %v1175, %v1628
      %v1701 = vadd.f32 %v1178, %v1631
      %v1702 = vadd.f32 %v1183, %v1636
      %v1703 = vadd.f32 %v1186, %v1639
      %v1704 = vadd.f32 %v1191, %v1644
      %v1705 = vadd.f32 %v1194, %v1647
      %v1706 = vadd.f32 %v1199, %v1652
      %v1707 = vadd.f32 %v1202, %v1655
      %v1708 = vadd.f32 %v1207, %v1660
      %v1709 = vadd.f32 %v1210, %v1663
      %v1710 = vadd.f32 %v1215, %v1668
      %v1711 = vadd.f32 %v1218, %v1671
      %v1712 = vadd.f32 %v1223, %v1676
      %v1713 = vadd.f32 %v1226, %v1679
      %s1714 = scalar_lea.vmem %s172, 12
      %v1715 = vld [vmem:[%s1714] sm:$0xf]
      %v1716 = vld [vmem:[%s1714 + $0x4] sm:$0xf]
      %v1717 = vld [vmem:[%s1714 + $0xc] sm:$0xf]
      %v1718 = vld [vmem:[%s1714 + $0x10] sm:$0xf]
      %v1719 = vld [vmem:[%s1714 + $0x18] sm:$0xf]
      %v1720 = vld [vmem:[%s1714 + $0x1c] sm:$0xf]
      %v1721 = vld [vmem:[%s1714 + $0x24] sm:$0xf]
      %v1722 = vld [vmem:[%s1714 + $0x28] sm:$0xf]
      %v1723 = vld [vmem:[%s1714 + $0x30] sm:$0xf]
      %v1724 = vld [vmem:[%s1714 + $0x34] sm:$0xf]
      %v1725 = vld [vmem:[%s1714 + $0x3c] sm:$0xf]
      %v1726 = vld [vmem:[%s1714 + $0x40] sm:$0xf]
      %v1727 = vld [vmem:[%s1714 + $0x48] sm:$0xf]
      %v1728 = vld [vmem:[%s1714 + $0x4c] sm:$0xf]
      %v1729 = vld [vmem:[%s1714 + $0x54] sm:$0xf]
      %v1730 = vld [vmem:[%s1714 + $0x58] sm:$0xf]
      %v1731 = vld [vmem:[%s1714 + $0x60] sm:$0xf]
      %v1732 = vld [vmem:[%s1714 + $0x64] sm:$0xf]
      %v1733 = vld [vmem:[%s1714 + $0x6c] sm:$0xf]
      %v1734 = vld [vmem:[%s1714 + $0x70] sm:$0xf]
      %v1735 = vld [vmem:[%s1714 + $0x78] sm:$0xf]
      %v1736 = vld [vmem:[%s1714 + $0x7c] sm:$0xf]
      %v1737 = vld [vmem:[%s1714 + $0x84] sm:$0xf]
      %v1738 = vld [vmem:[%s1714 + $0x88] sm:$0xf]
      %v1739 = vld [vmem:[%s1714 + $0x90] sm:$0xf]
      %v1740 = vld [vmem:[%s1714 + $0x94] sm:$0xf]
      %v1741 = vld [vmem:[%s1714 + $0x9c] sm:$0xf]
      %v1742 = vld [vmem:[%s1714 + $0xa0] sm:$0xf]
      %v1743 = vld [vmem:[%s1714 + $0xa8] sm:$0xf]
      %v1744 = vld [vmem:[%s1714 + $0xac] sm:$0xf]
      %v1745 = vld [vmem:[%s1714 + $0xb4] sm:$0xf]
      %v1746 = vld [vmem:[%s1714 + $0xb8] sm:$0xf]
      %s1747 = scalar_lea.vmem %s1, 192
      %v1748 = vld [vmem:[%s1747] sm:$0xf]
      %v1749 = vld [vmem:[%s1747 + $0x4] sm:$0xf]
      %v1750 = vld [vmem:[%s1747 + $0x8] sm:$0xf]
      %v1751 = vld [vmem:[%s1747 + $0xc] sm:$0xf]
      %v1752 = vld [vmem:[%s1747 + $0x10] sm:$0xf]
      %v1753 = vld [vmem:[%s1747 + $0x14] sm:$0xf]
      %v1754 = vld [vmem:[%s1747 + $0x18] sm:$0xf]
      %v1755 = vld [vmem:[%s1747 + $0x1c] sm:$0xf]
      %v1756 = vld [vmem:[%s1747 + $0x20] sm:$0xf]
      %v1757 = vld [vmem:[%s1747 + $0x24] sm:$0xf]
      %v1758 = vld [vmem:[%s1747 + $0x28] sm:$0xf]
      %v1759 = vld [vmem:[%s1747 + $0x2c] sm:$0xf]
      %v1760 = vld [vmem:[%s1747 + $0x30] sm:$0xf]
      %v1761 = vld [vmem:[%s1747 + $0x34] sm:$0xf]
      %v1762 = vld [vmem:[%s1747 + $0x38] sm:$0xf]
      %v1763 = vld [vmem:[%s1747 + $0x3c] sm:$0xf]
      %v1796 = vunpack.c.l.b16 %v1715
      %v1797 = vunpack.c.l.b16 %v1716
      %v1798 = vunpack.c.l.b16 %v1717
      %v1799 = vunpack.c.l.b16 %v1718
      %v1800 = vunpack.c.l.b16 %v1719
      %v1801 = vunpack.c.l.b16 %v1720
      %v1802 = vunpack.c.l.b16 %v1721
      %v1803 = vunpack.c.l.b16 %v1722
      %v1804 = vunpack.c.l.b16 %v1723
      %v1805 = vunpack.c.l.b16 %v1724
      %v1806 = vunpack.c.l.b16 %v1725
      %v1807 = vunpack.c.l.b16 %v1726
      %v1808 = vunpack.c.l.b16 %v1727
      %v1809 = vunpack.c.l.b16 %v1728
      %v1810 = vunpack.c.l.b16 %v1729
      %v1811 = vunpack.c.l.b16 %v1730
      %v1812 = vunpack.c.l.b16 %v1731
      %v1813 = vunpack.c.l.b16 %v1732
      %v1814 = vunpack.c.l.b16 %v1733
      %v1815 = vunpack.c.l.b16 %v1734
      %v1816 = vunpack.c.l.b16 %v1735
      %v1817 = vunpack.c.l.b16 %v1736
      %v1818 = vunpack.c.l.b16 %v1737
      %v1819 = vunpack.c.l.b16 %v1738
      %v1820 = vunpack.c.l.b16 %v1739
      %v1821 = vunpack.c.l.b16 %v1740
      %v1822 = vunpack.c.l.b16 %v1741
      %v1823 = vunpack.c.l.b16 %v1742
      %v1824 = vunpack.c.l.b16 %v1743
      %v1825 = vunpack.c.l.b16 %v1744
      %v1826 = vunpack.c.l.b16 %v1745
      %v1827 = vunpack.c.l.b16 %v1746
      %v1828 = vpack.c.b16 %v1797, %v1796
      %v1829 = vpack.c.b16 %v1799, %v1798
      %v1830 = vpack.c.b16 %v1801, %v1800
      %v1831 = vpack.c.b16 %v1803, %v1802
      %v1832 = vpack.c.b16 %v1805, %v1804
      %v1833 = vpack.c.b16 %v1807, %v1806
      %v1834 = vpack.c.b16 %v1809, %v1808
      %v1835 = vpack.c.b16 %v1811, %v1810
      %v1836 = vpack.c.b16 %v1813, %v1812
      %v1837 = vpack.c.b16 %v1815, %v1814
      %v1838 = vpack.c.b16 %v1817, %v1816
      %v1839 = vpack.c.b16 %v1819, %v1818
      %v1840 = vpack.c.b16 %v1821, %v1820
      %v1841 = vpack.c.b16 %v1823, %v1822
      %v1842 = vpack.c.b16 %v1825, %v1824
      %v1843 = vpack.c.b16 %v1827, %v1826
      %v1876 = vunpack.c.l.b16 %v1748
      %v1877 = vunpack.c.l.b16 %v1749
      %v1878 = vunpack.c.l.b16 %v1750
      %v1879 = vunpack.c.l.b16 %v1751
      %v1880 = vunpack.c.l.b16 %v1752
      %v1881 = vunpack.c.l.b16 %v1753
      %v1882 = vunpack.c.l.b16 %v1754
      %v1883 = vunpack.c.l.b16 %v1755
      %v1884 = vunpack.c.l.b16 %v1756
      %v1885 = vunpack.c.l.b16 %v1757
      %v1886 = vunpack.c.l.b16 %v1758
      %v1887 = vunpack.c.l.b16 %v1759
      %v1888 = vunpack.c.l.b16 %v1760
      %v1889 = vunpack.c.l.b16 %v1761
      %v1890 = vunpack.c.l.b16 %v1762
      %v1891 = vunpack.c.l.b16 %v1763
      %v1892 = vpack.c.b16 %v1877, %v1876
      %v1893 = vpack.c.b16 %v1879, %v1878
      %v1894 = vpack.c.b16 %v1881, %v1880
      %v1895 = vpack.c.b16 %v1883, %v1882
      %v1896 = vpack.c.b16 %v1885, %v1884
      %v1897 = vpack.c.b16 %v1887, %v1886
      %v1898 = vpack.c.b16 %v1889, %v1888
      %v1899 = vpack.c.b16 %v1891, %v1890
      %1908 = vmatprep.subr.bf16.mxu0 0
      %1909 = vmatpush1.bf16.msra.mxu0 %v1892
      %1910 = vmatprep.subr.bf16.mxu0 0
      %1911 = vmatpush1.bf16.msra.mxu0 %v1893
      %1912 = vmatprep.subr.bf16.mxu0 0
      %1913 = vmatpush1.bf16.msra.mxu0 %v1894
      %1914 = vmatprep.subr.bf16.mxu0 0
      %1915 = vmatpush1.bf16.msra.mxu0 %v1895
      %1916 = vmatprep.subr.bf16.mxu0 0
      %1917 = vmatpush1.bf16.msra.mxu0 %v1896
      %1918 = vmatprep.subr.bf16.mxu0 0
      %1919 = vmatpush1.bf16.msra.mxu0 %v1897
      %1920 = vmatprep.subr.bf16.mxu0 0
      %1921 = vmatpush1.bf16.msra.mxu0 %v1898
      %1922 = vmatprep.subr.bf16.mxu0 0
      %1923 = vmatpush1.bf16.msra.mxu0 %v1899
      %1924 = vmatprep.subr.bf16.mxu0 0
      %1925 = vmatpush1.bf16.msra.mxu0 0
      %1926 = vmatprep.subr.bf16.mxu0 0
      %1927 = vmatpush1.bf16.msra.mxu0 0
      %1928 = vmatprep.subr.bf16.mxu0 0
      %1929 = vmatpush1.bf16.msra.mxu0 0
      %1930 = vmatprep.subr.bf16.mxu0 0
      %1931 = vmatpush1.bf16.msra.mxu0 0
      %1932 = vmatprep.subr.bf16.mxu0 0
      %1933 = vmatpush1.bf16.msra.mxu0 0
      %1934 = vmatprep.subr.bf16.mxu0 0
      %1935 = vmatpush1.bf16.msra.mxu0 0
      %1936 = vmatprep.subr.bf16.mxu0 0
      %1937 = vmatpush1.bf16.msra.mxu0 0
      %1938 = vmatprep.subr.bf16.mxu0 0
      %1939 = vmatpush1.bf16.msra.mxu0 0
      %1940 = vmatprep.mubr.bf16.mxu0 0
      %1941 = vmatmul.mubr.bf16.gmra.mrb[0].mxu0 %v1828
      %v1942 = vpop.f32.mrb[0].mxu0
      %v1943 = vadd.f32 0.0, %v1942
      %v1944 = vpop.f32.mrb[0].mxu0
      %v1945 = vpop.f32.mrb[0].mxu0
      %v1946 = vadd.f32 0.0, %v1945
      %v1947 = vpop.f32.mrb[0].mxu0
      %1948 = vmatprep.mubr.bf16.mxu0 0
      %1949 = vmatmul.mubr.bf16.gmra.mrb[0].mxu0 %v1829
      %v1950 = vpop.f32.mrb[0].mxu0
      %v1951 = vadd.f32 0.0, %v1950
      %v1952 = vpop.f32.mrb[0].mxu0
      %v1953 = vpop.f32.mrb[0].mxu0
      %v1954 = vadd.f32 0.0, %v1953
      %v1955 = vpop.f32.mrb[0].mxu0
      %1956 = vmatprep.mubr.bf16.mxu0 0
      %1957 = vmatmul.mubr.bf16.gmra.mrb[0].mxu0 %v1830
      %v1958 = vpop.f32.mrb[0].mxu0
      %v1959 = vadd.f32 0.0, %v1958
      %v1960 = vpop.f32.mrb[0].mxu0
      %v1961 = vpop.f32.mrb[0].mxu0
      %v1962 = vadd.f32 0.0, %v1961
      %v1963 = vpop.f32.mrb[0].mxu0
      %1964 = vmatprep.mubr.bf16.mxu0 0
      %1965 = vmatmul.mubr.bf16.gmra.mrb[0].mxu0 %v1831
      %v1966 = vpop.f32.mrb[0].mxu0
      %v1967 = vadd.f32 0.0, %v1966
      %v1968 = vpop.f32.mrb[0].mxu0
      %v1969 = vpop.f32.mrb[0].mxu0
      %v1970 = vadd.f32 0.0, %v1969
      %v1971 = vpop.f32.mrb[0].mxu0
      %1972 = vmatprep.mubr.bf16.mxu0 0
      %1973 = vmatmul.mubr.bf16.gmra.mrb[0].mxu0 %v1832
      %v1974 = vpop.f32.mrb[0].mxu0
      %v1975 = vadd.f32 0.0, %v1974
      %v1976 = vpop.f32.mrb[0].mxu0
      %v1977 = vpop.f32.mrb[0].mxu0
      %v1978 = vadd.f32 0.0, %v1977
      %v1979 = vpop.f32.mrb[0].mxu0
      %1980 = vmatprep.mubr.bf16.mxu0 0
      %1981 = vmatmul.mubr.bf16.gmra.mrb[0].mxu0 %v1833
      %v1982 = vpop.f32.mrb[0].mxu0
      %v1983 = vadd.f32 0.0, %v1982
      %v1984 = vpop.f32.mrb[0].mxu0
      %v1985 = vpop.f32.mrb[0].mxu0
      %v1986 = vadd.f32 0.0, %v1985
      %v1987 = vpop.f32.mrb[0].mxu0
      %1988 = vmatprep.mubr.bf16.mxu0 0
      %1989 = vmatmul.mubr.bf16.gmra.mrb[0].mxu0 %v1834
      %v1990 = vpop.f32.mrb[0].mxu0
      %v1991 = vadd.f32 0.0, %v1990
      %v1992 = vpop.f32.mrb[0].mxu0
      %v1993 = vpop.f32.mrb[0].mxu0
      %v1994 = vadd.f32 0.0, %v1993
      %v1995 = vpop.f32.mrb[0].mxu0
      %1996 = vmatprep.mubr.bf16.mxu0 0
      %1997 = vmatmul.mubr.bf16.gmra.mrb[0].mxu0 %v1835
      %v1998 = vpop.f32.mrb[0].mxu0
      %v1999 = vadd.f32 0.0, %v1998
      %v2000 = vpop.f32.mrb[0].mxu0
      %v2001 = vpop.f32.mrb[0].mxu0
      %v2002 = vadd.f32 0.0, %v2001
      %v2003 = vpop.f32.mrb[0].mxu0
      %2004 = vmatprep.mubr.bf16.mxu0 0
      %2005 = vmatmul.mubr.bf16.gmra.mrb[0].mxu0 %v1836
      %v2006 = vpop.f32.mrb[0].mxu0
      %v2007 = vadd.f32 0.0, %v2006
      %v2008 = vpop.f32.mrb[0].mxu0
      %v2009 = vpop.f32.mrb[0].mxu0
      %v2010 = vadd.f32 0.0, %v2009
      %v2011 = vpop.f32.mrb[0].mxu0
      %2012 = vmatprep.mubr.bf16.mxu0 0
      %2013 = vmatmul.mubr.bf16.gmra.mrb[0].mxu0 %v1837
      %v2014 = vpop.f32.mrb[0].mxu0
      %v2015 = vadd.f32 0.0, %v2014
      %v2016 = vpop.f32.mrb[0].mxu0
      %v2017 = vpop.f32.mrb[0].mxu0
      %v2018 = vadd.f32 0.0, %v2017
      %v2019 = vpop.f32.mrb[0].mxu0
      %2020 = vmatprep.mubr.bf16.mxu0 0
      %2021 = vmatmul.mubr.bf16.gmra.mrb[0].mxu0 %v1838
      %v2022 = vpop.f32.mrb[0].mxu0
      %v2023 = vadd.f32 0.0, %v2022
      %v2024 = vpop.f32.mrb[0].mxu0
      %v2025 = vpop.f32.mrb[0].mxu0
      %v2026 = vadd.f32 0.0, %v2025
      %v2027 = vpop.f32.mrb[0].mxu0
      %2028 = vmatprep.mubr.bf16.mxu0 0
      %2029 = vmatmul.mubr.bf16.gmra.mrb[0].mxu0 %v1839
      %v2030 = vpop.f32.mrb[0].mxu0
      %v2031 = vadd.f32 0.0, %v2030
      %v2032 = vpop.f32.mrb[0].mxu0
      %v2033 = vpop.f32.mrb[0].mxu0
      %v2034 = vadd.f32 0.0, %v2033
      %v2035 = vpop.f32.mrb[0].mxu0
      %2036 = vmatprep.mubr.bf16.mxu0 0
      %2037 = vmatmul.mubr.bf16.gmra.mrb[0].mxu0 %v1840
      %v2038 = vpop.f32.mrb[0].mxu0
      %v2039 = vadd.f32 0.0, %v2038
      %v2040 = vpop.f32.mrb[0].mxu0
      %v2041 = vpop.f32.mrb[0].mxu0
      %v2042 = vadd.f32 0.0, %v2041
      %v2043 = vpop.f32.mrb[0].mxu0
      %2044 = vmatprep.mubr.bf16.mxu0 0
      %2045 = vmatmul.mubr.bf16.gmra.mrb[0].mxu0 %v1841
      %v2046 = vpop.f32.mrb[0].mxu0
      %v2047 = vadd.f32 0.0, %v2046
      %v2048 = vpop.f32.mrb[0].mxu0
      %v2049 = vpop.f32.mrb[0].mxu0
      %v2050 = vadd.f32 0.0, %v2049
      %v2051 = vpop.f32.mrb[0].mxu0
      %2052 = vmatprep.mubr.bf16.mxu0 0
      %2053 = vmatmul.mubr.bf16.gmra.mrb[0].mxu0 %v1842
      %v2054 = vpop.f32.mrb[0].mxu0
      %v2055 = vadd.f32 0.0, %v2054
      %v2056 = vpop.f32.mrb[0].mxu0
      %v2057 = vpop.f32.mrb[0].mxu0
      %v2058 = vadd.f32 0.0, %v2057
      %v2059 = vpop.f32.mrb[0].mxu0
      %2060 = vmatprep.mubr.bf16.mxu0 0
      %2061 = vmatmul.mubr.bf16.gmra.mrb[0].mxu0 %v1843
      %v2062 = vpop.f32.mrb[0].mxu0
      %v2063 = vadd.f32 0.0, %v2062
      %v2064 = vpop.f32.mrb[0].mxu0
      %v2065 = vpop.f32.mrb[0].mxu0
      %v2066 = vadd.f32 0.0, %v2065
      %v2067 = vpop.f32.mrb[0].mxu0
      %2068 = vdwg.mxu0
      %v2069 = vadd.f32 %v1682, %v1943
      %v2070 = vadd.f32 %v1683, %v1946
      %v2071 = vadd.f32 %v1684, %v1951
      %v2072 = vadd.f32 %v1685, %v1954
      %v2073 = vadd.f32 %v1686, %v1959
      %v2074 = vadd.f32 %v1687, %v1962
      %v2075 = vadd.f32 %v1688, %v1967
      %v2076 = vadd.f32 %v1689, %v1970
      %v2077 = vadd.f32 %v1690, %v1975
      %v2078 = vadd.f32 %v1691, %v1978
      %v2079 = vadd.f32 %v1692, %v1983
      %v2080 = vadd.f32 %v1693, %v1986
      %v2081 = vadd.f32 %v1694, %v1991
      %v2082 = vadd.f32 %v1695, %v1994
      %v2083 = vadd.f32 %v1696, %v1999
      %v2084 = vadd.f32 %v1697, %v2002
      %v2085 = vadd.f32 %v1698, %v2007
      %v2086 = vadd.f32 %v1699, %v2010
      %v2087 = vadd.f32 %v1700, %v2015
      %v2088 = vadd.f32 %v1701, %v2018
      %v2089 = vadd.f32 %v1702, %v2023
      %v2090 = vadd.f32 %v1703, %v2026
      %v2091 = vadd.f32 %v1704, %v2031
      %v2092 = vadd.f32 %v1705, %v2034
      %v2093 = vadd.f32 %v1706, %v2039
      %v2094 = vadd.f32 %v1707, %v2042
      %v2095 = vadd.f32 %v1708, %v2047
      %v2096 = vadd.f32 %v1709, %v2050
      %v2097 = vadd.f32 %v1710, %v2055
      %v2098 = vadd.f32 %v1711, %v2058
      %v2099 = vadd.f32 %v1712, %v2063
      %v2100 = vadd.f32 %v1713, %v2066
      %v2101 = vld [vmem:[%s1714] sm:$0xf]
      %v2102 = vld [vmem:[%s1714 + $0x4] sm:$0xf]
      %v2103 = vld [vmem:[%s1714 + $0x8] sm:$0x1]
      %v2104 = vld [vmem:[%s1714 + $0xc] sm:$0xf]
      %v2105 = vld [vmem:[%s1714 + $0x10] sm:$0xf]
      %v2106 = vld [vmem:[%s1714 + $0x14] sm:$0x1]
      %v2107 = vld [vmem:[%s1714 + $0x18] sm:$0xf]
      %v2108 = vld [vmem:[%s1714 + $0x1c] sm:$0xf]
      %v2109 = vld [vmem:[%s1714 + $0x20] sm:$0x1]
      %v2110 = vld [vmem:[%s1714 + $0x24] sm:$0xf]
      %v2111 = vld [vmem:[%s1714 + $0x28] sm:$0xf]
      %v2112 = vld [vmem:[%s1714 + $0x2c] sm:$0x1]
      %v2113 = vld [vmem:[%s1714 + $0x30] sm:$0xf]
      %v2114 = vld [vmem:[%s1714 + $0x34] sm:$0xf]
      %v2115 = vld [vmem:[%s1714 + $0x38] sm:$0x1]
      %v2116 = vld [vmem:[%s1714 + $0x3c] sm:$0xf]
      %v2117 = vld [vmem:[%s1714 + $0x40] sm:$0xf]
      %v2118 = vld [vmem:[%s1714 + $0x44] sm:$0x1]
      %v2119 = vld [vmem:[%s1714 + $0x48] sm:$0xf]
      %v2120 = vld [vmem:[%s1714 + $0x4c] sm:$0xf]
      %v2121 = vld [vmem:[%s1714 + $0x50] sm:$0x1]
      %v2122 = vld [vmem:[%s1714 + $0x54] sm:$0xf]
      %v2123 = vld [vmem:[%s1714 + $0x58] sm:$0xf]
      %v2124 = vld [vmem:[%s1714 + $0x5c] sm:$0x1]
      %v2125 = vld [vmem:[%s1714 + $0x60] sm:$0xf]
      %v2126 = vld [vmem:[%s1714 + $0x64] sm:$0xf]
      %v2127 = vld [vmem:[%s1714 + $0x68] sm:$0x1]
      %v2128 = vld [vmem:[%s1714 + $0x6c] sm:$0xf]
      %v2129 = vld [vmem:[%s1714 + $0x70] sm:$0xf]
      %v2130 = vld [vmem:[%s1714 + $0x74] sm:$0x1]
      %v2131 = vld [vmem:[%s1714 + $0x78] sm:$0xf]
      %v2132 = vld [vmem:[%s1714 + $0x7c] sm:$0xf]
      %v2133 = vld [vmem:[%s1714 + $0x80] sm:$0x1]
      %v2134 = vld [vmem:[%s1714 + $0x84] sm:$0xf]
      %v2135 = vld [vmem:[%s1714 + $0x88] sm:$0xf]
      %v2136 = vld [vmem:[%s1714 + $0x8c] sm:$0x1]
      %v2137 = vld [vmem:[%s1714 + $0x90] sm:$0xf]
      %v2138 = vld [vmem:[%s1714 + $0x94] sm:$0xf]
      %v2139 = vld [vmem:[%s1714 + $0x98] sm:$0x1]
      %v2140 = vld [vmem:[%s1714 + $0x9c] sm:$0xf]
      %v2141 = vld [vmem:[%s1714 + $0xa0] sm:$0xf]
      %v2142 = vld [vmem:[%s1714 + $0xa4] sm:$0x1]
      %v2143 = vld [vmem:[%s1714 + $0xa8] sm:$0xf]
      %v2144 = vld [vmem:[%s1714 + $0xac] sm:$0xf]
      %v2145 = vld [vmem:[%s1714 + $0xb0] sm:$0x1]
      %v2146 = vld [vmem:[%s1714 + $0xb4] sm:$0xf]
      %v2147 = vld [vmem:[%s1714 + $0xb8] sm:$0xf]
      %v2148 = vld [vmem:[%s1714 + $0xbc] sm:$0x1]
      %v2150 = vshrl.u32 %v2101, 16
      %v2152 = vrot.slane %v2150, 4
      %v2153 = vshll.u32 %v2101, 16
      %v2155 = vrot.slane %v2153, 5
      %v2156 = vor.u32 %v2152, %v2155
      %v2157 = vrot.slane %v2156, 4
      %v2159 = vshll.u32 %v2102, 16
      %v2161 = vrot.slane %v2159, 5
      %v2162 = vsel %vm249, %v2157, %v2161
      %v2163 = vshrl.u32 %v2102, 16
      %v2165 = vrot.slane %v2163, 4
      %v2166 = vor.u32 %v2165, %v2161
      %v2167 = vrot.slane %v2166, 4
      %v2169 = vshll.u32 %v2103, 16
      %v2171 = vrot.slane %v2169, 5
      %v2172 = vsel %vm249, %v2167, %v2171
      %v2174 = vshrl.u32 %v2104, 16
      %v2176 = vrot.slane %v2174, 4
      %v2177 = vshll.u32 %v2104, 16
      %v2179 = vrot.slane %v2177, 5
      %v2180 = vor.u32 %v2176, %v2179
      %v2181 = vrot.slane %v2180, 4
      %v2183 = vshll.u32 %v2105, 16
      %v2185 = vrot.slane %v2183, 5
      %v2186 = vsel %vm249, %v2181, %v2185
      %v2187 = vshrl.u32 %v2105, 16
      %v2189 = vrot.slane %v2187, 4
      %v2190 = vor.u32 %v2189, %v2185
      %v2191 = vrot.slane %v2190, 4
      %v2193 = vshll.u32 %v2106, 16
      %v2195 = vrot.slane %v2193, 5
      %v2196 = vsel %vm249, %v2191, %v2195
      %v2198 = vshrl.u32 %v2107, 16
      %v2200 = vrot.slane %v2198, 4
      %v2201 = vshll.u32 %v2107, 16
      %v2203 = vrot.slane %v2201, 5
      %v2204 = vor.u32 %v2200, %v2203
      %v2205 = vrot.slane %v2204, 4
      %v2207 = vshll.u32 %v2108, 16
      %v2209 = vrot.slane %v2207, 5
      %v2210 = vsel %vm249, %v2205, %v2209
      %v2211 = vshrl.u32 %v2108, 16
      %v2213 = vrot.slane %v2211, 4
      %v2214 = vor.u32 %v2213, %v2209
      %v2215 = vrot.slane %v2214, 4
      %v2217 = vshll.u32 %v2109, 16
      %v2219 = vrot.slane %v2217, 5
      %v2220 = vsel %vm249, %v2215, %v2219
      %v2222 = vshrl.u32 %v2110, 16
      %v2224 = vrot.slane %v2222, 4
      %v2225 = vshll.u32 %v2110, 16
      %v2227 = vrot.slane %v2225, 5
      %v2228 = vor.u32 %v2224, %v2227
      %v2229 = vrot.slane %v2228, 4
      %v2231 = vshll.u32 %v2111, 16
      %v2233 = vrot.slane %v2231, 5
      %v2234 = vsel %vm249, %v2229, %v2233
      %v2235 = vshrl.u32 %v2111, 16
      %v2237 = vrot.slane %v2235, 4
      %v2238 = vor.u32 %v2237, %v2233
      %v2239 = vrot.slane %v2238, 4
      %v2241 = vshll.u32 %v2112, 16
      %v2243 = vrot.slane %v2241, 5
      %v2244 = vsel %vm249, %v2239, %v2243
      %v2246 = vshrl.u32 %v2113, 16
      %v2248 = vrot.slane %v2246, 4
      %v2249 = vshll.u32 %v2113, 16
      %v2251 = vrot.slane %v2249, 5
      %v2252 = vor.u32 %v2248, %v2251
      %v2253 = vrot.slane %v2252, 4
      %v2255 = vshll.u32 %v2114, 16
      %v2257 = vrot.slane %v2255, 5
      %v2258 = vsel %vm249, %v2253, %v2257
      %v2259 = vshrl.u32 %v2114, 16
      %v2261 = vrot.slane %v2259, 4
      %v2262 = vor.u32 %v2261, %v2257
      %v2263 = vrot.slane %v2262, 4
      %v2265 = vshll.u32 %v2115, 16
      %v2267 = vrot.slane %v2265, 5
      %v2268 = vsel %vm249, %v2263, %v2267
      %v2270 = vshrl.u32 %v2116, 16
      %v2272 = vrot.slane %v2270, 4
      %v2273 = vshll.u32 %v2116, 16
      %v2275 = vrot.slane %v2273, 5
      %v2276 = vor.u32 %v2272, %v2275
      %v2277 = vrot.slane %v2276, 4
      %v2279 = vshll.u32 %v2117, 16
      %v2281 = vrot.slane %v2279, 5
      %v2282 = vsel %vm249, %v2277, %v2281
      %v2283 = vshrl.u32 %v2117, 16
      %v2285 = vrot.slane %v2283, 4
      %v2286 = vor.u32 %v2285, %v2281
      %v2287 = vrot.slane %v2286, 4
      %v2289 = vshll.u32 %v2118, 16
      %v2291 = vrot.slane %v2289, 5
      %v2292 = vsel %vm249, %v2287, %v2291
      %v2294 = vshrl.u32 %v2119, 16
      %v2296 = vrot.slane %v2294, 4
      %v2297 = vshll.u32 %v2119, 16
      %v2299 = vrot.slane %v2297, 5
      %v2300 = vor.u32 %v2296, %v2299
      %v2301 = vrot.slane %v2300, 4
      %v2303 = vshll.u32 %v2120, 16
      %v2305 = vrot.slane %v2303, 5
      %v2306 = vsel %vm249, %v2301, %v2305
      %v2307 = vshrl.u32 %v2120, 16
      %v2309 = vrot.slane %v2307, 4
      %v2310 = vor.u32 %v2309, %v2305
      %v2311 = vrot.slane %v2310, 4
      %v2313 = vshll.u32 %v2121, 16
      %v2315 = vrot.slane %v2313, 5
      %v2316 = vsel %vm249, %v2311, %v2315
      %v2318 = vshrl.u32 %v2122, 16
      %v2320 = vrot.slane %v2318, 4
      %v2321 = vshll.u32 %v2122, 16
      %v2323 = vrot.slane %v2321, 5
      %v2324 = vor.u32 %v2320, %v2323
      %v2325 = vrot.slane %v2324, 4
      %v2327 = vshll.u32 %v2123, 16
      %v2329 = vrot.slane %v2327, 5
      %v2330 = vsel %vm249, %v2325, %v2329
      %v2331 = vshrl.u32 %v2123, 16
      %v2333 = vrot.slane %v2331, 4
      %v2334 = vor.u32 %v2333, %v2329
      %v2335 = vrot.slane %v2334, 4
      %v2337 = vshll.u32 %v2124, 16
      %v2339 = vrot.slane %v2337, 5
      %v2340 = vsel %vm249, %v2335, %v2339
      %v2342 = vshrl.u32 %v2125, 16
      %v2344 = vrot.slane %v2342, 4
      %v2345 = vshll.u32 %v2125, 16
      %v2347 = vrot.slane %v2345, 5
      %v2348 = vor.u32 %v2344, %v2347
      %v2349 = vrot.slane %v2348, 4
      %v2351 = vshll.u32 %v2126, 16
      %v2353 = vrot.slane %v2351, 5
      %v2354 = vsel %vm249, %v2349, %v2353
      %v2355 = vshrl.u32 %v2126, 16
      %v2357 = vrot.slane %v2355, 4
      %v2358 = vor.u32 %v2357, %v2353
      %v2359 = vrot.slane %v2358, 4
      %v2361 = vshll.u32 %v2127, 16
      %v2363 = vrot.slane %v2361, 5
      %v2364 = vsel %vm249, %v2359, %v2363
      %v2366 = vshrl.u32 %v2128, 16
      %v2368 = vrot.slane %v2366, 4
      %v2369 = vshll.u32 %v2128, 16
      %v2371 = vrot.slane %v2369, 5
      %v2372 = vor.u32 %v2368, %v2371
      %v2373 = vrot.slane %v2372, 4
      %v2375 = vshll.u32 %v2129, 16
      %v2377 = vrot.slane %v2375, 5
      %v2378 = vsel %vm249, %v2373, %v2377
      %v2379 = vshrl.u32 %v2129, 16
      %v2381 = vrot.slane %v2379, 4
      %v2382 = vor.u32 %v2381, %v2377
      %v2383 = vrot.slane %v2382, 4
      %v2385 = vshll.u32 %v2130, 16
      %v2387 = vrot.slane %v2385, 5
      %v2388 = vsel %vm249, %v2383, %v2387
      %v2390 = vshrl.u32 %v2131, 16
      %v2392 = vrot.slane %v2390, 4
      %v2393 = vshll.u32 %v2131, 16
      %v2395 = vrot.slane %v2393, 5
      %v2396 = vor.u32 %v2392, %v2395
      %v2397 = vrot.slane %v2396, 4
      %v2399 = vshll.u32 %v2132, 16
      %v2401 = vrot.slane %v2399, 5
      %v2402 = vsel %vm249, %v2397, %v2401
      %v2403 = vshrl.u32 %v2132, 16
      %v2405 = vrot.slane %v2403, 4
      %v2406 = vor.u32 %v2405, %v2401
      %v2407 = vrot.slane %v2406, 4
      %v2409 = vshll.u32 %v2133, 16
      %v2411 = vrot.slane %v2409, 5
      %v2412 = vsel %vm249, %v2407, %v2411
      %v2414 = vshrl.u32 %v2134, 16
      %v2416 = vrot.slane %v2414, 4
      %v2417 = vshll.u32 %v2134, 16
      %v2419 = vrot.slane %v2417, 5
      %v2420 = vor.u32 %v2416, %v2419
      %v2421 = vrot.slane %v2420, 4
      %v2423 = vshll.u32 %v2135, 16
      %v2425 = vrot.slane %v2423, 5
      %v2426 = vsel %vm249, %v2421, %v2425
      %v2427 = vshrl.u32 %v2135, 16
      %v2429 = vrot.slane %v2427, 4
      %v2430 = vor.u32 %v2429, %v2425
      %v2431 = vrot.slane %v2430, 4
      %v2433 = vshll.u32 %v2136, 16
      %v2435 = vrot.slane %v2433, 5
      %v2436 = vsel %vm249, %v2431, %v2435
      %v2438 = vshrl.u32 %v2137, 16
      %v2440 = vrot.slane %v2438, 4
      %v2441 = vshll.u32 %v2137, 16
      %v2443 = vrot.slane %v2441, 5
      %v2444 = vor.u32 %v2440, %v2443
      %v2445 = vrot.slane %v2444, 4
      %v2447 = vshll.u32 %v2138, 16
      %v2449 = vrot.slane %v2447, 5
      %v2450 = vsel %vm249, %v2445, %v2449
      %v2451 = vshrl.u32 %v2138, 16
      %v2453 = vrot.slane %v2451, 4
      %v2454 = vor.u32 %v2453, %v2449
      %v2455 = vrot.slane %v2454, 4
      %v2457 = vshll.u32 %v2139, 16
      %v2459 = vrot.slane %v2457, 5
      %v2460 = vsel %vm249, %v2455, %v2459
      %v2462 = vshrl.u32 %v2140, 16
      %v2464 = vrot.slane %v2462, 4
      %v2465 = vshll.u32 %v2140, 16
      %v2467 = vrot.slane %v2465, 5
      %v2468 = vor.u32 %v2464, %v2467
      %v2469 = vrot.slane %v2468, 4
      %v2471 = vshll.u32 %v2141, 16
      %v2473 = vrot.slane %v2471, 5
      %v2474 = vsel %vm249, %v2469, %v2473
      %v2475 = vshrl.u32 %v2141, 16
      %v2477 = vrot.slane %v2475, 4
      %v2478 = vor.u32 %v2477, %v2473
      %v2479 = vrot.slane %v2478, 4
      %v2481 = vshll.u32 %v2142, 16
      %v2483 = vrot.slane %v2481, 5
      %v2484 = vsel %vm249, %v2479, %v2483
      %v2486 = vshrl.u32 %v2143, 16
      %v2488 = vrot.slane %v2486, 4
      %v2489 = vshll.u32 %v2143, 16
      %v2491 = vrot.slane %v2489, 5
      %v2492 = vor.u32 %v2488, %v2491
      %v2493 = vrot.slane %v2492, 4
      %v2495 = vshll.u32 %v2144, 16
      %v2497 = vrot.slane %v2495, 5
      %v2498 = vsel %vm249, %v2493, %v2497
      %v2499 = vshrl.u32 %v2144, 16
      %v2501 = vrot.slane %v2499, 4
      %v2502 = vor.u32 %v2501, %v2497
      %v2503 = vrot.slane %v2502, 4
      %v2505 = vshll.u32 %v2145, 16
      %v2507 = vrot.slane %v2505, 5
      %v2508 = vsel %vm249, %v2503, %v2507
      %v2510 = vshrl.u32 %v2146, 16
      %v2512 = vrot.slane %v2510, 4
      %v2513 = vshll.u32 %v2146, 16
      %v2515 = vrot.slane %v2513, 5
      %v2516 = vor.u32 %v2512, %v2515
      %v2517 = vrot.slane %v2516, 4
      %v2519 = vshll.u32 %v2147, 16
      %v2521 = vrot.slane %v2519, 5
      %v2522 = vsel %vm249, %v2517, %v2521
      %v2523 = vshrl.u32 %v2147, 16
      %v2525 = vrot.slane %v2523, 4
      %v2526 = vor.u32 %v2525, %v2521
      %v2527 = vrot.slane %v2526, 4
      %v2529 = vshll.u32 %v2148, 16
      %v2531 = vrot.slane %v2529, 5
      %v2532 = vsel %vm249, %v2527, %v2531
      %s2533 = scalar_lea.vmem %s1, 256
      %v2534 = vld [vmem:[%s2533] sm:$0xf]
      %v2535 = vld [vmem:[%s2533 + $0x4] sm:$0xf]
      %v2536 = vld [vmem:[%s2533 + $0x8] sm:$0xf]
      %v2537 = vld [vmem:[%s2533 + $0xc] sm:$0xf]
      %v2538 = vld [vmem:[%s2533 + $0x10] sm:$0xf]
      %v2539 = vld [vmem:[%s2533 + $0x14] sm:$0xf]
      %v2540 = vld [vmem:[%s2533 + $0x18] sm:$0xf]
      %v2541 = vld [vmem:[%s2533 + $0x1c] sm:$0xf]
      %v2542 = vld [vmem:[%s2533 + $0x20] sm:$0xf]
      %v2543 = vld [vmem:[%s2533 + $0x24] sm:$0xf]
      %v2544 = vld [vmem:[%s2533 + $0x28] sm:$0xf]
      %v2545 = vld [vmem:[%s2533 + $0x2c] sm:$0xf]
      %v2546 = vld [vmem:[%s2533 + $0x30] sm:$0xf]
      %v2547 = vld [vmem:[%s2533 + $0x34] sm:$0xf]
      %v2548 = vld [vmem:[%s2533 + $0x38] sm:$0xf]
      %v2549 = vld [vmem:[%s2533 + $0x3c] sm:$0xf]
      %v2550 = vunpack.c.l.b16 %v2162
      %v2551 = vunpack.c.l.b16 %v2172
      %v2552 = vunpack.c.l.b16 %v2186
      %v2553 = vunpack.c.l.b16 %v2196
      %v2554 = vunpack.c.l.b16 %v2210
      %v2555 = vunpack.c.l.b16 %v2220
      %v2556 = vunpack.c.l.b16 %v2234
      %v2557 = vunpack.c.l.b16 %v2244
      %v2558 = vunpack.c.l.b16 %v2258
      %v2559 = vunpack.c.l.b16 %v2268
      %v2560 = vunpack.c.l.b16 %v2282
      %v2561 = vunpack.c.l.b16 %v2292
      %v2562 = vunpack.c.l.b16 %v2306
      %v2563 = vunpack.c.l.b16 %v2316
      %v2564 = vunpack.c.l.b16 %v2330
      %v2565 = vunpack.c.l.b16 %v2340
      %v2566 = vunpack.c.l.b16 %v2354
      %v2567 = vunpack.c.l.b16 %v2364
      %v2568 = vunpack.c.l.b16 %v2378
      %v2569 = vunpack.c.l.b16 %v2388
      %v2570 = vunpack.c.l.b16 %v2402
      %v2571 = vunpack.c.l.b16 %v2412
      %v2572 = vunpack.c.l.b16 %v2426
      %v2573 = vunpack.c.l.b16 %v2436
      %v2574 = vunpack.c.l.b16 %v2450
      %v2575 = vunpack.c.l.b16 %v2460
      %v2576 = vunpack.c.l.b16 %v2474
      %v2577 = vunpack.c.l.b16 %v2484
      %v2578 = vunpack.c.l.b16 %v2498
      %v2579 = vunpack.c.l.b16 %v2508
      %v2580 = vunpack.c.l.b16 %v2522
      %v2581 = vunpack.c.l.b16 %v2532
      %v2582 = vpack.c.b16 %v2551, %v2550
      %v2583 = vpack.c.b16 %v2553, %v2552
      %v2584 = vpack.c.b16 %v2555, %v2554
      %v2585 = vpack.c.b16 %v2557, %v2556
      %v2586 = vpack.c.b16 %v2559, %v2558
      %v2587 = vpack.c.b16 %v2561, %v2560
      %v2588 = vpack.c.b16 %v2563, %v2562
      %v2589 = vpack.c.b16 %v2565, %v2564
      %v2590 = vpack.c.b16 %v2567, %v2566
      %v2591 = vpack.c.b16 %v2569, %v2568
      %v2592 = vpack.c.b16 %v2571, %v2570
      %v2593 = vpack.c.b16 %v2573, %v2572
      %v2594 = vpack.c.b16 %v2575, %v2574
      %v2595 = vpack.c.b16 %v2577, %v2576
      %v2596 = vpack.c.b16 %v2579, %v2578
      %v2597 = vpack.c.b16 %v2581, %v2580
      %v2630 = vunpack.c.l.b16 %v2534
      %v2631 = vunpack.c.l.b16 %v2535
      %v2632 = vunpack.c.l.b16 %v2536
      %v2633 = vunpack.c.l.b16 %v2537
      %v2634 = vunpack.c.l.b16 %v2538
      %v2635 = vunpack.c.l.b16 %v2539
      %v2636 = vunpack.c.l.b16 %v2540
      %v2637 = vunpack.c.l.b16 %v2541
      %v2638 = vunpack.c.l.b16 %v2542
      %v2639 = vunpack.c.l.b16 %v2543
      %v2640 = vunpack.c.l.b16 %v2544
      %v2641 = vunpack.c.l.b16 %v2545
      %v2642 = vunpack.c.l.b16 %v2546
      %v2643 = vunpack.c.l.b16 %v2547
      %v2644 = vunpack.c.l.b16 %v2548
      %v2645 = vunpack.c.l.b16 %v2549
      %v2646 = vpack.c.b16 %v2631, %v2630
      %v2647 = vpack.c.b16 %v2633, %v2632
      %v2648 = vpack.c.b16 %v2635, %v2634
      %v2649 = vpack.c.b16 %v2637, %v2636
      %v2650 = vpack.c.b16 %v2639, %v2638
      %v2651 = vpack.c.b16 %v2641, %v2640
      %v2652 = vpack.c.b16 %v2643, %v2642
      %v2653 = vpack.c.b16 %v2645, %v2644
      %2662 = vmatprep.subr.bf16.mxu0 0
      %2663 = vmatpush1.bf16.msra.mxu0 %v2646
      %2664 = vmatprep.subr.bf16.mxu0 0
      %2665 = vmatpush1.bf16.msra.mxu0 %v2647
      %2666 = vmatprep.subr.bf16.mxu0 0
      %2667 = vmatpush1.bf16.msra.mxu0 %v2648
      %2668 = vmatprep.subr.bf16.mxu0 0
      %2669 = vmatpush1.bf16.msra.mxu0 %v2649
      %2670 = vmatprep.subr.bf16.mxu0 0
      %2671 = vmatpush1.bf16.msra.mxu0 %v2650
      %2672 = vmatprep.subr.bf16.mxu0 0
      %2673 = vmatpush1.bf16.msra.mxu0 %v2651
      %2674 = vmatprep.subr.bf16.mxu0 0
      %2675 = vmatpush1.bf16.msra.mxu0 %v2652
      %2676 = vmatprep.subr.bf16.mxu0 0
      %2677 = vmatpush1.bf16.msra.mxu0 %v2653
      %2678 = vmatprep.subr.bf16.mxu0 0
      %2679 = vmatpush1.bf16.msra.mxu0 0
      %2680 = vmatprep.subr.bf16.mxu0 0
      %2681 = vmatpush1.bf16.msra.mxu0 0
      %2682 = vmatprep.subr.bf16.mxu0 0
      %2683 = vmatpush1.bf16.msra.mxu0 0
      %2684 = vmatprep.subr.bf16.mxu0 0
      %2685 = vmatpush1.bf16.msra.mxu0 0
      %2686 = vmatprep.subr.bf16.mxu0 0
      %2687 = vmatpush1.bf16.msra.mxu0 0
      %2688 = vmatprep.subr.bf16.mxu0 0
      %2689 = vmatpush1.bf16.msra.mxu0 0
      %2690 = vmatprep.subr.bf16.mxu0 0
      %2691 = vmatpush1.bf16.msra.mxu0 0
      %2692 = vmatprep.subr.bf16.mxu0 0
      %2693 = vmatpush1.bf16.msra.mxu0 0
      %2694 = vmatprep.mubr.bf16.mxu0 0
      %2695 = vmatmul.mubr.bf16.gmra.mrb[0].mxu0 %v2582
      %v2696 = vpop.f32.mrb[0].mxu0
      %v2697 = vadd.f32 0.0, %v2696
      %v2698 = vpop.f32.mrb[0].mxu0
      %v2699 = vpop.f32.mrb[0].mxu0
      %v2700 = vadd.f32 0.0, %v2699
      %v2701 = vpop.f32.mrb[0].mxu0
      %2702 = vmatprep.mubr.bf16.mxu0 0
      %2703 = vmatmul.mubr.bf16.gmra.mrb[0].mxu0 %v2583
      %v2704 = vpop.f32.mrb[0].mxu0
      %v2705 = vadd.f32 0.0, %v2704
      %v2706 = vpop.f32.mrb[0].mxu0
      %v2707 = vpop.f32.mrb[0].mxu0
      %v2708 = vadd.f32 0.0, %v2707
      %v2709 = vpop.f32.mrb[0].mxu0
      %2710 = vmatprep.mubr.bf16.mxu0 0
      %2711 = vmatmul.mubr.bf16.gmra.mrb[0].mxu0 %v2584
      %v2712 = vpop.f32.mrb[0].mxu0
      %v2713 = vadd.f32 0.0, %v2712
      %v2714 = vpop.f32.mrb[0].mxu0
      %v2715 = vpop.f32.mrb[0].mxu0
      %v2716 = vadd.f32 0.0, %v2715
      %v2717 = vpop.f32.mrb[0].mxu0
      %2718 = vmatprep.mubr.bf16.mxu0 0
      %2719 = vmatmul.mubr.bf16.gmra.mrb[0].mxu0 %v2585
      %v2720 = vpop.f32.mrb[0].mxu0
      %v2721 = vadd.f32 0.0, %v2720
      %v2722 = vpop.f32.mrb[0].mxu0
      %v2723 = vpop.f32.mrb[0].mxu0
      %v2724 = vadd.f32 0.0, %v2723
      %v2725 = vpop.f32.mrb[0].mxu0
      %2726 = vmatprep.mubr.bf16.mxu0 0
      %2727 = vmatmul.mubr.bf16.gmra.mrb[0].mxu0 %v2586
      %v2728 = vpop.f32.mrb[0].mxu0
      %v2729 = vadd.f32 0.0, %v2728
      %v2730 = vpop.f32.mrb[0].mxu0
      %v2731 = vpop.f32.mrb[0].mxu0
      %v2732 = vadd.f32 0.0, %v2731
      %v2733 = vpop.f32.mrb[0].mxu0
      %2734 = vmatprep.mubr.bf16.mxu0 0
      %2735 = vmatmul.mubr.bf16.gmra.mrb[0].mxu0 %v2587
      %v2736 = vpop.f32.mrb[0].mxu0
      %v2737 = vadd.f32 0.0, %v2736
      %v2738 = vpop.f32.mrb[0].mxu0
      %v2739 = vpop.f32.mrb[0].mxu0
      %v2740 = vadd.f32 0.0, %v2739
      %v2741 = vpop.f32.mrb[0].mxu0
      %2742 = vmatprep.mubr.bf16.mxu0 0
      %2743 = vmatmul.mubr.bf16.gmra.mrb[0].mxu0 %v2588
      %v2744 = vpop.f32.mrb[0].mxu0
      %v2745 = vadd.f32 0.0, %v2744
      %v2746 = vpop.f32.mrb[0].mxu0
      %v2747 = vpop.f32.mrb[0].mxu0
      %v2748 = vadd.f32 0.0, %v2747
      %v2749 = vpop.f32.mrb[0].mxu0
      %2750 = vmatprep.mubr.bf16.mxu0 0
      %2751 = vmatmul.mubr.bf16.gmra.mrb[0].mxu0 %v2589
      %v2752 = vpop.f32.mrb[0].mxu0
      %v2753 = vadd.f32 0.0, %v2752
      %v2754 = vpop.f32.mrb[0].mxu0
      %v2755 = vpop.f32.mrb[0].mxu0
      %v2756 = vadd.f32 0.0, %v2755
      %v2757 = vpop.f32.mrb[0].mxu0
      %2758 = vmatprep.mubr.bf16.mxu0 0
      %2759 = vmatmul.mubr.bf16.gmra.mrb[0].mxu0 %v2590
      %v2760 = vpop.f32.mrb[0].mxu0
      %v2761 = vadd.f32 0.0, %v2760
      %v2762 = vpop.f32.mrb[0].mxu0
      %v2763 = vpop.f32.mrb[0].mxu0
      %v2764 = vadd.f32 0.0, %v2763
      %v2765 = vpop.f32.mrb[0].mxu0
      %2766 = vmatprep.mubr.bf16.mxu0 0
      %2767 = vmatmul.mubr.bf16.gmra.mrb[0].mxu0 %v2591
      %v2768 = vpop.f32.mrb[0].mxu0
      %v2769 = vadd.f32 0.0, %v2768
      %v2770 = vpop.f32.mrb[0].mxu0
      %v2771 = vpop.f32.mrb[0].mxu0
      %v2772 = vadd.f32 0.0, %v2771
      %v2773 = vpop.f32.mrb[0].mxu0
      %2774 = vmatprep.mubr.bf16.mxu0 0
      %2775 = vmatmul.mubr.bf16.gmra.mrb[0].mxu0 %v2592
      %v2776 = vpop.f32.mrb[0].mxu0
      %v2777 = vadd.f32 0.0, %v2776
      %v2778 = vpop.f32.mrb[0].mxu0
      %v2779 = vpop.f32.mrb[0].mxu0
      %v2780 = vadd.f32 0.0, %v2779
      %v2781 = vpop.f32.mrb[0].mxu0
      %2782 = vmatprep.mubr.bf16.mxu0 0
      %2783 = vmatmul.mubr.bf16.gmra.mrb[0].mxu0 %v2593
      %v2784 = vpop.f32.mrb[0].mxu0
      %v2785 = vadd.f32 0.0, %v2784
      %v2786 = vpop.f32.mrb[0].mxu0
      %v2787 = vpop.f32.mrb[0].mxu0
      %v2788 = vadd.f32 0.0, %v2787
      %v2789 = vpop.f32.mrb[0].mxu0
      %2790 = vmatprep.mubr.bf16.mxu0 0
      %2791 = vmatmul.mubr.bf16.gmra.mrb[0].mxu0 %v2594
      %v2792 = vpop.f32.mrb[0].mxu0
      %v2793 = vadd.f32 0.0, %v2792
      %v2794 = vpop.f32.mrb[0].mxu0
      %v2795 = vpop.f32.mrb[0].mxu0
      %v2796 = vadd.f32 0.0, %v2795
      %v2797 = vpop.f32.mrb[0].mxu0
      %2798 = vmatprep.mubr.bf16.mxu0 0
      %2799 = vmatmul.mubr.bf16.gmra.mrb[0].mxu0 %v2595
      %v2800 = vpop.f32.mrb[0].mxu0
      %v2801 = vadd.f32 0.0, %v2800
      %v2802 = vpop.f32.mrb[0].mxu0
      %v2803 = vpop.f32.mrb[0].mxu0
      %v2804 = vadd.f32 0.0, %v2803
      %v2805 = vpop.f32.mrb[0].mxu0
      %2806 = vmatprep.mubr.bf16.mxu0 0
      %2807 = vmatmul.mubr.bf16.gmra.mrb[0].mxu0 %v2596
      %v2808 = vpop.f32.mrb[0].mxu0
      %v2809 = vadd.f32 0.0, %v2808
      %v2810 = vpop.f32.mrb[0].mxu0
      %v2811 = vpop.f32.mrb[0].mxu0
      %v2812 = vadd.f32 0.0, %v2811
      %v2813 = vpop.f32.mrb[0].mxu0
      %2814 = vmatprep.mubr.bf16.mxu0 0
      %2815 = vmatmul.mubr.bf16.gmra.mrb[0].mxu0 %v2597
      %v2816 = vpop.f32.mrb[0].mxu0
      %v2817 = vadd.f32 0.0, %v2816
      %v2818 = vpop.f32.mrb[0].mxu0
      %v2819 = vpop.f32.mrb[0].mxu0
      %v2820 = vadd.f32 0.0, %v2819
      %v2821 = vpop.f32.mrb[0].mxu0
      %2822 = vdwg.mxu0
      %v2823 = vadd.f32 %v2069, %v2697
      %v2824 = vadd.f32 %v2070, %v2700
      %v2825 = vadd.f32 %v2071, %v2705
      %v2826 = vadd.f32 %v2072, %v2708
      %v2827 = vadd.f32 %v2073, %v2713
      %v2828 = vadd.f32 %v2074, %v2716
      %v2829 = vadd.f32 %v2075, %v2721
      %v2830 = vadd.f32 %v2076, %v2724
      %v2831 = vadd.f32 %v2077, %v2729
      %v2832 = vadd.f32 %v2078, %v2732
      %v2833 = vadd.f32 %v2079, %v2737
      %v2834 = vadd.f32 %v2080, %v2740
      %v2835 = vadd.f32 %v2081, %v2745
      %v2836 = vadd.f32 %v2082, %v2748
      %v2837 = vadd.f32 %v2083, %v2753
      %v2838 = vadd.f32 %v2084, %v2756
      %v2839 = vadd.f32 %v2085, %v2761
      %v2840 = vadd.f32 %v2086, %v2764
      %v2841 = vadd.f32 %v2087, %v2769
      %v2842 = vadd.f32 %v2088, %v2772
      %v2843 = vadd.f32 %v2089, %v2777
      %v2844 = vadd.f32 %v2090, %v2780
      %v2845 = vadd.f32 %v2091, %v2785
      %v2846 = vadd.f32 %v2092, %v2788
      %v2847 = vadd.f32 %v2093, %v2793
      %v2848 = vadd.f32 %v2094, %v2796
      %v2849 = vadd.f32 %v2095, %v2801
      %v2850 = vadd.f32 %v2096, %v2804
      %v2851 = vadd.f32 %v2097, %v2809
      %v2852 = vadd.f32 %v2098, %v2812
      %v2853 = vadd.f32 %v2099, %v2817
      %v2854 = vadd.f32 %v2100, %v2820
      %v2855 = vld [vmem:[%s1714] sm:$0xe]
      %v2856 = vld [vmem:[%s1714 + $0xc] sm:$0xe]
      %v2857 = vld [vmem:[%s1714 + $0x18] sm:$0xe]
      %v2858 = vld [vmem:[%s1714 + $0x24] sm:$0xe]
      %v2859 = vld [vmem:[%s1714 + $0x30] sm:$0xe]
      %v2860 = vld [vmem:[%s1714 + $0x3c] sm:$0xe]
      %v2861 = vld [vmem:[%s1714 + $0x48] sm:$0xe]
      %v2862 = vld [vmem:[%s1714 + $0x54] sm:$0xe]
      %v2863 = vld [vmem:[%s1714 + $0x60] sm:$0xe]
      %v2864 = vld [vmem:[%s1714 + $0x6c] sm:$0xe]
      %v2865 = vld [vmem:[%s1714 + $0x78] sm:$0xe]
      %v2866 = vld [vmem:[%s1714 + $0x84] sm:$0xe]
      %v2867 = vld [vmem:[%s1714 + $0x90] sm:$0xe]
      %v2868 = vld [vmem:[%s1714 + $0x9c] sm:$0xe]
      %v2869 = vld [vmem:[%s1714 + $0xa8] sm:$0xe]
      %v2870 = vld [vmem:[%s1714 + $0xb4] sm:$0xe]
      %v2919 = vrot.slane %v2855, 5
      %v2920 = vrot.slane %v2919, 4
      %v2921 = vrot.slane %v2102, 5
      %v2922 = vsel %vm1279, %v2920, %v2921
      %v2923 = vrot.slane %v2921, 4
      %v2924 = vrot.slane %v2103, 5
      %v2925 = vsel %vm1279, %v2923, %v2924
      %v2926 = vrot.slane %v2856, 5
      %v2927 = vrot.slane %v2926, 4
      %v2928 = vrot.slane %v2105, 5
      %v2929 = vsel %vm1279, %v2927, %v2928
      %v2930 = vrot.slane %v2928, 4
      %v2931 = vrot.slane %v2106, 5
      %v2932 = vsel %vm1279, %v2930, %v2931
      %v2933 = vrot.slane %v2857, 5
      %v2934 = vrot.slane %v2933, 4
      %v2935 = vrot.slane %v2108, 5
      %v2936 = vsel %vm1279, %v2934, %v2935
      %v2937 = vrot.slane %v2935, 4
      %v2938 = vrot.slane %v2109, 5
      %v2939 = vsel %vm1279, %v2937, %v2938
      %v2940 = vrot.slane %v2858, 5
      %v2941 = vrot.slane %v2940, 4
      %v2942 = vrot.slane %v2111, 5
      %v2943 = vsel %vm1279, %v2941, %v2942
      %v2944 = vrot.slane %v2942, 4
      %v2945 = vrot.slane %v2112, 5
      %v2946 = vsel %vm1279, %v2944, %v2945
      %v2947 = vrot.slane %v2859, 5
      %v2948 = vrot.slane %v2947, 4
      %v2949 = vrot.slane %v2114, 5
      %v2950 = vsel %vm1279, %v2948, %v2949
      %v2951 = vrot.slane %v2949, 4
      %v2952 = vrot.slane %v2115, 5
      %v2953 = vsel %vm1279, %v2951, %v2952
      %v2954 = vrot.slane %v2860, 5
      %v2955 = vrot.slane %v2954, 4
      %v2956 = vrot.slane %v2117, 5
      %v2957 = vsel %vm1279, %v2955, %v2956
      %v2958 = vrot.slane %v2956, 4
      %v2959 = vrot.slane %v2118, 5
      %v2960 = vsel %vm1279, %v2958, %v2959
      %v2961 = vrot.slane %v2861, 5
      %v2962 = vrot.slane %v2961, 4
      %v2963 = vrot.slane %v2120, 5
      %v2964 = vsel %vm1279, %v2962, %v2963
      %v2965 = vrot.slane %v2963, 4
      %v2966 = vrot.slane %v2121, 5
      %v2967 = vsel %vm1279, %v2965, %v2966
      %v2968 = vrot.slane %v2862, 5
      %v2969 = vrot.slane %v2968, 4
      %v2970 = vrot.slane %v2123, 5
      %v2971 = vsel %vm1279, %v2969, %v2970
      %v2972 = vrot.slane %v2970, 4
      %v2973 = vrot.slane %v2124, 5
      %v2974 = vsel %vm1279, %v2972, %v2973
      %v2975 = vrot.slane %v2863, 5
      %v2976 = vrot.slane %v2975, 4
      %v2977 = vrot.slane %v2126, 5
      %v2978 = vsel %vm1279, %v2976, %v2977
      %v2979 = vrot.slane %v2977, 4
      %v2980 = vrot.slane %v2127, 5
      %v2981 = vsel %vm1279, %v2979, %v2980
      %v2982 = vrot.slane %v2864, 5
      %v2983 = vrot.slane %v2982, 4
      %v2984 = vrot.slane %v2129, 5
      %v2985 = vsel %vm1279, %v2983, %v2984
      %v2986 = vrot.slane %v2984, 4
      %v2987 = vrot.slane %v2130, 5
      %v2988 = vsel %vm1279, %v2986, %v2987
      %v2989 = vrot.slane %v2865, 5
      %v2990 = vrot.slane %v2989, 4
      %v2991 = vrot.slane %v2132, 5
      %v2992 = vsel %vm1279, %v2990, %v2991
      %v2993 = vrot.slane %v2991, 4
      %v2994 = vrot.slane %v2133, 5
      %v2995 = vsel %vm1279, %v2993, %v2994
      %v2996 = vrot.slane %v2866, 5
      %v2997 = vrot.slane %v2996, 4
      %v2998 = vrot.slane %v2135, 5
      %v2999 = vsel %vm1279, %v2997, %v2998
      %v3000 = vrot.slane %v2998, 4
      %v3001 = vrot.slane %v2136, 5
      %v3002 = vsel %vm1279, %v3000, %v3001
      %v3003 = vrot.slane %v2867, 5
      %v3004 = vrot.slane %v3003, 4
      %v3005 = vrot.slane %v2138, 5
      %v3006 = vsel %vm1279, %v3004, %v3005
      %v3007 = vrot.slane %v3005, 4
      %v3008 = vrot.slane %v2139, 5
      %v3009 = vsel %vm1279, %v3007, %v3008
      %v3010 = vrot.slane %v2868, 5
      %v3011 = vrot.slane %v3010, 4
      %v3012 = vrot.slane %v2141, 5
      %v3013 = vsel %vm1279, %v3011, %v3012
      %v3014 = vrot.slane %v3012, 4
      %v3015 = vrot.slane %v2142, 5
      %v3016 = vsel %vm1279, %v3014, %v3015
      %v3017 = vrot.slane %v2869, 5
      %v3018 = vrot.slane %v3017, 4
      %v3019 = vrot.slane %v2144, 5
      %v3020 = vsel %vm1279, %v3018, %v3019
      %v3021 = vrot.slane %v3019, 4
      %v3022 = vrot.slane %v2145, 5
      %v3023 = vsel %vm1279, %v3021, %v3022
      %v3024 = vrot.slane %v2870, 5
      %v3025 = vrot.slane %v3024, 4
      %v3026 = vrot.slane %v2147, 5
      %v3027 = vsel %vm1279, %v3025, %v3026
      %v3028 = vrot.slane %v3026, 4
      %v3029 = vrot.slane %v2148, 5
      %v3030 = vsel %vm1279, %v3028, %v3029
      %s3031 = scalar_lea.vmem %s1, 320
      %v3032 = vld [vmem:[%s3031] sm:$0xf]
      %v3033 = vld [vmem:[%s3031 + $0x4] sm:$0xf]
      %v3034 = vld [vmem:[%s3031 + $0x8] sm:$0xf]
      %v3035 = vld [vmem:[%s3031 + $0xc] sm:$0xf]
      %v3036 = vld [vmem:[%s3031 + $0x10] sm:$0xf]
      %v3037 = vld [vmem:[%s3031 + $0x14] sm:$0xf]
      %v3038 = vld [vmem:[%s3031 + $0x18] sm:$0xf]
      %v3039 = vld [vmem:[%s3031 + $0x1c] sm:$0xf]
      %v3040 = vld [vmem:[%s3031 + $0x20] sm:$0xf]
      %v3041 = vld [vmem:[%s3031 + $0x24] sm:$0xf]
      %v3042 = vld [vmem:[%s3031 + $0x28] sm:$0xf]
      %v3043 = vld [vmem:[%s3031 + $0x2c] sm:$0xf]
      %v3044 = vld [vmem:[%s3031 + $0x30] sm:$0xf]
      %v3045 = vld [vmem:[%s3031 + $0x34] sm:$0xf]
      %v3046 = vld [vmem:[%s3031 + $0x38] sm:$0xf]
      %v3047 = vld [vmem:[%s3031 + $0x3c] sm:$0xf]
      %v3048 = vunpack.c.l.b16 %v2922
      %v3049 = vunpack.c.l.b16 %v2925
      %v3050 = vunpack.c.l.b16 %v2929
      %v3051 = vunpack.c.l.b16 %v2932
      %v3052 = vunpack.c.l.b16 %v2936
      %v3053 = vunpack.c.l.b16 %v2939
      %v3054 = vunpack.c.l.b16 %v2943
      %v3055 = vunpack.c.l.b16 %v2946
      %v3056 = vunpack.c.l.b16 %v2950
      %v3057 = vunpack.c.l.b16 %v2953
      %v3058 = vunpack.c.l.b16 %v2957
      %v3059 = vunpack.c.l.b16 %v2960
      %v3060 = vunpack.c.l.b16 %v2964
      %v3061 = vunpack.c.l.b16 %v2967
      %v3062 = vunpack.c.l.b16 %v2971
      %v3063 = vunpack.c.l.b16 %v2974
      %v3064 = vunpack.c.l.b16 %v2978
      %v3065 = vunpack.c.l.b16 %v2981
      %v3066 = vunpack.c.l.b16 %v2985
      %v3067 = vunpack.c.l.b16 %v2988
      %v3068 = vunpack.c.l.b16 %v2992
      %v3069 = vunpack.c.l.b16 %v2995
      %v3070 = vunpack.c.l.b16 %v2999
      %v3071 = vunpack.c.l.b16 %v3002
      %v3072 = vunpack.c.l.b16 %v3006
      %v3073 = vunpack.c.l.b16 %v3009
      %v3074 = vunpack.c.l.b16 %v3013
      %v3075 = vunpack.c.l.b16 %v3016
      %v3076 = vunpack.c.l.b16 %v3020
      %v3077 = vunpack.c.l.b16 %v3023
      %v3078 = vunpack.c.l.b16 %v3027
      %v3079 = vunpack.c.l.b16 %v3030
      %v3080 = vpack.c.b16 %v3049, %v3048
      %v3081 = vpack.c.b16 %v3051, %v3050
      %v3082 = vpack.c.b16 %v3053, %v3052
      %v3083 = vpack.c.b16 %v3055, %v3054
      %v3084 = vpack.c.b16 %v3057, %v3056
      %v3085 = vpack.c.b16 %v3059, %v3058
      %v3086 = vpack.c.b16 %v3061, %v3060
      %v3087 = vpack.c.b16 %v3063, %v3062
      %v3088 = vpack.c.b16 %v3065, %v3064
      %v3089 = vpack.c.b16 %v3067, %v3066
      %v3090 = vpack.c.b16 %v3069, %v3068
      %v3091 = vpack.c.b16 %v3071, %v3070
      %v3092 = vpack.c.b16 %v3073, %v3072
      %v3093 = vpack.c.b16 %v3075, %v3074
      %v3094 = vpack.c.b16 %v3077, %v3076
      %v3095 = vpack.c.b16 %v3079, %v3078
      %v3128 = vunpack.c.l.b16 %v3032
      %v3129 = vunpack.c.l.b16 %v3033
      %v3130 = vunpack.c.l.b16 %v3034
      %v3131 = vunpack.c.l.b16 %v3035
      %v3132 = vunpack.c.l.b16 %v3036
      %v3133 = vunpack.c.l.b16 %v3037
      %v3134 = vunpack.c.l.b16 %v3038
      %v3135 = vunpack.c.l.b16 %v3039
      %v3136 = vunpack.c.l.b16 %v3040
      %v3137 = vunpack.c.l.b16 %v3041
      %v3138 = vunpack.c.l.b16 %v3042
      %v3139 = vunpack.c.l.b16 %v3043
      %v3140 = vunpack.c.l.b16 %v3044
      %v3141 = vunpack.c.l.b16 %v3045
      %v3142 = vunpack.c.l.b16 %v3046
      %v3143 = vunpack.c.l.b16 %v3047
      %v3144 = vpack.c.b16 %v3129, %v3128
      %v3145 = vpack.c.b16 %v3131, %v3130
      %v3146 = vpack.c.b16 %v3133, %v3132
      %v3147 = vpack.c.b16 %v3135, %v3134
      %v3148 = vpack.c.b16 %v3137, %v3136
      %v3149 = vpack.c.b16 %v3139, %v3138
      %v3150 = vpack.c.b16 %v3141, %v3140
      %v3151 = vpack.c.b16 %v3143, %v3142
      %3160 = vmatprep.subr.bf16.mxu0 0
      %3161 = vmatpush1.bf16.msra.mxu0 %v3144
      %3162 = vmatprep.subr.bf16.mxu0 0
      %3163 = vmatpush1.bf16.msra.mxu0 %v3145
      %3164 = vmatprep.subr.bf16.mxu0 0
      %3165 = vmatpush1.bf16.msra.mxu0 %v3146
      %3166 = vmatprep.subr.bf16.mxu0 0
      %3167 = vmatpush1.bf16.msra.mxu0 %v3147
      %3168 = vmatprep.subr.bf16.mxu0 0
      %3169 = vmatpush1.bf16.msra.mxu0 %v3148
      %3170 = vmatprep.subr.bf16.mxu0 0
      %3171 = vmatpush1.bf16.msra.mxu0 %v3149
      %3172 = vmatprep.subr.bf16.mxu0 0
      %3173 = vmatpush1.bf16.msra.mxu0 %v3150
      %3174 = vmatprep.subr.bf16.mxu0 0
      %3175 = vmatpush1.bf16.msra.mxu0 %v3151
      %3176 = vmatprep.subr.bf16.mxu0 0
      %3177 = vmatpush1.bf16.msra.mxu0 0
      %3178 = vmatprep.subr.bf16.mxu0 0
      %3179 = vmatpush1.bf16.msra.mxu0 0
      %3180 = vmatprep.subr.bf16.mxu0 0
      %3181 = vmatpush1.bf16.msra.mxu0 0
      %3182 = vmatprep.subr.bf16.mxu0 0
      %3183 = vmatpush1.bf16.msra.mxu0 0
      %3184 = vmatprep.subr.bf16.mxu0 0
      %3185 = vmatpush1.bf16.msra.mxu0 0
      %3186 = vmatprep.subr.bf16.mxu0 0
      %3187 = vmatpush1.bf16.msra.mxu0 0
      %3188 = vmatprep.subr.bf16.mxu0 0
      %3189 = vmatpush1.bf16.msra.mxu0 0
      %3190 = vmatprep.subr.bf16.mxu0 0
      %3191 = vmatpush1.bf16.msra.mxu0 0
      %3192 = vmatprep.mubr.bf16.mxu0 0
      %3193 = vmatmul.mubr.bf16.gmra.mrb[0].mxu0 %v3080
      %v3194 = vpop.f32.mrb[0].mxu0
      %v3195 = vadd.f32 0.0, %v3194
      %v3196 = vpop.f32.mrb[0].mxu0
      %v3197 = vpop.f32.mrb[0].mxu0
      %v3198 = vadd.f32 0.0, %v3197
      %v3199 = vpop.f32.mrb[0].mxu0
      %3200 = vmatprep.mubr.bf16.mxu0 0
      %3201 = vmatmul.mubr.bf16.gmra.mrb[0].mxu0 %v3081
      %v3202 = vpop.f32.mrb[0].mxu0
      %v3203 = vadd.f32 0.0, %v3202
      %v3204 = vpop.f32.mrb[0].mxu0
      %v3205 = vpop.f32.mrb[0].mxu0
      %v3206 = vadd.f32 0.0, %v3205
      %v3207 = vpop.f32.mrb[0].mxu0
      %3208 = vmatprep.mubr.bf16.mxu0 0
      %3209 = vmatmul.mubr.bf16.gmra.mrb[0].mxu0 %v3082
      %v3210 = vpop.f32.mrb[0].mxu0
      %v3211 = vadd.f32 0.0, %v3210
      %v3212 = vpop.f32.mrb[0].mxu0
      %v3213 = vpop.f32.mrb[0].mxu0
      %v3214 = vadd.f32 0.0, %v3213
      %v3215 = vpop.f32.mrb[0].mxu0
      %3216 = vmatprep.mubr.bf16.mxu0 0
      %3217 = vmatmul.mubr.bf16.gmra.mrb[0].mxu0 %v3083
      %v3218 = vpop.f32.mrb[0].mxu0
      %v3219 = vadd.f32 0.0, %v3218
      %v3220 = vpop.f32.mrb[0].mxu0
      %v3221 = vpop.f32.mrb[0].mxu0
      %v3222 = vadd.f32 0.0, %v3221
      %v3223 = vpop.f32.mrb[0].mxu0
      %3224 = vmatprep.mubr.bf16.mxu0 0
      %3225 = vmatmul.mubr.bf16.gmra.mrb[0].mxu0 %v3084
      %v3226 = vpop.f32.mrb[0].mxu0
      %v3227 = vadd.f32 0.0, %v3226
      %v3228 = vpop.f32.mrb[0].mxu0
      %v3229 = vpop.f32.mrb[0].mxu0
      %v3230 = vadd.f32 0.0, %v3229
      %v3231 = vpop.f32.mrb[0].mxu0
      %3232 = vmatprep.mubr.bf16.mxu0 0
      %3233 = vmatmul.mubr.bf16.gmra.mrb[0].mxu0 %v3085
      %v3234 = vpop.f32.mrb[0].mxu0
      %v3235 = vadd.f32 0.0, %v3234
      %v3236 = vpop.f32.mrb[0].mxu0
      %v3237 = vpop.f32.mrb[0].mxu0
      %v3238 = vadd.f32 0.0, %v3237
      %v3239 = vpop.f32.mrb[0].mxu0
      %3240 = vmatprep.mubr.bf16.mxu0 0
      %3241 = vmatmul.mubr.bf16.gmra.mrb[0].mxu0 %v3086
      %v3242 = vpop.f32.mrb[0].mxu0
      %v3243 = vadd.f32 0.0, %v3242
      %v3244 = vpop.f32.mrb[0].mxu0
      %v3245 = vpop.f32.mrb[0].mxu0
      %v3246 = vadd.f32 0.0, %v3245
      %v3247 = vpop.f32.mrb[0].mxu0
      %3248 = vmatprep.mubr.bf16.mxu0 0
      %3249 = vmatmul.mubr.bf16.gmra.mrb[0].mxu0 %v3087
      %v3250 = vpop.f32.mrb[0].mxu0
      %v3251 = vadd.f32 0.0, %v3250
      %v3252 = vpop.f32.mrb[0].mxu0
      %v3253 = vpop.f32.mrb[0].mxu0
      %v3254 = vadd.f32 0.0, %v3253
      %v3255 = vpop.f32.mrb[0].mxu0
      %3256 = vmatprep.mubr.bf16.mxu0 0
      %3257 = vmatmul.mubr.bf16.gmra.mrb[0].mxu0 %v3088
      %v3258 = vpop.f32.mrb[0].mxu0
      %v3259 = vadd.f32 0.0, %v3258
      %v3260 = vpop.f32.mrb[0].mxu0
      %v3261 = vpop.f32.mrb[0].mxu0
      %v3262 = vadd.f32 0.0, %v3261
      %v3263 = vpop.f32.mrb[0].mxu0
      %3264 = vmatprep.mubr.bf16.mxu0 0
      %3265 = vmatmul.mubr.bf16.gmra.mrb[0].mxu0 %v3089
      %v3266 = vpop.f32.mrb[0].mxu0
      %v3267 = vadd.f32 0.0, %v3266
      %v3268 = vpop.f32.mrb[0].mxu0
      %v3269 = vpop.f32.mrb[0].mxu0
      %v3270 = vadd.f32 0.0, %v3269
      %v3271 = vpop.f32.mrb[0].mxu0
      %3272 = vmatprep.mubr.bf16.mxu0 0
      %3273 = vmatmul.mubr.bf16.gmra.mrb[0].mxu0 %v3090
      %v3274 = vpop.f32.mrb[0].mxu0
      %v3275 = vadd.f32 0.0, %v3274
      %v3276 = vpop.f32.mrb[0].mxu0
      %v3277 = vpop.f32.mrb[0].mxu0
      %v3278 = vadd.f32 0.0, %v3277
      %v3279 = vpop.f32.mrb[0].mxu0
      %3280 = vmatprep.mubr.bf16.mxu0 0
      %3281 = vmatmul.mubr.bf16.gmra.mrb[0].mxu0 %v3091
      %v3282 = vpop.f32.mrb[0].mxu0
      %v3283 = vadd.f32 0.0, %v3282
      %v3284 = vpop.f32.mrb[0].mxu0
      %v3285 = vpop.f32.mrb[0].mxu0
      %v3286 = vadd.f32 0.0, %v3285
      %v3287 = vpop.f32.mrb[0].mxu0
      %3288 = vmatprep.mubr.bf16.mxu0 0
      %3289 = vmatmul.mubr.bf16.gmra.mrb[0].mxu0 %v3092
      %v3290 = vpop.f32.mrb[0].mxu0
      %v3291 = vadd.f32 0.0, %v3290
      %v3292 = vpop.f32.mrb[0].mxu0
      %v3293 = vpop.f32.mrb[0].mxu0
      %v3294 = vadd.f32 0.0, %v3293
      %v3295 = vpop.f32.mrb[0].mxu0
      %3296 = vmatprep.mubr.bf16.mxu0 0
      %3297 = vmatmul.mubr.bf16.gmra.mrb[0].mxu0 %v3093
      %v3298 = vpop.f32.mrb[0].mxu0
      %v3299 = vadd.f32 0.0, %v3298
      %v3300 = vpop.f32.mrb[0].mxu0
      %v3301 = vpop.f32.mrb[0].mxu0
      %v3302 = vadd.f32 0.0, %v3301
      %v3303 = vpop.f32.mrb[0].mxu0
      %3304 = vmatprep.mubr.bf16.mxu0 0
      %3305 = vmatmul.mubr.bf16.gmra.mrb[0].mxu0 %v3094
      %v3306 = vpop.f32.mrb[0].mxu0
      %v3307 = vadd.f32 0.0, %v3306
      %v3308 = vpop.f32.mrb[0].mxu0
      %v3309 = vpop.f32.mrb[0].mxu0
      %v3310 = vadd.f32 0.0, %v3309
      %v3311 = vpop.f32.mrb[0].mxu0
      %3312 = vmatprep.mubr.bf16.mxu0 0
      %3313 = vmatmul.mubr.bf16.gmra.mrb[0].mxu0 %v3095
      %v3314 = vpop.f32.mrb[0].mxu0
      %v3315 = vadd.f32 0.0, %v3314
      %v3316 = vpop.f32.mrb[0].mxu0
      %v3317 = vpop.f32.mrb[0].mxu0
      %v3318 = vadd.f32 0.0, %v3317
      %v3319 = vpop.f32.mrb[0].mxu0
      %3320 = vdwg.mxu0
      %v3321 = vadd.f32 %v2823, %v3195
      %v3322 = vadd.f32 %v2824, %v3198
      %v3323 = vadd.f32 %v2825, %v3203
      %v3324 = vadd.f32 %v2826, %v3206
      %v3325 = vadd.f32 %v2827, %v3211
      %v3326 = vadd.f32 %v2828, %v3214
      %v3327 = vadd.f32 %v2829, %v3219
      %v3328 = vadd.f32 %v2830, %v3222
      %v3329 = vadd.f32 %v2831, %v3227
      %v3330 = vadd.f32 %v2832, %v3230
      %v3331 = vadd.f32 %v2833, %v3235
      %v3332 = vadd.f32 %v2834, %v3238
      %v3333 = vadd.f32 %v2835, %v3243
      %v3334 = vadd.f32 %v2836, %v3246
      %v3335 = vadd.f32 %v2837, %v3251
      %v3336 = vadd.f32 %v2838, %v3254
      %v3337 = vadd.f32 %v2839, %v3259
      %v3338 = vadd.f32 %v2840, %v3262
      %v3339 = vadd.f32 %v2841, %v3267
      %v3340 = vadd.f32 %v2842, %v3270
      %v3341 = vadd.f32 %v2843, %v3275
      %v3342 = vadd.f32 %v2844, %v3278
      %v3343 = vadd.f32 %v2845, %v3283
      %v3344 = vadd.f32 %v2846, %v3286
      %v3345 = vadd.f32 %v2847, %v3291
      %v3346 = vadd.f32 %v2848, %v3294
      %v3347 = vadd.f32 %v2849, %v3299
      %v3348 = vadd.f32 %v2850, %v3302
      %v3349 = vadd.f32 %v2851, %v3307
      %v3350 = vadd.f32 %v2852, %v3310
      %v3351 = vadd.f32 %v2853, %v3315
      %v3352 = vadd.f32 %v2854, %v3318
      %s3353 = scalar_lea.vmem %s172, 24
      %v3354 = vld [vmem:[%s3353] sm:$0xf]
      %v3355 = vld [vmem:[%s3353 + $0x4] sm:$0xf]
      %v3356 = vld [vmem:[%s3353 + $0xc] sm:$0xf]
      %v3357 = vld [vmem:[%s3353 + $0x10] sm:$0xf]
      %v3358 = vld [vmem:[%s3353 + $0x18] sm:$0xf]
      %v3359 = vld [vmem:[%s3353 + $0x1c] sm:$0xf]
      %v3360 = vld [vmem:[%s3353 + $0x24] sm:$0xf]
      %v3361 = vld [vmem:[%s3353 + $0x28] sm:$0xf]
      %v3362 = vld [vmem:[%s3353 + $0x30] sm:$0xf]
      %v3363 = vld [vmem:[%s3353 + $0x34] sm:$0xf]
      %v3364 = vld [vmem:[%s3353 + $0x3c] sm:$0xf]
      %v3365 = vld [vmem:[%s3353 + $0x40] sm:$0xf]
      %v3366 = vld [vmem:[%s3353 + $0x48] sm:$0xf]
      %v3367 = vld [vmem:[%s3353 + $0x4c] sm:$0xf]
      %v3368 = vld [vmem:[%s3353 + $0x54] sm:$0xf]
      %v3369 = vld [vmem:[%s3353 + $0x58] sm:$0xf]
      %v3370 = vld [vmem:[%s3353 + $0x60] sm:$0xf]
      %v3371 = vld [vmem:[%s3353 + $0x64] sm:$0xf]
      %v3372 = vld [vmem:[%s3353 + $0x6c] sm:$0xf]
      %v3373 = vld [vmem:[%s3353 + $0x70] sm:$0xf]
      %v3374 = vld [vmem:[%s3353 + $0x78] sm:$0xf]
      %v3375 = vld [vmem:[%s3353 + $0x7c] sm:$0xf]
      %v3376 = vld [vmem:[%s3353 + $0x84] sm:$0xf]
      %v3377 = vld [vmem:[%s3353 + $0x88] sm:$0xf]
      %v3378 = vld [vmem:[%s3353 + $0x90] sm:$0xf]
      %v3379 = vld [vmem:[%s3353 + $0x94] sm:$0xf]
      %v3380 = vld [vmem:[%s3353 + $0x9c] sm:$0xf]
      %v3381 = vld [vmem:[%s3353 + $0xa0] sm:$0xf]
      %v3382 = vld [vmem:[%s3353 + $0xa8] sm:$0xf]
      %v3383 = vld [vmem:[%s3353 + $0xac] sm:$0xf]
      %v3384 = vld [vmem:[%s3353 + $0xb4] sm:$0xf]
      %v3385 = vld [vmem:[%s3353 + $0xb8] sm:$0xf]
      %s3386 = scalar_lea.vmem %s1, 384
      %v3387 = vld [vmem:[%s3386] sm:$0xf]
      %v3388 = vld [vmem:[%s3386 + $0x4] sm:$0xf]
      %v3389 = vld [vmem:[%s3386 + $0x8] sm:$0xf]
      %v3390 = vld [vmem:[%s3386 + $0xc] sm:$0xf]
      %v3391 = vld [vmem:[%s3386 + $0x10] sm:$0xf]
      %v3392 = vld [vmem:[%s3386 + $0x14] sm:$0xf]
      %v3393 = vld [vmem:[%s3386 + $0x18] sm:$0xf]
      %v3394 = vld [vmem:[%s3386 + $0x1c] sm:$0xf]
      %v3395 = vld [vmem:[%s3386 + $0x20] sm:$0xf]
      %v3396 = vld [vmem:[%s3386 + $0x24] sm:$0xf]
      %v3397 = vld [vmem:[%s3386 + $0x28] sm:$0xf]
      %v3398 = vld [vmem:[%s3386 + $0x2c] sm:$0xf]
      %v3399 = vld [vmem:[%s3386 + $0x30] sm:$0xf]
      %v3400 = vld [vmem:[%s3386 + $0x34] sm:$0xf]
      %v3401 = vld [vmem:[%s3386 + $0x38] sm:$0xf]
      %v3402 = vld [vmem:[%s3386 + $0x3c] sm:$0xf]
      %v3435 = vunpack.c.l.b16 %v3354
      %v3436 = vunpack.c.l.b16 %v3355
      %v3437 = vunpack.c.l.b16 %v3356
      %v3438 = vunpack.c.l.b16 %v3357
      %v3439 = vunpack.c.l.b16 %v3358
      %v3440 = vunpack.c.l.b16 %v3359
      %v3441 = vunpack.c.l.b16 %v3360
      %v3442 = vunpack.c.l.b16 %v3361
      %v3443 = vunpack.c.l.b16 %v3362
      %v3444 = vunpack.c.l.b16 %v3363
      %v3445 = vunpack.c.l.b16 %v3364
      %v3446 = vunpack.c.l.b16 %v3365
      %v3447 = vunpack.c.l.b16 %v3366
      %v3448 = vunpack.c.l.b16 %v3367
      %v3449 = vunpack.c.l.b16 %v3368
      %v3450 = vunpack.c.l.b16 %v3369
      %v3451 = vunpack.c.l.b16 %v3370
      %v3452 = vunpack.c.l.b16 %v3371
      %v3453 = vunpack.c.l.b16 %v3372
      %v3454 = vunpack.c.l.b16 %v3373
      %v3455 = vunpack.c.l.b16 %v3374
      %v3456 = vunpack.c.l.b16 %v3375
      %v3457 = vunpack.c.l.b16 %v3376
      %v3458 = vunpack.c.l.b16 %v3377
      %v3459 = vunpack.c.l.b16 %v3378
      %v3460 = vunpack.c.l.b16 %v3379
      %v3461 = vunpack.c.l.b16 %v3380
      %v3462 = vunpack.c.l.b16 %v3381
      %v3463 = vunpack.c.l.b16 %v3382
      %v3464 = vunpack.c.l.b16 %v3383
      %v3465 = vunpack.c.l.b16 %v3384
      %v3466 = vunpack.c.l.b16 %v3385
      %v3467 = vpack.c.b16 %v3436, %v3435
      %v3468 = vpack.c.b16 %v3438, %v3437
      %v3469 = vpack.c.b16 %v3440, %v3439
      %v3470 = vpack.c.b16 %v3442, %v3441
      %v3471 = vpack.c.b16 %v3444, %v3443
      %v3472 = vpack.c.b16 %v3446, %v3445
      %v3473 = vpack.c.b16 %v3448, %v3447
      %v3474 = vpack.c.b16 %v3450, %v3449
      %v3475 = vpack.c.b16 %v3452, %v3451
      %v3476 = vpack.c.b16 %v3454, %v3453
      %v3477 = vpack.c.b16 %v3456, %v3455
      %v3478 = vpack.c.b16 %v3458, %v3457
      %v3479 = vpack.c.b16 %v3460, %v3459
      %v3480 = vpack.c.b16 %v3462, %v3461
      %v3481 = vpack.c.b16 %v3464, %v3463
      %v3482 = vpack.c.b16 %v3466, %v3465
      %v3515 = vunpack.c.l.b16 %v3387
      %v3516 = vunpack.c.l.b16 %v3388
      %v3517 = vunpack.c.l.b16 %v3389
      %v3518 = vunpack.c.l.b16 %v3390
      %v3519 = vunpack.c.l.b16 %v3391
      %v3520 = vunpack.c.l.b16 %v3392
      %v3521 = vunpack.c.l.b16 %v3393
      %v3522 = vunpack.c.l.b16 %v3394
      %v3523 = vunpack.c.l.b16 %v3395
      %v3524 = vunpack.c.l.b16 %v3396
      %v3525 = vunpack.c.l.b16 %v3397
      %v3526 = vunpack.c.l.b16 %v3398
      %v3527 = vunpack.c.l.b16 %v3399
      %v3528 = vunpack.c.l.b16 %v3400
      %v3529 = vunpack.c.l.b16 %v3401
      %v3530 = vunpack.c.l.b16 %v3402
      %v3531 = vpack.c.b16 %v3516, %v3515
      %v3532 = vpack.c.b16 %v3518, %v3517
      %v3533 = vpack.c.b16 %v3520, %v3519
      %v3534 = vpack.c.b16 %v3522, %v3521
      %v3535 = vpack.c.b16 %v3524, %v3523
      %v3536 = vpack.c.b16 %v3526, %v3525
      %v3537 = vpack.c.b16 %v3528, %v3527
      %v3538 = vpack.c.b16 %v3530, %v3529
      %3547 = vmatprep.subr.bf16.mxu0 0
      %3548 = vmatpush1.bf16.msra.mxu0 %v3531
      %3549 = vmatprep.subr.bf16.mxu0 0
      %3550 = vmatpush1.bf16.msra.mxu0 %v3532
      %3551 = vmatprep.subr.bf16.mxu0 0
      %3552 = vmatpush1.bf16.msra.mxu0 %v3533
      %3553 = vmatprep.subr.bf16.mxu0 0
      %3554 = vmatpush1.bf16.msra.mxu0 %v3534
      %3555 = vmatprep.subr.bf16.mxu0 0
      %3556 = vmatpush1.bf16.msra.mxu0 %v3535
      %3557 = vmatprep.subr.bf16.mxu0 0
      %3558 = vmatpush1.bf16.msra.mxu0 %v3536
      %3559 = vmatprep.subr.bf16.mxu0 0
      %3560 = vmatpush1.bf16.msra.mxu0 %v3537
      %3561 = vmatprep.subr.bf16.mxu0 0
      %3562 = vmatpush1.bf16.msra.mxu0 %v3538
      %3563 = vmatprep.subr.bf16.mxu0 0
      %3564 = vmatpush1.bf16.msra.mxu0 0
      %3565 = vmatprep.subr.bf16.mxu0 0
      %3566 = vmatpush1.bf16.msra.mxu0 0
      %3567 = vmatprep.subr.bf16.mxu0 0
      %3568 = vmatpush1.bf16.msra.mxu0 0
      %3569 = vmatprep.subr.bf16.mxu0 0
      %3570 = vmatpush1.bf16.msra.mxu0 0
      %3571 = vmatprep.subr.bf16.mxu0 0
      %3572 = vmatpush1.bf16.msra.mxu0 0
      %3573 = vmatprep.subr.bf16.mxu0 0
      %3574 = vmatpush1.bf16.msra.mxu0 0
      %3575 = vmatprep.subr.bf16.mxu0 0
      %3576 = vmatpush1.bf16.msra.mxu0 0
      %3577 = vmatprep.subr.bf16.mxu0 0
      %3578 = vmatpush1.bf16.msra.mxu0 0
      %3579 = vmatprep.mubr.bf16.mxu0 0
      %3580 = vmatmul.mubr.bf16.gmra.mrb[0].mxu0 %v3467
      %v3581 = vpop.f32.mrb[0].mxu0
      %v3582 = vadd.f32 0.0, %v3581
      %v3583 = vpop.f32.mrb[0].mxu0
      %v3584 = vpop.f32.mrb[0].mxu0
      %v3585 = vadd.f32 0.0, %v3584
      %v3586 = vpop.f32.mrb[0].mxu0
      %3587 = vmatprep.mubr.bf16.mxu0 0
      %3588 = vmatmul.mubr.bf16.gmra.mrb[0].mxu0 %v3468
      %v3589 = vpop.f32.mrb[0].mxu0
      %v3590 = vadd.f32 0.0, %v3589
      %v3591 = vpop.f32.mrb[0].mxu0
      %v3592 = vpop.f32.mrb[0].mxu0
      %v3593 = vadd.f32 0.0, %v3592
      %v3594 = vpop.f32.mrb[0].mxu0
      %3595 = vmatprep.mubr.bf16.mxu0 0
      %3596 = vmatmul.mubr.bf16.gmra.mrb[0].mxu0 %v3469
      %v3597 = vpop.f32.mrb[0].mxu0
      %v3598 = vadd.f32 0.0, %v3597
      %v3599 = vpop.f32.mrb[0].mxu0
      %v3600 = vpop.f32.mrb[0].mxu0
      %v3601 = vadd.f32 0.0, %v3600
      %v3602 = vpop.f32.mrb[0].mxu0
      %3603 = vmatprep.mubr.bf16.mxu0 0
      %3604 = vmatmul.mubr.bf16.gmra.mrb[0].mxu0 %v3470
      %v3605 = vpop.f32.mrb[0].mxu0
      %v3606 = vadd.f32 0.0, %v3605
      %v3607 = vpop.f32.mrb[0].mxu0
      %v3608 = vpop.f32.mrb[0].mxu0
      %v3609 = vadd.f32 0.0, %v3608
      %v3610 = vpop.f32.mrb[0].mxu0
      %3611 = vmatprep.mubr.bf16.mxu0 0
      %3612 = vmatmul.mubr.bf16.gmra.mrb[0].mxu0 %v3471
      %v3613 = vpop.f32.mrb[0].mxu0
      %v3614 = vadd.f32 0.0, %v3613
      %v3615 = vpop.f32.mrb[0].mxu0
      %v3616 = vpop.f32.mrb[0].mxu0
      %v3617 = vadd.f32 0.0, %v3616
      %v3618 = vpop.f32.mrb[0].mxu0
      %3619 = vmatprep.mubr.bf16.mxu0 0
      %3620 = vmatmul.mubr.bf16.gmra.mrb[0].mxu0 %v3472
      %v3621 = vpop.f32.mrb[0].mxu0
      %v3622 = vadd.f32 0.0, %v3621
      %v3623 = vpop.f32.mrb[0].mxu0
      %v3624 = vpop.f32.mrb[0].mxu0
      %v3625 = vadd.f32 0.0, %v3624
      %v3626 = vpop.f32.mrb[0].mxu0
      %3627 = vmatprep.mubr.bf16.mxu0 0
      %3628 = vmatmul.mubr.bf16.gmra.mrb[0].mxu0 %v3473
      %v3629 = vpop.f32.mrb[0].mxu0
      %v3630 = vadd.f32 0.0, %v3629
      %v3631 = vpop.f32.mrb[0].mxu0
      %v3632 = vpop.f32.mrb[0].mxu0
      %v3633 = vadd.f32 0.0, %v3632
      %v3634 = vpop.f32.mrb[0].mxu0
      %3635 = vmatprep.mubr.bf16.mxu0 0
      %3636 = vmatmul.mubr.bf16.gmra.mrb[0].mxu0 %v3474
      %v3637 = vpop.f32.mrb[0].mxu0
      %v3638 = vadd.f32 0.0, %v3637
      %v3639 = vpop.f32.mrb[0].mxu0
      %v3640 = vpop.f32.mrb[0].mxu0
      %v3641 = vadd.f32 0.0, %v3640
      %v3642 = vpop.f32.mrb[0].mxu0
      %3643 = vmatprep.mubr.bf16.mxu0 0
      %3644 = vmatmul.mubr.bf16.gmra.mrb[0].mxu0 %v3475
      %v3645 = vpop.f32.mrb[0].mxu0
      %v3646 = vadd.f32 0.0, %v3645
      %v3647 = vpop.f32.mrb[0].mxu0
      %v3648 = vpop.f32.mrb[0].mxu0
      %v3649 = vadd.f32 0.0, %v3648
      %v3650 = vpop.f32.mrb[0].mxu0
      %3651 = vmatprep.mubr.bf16.mxu0 0
      %3652 = vmatmul.mubr.bf16.gmra.mrb[0].mxu0 %v3476
      %v3653 = vpop.f32.mrb[0].mxu0
      %v3654 = vadd.f32 0.0, %v3653
      %v3655 = vpop.f32.mrb[0].mxu0
      %v3656 = vpop.f32.mrb[0].mxu0
      %v3657 = vadd.f32 0.0, %v3656
      %v3658 = vpop.f32.mrb[0].mxu0
      %3659 = vmatprep.mubr.bf16.mxu0 0
      %3660 = vmatmul.mubr.bf16.gmra.mrb[0].mxu0 %v3477
      %v3661 = vpop.f32.mrb[0].mxu0
      %v3662 = vadd.f32 0.0, %v3661
      %v3663 = vpop.f32.mrb[0].mxu0
      %v3664 = vpop.f32.mrb[0].mxu0
      %v3665 = vadd.f32 0.0, %v3664
      %v3666 = vpop.f32.mrb[0].mxu0
      %3667 = vmatprep.mubr.bf16.mxu0 0
      %3668 = vmatmul.mubr.bf16.gmra.mrb[0].mxu0 %v3478
      %v3669 = vpop.f32.mrb[0].mxu0
      %v3670 = vadd.f32 0.0, %v3669
      %v3671 = vpop.f32.mrb[0].mxu0
      %v3672 = vpop.f32.mrb[0].mxu0
      %v3673 = vadd.f32 0.0, %v3672
      %v3674 = vpop.f32.mrb[0].mxu0
      %3675 = vmatprep.mubr.bf16.mxu0 0
      %3676 = vmatmul.mubr.bf16.gmra.mrb[0].mxu0 %v3479
      %v3677 = vpop.f32.mrb[0].mxu0
      %v3678 = vadd.f32 0.0, %v3677
      %v3679 = vpop.f32.mrb[0].mxu0
      %v3680 = vpop.f32.mrb[0].mxu0
      %v3681 = vadd.f32 0.0, %v3680
      %v3682 = vpop.f32.mrb[0].mxu0
      %3683 = vmatprep.mubr.bf16.mxu0 0
      %3684 = vmatmul.mubr.bf16.gmra.mrb[0].mxu0 %v3480
      %v3685 = vpop.f32.mrb[0].mxu0
      %v3686 = vadd.f32 0.0, %v3685
      %v3687 = vpop.f32.mrb[0].mxu0
      %v3688 = vpop.f32.mrb[0].mxu0
      %v3689 = vadd.f32 0.0, %v3688
      %v3690 = vpop.f32.mrb[0].mxu0
      %3691 = vmatprep.mubr.bf16.mxu0 0
      %3692 = vmatmul.mubr.bf16.gmra.mrb[0].mxu0 %v3481
      %v3693 = vpop.f32.mrb[0].mxu0
      %v3694 = vadd.f32 0.0, %v3693
      %v3695 = vpop.f32.mrb[0].mxu0
      %v3696 = vpop.f32.mrb[0].mxu0
      %v3697 = vadd.f32 0.0, %v3696
      %v3698 = vpop.f32.mrb[0].mxu0
      %3699 = vmatprep.mubr.bf16.mxu0 0
      %3700 = vmatmul.mubr.bf16.gmra.mrb[0].mxu0 %v3482
      %v3701 = vpop.f32.mrb[0].mxu0
      %v3702 = vadd.f32 0.0, %v3701
      %v3703 = vpop.f32.mrb[0].mxu0
      %v3704 = vpop.f32.mrb[0].mxu0
      %v3705 = vadd.f32 0.0, %v3704
      %v3706 = vpop.f32.mrb[0].mxu0
      %3707 = vdwg.mxu0
      %v3708 = vadd.f32 %v3321, %v3582
      %v3709 = vadd.f32 %v3322, %v3585
      %v3710 = vadd.f32 %v3323, %v3590
      %v3711 = vadd.f32 %v3324, %v3593
      %v3712 = vadd.f32 %v3325, %v3598
      %v3713 = vadd.f32 %v3326, %v3601
      %v3714 = vadd.f32 %v3327, %v3606
      %v3715 = vadd.f32 %v3328, %v3609
      %v3716 = vadd.f32 %v3329, %v3614
      %v3717 = vadd.f32 %v3330, %v3617
      %v3718 = vadd.f32 %v3331, %v3622
      %v3719 = vadd.f32 %v3332, %v3625
      %v3720 = vadd.f32 %v3333, %v3630
      %v3721 = vadd.f32 %v3334, %v3633
      %v3722 = vadd.f32 %v3335, %v3638
      %v3723 = vadd.f32 %v3336, %v3641
      %v3724 = vadd.f32 %v3337, %v3646
      %v3725 = vadd.f32 %v3338, %v3649
      %v3726 = vadd.f32 %v3339, %v3654
      %v3727 = vadd.f32 %v3340, %v3657
      %v3728 = vadd.f32 %v3341, %v3662
      %v3729 = vadd.f32 %v3342, %v3665
      %v3730 = vadd.f32 %v3343, %v3670
      %v3731 = vadd.f32 %v3344, %v3673
      %v3732 = vadd.f32 %v3345, %v3678
      %v3733 = vadd.f32 %v3346, %v3681
      %v3734 = vadd.f32 %v3347, %v3686
      %v3735 = vadd.f32 %v3348, %v3689
      %v3736 = vadd.f32 %v3349, %v3694
      %v3737 = vadd.f32 %v3350, %v3697
      %v3738 = vadd.f32 %v3351, %v3702
      %v3739 = vadd.f32 %v3352, %v3705
      %v3740 = vld [vmem:[%s3353] sm:$0xf]
      %v3741 = vld [vmem:[%s3353 + $0x4] sm:$0xf]
      %v3742 = vld [vmem:[%s3353 + $0x8] sm:$0x1]
      %v3743 = vld [vmem:[%s3353 + $0xc] sm:$0xf]
      %v3744 = vld [vmem:[%s3353 + $0x10] sm:$0xf]
      %v3745 = vld [vmem:[%s3353 + $0x14] sm:$0x1]
      %v3746 = vld [vmem:[%s3353 + $0x18] sm:$0xf]
      %v3747 = vld [vmem:[%s3353 + $0x1c] sm:$0xf]
      %v3748 = vld [vmem:[%s3353 + $0x20] sm:$0x1]
      %v3749 = vld [vmem:[%s3353 + $0x24] sm:$0xf]
      %v3750 = vld [vmem:[%s3353 + $0x28] sm:$0xf]
      %v3751 = vld [vmem:[%s3353 + $0x2c] sm:$0x1]
      %v3752 = vld [vmem:[%s3353 + $0x30] sm:$0xf]
      %v3753 = vld [vmem:[%s3353 + $0x34] sm:$0xf]
      %v3754 = vld [vmem:[%s3353 + $0x38] sm:$0x1]
      %v3755 = vld [vmem:[%s3353 + $0x3c] sm:$0xf]
      %v3756 = vld [vmem:[%s3353 + $0x40] sm:$0xf]
      %v3757 = vld [vmem:[%s3353 + $0x44] sm:$0x1]
      %v3758 = vld [vmem:[%s3353 + $0x48] sm:$0xf]
      %v3759 = vld [vmem:[%s3353 + $0x4c] sm:$0xf]
      %v3760 = vld [vmem:[%s3353 + $0x50] sm:$0x1]
      %v3761 = vld [vmem:[%s3353 + $0x54] sm:$0xf]
      %v3762 = vld [vmem:[%s3353 + $0x58] sm:$0xf]
      %v3763 = vld [vmem:[%s3353 + $0x5c] sm:$0x1]
      %v3764 = vld [vmem:[%s3353 + $0x60] sm:$0xf]
      %v3765 = vld [vmem:[%s3353 + $0x64] sm:$0xf]
      %v3766 = vld [vmem:[%s3353 + $0x68] sm:$0x1]
      %v3767 = vld [vmem:[%s3353 + $0x6c] sm:$0xf]
      %v3768 = vld [vmem:[%s3353 + $0x70] sm:$0xf]
      %v3769 = vld [vmem:[%s3353 + $0x74] sm:$0x1]
      %v3770 = vld [vmem:[%s3353 + $0x78] sm:$0xf]
      %v3771 = vld [vmem:[%s3353 + $0x7c] sm:$0xf]
      %v3772 = vld [vmem:[%s3353 + $0x80] sm:$0x1]
      %v3773 = vld [vmem:[%s3353 + $0x84] sm:$0xf]
      %v3774 = vld [vmem:[%s3353 + $0x88] sm:$0xf]
      %v3775 = vld [vmem:[%s3353 + $0x8c] sm:$0x1]
      %v3776 = vld [vmem:[%s3353 + $0x90] sm:$0xf]
      %v3777 = vld [vmem:[%s3353 + $0x94] sm:$0xf]
      %v3778 = vld [vmem:[%s3353 + $0x98] sm:$0x1]
      %v3779 = vld [vmem:[%s3353 + $0x9c] sm:$0xf]
      %v3780 = vld [vmem:[%s3353 + $0xa0] sm:$0xf]
      %v3781 = vld [vmem:[%s3353 + $0xa4] sm:$0x1]
      %v3782 = vld [vmem:[%s3353 + $0xa8] sm:$0xf]
      %v3783 = vld [vmem:[%s3353 + $0xac] sm:$0xf]
      %v3784 = vld [vmem:[%s3353 + $0xb0] sm:$0x1]
      %v3785 = vld [vmem:[%s3353 + $0xb4] sm:$0xf]
      %v3786 = vld [vmem:[%s3353 + $0xb8] sm:$0xf]
      %v3787 = vld [vmem:[%s3353 + $0xbc] sm:$0x1]
      %v3789 = vshrl.u32 %v3740, 16
      %v3791 = vrot.slane %v3789, 4
      %v3792 = vshll.u32 %v3740, 16
      %v3794 = vrot.slane %v3792, 5
      %v3795 = vor.u32 %v3791, %v3794
      %v3796 = vrot.slane %v3795, 4
      %v3798 = vshll.u32 %v3741, 16
      %v3800 = vrot.slane %v3798, 5
      %v3801 = vsel %vm249, %v3796, %v3800
      %v3802 = vshrl.u32 %v3741, 16
      %v3804 = vrot.slane %v3802, 4
      %v3805 = vor.u32 %v3804, %v3800
      %v3806 = vrot.slane %v3805, 4
      %v3808 = vshll.u32 %v3742, 16
      %v3810 = vrot.slane %v3808, 5
      %v3811 = vsel %vm249, %v3806, %v3810
      %v3813 = vshrl.u32 %v3743, 16
      %v3815 = vrot.slane %v3813, 4
      %v3816 = vshll.u32 %v3743, 16
      %v3818 = vrot.slane %v3816, 5
      %v3819 = vor.u32 %v3815, %v3818
      %v3820 = vrot.slane %v3819, 4
      %v3822 = vshll.u32 %v3744, 16
      %v3824 = vrot.slane %v3822, 5
      %v3825 = vsel %vm249, %v3820, %v3824
      %v3826 = vshrl.u32 %v3744, 16
      %v3828 = vrot.slane %v3826, 4
      %v3829 = vor.u32 %v3828, %v3824
      %v3830 = vrot.slane %v3829, 4
      %v3832 = vshll.u32 %v3745, 16
      %v3834 = vrot.slane %v3832, 5
      %v3835 = vsel %vm249, %v3830, %v3834
      %v3837 = vshrl.u32 %v3746, 16
      %v3839 = vrot.slane %v3837, 4
      %v3840 = vshll.u32 %v3746, 16
      %v3842 = vrot.slane %v3840, 5
      %v3843 = vor.u32 %v3839, %v3842
      %v3844 = vrot.slane %v3843, 4
      %v3846 = vshll.u32 %v3747, 16
      %v3848 = vrot.slane %v3846, 5
      %v3849 = vsel %vm249, %v3844, %v3848
      %v3850 = vshrl.u32 %v3747, 16
      %v3852 = vrot.slane %v3850, 4
      %v3853 = vor.u32 %v3852, %v3848
      %v3854 = vrot.slane %v3853, 4
      %v3856 = vshll.u32 %v3748, 16
      %v3858 = vrot.slane %v3856, 5
      %v3859 = vsel %vm249, %v3854, %v3858
      %v3861 = vshrl.u32 %v3749, 16
      %v3863 = vrot.slane %v3861, 4
      %v3864 = vshll.u32 %v3749, 16
      %v3866 = vrot.slane %v3864, 5
      %v3867 = vor.u32 %v3863, %v3866
      %v3868 = vrot.slane %v3867, 4
      %v3870 = vshll.u32 %v3750, 16
      %v3872 = vrot.slane %v3870, 5
      %v3873 = vsel %vm249, %v3868, %v3872
      %v3874 = vshrl.u32 %v3750, 16
      %v3876 = vrot.slane %v3874, 4
      %v3877 = vor.u32 %v3876, %v3872
      %v3878 = vrot.slane %v3877, 4
      %v3880 = vshll.u32 %v3751, 16
      %v3882 = vrot.slane %v3880, 5
      %v3883 = vsel %vm249, %v3878, %v3882
      %v3885 = vshrl.u32 %v3752, 16
      %v3887 = vrot.slane %v3885, 4
      %v3888 = vshll.u32 %v3752, 16
      %v3890 = vrot.slane %v3888, 5
      %v3891 = vor.u32 %v3887, %v3890
      %v3892 = vrot.slane %v3891, 4
      %v3894 = vshll.u32 %v3753, 16
      %v3896 = vrot.slane %v3894, 5
      %v3897 = vsel %vm249, %v3892, %v3896
      %v3898 = vshrl.u32 %v3753, 16
      %v3900 = vrot.slane %v3898, 4
      %v3901 = vor.u32 %v3900, %v3896
      %v3902 = vrot.slane %v3901, 4
      %v3904 = vshll.u32 %v3754, 16
      %v3906 = vrot.slane %v3904, 5
      %v3907 = vsel %vm249, %v3902, %v3906
      %v3909 = vshrl.u32 %v3755, 16
      %v3911 = vrot.slane %v3909, 4
      %v3912 = vshll.u32 %v3755, 16
      %v3914 = vrot.slane %v3912, 5
      %v3915 = vor.u32 %v3911, %v3914
      %v3916 = vrot.slane %v3915, 4
      %v3918 = vshll.u32 %v3756, 16
      %v3920 = vrot.slane %v3918, 5
      %v3921 = vsel %vm249, %v3916, %v3920
      %v3922 = vshrl.u32 %v3756, 16
      %v3924 = vrot.slane %v3922, 4
      %v3925 = vor.u32 %v3924, %v3920
      %v3926 = vrot.slane %v3925, 4
      %v3928 = vshll.u32 %v3757, 16
      %v3930 = vrot.slane %v3928, 5
      %v3931 = vsel %vm249, %v3926, %v3930
      %v3933 = vshrl.u32 %v3758, 16
      %v3935 = vrot.slane %v3933, 4
      %v3936 = vshll.u32 %v3758, 16
      %v3938 = vrot.slane %v3936, 5
      %v3939 = vor.u32 %v3935, %v3938
      %v3940 = vrot.slane %v3939, 4
      %v3942 = vshll.u32 %v3759, 16
      %v3944 = vrot.slane %v3942, 5
      %v3945 = vsel %vm249, %v3940, %v3944
      %v3946 = vshrl.u32 %v3759, 16
      %v3948 = vrot.slane %v3946, 4
      %v3949 = vor.u32 %v3948, %v3944
      %v3950 = vrot.slane %v3949, 4
      %v3952 = vshll.u32 %v3760, 16
      %v3954 = vrot.slane %v3952, 5
      %v3955 = vsel %vm249, %v3950, %v3954
      %v3957 = vshrl.u32 %v3761, 16
      %v3959 = vrot.slane %v3957, 4
      %v3960 = vshll.u32 %v3761, 16
      %v3962 = vrot.slane %v3960, 5
      %v3963 = vor.u32 %v3959, %v3962
      %v3964 = vrot.slane %v3963, 4
      %v3966 = vshll.u32 %v3762, 16
      %v3968 = vrot.slane %v3966, 5
      %v3969 = vsel %vm249, %v3964, %v3968
      %v3970 = vshrl.u32 %v3762, 16
      %v3972 = vrot.slane %v3970, 4
      %v3973 = vor.u32 %v3972, %v3968
      %v3974 = vrot.slane %v3973, 4
      %v3976 = vshll.u32 %v3763, 16
      %v3978 = vrot.slane %v3976, 5
      %v3979 = vsel %vm249, %v3974, %v3978
      %v3981 = vshrl.u32 %v3764, 16
      %v3983 = vrot.slane %v3981, 4
      %v3984 = vshll.u32 %v3764, 16
      %v3986 = vrot.slane %v3984, 5
      %v3987 = vor.u32 %v3983, %v3986
      %v3988 = vrot.slane %v3987, 4
      %v3990 = vshll.u32 %v3765, 16
      %v3992 = vrot.slane %v3990, 5
      %v3993 = vsel %vm249, %v3988, %v3992
      %v3994 = vshrl.u32 %v3765, 16
      %v3996 = vrot.slane %v3994, 4
      %v3997 = vor.u32 %v3996, %v3992
      %v3998 = vrot.slane %v3997, 4
      %v4000 = vshll.u32 %v3766, 16
      %v4002 = vrot.slane %v4000, 5
      %v4003 = vsel %vm249, %v3998, %v4002
      %v4005 = vshrl.u32 %v3767, 16
      %v4007 = vrot.slane %v4005, 4
      %v4008 = vshll.u32 %v3767, 16
      %v4010 = vrot.slane %v4008, 5
      %v4011 = vor.u32 %v4007, %v4010
      %v4012 = vrot.slane %v4011, 4
      %v4014 = vshll.u32 %v3768, 16
      %v4016 = vrot.slane %v4014, 5
      %v4017 = vsel %vm249, %v4012, %v4016
      %v4018 = vshrl.u32 %v3768, 16
      %v4020 = vrot.slane %v4018, 4
      %v4021 = vor.u32 %v4020, %v4016
      %v4022 = vrot.slane %v4021, 4
      %v4024 = vshll.u32 %v3769, 16
      %v4026 = vrot.slane %v4024, 5
      %v4027 = vsel %vm249, %v4022, %v4026
      %v4029 = vshrl.u32 %v3770, 16
      %v4031 = vrot.slane %v4029, 4
      %v4032 = vshll.u32 %v3770, 16
      %v4034 = vrot.slane %v4032, 5
      %v4035 = vor.u32 %v4031, %v4034
      %v4036 = vrot.slane %v4035, 4
      %v4038 = vshll.u32 %v3771, 16
      %v4040 = vrot.slane %v4038, 5
      %v4041 = vsel %vm249, %v4036, %v4040
      %v4042 = vshrl.u32 %v3771, 16
      %v4044 = vrot.slane %v4042, 4
      %v4045 = vor.u32 %v4044, %v4040
      %v4046 = vrot.slane %v4045, 4
      %v4048 = vshll.u32 %v3772, 16
      %v4050 = vrot.slane %v4048, 5
      %v4051 = vsel %vm249, %v4046, %v4050
      %v4053 = vshrl.u32 %v3773, 16
      %v4055 = vrot.slane %v4053, 4
      %v4056 = vshll.u32 %v3773, 16
      %v4058 = vrot.slane %v4056, 5
      %v4059 = vor.u32 %v4055, %v4058
      %v4060 = vrot.slane %v4059, 4
      %v4062 = vshll.u32 %v3774, 16
      %v4064 = vrot.slane %v4062, 5
      %v4065 = vsel %vm249, %v4060, %v4064
      %v4066 = vshrl.u32 %v3774, 16
      %v4068 = vrot.slane %v4066, 4
      %v4069 = vor.u32 %v4068, %v4064
      %v4070 = vrot.slane %v4069, 4
      %v4072 = vshll.u32 %v3775, 16
      %v4074 = vrot.slane %v4072, 5
      %v4075 = vsel %vm249, %v4070, %v4074
      %v4077 = vshrl.u32 %v3776, 16
      %v4079 = vrot.slane %v4077, 4
      %v4080 = vshll.u32 %v3776, 16
      %v4082 = vrot.slane %v4080, 5
      %v4083 = vor.u32 %v4079, %v4082
      %v4084 = vrot.slane %v4083, 4
      %v4086 = vshll.u32 %v3777, 16
      %v4088 = vrot.slane %v4086, 5
      %v4089 = vsel %vm249, %v4084, %v4088
      %v4090 = vshrl.u32 %v3777, 16
      %v4092 = vrot.slane %v4090, 4
      %v4093 = vor.u32 %v4092, %v4088
      %v4094 = vrot.slane %v4093, 4
      %v4096 = vshll.u32 %v3778, 16
      %v4098 = vrot.slane %v4096, 5
      %v4099 = vsel %vm249, %v4094, %v4098
      %v4101 = vshrl.u32 %v3779, 16
      %v4103 = vrot.slane %v4101, 4
      %v4104 = vshll.u32 %v3779, 16
      %v4106 = vrot.slane %v4104, 5
      %v4107 = vor.u32 %v4103, %v4106
      %v4108 = vrot.slane %v4107, 4
      %v4110 = vshll.u32 %v3780, 16
      %v4112 = vrot.slane %v4110, 5
      %v4113 = vsel %vm249, %v4108, %v4112
      %v4114 = vshrl.u32 %v3780, 16
      %v4116 = vrot.slane %v4114, 4
      %v4117 = vor.u32 %v4116, %v4112
      %v4118 = vrot.slane %v4117, 4
      %v4120 = vshll.u32 %v3781, 16
      %v4122 = vrot.slane %v4120, 5
      %v4123 = vsel %vm249, %v4118, %v4122
      %v4125 = vshrl.u32 %v3782, 16
      %v4127 = vrot.slane %v4125, 4
      %v4128 = vshll.u32 %v3782, 16
      %v4130 = vrot.slane %v4128, 5
      %v4131 = vor.u32 %v4127, %v4130
      %v4132 = vrot.slane %v4131, 4
      %v4134 = vshll.u32 %v3783, 16
      %v4136 = vrot.slane %v4134, 5
      %v4137 = vsel %vm249, %v4132, %v4136
      %v4138 = vshrl.u32 %v3783, 16
      %v4140 = vrot.slane %v4138, 4
      %v4141 = vor.u32 %v4140, %v4136
      %v4142 = vrot.slane %v4141, 4
      %v4144 = vshll.u32 %v3784, 16
      %v4146 = vrot.slane %v4144, 5
      %v4147 = vsel %vm249, %v4142, %v4146
      %v4149 = vshrl.u32 %v3785, 16
      %v4151 = vrot.slane %v4149, 4
      %v4152 = vshll.u32 %v3785, 16
      %v4154 = vrot.slane %v4152, 5
      %v4155 = vor.u32 %v4151, %v4154
      %v4156 = vrot.slane %v4155, 4
      %v4158 = vshll.u32 %v3786, 16
      %v4160 = vrot.slane %v4158, 5
      %v4161 = vsel %vm249, %v4156, %v4160
      %v4162 = vshrl.u32 %v3786, 16
      %v4164 = vrot.slane %v4162, 4
      %v4165 = vor.u32 %v4164, %v4160
      %v4166 = vrot.slane %v4165, 4
      %v4168 = vshll.u32 %v3787, 16
      %v4170 = vrot.slane %v4168, 5
      %v4171 = vsel %vm249, %v4166, %v4170
      %s4172 = scalar_lea.vmem %s1, 448
      %v4173 = vld [vmem:[%s4172] sm:$0xf]
      %v4174 = vld [vmem:[%s4172 + $0x4] sm:$0xf]
      %v4175 = vld [vmem:[%s4172 + $0x8] sm:$0xf]
      %v4176 = vld [vmem:[%s4172 + $0xc] sm:$0xf]
      %v4177 = vld [vmem:[%s4172 + $0x10] sm:$0xf]
      %v4178 = vld [vmem:[%s4172 + $0x14] sm:$0xf]
      %v4179 = vld [vmem:[%s4172 + $0x18] sm:$0xf]
      %v4180 = vld [vmem:[%s4172 + $0x1c] sm:$0xf]
      %v4181 = vld [vmem:[%s4172 + $0x20] sm:$0xf]
      %v4182 = vld [vmem:[%s4172 + $0x24] sm:$0xf]
      %v4183 = vld [vmem:[%s4172 + $0x28] sm:$0xf]
      %v4184 = vld [vmem:[%s4172 + $0x2c] sm:$0xf]
      %v4185 = vld [vmem:[%s4172 + $0x30] sm:$0xf]
      %v4186 = vld [vmem:[%s4172 + $0x34] sm:$0xf]
      %v4187 = vld [vmem:[%s4172 + $0x38] sm:$0xf]
      %v4188 = vld [vmem:[%s4172 + $0x3c] sm:$0xf]
      %v4189 = vunpack.c.l.b16 %v3801
      %v4190 = vunpack.c.l.b16 %v3811
      %v4191 = vunpack.c.l.b16 %v3825
      %v4192 = vunpack.c.l.b16 %v3835
      %v4193 = vunpack.c.l.b16 %v3849
      %v4194 = vunpack.c.l.b16 %v3859
      %v4195 = vunpack.c.l.b16 %v3873
      %v4196 = vunpack.c.l.b16 %v3883
      %v4197 = vunpack.c.l.b16 %v3897
      %v4198 = vunpack.c.l.b16 %v3907
      %v4199 = vunpack.c.l.b16 %v3921
      %v4200 = vunpack.c.l.b16 %v3931
      %v4201 = vunpack.c.l.b16 %v3945
      %v4202 = vunpack.c.l.b16 %v3955
      %v4203 = vunpack.c.l.b16 %v3969
      %v4204 = vunpack.c.l.b16 %v3979
      %v4205 = vunpack.c.l.b16 %v3993
      %v4206 = vunpack.c.l.b16 %v4003
      %v4207 = vunpack.c.l.b16 %v4017
      %v4208 = vunpack.c.l.b16 %v4027
      %v4209 = vunpack.c.l.b16 %v4041
      %v4210 = vunpack.c.l.b16 %v4051
      %v4211 = vunpack.c.l.b16 %v4065
      %v4212 = vunpack.c.l.b16 %v4075
      %v4213 = vunpack.c.l.b16 %v4089
      %v4214 = vunpack.c.l.b16 %v4099
      %v4215 = vunpack.c.l.b16 %v4113
      %v4216 = vunpack.c.l.b16 %v4123
      %v4217 = vunpack.c.l.b16 %v4137
      %v4218 = vunpack.c.l.b16 %v4147
      %v4219 = vunpack.c.l.b16 %v4161
      %v4220 = vunpack.c.l.b16 %v4171
      %v4221 = vpack.c.b16 %v4190, %v4189
      %v4222 = vpack.c.b16 %v4192, %v4191
      %v4223 = vpack.c.b16 %v4194, %v4193
      %v4224 = vpack.c.b16 %v4196, %v4195
      %v4225 = vpack.c.b16 %v4198, %v4197
      %v4226 = vpack.c.b16 %v4200, %v4199
      %v4227 = vpack.c.b16 %v4202, %v4201
      %v4228 = vpack.c.b16 %v4204, %v4203
      %v4229 = vpack.c.b16 %v4206, %v4205
      %v4230 = vpack.c.b16 %v4208, %v4207
      %v4231 = vpack.c.b16 %v4210, %v4209
      %v4232 = vpack.c.b16 %v4212, %v4211
      %v4233 = vpack.c.b16 %v4214, %v4213
      %v4234 = vpack.c.b16 %v4216, %v4215
      %v4235 = vpack.c.b16 %v4218, %v4217
      %v4236 = vpack.c.b16 %v4220, %v4219
      %v4269 = vunpack.c.l.b16 %v4173
      %v4270 = vunpack.c.l.b16 %v4174
      %v4271 = vunpack.c.l.b16 %v4175
      %v4272 = vunpack.c.l.b16 %v4176
      %v4273 = vunpack.c.l.b16 %v4177
      %v4274 = vunpack.c.l.b16 %v4178
      %v4275 = vunpack.c.l.b16 %v4179
      %v4276 = vunpack.c.l.b16 %v4180
      %v4277 = vunpack.c.l.b16 %v4181
      %v4278 = vunpack.c.l.b16 %v4182
      %v4279 = vunpack.c.l.b16 %v4183
      %v4280 = vunpack.c.l.b16 %v4184
      %v4281 = vunpack.c.l.b16 %v4185
      %v4282 = vunpack.c.l.b16 %v4186
      %v4283 = vunpack.c.l.b16 %v4187
      %v4284 = vunpack.c.l.b16 %v4188
      %v4285 = vpack.c.b16 %v4270, %v4269
      %v4286 = vpack.c.b16 %v4272, %v4271
      %v4287 = vpack.c.b16 %v4274, %v4273
      %v4288 = vpack.c.b16 %v4276, %v4275
      %v4289 = vpack.c.b16 %v4278, %v4277
      %v4290 = vpack.c.b16 %v4280, %v4279
      %v4291 = vpack.c.b16 %v4282, %v4281
      %v4292 = vpack.c.b16 %v4284, %v4283
      %4301 = vmatprep.subr.bf16.mxu0 0
      %4302 = vmatpush1.bf16.msra.mxu0 %v4285
      %4303 = vmatprep.subr.bf16.mxu0 0
      %4304 = vmatpush1.bf16.msra.mxu0 %v4286
      %4305 = vmatprep.subr.bf16.mxu0 0
      %4306 = vmatpush1.bf16.msra.mxu0 %v4287
      %4307 = vmatprep.subr.bf16.mxu0 0
      %4308 = vmatpush1.bf16.msra.mxu0 %v4288
      %4309 = vmatprep.subr.bf16.mxu0 0
      %4310 = vmatpush1.bf16.msra.mxu0 %v4289
      %4311 = vmatprep.subr.bf16.mxu0 0
      %4312 = vmatpush1.bf16.msra.mxu0 %v4290
      %4313 = vmatprep.subr.bf16.mxu0 0
      %4314 = vmatpush1.bf16.msra.mxu0 %v4291
      %4315 = vmatprep.subr.bf16.mxu0 0
      %4316 = vmatpush1.bf16.msra.mxu0 %v4292
      %4317 = vmatprep.subr.bf16.mxu0 0
      %4318 = vmatpush1.bf16.msra.mxu0 0
      %4319 = vmatprep.subr.bf16.mxu0 0
      %4320 = vmatpush1.bf16.msra.mxu0 0
      %4321 = vmatprep.subr.bf16.mxu0 0
      %4322 = vmatpush1.bf16.msra.mxu0 0
      %4323 = vmatprep.subr.bf16.mxu0 0
      %4324 = vmatpush1.bf16.msra.mxu0 0
      %4325 = vmatprep.subr.bf16.mxu0 0
      %4326 = vmatpush1.bf16.msra.mxu0 0
      %4327 = vmatprep.subr.bf16.mxu0 0
      %4328 = vmatpush1.bf16.msra.mxu0 0
      %4329 = vmatprep.subr.bf16.mxu0 0
      %4330 = vmatpush1.bf16.msra.mxu0 0
      %4331 = vmatprep.subr.bf16.mxu0 0
      %4332 = vmatpush1.bf16.msra.mxu0 0
      %4333 = vmatprep.mubr.bf16.mxu0 0
      %4334 = vmatmul.mubr.bf16.gmra.mrb[0].mxu0 %v4221
      %v4335 = vpop.f32.mrb[0].mxu0
      %v4336 = vadd.f32 0.0, %v4335
      %v4337 = vpop.f32.mrb[0].mxu0
      %v4338 = vpop.f32.mrb[0].mxu0
      %v4339 = vadd.f32 0.0, %v4338
      %v4340 = vpop.f32.mrb[0].mxu0
      %4341 = vmatprep.mubr.bf16.mxu0 0
      %4342 = vmatmul.mubr.bf16.gmra.mrb[0].mxu0 %v4222
      %v4343 = vpop.f32.mrb[0].mxu0
      %v4344 = vadd.f32 0.0, %v4343
      %v4345 = vpop.f32.mrb[0].mxu0
      %v4346 = vpop.f32.mrb[0].mxu0
      %v4347 = vadd.f32 0.0, %v4346
      %v4348 = vpop.f32.mrb[0].mxu0
      %4349 = vmatprep.mubr.bf16.mxu0 0
      %4350 = vmatmul.mubr.bf16.gmra.mrb[0].mxu0 %v4223
      %v4351 = vpop.f32.mrb[0].mxu0
      %v4352 = vadd.f32 0.0, %v4351
      %v4353 = vpop.f32.mrb[0].mxu0
      %v4354 = vpop.f32.mrb[0].mxu0
      %v4355 = vadd.f32 0.0, %v4354
      %v4356 = vpop.f32.mrb[0].mxu0
      %4357 = vmatprep.mubr.bf16.mxu0 0
      %4358 = vmatmul.mubr.bf16.gmra.mrb[0].mxu0 %v4224
      %v4359 = vpop.f32.mrb[0].mxu0
      %v4360 = vadd.f32 0.0, %v4359
      %v4361 = vpop.f32.mrb[0].mxu0
      %v4362 = vpop.f32.mrb[0].mxu0
      %v4363 = vadd.f32 0.0, %v4362
      %v4364 = vpop.f32.mrb[0].mxu0
      %4365 = vmatprep.mubr.bf16.mxu0 0
      %4366 = vmatmul.mubr.bf16.gmra.mrb[0].mxu0 %v4225
      %v4367 = vpop.f32.mrb[0].mxu0
      %v4368 = vadd.f32 0.0, %v4367
      %v4369 = vpop.f32.mrb[0].mxu0
      %v4370 = vpop.f32.mrb[0].mxu0
      %v4371 = vadd.f32 0.0, %v4370
      %v4372 = vpop.f32.mrb[0].mxu0
      %4373 = vmatprep.mubr.bf16.mxu0 0
      %4374 = vmatmul.mubr.bf16.gmra.mrb[0].mxu0 %v4226
      %v4375 = vpop.f32.mrb[0].mxu0
      %v4376 = vadd.f32 0.0, %v4375
      %v4377 = vpop.f32.mrb[0].mxu0
      %v4378 = vpop.f32.mrb[0].mxu0
      %v4379 = vadd.f32 0.0, %v4378
      %v4380 = vpop.f32.mrb[0].mxu0
      %4381 = vmatprep.mubr.bf16.mxu0 0
      %4382 = vmatmul.mubr.bf16.gmra.mrb[0].mxu0 %v4227
      %v4383 = vpop.f32.mrb[0].mxu0
      %v4384 = vadd.f32 0.0, %v4383
      %v4385 = vpop.f32.mrb[0].mxu0
      %v4386 = vpop.f32.mrb[0].mxu0
      %v4387 = vadd.f32 0.0, %v4386
      %v4388 = vpop.f32.mrb[0].mxu0
      %4389 = vmatprep.mubr.bf16.mxu0 0
      %4390 = vmatmul.mubr.bf16.gmra.mrb[0].mxu0 %v4228
      %v4391 = vpop.f32.mrb[0].mxu0
      %v4392 = vadd.f32 0.0, %v4391
      %v4393 = vpop.f32.mrb[0].mxu0
      %v4394 = vpop.f32.mrb[0].mxu0
      %v4395 = vadd.f32 0.0, %v4394
      %v4396 = vpop.f32.mrb[0].mxu0
      %4397 = vmatprep.mubr.bf16.mxu0 0
      %4398 = vmatmul.mubr.bf16.gmra.mrb[0].mxu0 %v4229
      %v4399 = vpop.f32.mrb[0].mxu0
      %v4400 = vadd.f32 0.0, %v4399
      %v4401 = vpop.f32.mrb[0].mxu0
      %v4402 = vpop.f32.mrb[0].mxu0
      %v4403 = vadd.f32 0.0, %v4402
      %v4404 = vpop.f32.mrb[0].mxu0
      %4405 = vmatprep.mubr.bf16.mxu0 0
      %4406 = vmatmul.mubr.bf16.gmra.mrb[0].mxu0 %v4230
      %v4407 = vpop.f32.mrb[0].mxu0
      %v4408 = vadd.f32 0.0, %v4407
      %v4409 = vpop.f32.mrb[0].mxu0
      %v4410 = vpop.f32.mrb[0].mxu0
      %v4411 = vadd.f32 0.0, %v4410
      %v4412 = vpop.f32.mrb[0].mxu0
      %4413 = vmatprep.mubr.bf16.mxu0 0
      %4414 = vmatmul.mubr.bf16.gmra.mrb[0].mxu0 %v4231
      %v4415 = vpop.f32.mrb[0].mxu0
      %v4416 = vadd.f32 0.0, %v4415
      %v4417 = vpop.f32.mrb[0].mxu0
      %v4418 = vpop.f32.mrb[0].mxu0
      %v4419 = vadd.f32 0.0, %v4418
      %v4420 = vpop.f32.mrb[0].mxu0
      %4421 = vmatprep.mubr.bf16.mxu0 0
      %4422 = vmatmul.mubr.bf16.gmra.mrb[0].mxu0 %v4232
      %v4423 = vpop.f32.mrb[0].mxu0
      %v4424 = vadd.f32 0.0, %v4423
      %v4425 = vpop.f32.mrb[0].mxu0
      %v4426 = vpop.f32.mrb[0].mxu0
      %v4427 = vadd.f32 0.0, %v4426
      %v4428 = vpop.f32.mrb[0].mxu0
      %4429 = vmatprep.mubr.bf16.mxu0 0
      %4430 = vmatmul.mubr.bf16.gmra.mrb[0].mxu0 %v4233
      %v4431 = vpop.f32.mrb[0].mxu0
      %v4432 = vadd.f32 0.0, %v4431
      %v4433 = vpop.f32.mrb[0].mxu0
      %v4434 = vpop.f32.mrb[0].mxu0
      %v4435 = vadd.f32 0.0, %v4434
      %v4436 = vpop.f32.mrb[0].mxu0
      %4437 = vmatprep.mubr.bf16.mxu0 0
      %4438 = vmatmul.mubr.bf16.gmra.mrb[0].mxu0 %v4234
      %v4439 = vpop.f32.mrb[0].mxu0
      %v4440 = vadd.f32 0.0, %v4439
      %v4441 = vpop.f32.mrb[0].mxu0
      %v4442 = vpop.f32.mrb[0].mxu0
      %v4443 = vadd.f32 0.0, %v4442
      %v4444 = vpop.f32.mrb[0].mxu0
      %4445 = vmatprep.mubr.bf16.mxu0 0
      %4446 = vmatmul.mubr.bf16.gmra.mrb[0].mxu0 %v4235
      %v4447 = vpop.f32.mrb[0].mxu0
      %v4448 = vadd.f32 0.0, %v4447
      %v4449 = vpop.f32.mrb[0].mxu0
      %v4450 = vpop.f32.mrb[0].mxu0
      %v4451 = vadd.f32 0.0, %v4450
      %v4452 = vpop.f32.mrb[0].mxu0
      %4453 = vmatprep.mubr.bf16.mxu0 0
      %4454 = vmatmul.mubr.bf16.gmra.mrb[0].mxu0 %v4236
      %v4455 = vpop.f32.mrb[0].mxu0
      %v4456 = vadd.f32 0.0, %v4455
      %v4457 = vpop.f32.mrb[0].mxu0
      %v4458 = vpop.f32.mrb[0].mxu0
      %v4459 = vadd.f32 0.0, %v4458
      %v4460 = vpop.f32.mrb[0].mxu0
      %4461 = vdwg.mxu0
      %v4462 = vadd.f32 %v3708, %v4336
      %v4463 = vadd.f32 %v3709, %v4339
      %v4464 = vadd.f32 %v3710, %v4344
      %v4465 = vadd.f32 %v3711, %v4347
      %v4466 = vadd.f32 %v3712, %v4352
      %v4467 = vadd.f32 %v3713, %v4355
      %v4468 = vadd.f32 %v3714, %v4360
      %v4469 = vadd.f32 %v3715, %v4363
      %v4470 = vadd.f32 %v3716, %v4368
      %v4471 = vadd.f32 %v3717, %v4371
      %v4472 = vadd.f32 %v3718, %v4376
      %v4473 = vadd.f32 %v3719, %v4379
      %v4474 = vadd.f32 %v3720, %v4384
      %v4475 = vadd.f32 %v3721, %v4387
      %v4476 = vadd.f32 %v3722, %v4392
      %v4477 = vadd.f32 %v3723, %v4395
      %v4478 = vadd.f32 %v3724, %v4400
      %v4479 = vadd.f32 %v3725, %v4403
      %v4480 = vadd.f32 %v3726, %v4408
      %v4481 = vadd.f32 %v3727, %v4411
      %v4482 = vadd.f32 %v3728, %v4416
      %v4483 = vadd.f32 %v3729, %v4419
      %v4484 = vadd.f32 %v3730, %v4424
      %v4485 = vadd.f32 %v3731, %v4427
      %v4486 = vadd.f32 %v3732, %v4432
      %v4487 = vadd.f32 %v3733, %v4435
      %v4488 = vadd.f32 %v3734, %v4440
      %v4489 = vadd.f32 %v3735, %v4443
      %v4490 = vadd.f32 %v3736, %v4448
      %v4491 = vadd.f32 %v3737, %v4451
      %v4492 = vadd.f32 %v3738, %v4456
      %v4493 = vadd.f32 %v3739, %v4459
      %v4494 = vld [vmem:[%s3353] sm:$0xe]
      %v4495 = vld [vmem:[%s3353 + $0xc] sm:$0xe]
      %v4496 = vld [vmem:[%s3353 + $0x18] sm:$0xe]
      %v4497 = vld [vmem:[%s3353 + $0x24] sm:$0xe]
      %v4498 = vld [vmem:[%s3353 + $0x30] sm:$0xe]
      %v4499 = vld [vmem:[%s3353 + $0x3c] sm:$0xe]
      %v4500 = vld [vmem:[%s3353 + $0x48] sm:$0xe]
      %v4501 = vld [vmem:[%s3353 + $0x54] sm:$0xe]
      %v4502 = vld [vmem:[%s3353 + $0x60] sm:$0xe]
      %v4503 = vld [vmem:[%s3353 + $0x6c] sm:$0xe]
      %v4504 = vld [vmem:[%s3353 + $0x78] sm:$0xe]
      %v4505 = vld [vmem:[%s3353 + $0x84] sm:$0xe]
      %v4506 = vld [vmem:[%s3353 + $0x90] sm:$0xe]
      %v4507 = vld [vmem:[%s3353 + $0x9c] sm:$0xe]
      %v4508 = vld [vmem:[%s3353 + $0xa8] sm:$0xe]
      %v4509 = vld [vmem:[%s3353 + $0xb4] sm:$0xe]
      %v4558 = vrot.slane %v4494, 5
      %v4559 = vrot.slane %v4558, 4
      %v4560 = vrot.slane %v3741, 5
      %v4561 = vsel %vm1279, %v4559, %v4560
      %v4562 = vrot.slane %v4560, 4
      %v4563 = vrot.slane %v3742, 5
      %v4564 = vsel %vm1279, %v4562, %v4563
      %v4565 = vrot.slane %v4495, 5
      %v4566 = vrot.slane %v4565, 4
      %v4567 = vrot.slane %v3744, 5
      %v4568 = vsel %vm1279, %v4566, %v4567
      %v4569 = vrot.slane %v4567, 4
      %v4570 = vrot.slane %v3745, 5
      %v4571 = vsel %vm1279, %v4569, %v4570
      %v4572 = vrot.slane %v4496, 5
      %v4573 = vrot.slane %v4572, 4
      %v4574 = vrot.slane %v3747, 5
      %v4575 = vsel %vm1279, %v4573, %v4574
      %v4576 = vrot.slane %v4574, 4
      %v4577 = vrot.slane %v3748, 5
      %v4578 = vsel %vm1279, %v4576, %v4577
      %v4579 = vrot.slane %v4497, 5
      %v4580 = vrot.slane %v4579, 4
      %v4581 = vrot.slane %v3750, 5
      %v4582 = vsel %vm1279, %v4580, %v4581
      %v4583 = vrot.slane %v4581, 4
      %v4584 = vrot.slane %v3751, 5
      %v4585 = vsel %vm1279, %v4583, %v4584
      %v4586 = vrot.slane %v4498, 5
      %v4587 = vrot.slane %v4586, 4
      %v4588 = vrot.slane %v3753, 5
      %v4589 = vsel %vm1279, %v4587, %v4588
      %v4590 = vrot.slane %v4588, 4
      %v4591 = vrot.slane %v3754, 5
      %v4592 = vsel %vm1279, %v4590, %v4591
      %v4593 = vrot.slane %v4499, 5
      %v4594 = vrot.slane %v4593, 4
      %v4595 = vrot.slane %v3756, 5
      %v4596 = vsel %vm1279, %v4594, %v4595
      %v4597 = vrot.slane %v4595, 4
      %v4598 = vrot.slane %v3757, 5
      %v4599 = vsel %vm1279, %v4597, %v4598
      %v4600 = vrot.slane %v4500, 5
      %v4601 = vrot.slane %v4600, 4
      %v4602 = vrot.slane %v3759, 5
      %v4603 = vsel %vm1279, %v4601, %v4602
      %v4604 = vrot.slane %v4602, 4
      %v4605 = vrot.slane %v3760, 5
      %v4606 = vsel %vm1279, %v4604, %v4605
      %v4607 = vrot.slane %v4501, 5
      %v4608 = vrot.slane %v4607, 4
      %v4609 = vrot.slane %v3762, 5
      %v4610 = vsel %vm1279, %v4608, %v4609
      %v4611 = vrot.slane %v4609, 4
      %v4612 = vrot.slane %v3763, 5
      %v4613 = vsel %vm1279, %v4611, %v4612
      %v4614 = vrot.slane %v4502, 5
      %v4615 = vrot.slane %v4614, 4
      %v4616 = vrot.slane %v3765, 5
      %v4617 = vsel %vm1279, %v4615, %v4616
      %v4618 = vrot.slane %v4616, 4
      %v4619 = vrot.slane %v3766, 5
      %v4620 = vsel %vm1279, %v4618, %v4619
      %v4621 = vrot.slane %v4503, 5
      %v4622 = vrot.slane %v4621, 4
      %v4623 = vrot.slane %v3768, 5
      %v4624 = vsel %vm1279, %v4622, %v4623
      %v4625 = vrot.slane %v4623, 4
      %v4626 = vrot.slane %v3769, 5
      %v4627 = vsel %vm1279, %v4625, %v4626
      %v4628 = vrot.slane %v4504, 5
      %v4629 = vrot.slane %v4628, 4
      %v4630 = vrot.slane %v3771, 5
      %v4631 = vsel %vm1279, %v4629, %v4630
      %v4632 = vrot.slane %v4630, 4
      %v4633 = vrot.slane %v3772, 5
      %v4634 = vsel %vm1279, %v4632, %v4633
      %v4635 = vrot.slane %v4505, 5
      %v4636 = vrot.slane %v4635, 4
      %v4637 = vrot.slane %v3774, 5
      %v4638 = vsel %vm1279, %v4636, %v4637
      %v4639 = vrot.slane %v4637, 4
      %v4640 = vrot.slane %v3775, 5
      %v4641 = vsel %vm1279, %v4639, %v4640
      %v4642 = vrot.slane %v4506, 5
      %v4643 = vrot.slane %v4642, 4
      %v4644 = vrot.slane %v3777, 5
      %v4645 = vsel %vm1279, %v4643, %v4644
      %v4646 = vrot.slane %v4644, 4
      %v4647 = vrot.slane %v3778, 5
      %v4648 = vsel %vm1279, %v4646, %v4647
      %v4649 = vrot.slane %v4507, 5
      %v4650 = vrot.slane %v4649, 4
      %v4651 = vrot.slane %v3780, 5
      %v4652 = vsel %vm1279, %v4650, %v4651
      %v4653 = vrot.slane %v4651, 4
      %v4654 = vrot.slane %v3781, 5
      %v4655 = vsel %vm1279, %v4653, %v4654
      %v4656 = vrot.slane %v4508, 5
      %v4657 = vrot.slane %v4656, 4
      %v4658 = vrot.slane %v3783, 5
      %v4659 = vsel %vm1279, %v4657, %v4658
      %v4660 = vrot.slane %v4658, 4
      %v4661 = vrot.slane %v3784, 5
      %v4662 = vsel %vm1279, %v4660, %v4661
      %v4663 = vrot.slane %v4509, 5
      %v4664 = vrot.slane %v4663, 4
      %v4665 = vrot.slane %v3786, 5
      %v4666 = vsel %vm1279, %v4664, %v4665
      %v4667 = vrot.slane %v4665, 4
      %v4668 = vrot.slane %v3787, 5
      %v4669 = vsel %vm1279, %v4667, %v4668
      %s4670 = scalar_lea.vmem %s1, 512
      %v4671 = vld [vmem:[%s4670] sm:$0xf]
      %v4672 = vld [vmem:[%s4670 + $0x4] sm:$0xf]
      %v4673 = vld [vmem:[%s4670 + $0x8] sm:$0xf]
      %v4674 = vld [vmem:[%s4670 + $0xc] sm:$0xf]
      %v4675 = vld [vmem:[%s4670 + $0x10] sm:$0xf]
      %v4676 = vld [vmem:[%s4670 + $0x14] sm:$0xf]
      %v4677 = vld [vmem:[%s4670 + $0x18] sm:$0xf]
      %v4678 = vld [vmem:[%s4670 + $0x1c] sm:$0xf]
      %v4679 = vld [vmem:[%s4670 + $0x20] sm:$0xf]
      %v4680 = vld [vmem:[%s4670 + $0x24] sm:$0xf]
      %v4681 = vld [vmem:[%s4670 + $0x28] sm:$0xf]
      %v4682 = vld [vmem:[%s4670 + $0x2c] sm:$0xf]
      %v4683 = vld [vmem:[%s4670 + $0x30] sm:$0xf]
      %v4684 = vld [vmem:[%s4670 + $0x34] sm:$0xf]
      %v4685 = vld [vmem:[%s4670 + $0x38] sm:$0xf]
      %v4686 = vld [vmem:[%s4670 + $0x3c] sm:$0xf]
      %v4687 = vunpack.c.l.b16 %v4561
      %v4688 = vunpack.c.l.b16 %v4564
      %v4689 = vunpack.c.l.b16 %v4568
      %v4690 = vunpack.c.l.b16 %v4571
      %v4691 = vunpack.c.l.b16 %v4575
      %v4692 = vunpack.c.l.b16 %v4578
      %v4693 = vunpack.c.l.b16 %v4582
      %v4694 = vunpack.c.l.b16 %v4585
      %v4695 = vunpack.c.l.b16 %v4589
      %v4696 = vunpack.c.l.b16 %v4592
      %v4697 = vunpack.c.l.b16 %v4596
      %v4698 = vunpack.c.l.b16 %v4599
      %v4699 = vunpack.c.l.b16 %v4603
      %v4700 = vunpack.c.l.b16 %v4606
      %v4701 = vunpack.c.l.b16 %v4610
      %v4702 = vunpack.c.l.b16 %v4613
      %v4703 = vunpack.c.l.b16 %v4617
      %v4704 = vunpack.c.l.b16 %v4620
      %v4705 = vunpack.c.l.b16 %v4624
      %v4706 = vunpack.c.l.b16 %v4627
      %v4707 = vunpack.c.l.b16 %v4631
      %v4708 = vunpack.c.l.b16 %v4634
      %v4709 = vunpack.c.l.b16 %v4638
      %v4710 = vunpack.c.l.b16 %v4641
      %v4711 = vunpack.c.l.b16 %v4645
      %v4712 = vunpack.c.l.b16 %v4648
      %v4713 = vunpack.c.l.b16 %v4652
      %v4714 = vunpack.c.l.b16 %v4655
      %v4715 = vunpack.c.l.b16 %v4659
      %v4716 = vunpack.c.l.b16 %v4662
      %v4717 = vunpack.c.l.b16 %v4666
      %v4718 = vunpack.c.l.b16 %v4669
      %v4719 = vpack.c.b16 %v4688, %v4687
      %v4720 = vpack.c.b16 %v4690, %v4689
      %v4721 = vpack.c.b16 %v4692, %v4691
      %v4722 = vpack.c.b16 %v4694, %v4693
      %v4723 = vpack.c.b16 %v4696, %v4695
      %v4724 = vpack.c.b16 %v4698, %v4697
      %v4725 = vpack.c.b16 %v4700, %v4699
      %v4726 = vpack.c.b16 %v4702, %v4701
      %v4727 = vpack.c.b16 %v4704, %v4703
      %v4728 = vpack.c.b16 %v4706, %v4705
      %v4729 = vpack.c.b16 %v4708, %v4707
      %v4730 = vpack.c.b16 %v4710, %v4709
      %v4731 = vpack.c.b16 %v4712, %v4711
      %v4732 = vpack.c.b16 %v4714, %v4713
      %v4733 = vpack.c.b16 %v4716, %v4715
      %v4734 = vpack.c.b16 %v4718, %v4717
      %v4767 = vunpack.c.l.b16 %v4671
      %v4768 = vunpack.c.l.b16 %v4672
      %v4769 = vunpack.c.l.b16 %v4673
      %v4770 = vunpack.c.l.b16 %v4674
      %v4771 = vunpack.c.l.b16 %v4675
      %v4772 = vunpack.c.l.b16 %v4676
      %v4773 = vunpack.c.l.b16 %v4677
      %v4774 = vunpack.c.l.b16 %v4678
      %v4775 = vunpack.c.l.b16 %v4679
      %v4776 = vunpack.c.l.b16 %v4680
      %v4777 = vunpack.c.l.b16 %v4681
      %v4778 = vunpack.c.l.b16 %v4682
      %v4779 = vunpack.c.l.b16 %v4683
      %v4780 = vunpack.c.l.b16 %v4684
      %v4781 = vunpack.c.l.b16 %v4685
      %v4782 = vunpack.c.l.b16 %v4686
      %v4783 = vpack.c.b16 %v4768, %v4767
      %v4784 = vpack.c.b16 %v4770, %v4769
      %v4785 = vpack.c.b16 %v4772, %v4771
      %v4786 = vpack.c.b16 %v4774, %v4773
      %v4787 = vpack.c.b16 %v4776, %v4775
      %v4788 = vpack.c.b16 %v4778, %v4777
      %v4789 = vpack.c.b16 %v4780, %v4779
      %v4790 = vpack.c.b16 %v4782, %v4781
      %4799 = vmatprep.subr.bf16.mxu0 0
      %4800 = vmatpush1.bf16.msra.mxu0 %v4783
      %4801 = vmatprep.subr.bf16.mxu0 0
      %4802 = vmatpush1.bf16.msra.mxu0 %v4784
      %4803 = vmatprep.subr.bf16.mxu0 0
      %4804 = vmatpush1.bf16.msra.mxu0 %v4785
      %4805 = vmatprep.subr.bf16.mxu0 0
      %4806 = vmatpush1.bf16.msra.mxu0 %v4786
      %4807 = vmatprep.subr.bf16.mxu0 0
      %4808 = vmatpush1.bf16.msra.mxu0 %v4787
      %4809 = vmatprep.subr.bf16.mxu0 0
      %4810 = vmatpush1.bf16.msra.mxu0 %v4788
      %4811 = vmatprep.subr.bf16.mxu0 0
      %4812 = vmatpush1.bf16.msra.mxu0 %v4789
      %4813 = vmatprep.subr.bf16.mxu0 0
      %4814 = vmatpush1.bf16.msra.mxu0 %v4790
      %4815 = vmatprep.subr.bf16.mxu0 0
      %4816 = vmatpush1.bf16.msra.mxu0 0
      %4817 = vmatprep.subr.bf16.mxu0 0
      %4818 = vmatpush1.bf16.msra.mxu0 0
      %4819 = vmatprep.subr.bf16.mxu0 0
      %4820 = vmatpush1.bf16.msra.mxu0 0
      %4821 = vmatprep.subr.bf16.mxu0 0
      %4822 = vmatpush1.bf16.msra.mxu0 0
      %4823 = vmatprep.subr.bf16.mxu0 0
      %4824 = vmatpush1.bf16.msra.mxu0 0
      %4825 = vmatprep.subr.bf16.mxu0 0
      %4826 = vmatpush1.bf16.msra.mxu0 0
      %4827 = vmatprep.subr.bf16.mxu0 0
      %4828 = vmatpush1.bf16.msra.mxu0 0
      %4829 = vmatprep.subr.bf16.mxu0 0
      %4830 = vmatpush1.bf16.msra.mxu0 0
      %4831 = vmatprep.mubr.bf16.mxu0 0
      %4832 = vmatmul.mubr.bf16.gmra.mrb[0].mxu0 %v4719
      %v4833 = vpop.f32.mrb[0].mxu0
      %v4834 = vadd.f32 0.0, %v4833
      %v4835 = vpop.f32.mrb[0].mxu0
      %v4836 = vpop.f32.mrb[0].mxu0
      %v4837 = vadd.f32 0.0, %v4836
      %v4838 = vpop.f32.mrb[0].mxu0
      %4839 = vmatprep.mubr.bf16.mxu0 0
      %4840 = vmatmul.mubr.bf16.gmra.mrb[0].mxu0 %v4720
      %v4841 = vpop.f32.mrb[0].mxu0
      %v4842 = vadd.f32 0.0, %v4841
      %v4843 = vpop.f32.mrb[0].mxu0
      %v4844 = vpop.f32.mrb[0].mxu0
      %v4845 = vadd.f32 0.0, %v4844
      %v4846 = vpop.f32.mrb[0].mxu0
      %4847 = vmatprep.mubr.bf16.mxu0 0
      %4848 = vmatmul.mubr.bf16.gmra.mrb[0].mxu0 %v4721
      %v4849 = vpop.f32.mrb[0].mxu0
      %v4850 = vadd.f32 0.0, %v4849
      %v4851 = vpop.f32.mrb[0].mxu0
      %v4852 = vpop.f32.mrb[0].mxu0
      %v4853 = vadd.f32 0.0, %v4852
      %v4854 = vpop.f32.mrb[0].mxu0
      %4855 = vmatprep.mubr.bf16.mxu0 0
      %4856 = vmatmul.mubr.bf16.gmra.mrb[0].mxu0 %v4722
      %v4857 = vpop.f32.mrb[0].mxu0
      %v4858 = vadd.f32 0.0, %v4857
      %v4859 = vpop.f32.mrb[0].mxu0
      %v4860 = vpop.f32.mrb[0].mxu0
      %v4861 = vadd.f32 0.0, %v4860
      %v4862 = vpop.f32.mrb[0].mxu0
      %4863 = vmatprep.mubr.bf16.mxu0 0
      %4864 = vmatmul.mubr.bf16.gmra.mrb[0].mxu0 %v4723
      %v4865 = vpop.f32.mrb[0].mxu0
      %v4866 = vadd.f32 0.0, %v4865
      %v4867 = vpop.f32.mrb[0].mxu0
      %v4868 = vpop.f32.mrb[0].mxu0
      %v4869 = vadd.f32 0.0, %v4868
      %v4870 = vpop.f32.mrb[0].mxu0
      %4871 = vmatprep.mubr.bf16.mxu0 0
      %4872 = vmatmul.mubr.bf16.gmra.mrb[0].mxu0 %v4724
      %v4873 = vpop.f32.mrb[0].mxu0
      %v4874 = vadd.f32 0.0, %v4873
      %v4875 = vpop.f32.mrb[0].mxu0
      %v4876 = vpop.f32.mrb[0].mxu0
      %v4877 = vadd.f32 0.0, %v4876
      %v4878 = vpop.f32.mrb[0].mxu0
      %4879 = vmatprep.mubr.bf16.mxu0 0
      %4880 = vmatmul.mubr.bf16.gmra.mrb[0].mxu0 %v4725
      %v4881 = vpop.f32.mrb[0].mxu0
      %v4882 = vadd.f32 0.0, %v4881
      %v4883 = vpop.f32.mrb[0].mxu0
      %v4884 = vpop.f32.mrb[0].mxu0
      %v4885 = vadd.f32 0.0, %v4884
      %v4886 = vpop.f32.mrb[0].mxu0
      %4887 = vmatprep.mubr.bf16.mxu0 0
      %4888 = vmatmul.mubr.bf16.gmra.mrb[0].mxu0 %v4726
      %v4889 = vpop.f32.mrb[0].mxu0
      %v4890 = vadd.f32 0.0, %v4889
      %v4891 = vpop.f32.mrb[0].mxu0
      %v4892 = vpop.f32.mrb[0].mxu0
      %v4893 = vadd.f32 0.0, %v4892
      %v4894 = vpop.f32.mrb[0].mxu0
      %4895 = vmatprep.mubr.bf16.mxu0 0
      %4896 = vmatmul.mubr.bf16.gmra.mrb[0].mxu0 %v4727
      %v4897 = vpop.f32.mrb[0].mxu0
      %v4898 = vadd.f32 0.0, %v4897
      %v4899 = vpop.f32.mrb[0].mxu0
      %v4900 = vpop.f32.mrb[0].mxu0
      %v4901 = vadd.f32 0.0, %v4900
      %v4902 = vpop.f32.mrb[0].mxu0
      %4903 = vmatprep.mubr.bf16.mxu0 0
      %4904 = vmatmul.mubr.bf16.gmra.mrb[0].mxu0 %v4728
      %v4905 = vpop.f32.mrb[0].mxu0
      %v4906 = vadd.f32 0.0, %v4905
      %v4907 = vpop.f32.mrb[0].mxu0
      %v4908 = vpop.f32.mrb[0].mxu0
      %v4909 = vadd.f32 0.0, %v4908
      %v4910 = vpop.f32.mrb[0].mxu0
      %4911 = vmatprep.mubr.bf16.mxu0 0
      %4912 = vmatmul.mubr.bf16.gmra.mrb[0].mxu0 %v4729
      %v4913 = vpop.f32.mrb[0].mxu0
      %v4914 = vadd.f32 0.0, %v4913
      %v4915 = vpop.f32.mrb[0].mxu0
      %v4916 = vpop.f32.mrb[0].mxu0
      %v4917 = vadd.f32 0.0, %v4916
      %v4918 = vpop.f32.mrb[0].mxu0
      %4919 = vmatprep.mubr.bf16.mxu0 0
      %4920 = vmatmul.mubr.bf16.gmra.mrb[0].mxu0 %v4730
      %v4921 = vpop.f32.mrb[0].mxu0
      %v4922 = vadd.f32 0.0, %v4921
      %v4923 = vpop.f32.mrb[0].mxu0
      %v4924 = vpop.f32.mrb[0].mxu0
      %v4925 = vadd.f32 0.0, %v4924
      %v4926 = vpop.f32.mrb[0].mxu0
      %4927 = vmatprep.mubr.bf16.mxu0 0
      %4928 = vmatmul.mubr.bf16.gmra.mrb[0].mxu0 %v4731
      %v4929 = vpop.f32.mrb[0].mxu0
      %v4930 = vadd.f32 0.0, %v4929
      %v4931 = vpop.f32.mrb[0].mxu0
      %v4932 = vpop.f32.mrb[0].mxu0
      %v4933 = vadd.f32 0.0, %v4932
      %v4934 = vpop.f32.mrb[0].mxu0
      %4935 = vmatprep.mubr.bf16.mxu0 0
      %4936 = vmatmul.mubr.bf16.gmra.mrb[0].mxu0 %v4732
      %v4937 = vpop.f32.mrb[0].mxu0
      %v4938 = vadd.f32 0.0, %v4937
      %v4939 = vpop.f32.mrb[0].mxu0
      %v4940 = vpop.f32.mrb[0].mxu0
      %v4941 = vadd.f32 0.0, %v4940
      %v4942 = vpop.f32.mrb[0].mxu0
      %4943 = vmatprep.mubr.bf16.mxu0 0
      %4944 = vmatmul.mubr.bf16.gmra.mrb[0].mxu0 %v4733
      %v4945 = vpop.f32.mrb[0].mxu0
      %v4946 = vadd.f32 0.0, %v4945
      %v4947 = vpop.f32.mrb[0].mxu0
      %v4948 = vpop.f32.mrb[0].mxu0
      %v4949 = vadd.f32 0.0, %v4948
      %v4950 = vpop.f32.mrb[0].mxu0
      %4951 = vmatprep.mubr.bf16.mxu0 0
      %4952 = vmatmul.mubr.bf16.gmra.mrb[0].mxu0 %v4734
      %v4953 = vpop.f32.mrb[0].mxu0
      %v4954 = vadd.f32 0.0, %v4953
      %v4955 = vpop.f32.mrb[0].mxu0
      %v4956 = vpop.f32.mrb[0].mxu0
      %v4957 = vadd.f32 0.0, %v4956
      %v4958 = vpop.f32.mrb[0].mxu0
      %4959 = vdwg.mxu0
      %v4960 = vadd.f32 %v4462, %v4834
      %v4961 = vadd.f32 %v4463, %v4837
      %v4962 = vadd.f32 %v4464, %v4842
      %v4963 = vadd.f32 %v4465, %v4845
      %v4964 = vadd.f32 %v4466, %v4850
      %v4965 = vadd.f32 %v4467, %v4853
      %v4966 = vadd.f32 %v4468, %v4858
      %v4967 = vadd.f32 %v4469, %v4861
      %v4968 = vadd.f32 %v4470, %v4866
      %v4969 = vadd.f32 %v4471, %v4869
      %v4970 = vadd.f32 %v4472, %v4874
      %v4971 = vadd.f32 %v4473, %v4877
      %v4972 = vadd.f32 %v4474, %v4882
      %v4973 = vadd.f32 %v4475, %v4885
      %v4974 = vadd.f32 %v4476, %v4890
      %v4975 = vadd.f32 %v4477, %v4893
      %v4976 = vadd.f32 %v4478, %v4898
      %v4977 = vadd.f32 %v4479, %v4901
      %v4978 = vadd.f32 %v4480, %v4906
      %v4979 = vadd.f32 %v4481, %v4909
      %v4980 = vadd.f32 %v4482, %v4914
      %v4981 = vadd.f32 %v4483, %v4917
      %v4982 = vadd.f32 %v4484, %v4922
      %v4983 = vadd.f32 %v4485, %v4925
      %v4984 = vadd.f32 %v4486, %v4930
      %v4985 = vadd.f32 %v4487, %v4933
      %v4986 = vadd.f32 %v4488, %v4938
      %v4987 = vadd.f32 %v4489, %v4941
      %v4988 = vadd.f32 %v4490, %v4946
      %v4989 = vadd.f32 %v4491, %v4949
      %v4990 = vadd.f32 %v4492, %v4954
      %v4991 = vadd.f32 %v4493, %v4957
      %v4992 = vpack.c.bf16 %v4961, %v4960
      %v4993 = vpack.c.bf16 %v4963, %v4962
      %v4994 = vpack.c.bf16 %v4965, %v4964
      %v4995 = vpack.c.bf16 %v4967, %v4966
      %v4996 = vpack.c.bf16 %v4969, %v4968
      %v4997 = vpack.c.bf16 %v4971, %v4970
      %v4998 = vpack.c.bf16 %v4973, %v4972
      %v4999 = vpack.c.bf16 %v4975, %v4974
      %v5000 = vpack.c.bf16 %v4977, %v4976
      %v5001 = vpack.c.bf16 %v4979, %v4978
      %v5002 = vpack.c.bf16 %v4981, %v4980
      %v5003 = vpack.c.bf16 %v4983, %v4982
      %v5004 = vpack.c.bf16 %v4985, %v4984
      %v5005 = vpack.c.bf16 %v4987, %v4986
      %v5006 = vpack.c.bf16 %v4989, %v4988
      %v5007 = vpack.c.bf16 %v4991, %v4990
      %v5024 = vunpack.c.l.b16 %v4992
      %v5025 = vunpack.c.h.b16 %v4992
      %v5026 = vunpack.c.l.b16 %v4993
      %v5027 = vunpack.c.h.b16 %v4993
      %v5028 = vunpack.c.l.b16 %v4994
      %v5029 = vunpack.c.h.b16 %v4994
      %v5030 = vunpack.c.l.b16 %v4995
      %v5031 = vunpack.c.h.b16 %v4995
      %v5032 = vunpack.c.l.b16 %v4996
      %v5033 = vunpack.c.h.b16 %v4996
      %v5034 = vunpack.c.l.b16 %v4997
      %v5035 = vunpack.c.h.b16 %v4997
      %v5036 = vunpack.c.l.b16 %v4998
      %v5037 = vunpack.c.h.b16 %v4998
      %v5038 = vunpack.c.l.b16 %v4999
      %v5039 = vunpack.c.h.b16 %v4999
      %v5040 = vunpack.c.l.b16 %v5000
      %v5041 = vunpack.c.h.b16 %v5000
      %v5042 = vunpack.c.l.b16 %v5001
      %v5043 = vunpack.c.h.b16 %v5001
      %v5044 = vunpack.c.l.b16 %v5002
      %v5045 = vunpack.c.h.b16 %v5002
      %v5046 = vunpack.c.l.b16 %v5003
      %v5047 = vunpack.c.h.b16 %v5003
      %v5048 = vunpack.c.l.b16 %v5004
      %v5049 = vunpack.c.h.b16 %v5004
      %v5050 = vunpack.c.l.b16 %v5005
      %v5051 = vunpack.c.h.b16 %v5005
      %v5052 = vunpack.c.l.b16 %v5006
      %v5053 = vunpack.c.h.b16 %v5006
      %v5054 = vunpack.c.l.b16 %v5007
      %v5055 = vunpack.c.h.b16 %v5007
      %v5056 = vpack.c.b16 %v5024, %v5024
      %v5057 = vpack.c.b16 %v5025, %v5025
      %v5058 = vpack.c.b16 %v5026, %v5026
      %v5059 = vpack.c.b16 %v5027, %v5027
      %v5060 = vpack.c.b16 %v5028, %v5028
      %v5061 = vpack.c.b16 %v5029, %v5029
      %v5062 = vpack.c.b16 %v5030, %v5030
      %v5063 = vpack.c.b16 %v5031, %v5031
      %v5064 = vpack.c.b16 %v5032, %v5032
      %v5065 = vpack.c.b16 %v5033, %v5033
      %v5066 = vpack.c.b16 %v5034, %v5034
      %v5067 = vpack.c.b16 %v5035, %v5035
      %v5068 = vpack.c.b16 %v5036, %v5036
      %v5069 = vpack.c.b16 %v5037, %v5037
      %v5070 = vpack.c.b16 %v5038, %v5038
      %v5071 = vpack.c.b16 %v5039, %v5039
      %v5072 = vpack.c.b16 %v5040, %v5040
      %v5073 = vpack.c.b16 %v5041, %v5041
      %v5074 = vpack.c.b16 %v5042, %v5042
      %v5075 = vpack.c.b16 %v5043, %v5043
      %v5076 = vpack.c.b16 %v5044, %v5044
      %v5077 = vpack.c.b16 %v5045, %v5045
      %v5078 = vpack.c.b16 %v5046, %v5046
      %v5079 = vpack.c.b16 %v5047, %v5047
      %v5080 = vpack.c.b16 %v5048, %v5048
      %v5081 = vpack.c.b16 %v5049, %v5049
      %v5082 = vpack.c.b16 %v5050, %v5050
      %v5083 = vpack.c.b16 %v5051, %v5051
      %v5084 = vpack.c.b16 %v5052, %v5052
      %v5085 = vpack.c.b16 %v5053, %v5053
      %v5086 = vpack.c.b16 %v5054, %v5054
      %v5087 = vpack.c.b16 %v5055, %v5055
      %5120 = vst [vmem:[%s177] sm:$0xf] %v5056
      %5121 = vst [vmem:[%s177 + $0x4] sm:$0xf] %v5057
      %5122 = vst [vmem:[%s177 + $0x8] sm:$0xf] %v5058
      %5123 = vst [vmem:[%s177 + $0xc] sm:$0xf] %v5059
      %5124 = vst [vmem:[%s177 + $0x10] sm:$0xf] %v5060
      %5125 = vst [vmem:[%s177 + $0x14] sm:$0xf] %v5061
      %5126 = vst [vmem:[%s177 + $0x18] sm:$0xf] %v5062
      %5127 = vst [vmem:[%s177 + $0x1c] sm:$0xf] %v5063
      %5128 = vst [vmem:[%s177 + $0x20] sm:$0xf] %v5064
      %5129 = vst [vmem:[%s177 + $0x24] sm:$0xf] %v5065
      %5130 = vst [vmem:[%s177 + $0x28] sm:$0xf] %v5066
      %5131 = vst [vmem:[%s177 + $0x2c] sm:$0xf] %v5067
      %5132 = vst [vmem:[%s177 + $0x30] sm:$0xf] %v5068
      %5133 = vst [vmem:[%s177 + $0x34] sm:$0xf] %v5069
      %5134 = vst [vmem:[%s177 + $0x38] sm:$0xf] %v5070
      %5135 = vst [vmem:[%s177 + $0x3c] sm:$0xf] %v5071
      %5136 = vst [vmem:[%s177 + $0x40] sm:$0xf] %v5072
      %5137 = vst [vmem:[%s177 + $0x44] sm:$0xf] %v5073
      %5138 = vst [vmem:[%s177 + $0x48] sm:$0xf] %v5074
      %5139 = vst [vmem:[%s177 + $0x4c] sm:$0xf] %v5075
      %5140 = vst [vmem:[%s177 + $0x50] sm:$0xf] %v5076
      %5141 = vst [vmem:[%s177 + $0x54] sm:$0xf] %v5077
      %5142 = vst [vmem:[%s177 + $0x58] sm:$0xf] %v5078
      %5143 = vst [vmem:[%s177 + $0x5c] sm:$0xf] %v5079
      %5144 = vst [vmem:[%s177 + $0x60] sm:$0xf] %v5080
      %5145 = vst [vmem:[%s177 + $0x64] sm:$0xf] %v5081
      %5146 = vst [vmem:[%s177 + $0x68] sm:$0xf] %v5082
      %5147 = vst [vmem:[%s177 + $0x6c] sm:$0xf] %v5083
      %5148 = vst [vmem:[%s177 + $0x70] sm:$0xf] %v5084
      %5149 = vst [vmem:[%s177 + $0x74] sm:$0xf] %v5085
      %5150 = vst [vmem:[%s177 + $0x78] sm:$0xf] %v5086
      %5151 = vst [vmem:[%s177 + $0x7c] sm:$0xf] %v5087
      %v5152 = vadd.f32 %v4960, %v4961
      %v5153 = vadd.f32 %v5152, %v4962
      %v5154 = vadd.f32 %v5153, %v4963
      %v5155 = vadd.f32 %v5154, %v4964
      %v5156 = vadd.f32 %v5155, %v4965
      %v5157 = vadd.f32 %v5156, %v4966
      %v5158 = vadd.f32 %v5157, %v4967
      %v5159 = vadd.f32 %v5158, %v4968
      %v5160 = vadd.f32 %v5159, %v4969
      %v5161 = vadd.f32 %v5160, %v4970
      %v5162 = vadd.f32 %v5161, %v4971
      %v5163 = vadd.f32 %v5162, %v4972
      %v5164 = vadd.f32 %v5163, %v4973
      %v5165 = vadd.f32 %v5164, %v4974
      %v5166 = vadd.f32 %v5165, %v4975
      %v5167 = vadd.f32 %v5166, %v4976
      %v5168 = vadd.f32 %v5167, %v4977
      %v5169 = vadd.f32 %v5168, %v4978
      %v5170 = vadd.f32 %v5169, %v4979
      %v5171 = vadd.f32 %v5170, %v4980
      %v5172 = vadd.f32 %v5171, %v4981
      %v5173 = vadd.f32 %v5172, %v4982
      %v5174 = vadd.f32 %v5173, %v4983
      %v5175 = vadd.f32 %v5174, %v4984
      %v5176 = vadd.f32 %v5175, %v4985
      %v5177 = vadd.f32 %v5176, %v4986
      %v5178 = vadd.f32 %v5177, %v4987
      %v5179 = vadd.f32 %v5178, %v4988
      %v5180 = vadd.f32 %v5179, %v4989
      %v5181 = vadd.f32 %v5180, %v4990
      %v5182 = vadd.f32 %v5181, %v4991
      %v5183 = vrot.slane %v5182, 4
      %v5184 = vadd.f32 %v5182, %v5183
      %v5185 = vrot.slane %v5184, 2
      %v5186 = vadd.f32 %v5184, %v5185
      %v5187 = vrot.slane %v5186, 1
      %v5188 = vadd.f32 %v5186, %v5187
      %5189 = vst [vmem:[%s181] sm:$0x1] %v5188
      %v5190 = vmul.f32 %v4960, %v4960
      %v5191 = vmul.f32 %v4961, %v4961
      %v5192 = vmul.f32 %v4962, %v4962
      %v5193 = vmul.f32 %v4963, %v4963
      %v5194 = vmul.f32 %v4964, %v4964
      %v5195 = vmul.f32 %v4965, %v4965
      %v5196 = vmul.f32 %v4966, %v4966
      %v5197 = vmul.f32 %v4967, %v4967
      %v5198 = vmul.f32 %v4968, %v4968
      %v5199 = vmul.f32 %v4969, %v4969
      %v5200 = vmul.f32 %v4970, %v4970
      %v5201 = vmul.f32 %v4971, %v4971
      %v5202 = vmul.f32 %v4972, %v4972
      %v5203 = vmul.f32 %v4973, %v4973
      %v5204 = vmul.f32 %v4974, %v4974
      %v5205 = vmul.f32 %v4975, %v4975
      %v5206 = vmul.f32 %v4976, %v4976
      %v5207 = vmul.f32 %v4977, %v4977
      %v5208 = vmul.f32 %v4978, %v4978
      %v5209 = vmul.f32 %v4979, %v4979
      %v5210 = vmul.f32 %v4980, %v4980
      %v5211 = vmul.f32 %v4981, %v4981
      %v5212 = vmul.f32 %v4982, %v4982
      %v5213 = vmul.f32 %v4983, %v4983
      %v5214 = vmul.f32 %v4984, %v4984
      %v5215 = vmul.f32 %v4985, %v4985
      %v5216 = vmul.f32 %v4986, %v4986
      %v5217 = vmul.f32 %v4987, %v4987
      %v5218 = vmul.f32 %v4988, %v4988
      %v5219 = vmul.f32 %v4989, %v4989
      %v5220 = vmul.f32 %v4990, %v4990
      %v5221 = vmul.f32 %v4991, %v4991
      %v5222 = vadd.f32 %v5190, %v5191
      %v5223 = vadd.f32 %v5222, %v5192
      %v5224 = vadd.f32 %v5223, %v5193
      %v5225 = vadd.f32 %v5224, %v5194
      %v5226 = vadd.f32 %v5225, %v5195
      %v5227 = vadd.f32 %v5226, %v5196
      %v5228 = vadd.f32 %v5227, %v5197
      %v5229 = vadd.f32 %v5228, %v5198
      %v5230 = vadd.f32 %v5229, %v5199
      %v5231 = vadd.f32 %v5230, %v5200
      %v5232 = vadd.f32 %v5231, %v5201
      %v5233 = vadd.f32 %v5232, %v5202
      %v5234 = vadd.f32 %v5233, %v5203
      %v5235 = vadd.f32 %v5234, %v5204
      %v5236 = vadd.f32 %v5235, %v5205
      %v5237 = vadd.f32 %v5236, %v5206
      %v5238 = vadd.f32 %v5237, %v5207
      %v5239 = vadd.f32 %v5238, %v5208
      %v5240 = vadd.f32 %v5239, %v5209
      %v5241 = vadd.f32 %v5240, %v5210
      %v5242 = vadd.f32 %v5241, %v5211
      %v5243 = vadd.f32 %v5242, %v5212
      %v5244 = vadd.f32 %v5243, %v5213
      %v5245 = vadd.f32 %v5244, %v5214
      %v5246 = vadd.f32 %v5245, %v5215
      %v5247 = vadd.f32 %v5246, %v5216
      %v5248 = vadd.f32 %v5247, %v5217
      %v5249 = vadd.f32 %v5248, %v5218
      %v5250 = vadd.f32 %v5249, %v5219
      %v5251 = vadd.f32 %v5250, %v5220
      %v5252 = vadd.f32 %v5251, %v5221
      %v5253 = vrot.slane %v5252, 4
      %v5254 = vadd.f32 %v5252, %v5253
      %v5255 = vrot.slane %v5254, 2
      %v5256 = vadd.f32 %v5254, %v5255
      %v5257 = vrot.slane %v5256, 1
      %v5258 = vadd.f32 %v5256, %v5257
      %5259 = vst [vmem:[%s181 + $0x1] sm:$0x1] %v5258
      %p5260 = scmp.lt.s32.totalorder %s15, 1
      %s5261 = scalar_select %p5260, %s15, 1
      %s5262 = smul.addr %s5261, 32
      %s5263 = smul.addr %s5262, 4
      %s5264 = scalar_lea.vmem %s2, %s5263
      %p5265 = scmp.lt.s32.totalorder %s15, 1
      %s5266 = scalar_select %p5265, %s15, 1
      %s5267 = smul.addr %s5266, 2
      %s5268 = scalar_lea.vmem %s3, %s5267
      // Predicated region
      $region29: #{basic_block_forward.3} parent=27 // pred_check
        %p5269 = pneg %p80
      $region30: #{basic_block_forward.3} parent=27 // pred_check_branch
        %5271 = sbr.rel (%p5269) target = $region32
      $region31: #{basic_block_forward.3} parent=27 // pred_region
        _
      $region32: #{basic_block_forward.3} parent=27 // pred_fallthru
        _
      // Predicated region
      $region33: #{basic_block_forward.3} parent=27 // pred_check
        %p5272 = pneg %p106
      $region34: #{basic_block_forward.3} parent=27 // pred_check_branch
        %5274 = sbr.rel (%p5272) target = $region36
      $region35: #{basic_block_forward.3} parent=27 // pred_region
        _
      $region36: #{basic_block_forward.3} parent=27 // pred_fallthru
        _
    $region28: #{basic_block_forward.3} parent=5 // pred_fallthru
      _
    %p5275 = scmp.le.s32.totalorder 2, %s10
    // Predicated region
    $region37: #{basic_block_forward.3} parent=5 // pred_check
      %p5276 = pneg %p5275
    $region38: #{basic_block_forward.3} parent=5 // pred_check_branch
      %5278 = sbr.rel (%p5276) target = $region40
    $region39: #{basic_block_forward.3} parent=5 // pred_region
      %s5279 = ssub.s32 %s10, 2
      // Predicated region
      $region41: #{basic_block_forward.3} parent=39 // pred_check
        %p5280 = pneg %p86
      $region42: #{basic_block_forward.3} parent=39 // pred_check_branch
        %5282 = sbr.rel (%p5280) target = $region44
      $region43: #{basic_block_forward.3} parent=39 // pred_region
        %p5283 = scmp.lt.s32.totalorder %s16, 1
        %s5284 = scalar_select %p5283, %s16, 1
        %s5285 = smul.addr %s5284, 32
        %s5286 = smul.addr %s5285, 4
        %s5287 = scalar_lea.vmem %s2, %s5286
      $region44: #{basic_block_forward.3} parent=39 // pred_fallthru
        _
      // Predicated region
      $region45: #{basic_block_forward.3} parent=39 // pred_check
        %p5288 = pneg %p112
      $region46: #{basic_block_forward.3} parent=39 // pred_check_branch
        %5290 = sbr.rel (%p5288) target = $region48
      $region47: #{basic_block_forward.3} parent=39 // pred_region
        %p5291 = scmp.lt.s32.totalorder %s16, 1
        %s5292 = scalar_select %p5291, %s16, 1
        %s5293 = smul.addr %s5292, 2
        %s5294 = scalar_lea.vmem %s3, %s5293
      $region48: #{basic_block_forward.3} parent=39 // pred_fallthru
        _
    $region40: #{basic_block_forward.3} parent=5 // pred_fallthru
      _
  $region6: #{basic_block_forward.3} parent=0 // loop_footer
    %s14 = sadd.s32 1, %s10
  $region7: #{basic_block_forward.3} parent=0 // loop_footer_branch
    %9 = sbr.rel target = $region3
  $region8: #{basic_block_forward.3} parent=0 // loop_exit
    _

</llo_original>
